<compile_context>
chip_gen: v5e
topology: v5e:2x2
jax: 0.10.0
libtpu: 0.0.40
codegen_flags: <defaults>
</compile_context>

<pallas_src>
import functools

import jax
import jax.numpy as jnp
from jax import lax
from jax.experimental import pallas as pl
from jax.experimental.pallas import tpu as pltpu


def _conv_bn_kernel(x_ref, w_ref, b_ref, o_ref, *, H, W, C_in, C_out_p, K, DBLK):
    # x_ref: (1, Dp, Hp, Wp, Cin)       padded input, one batch element (bf16)
    # w_ref: (K*K*K*Cin, C_out_p)       weight, tap-major rows, BN scale folded (bf16)
    # b_ref: (1, C_out_p)               BN bias (f32)
    # o_ref: (1, DBLK, H, W, C_out_p)   output depth-block (f32)
    db = pl.program_id(1)
    d0 = db * DBLK

    # im2col: fold all K^3 taps into the contraction dimension.
    pieces = []
    for kd in range(K):
        xd = x_ref[0, pl.ds(d0 + kd, DBLK), :, :, :]          # (DBLK, Hp, Wp, Cin)
        for kh in range(K):
            for kw in range(K):
                pieces.append(xd[:, kh:kh + H, kw:kw + W, :])  # (DBLK, H, W, Cin)
    patch = jnp.concatenate(pieces, axis=-1)                   # (DBLK, H, W, K^3*Cin)
    patch = patch.reshape(DBLK * H * W, K * K * K * C_in)

    # single MXU matmul (bf16 in, f32 accumulate); BN scale already in w.
    y = jnp.dot(patch, w_ref[...], preferred_element_type=jnp.float32)
    y = y + b_ref[0, :]                                        # BN bias (eval mode)
    o_ref[0] = y.reshape(DBLK, H, W, C_out_p).astype(o_ref.dtype)


def conv_bn_3d(x_ncdhw, w_oidhw, bn_scale, bn_bias):
    """Conv3d(k=3, s=1, p=1, bias=False) + BatchNorm3d (eval mode, folded).

    x: (N, Cin, D, H, W) f32; w: (Cout, Cin, 3, 3, 3) f32;
    bn_scale / bn_bias: (Cout,) f32.  Returns (N, Cout, D, H, W) f32.
    """
    N, C_in, D, H, W = x_ncdhw.shape
    C_out, _, K, _, _ = w_oidhw.shape
    assert K == 3

    C_out_p = ((C_out + 127) // 128) * 128   # lane-dense stores + full MXU N dim

    # Depth-block size: largest divisor of D (<= 8) with a modest output block.
    DBLK = 1
    for cand in range(min(D, 8), 0, -1):
        if D % cand == 0 and cand * H * W * C_out_p * 4 <= 8 * 1024 * 1024:
            DBLK = cand
            break

    # channels-last + zero padding (pad=1); bf16 for MXU-native matmul inputs.
    x = jnp.transpose(x_ncdhw, (0, 2, 3, 4, 1)).astype(jnp.bfloat16)   # (N,D,H,W,Cin)
    xp = jnp.pad(x, ((0, 0), (1, 1), (1, 1), (1, 1), (0, 0)))
    Dp, Hp, Wp = D + 2, H + 2, W + 2
    # TODO(synk): jnp.pad writes one extra HBM copy of the activation; for
    #             memory-bound sizes handle the halo in-kernel instead.

    # weight -> (kd, kh, kw, Cin, Cout) rows; fold BN scale; pad Cout; bf16.
    w = jnp.transpose(w_oidhw, (2, 3, 4, 1, 0)).reshape(K * K * K * C_in, C_out)
    w = w * bn_scale[None, :]
    w = jnp.pad(w, ((0, 0), (0, C_out_p - C_out))).astype(jnp.bfloat16)
    b = jnp.pad(bn_bias, (0, C_out_p - C_out)).astype(jnp.float32).reshape(1, C_out_p)

    kernel = functools.partial(_conv_bn_kernel, H=H, W=W, C_in=C_in,
                               C_out_p=C_out_p, K=K, DBLK=DBLK)

    # Explicit VMEM budget: double-buffered in/out blocks + weights + im2col slack.
    in_block = 2 * Dp * Hp * Wp * C_in * 2
    out_block = 2 * DBLK * H * W * C_out_p * 4
    patch_tmp = 3 * DBLK * H * W * (K * K * K * C_in) * 2
    wt_bytes = w.size * 2 + b.size * 4
    vmem_limit = int(min(max(2 * (in_block + out_block + patch_tmp + wt_bytes),
                             32 * 1024 * 1024), 64 * 1024 * 1024))

    out = pl.pallas_call(
        kernel,
        out_shape=jax.ShapeDtypeStruct((N, D, H, W, C_out_p), jnp.float32),
        grid_spec=pltpu.PrefetchScalarGridSpec(
            num_scalar_prefetch=0,
            grid=(N, D // DBLK),
            in_specs=[
                # full padded volume of one batch element (small; fits VMEM here)
                pl.BlockSpec((1, Dp, Hp, Wp, C_in), lambda n, db: (n, 0, 0, 0, 0)),
                pl.BlockSpec((K * K * K * C_in, C_out_p), lambda n, db: (0, 0)),
                pl.BlockSpec((1, C_out_p), lambda n, db: (0, 0)),
            ],
            out_specs=pl.BlockSpec((1, DBLK, H, W, C_out_p),
                                   lambda n, db: (n, db, 0, 0, 0)),
        ),
        compiler_params=pltpu.CompilerParams(
            dimension_semantics=("parallel", "parallel"),
            vmem_limit_bytes=vmem_limit),
    )(xp, w, b)

    out = out[..., :C_out]                                  # strip Cout padding
    return jnp.transpose(out, (0, 4, 1, 2, 3))              # back to NCDHW


def _reference(x_ncdhw, w_oidhw, bn_scale, bn_bias):
    y = lax.conv_general_dilated(
        x_ncdhw, w_oidhw,
        window_strides=(1, 1, 1),
        padding=[(1, 1)] * 3,
        dimension_numbers=("NCDHW", "OIDHW", "NCDHW"))
    return y * bn_scale[None, :, None, None, None] + bn_bias[None, :, None, None, None]


if __name__ == "__main__":
    key = jax.random.PRNGKey(0)
    k_x, k_w, k_g, k_b, k_m, k_v = jax.random.split(key, 6)

    N, C_in, C_out, D, H, W = 2, 4, 8, 6, 8, 8
    eps = 1e-5

    x = jax.random.normal(k_x, (N, C_in, D, H, W), dtype=jnp.float32)
    weight = jax.random.normal(k_w, (C_out, C_in, 3, 3, 3), dtype=jnp.float32) * 0.1

    # deterministic BatchNorm3d parameters / running stats (eval-mode fold)
    gamma = 1.0 + 0.1 * jax.random.normal(k_g, (C_out,), dtype=jnp.float32)
    beta = 0.1 * jax.random.normal(k_b, (C_out,), dtype=jnp.float32)
    running_mean = 0.1 * jax.random.normal(k_m, (C_out,), dtype=jnp.float32)
    running_var = 1.0 + 0.1 * jax.random.uniform(k_v, (C_out,), dtype=jnp.float32)

    bn_scale = gamma / jnp.sqrt(running_var + eps)
    bn_bias = beta - running_mean * bn_scale

    out = jax.block_until_ready(conv_bn_3d(x, weight, bn_scale, bn_bias))
    ref = jax.block_until_ready(_reference(x, weight, bn_scale, bn_bias))

    assert out.shape == (N, C_out, D, H, W)
    # bf16 MXU inputs (f32 accumulation) -> loosened tolerance vs f32 reference.
    assert jnp.allclose(out, ref, atol=5e-2, rtol=5e-2), "mismatch vs reference"

    print("KERNEL_OK")
</pallas_src>

<mosaic_0001>
module attributes {stable_mosaic.version = 11 : i64} {
  func.func @_conv_bn_kernel(%arg0: i32, %arg1: i32, %arg2: memref<1x8x10x10x4xbf16, #tpu.memory_space<vmem>>, %arg3: memref<108x128xbf16, #tpu.memory_space<vmem>>, %arg4: memref<1x128xf32, #tpu.memory_space<vmem>>, %arg5: memref<1x6x8x8x128xf32, #tpu.memory_space<vmem>>) attributes {dimension_semantics = [#tpu.dimension_semantics<parallel>, #tpu.dimension_semantics<parallel>], iteration_bounds = array<i64: 2, 1>, scalar_prefetch = 0 : i64, scratch_operands = 0 : i64, tpu.core_type = #tpu.core_type<tc>, window_params = [{transform_indices = @transform_0, window_bounds = array<i64: 1, 8, 10, 10, 4>}, {pipeline_mode = #tpu.pipeline_mode<synchronous>, transform_indices = @transform_1, window_bounds = array<i64: 108, 128>}, {pipeline_mode = #tpu.pipeline_mode<synchronous>, transform_indices = @transform_2, window_bounds = array<i64: 1, 128>}, {transform_indices = @transform_3, window_bounds = array<i64: 1, 6, 8, 8, 128>}]} {
    %c6_i32 = arith.constant 6 : i32
    %0 = arith.muli %arg1, %c6_i32 : i32
    %c0_i32 = arith.constant 0 : i32
    %1 = arith.addi %0, %c0_i32 : i32
    %c0 = arith.constant 0 : index
    %2 = arith.index_cast %1 : i32 to index
    %c0_0 = arith.constant 0 : index
    %c0_1 = arith.constant 0 : index
    %c0_2 = arith.constant 0 : index
    %3 = vector.load %arg2[%c0, %2, %c0_0, %c0_1, %c0_2] : memref<1x8x10x10x4xbf16, #tpu.memory_space<vmem>>, vector<1x6x10x10x4xbf16>
    %4 = vector.shape_cast %3 : vector<1x6x10x10x4xbf16> to vector<6x10x10x4xbf16>
    %5 = vector.extract_strided_slice %4 {offsets = [0, 0, 0, 0], sizes = [6, 8, 8, 4], strides = [1, 1, 1, 1]} : vector<6x10x10x4xbf16> to vector<6x8x8x4xbf16>
    %6 = vector.extract_strided_slice %4 {offsets = [0, 0, 1, 0], sizes = [6, 8, 8, 4], strides = [1, 1, 1, 1]} : vector<6x10x10x4xbf16> to vector<6x8x8x4xbf16>
    %7 = vector.extract_strided_slice %4 {offsets = [0, 0, 2, 0], sizes = [6, 8, 8, 4], strides = [1, 1, 1, 1]} : vector<6x10x10x4xbf16> to vector<6x8x8x4xbf16>
    %8 = vector.extract_strided_slice %4 {offsets = [0, 1, 0, 0], sizes = [6, 8, 8, 4], strides = [1, 1, 1, 1]} : vector<6x10x10x4xbf16> to vector<6x8x8x4xbf16>
    %9 = vector.extract_strided_slice %4 {offsets = [0, 1, 1, 0], sizes = [6, 8, 8, 4], strides = [1, 1, 1, 1]} : vector<6x10x10x4xbf16> to vector<6x8x8x4xbf16>
    %10 = vector.extract_strided_slice %4 {offsets = [0, 1, 2, 0], sizes = [6, 8, 8, 4], strides = [1, 1, 1, 1]} : vector<6x10x10x4xbf16> to vector<6x8x8x4xbf16>
    %11 = vector.extract_strided_slice %4 {offsets = [0, 2, 0, 0], sizes = [6, 8, 8, 4], strides = [1, 1, 1, 1]} : vector<6x10x10x4xbf16> to vector<6x8x8x4xbf16>
    %12 = vector.extract_strided_slice %4 {offsets = [0, 2, 1, 0], sizes = [6, 8, 8, 4], strides = [1, 1, 1, 1]} : vector<6x10x10x4xbf16> to vector<6x8x8x4xbf16>
    %13 = vector.extract_strided_slice %4 {offsets = [0, 2, 2, 0], sizes = [6, 8, 8, 4], strides = [1, 1, 1, 1]} : vector<6x10x10x4xbf16> to vector<6x8x8x4xbf16>
    %c1_i32 = arith.constant 1 : i32
    %14 = arith.addi %0, %c1_i32 : i32
    %c0_3 = arith.constant 0 : index
    %15 = arith.index_cast %14 : i32 to index
    %c0_4 = arith.constant 0 : index
    %c0_5 = arith.constant 0 : index
    %c0_6 = arith.constant 0 : index
    %16 = vector.load %arg2[%c0_3, %15, %c0_4, %c0_5, %c0_6] : memref<1x8x10x10x4xbf16, #tpu.memory_space<vmem>>, vector<1x6x10x10x4xbf16>
    %17 = vector.shape_cast %16 : vector<1x6x10x10x4xbf16> to vector<6x10x10x4xbf16>
    %18 = vector.extract_strided_slice %17 {offsets = [0, 0, 0, 0], sizes = [6, 8, 8, 4], strides = [1, 1, 1, 1]} : vector<6x10x10x4xbf16> to vector<6x8x8x4xbf16>
    %19 = vector.extract_strided_slice %17 {offsets = [0, 0, 1, 0], sizes = [6, 8, 8, 4], strides = [1, 1, 1, 1]} : vector<6x10x10x4xbf16> to vector<6x8x8x4xbf16>
    %20 = vector.extract_strided_slice %17 {offsets = [0, 0, 2, 0], sizes = [6, 8, 8, 4], strides = [1, 1, 1, 1]} : vector<6x10x10x4xbf16> to vector<6x8x8x4xbf16>
    %21 = vector.extract_strided_slice %17 {offsets = [0, 1, 0, 0], sizes = [6, 8, 8, 4], strides = [1, 1, 1, 1]} : vector<6x10x10x4xbf16> to vector<6x8x8x4xbf16>
    %22 = vector.extract_strided_slice %17 {offsets = [0, 1, 1, 0], sizes = [6, 8, 8, 4], strides = [1, 1, 1, 1]} : vector<6x10x10x4xbf16> to vector<6x8x8x4xbf16>
    %23 = vector.extract_strided_slice %17 {offsets = [0, 1, 2, 0], sizes = [6, 8, 8, 4], strides = [1, 1, 1, 1]} : vector<6x10x10x4xbf16> to vector<6x8x8x4xbf16>
    %24 = vector.extract_strided_slice %17 {offsets = [0, 2, 0, 0], sizes = [6, 8, 8, 4], strides = [1, 1, 1, 1]} : vector<6x10x10x4xbf16> to vector<6x8x8x4xbf16>
    %25 = vector.extract_strided_slice %17 {offsets = [0, 2, 1, 0], sizes = [6, 8, 8, 4], strides = [1, 1, 1, 1]} : vector<6x10x10x4xbf16> to vector<6x8x8x4xbf16>
    %26 = vector.extract_strided_slice %17 {offsets = [0, 2, 2, 0], sizes = [6, 8, 8, 4], strides = [1, 1, 1, 1]} : vector<6x10x10x4xbf16> to vector<6x8x8x4xbf16>
    %c2_i32 = arith.constant 2 : i32
    %27 = arith.addi %0, %c2_i32 : i32
    %c0_7 = arith.constant 0 : index
    %28 = arith.index_cast %27 : i32 to index
    %c0_8 = arith.constant 0 : index
    %c0_9 = arith.constant 0 : index
    %c0_10 = arith.constant 0 : index
    %29 = vector.load %arg2[%c0_7, %28, %c0_8, %c0_9, %c0_10] : memref<1x8x10x10x4xbf16, #tpu.memory_space<vmem>>, vector<1x6x10x10x4xbf16>
    %30 = vector.shape_cast %29 : vector<1x6x10x10x4xbf16> to vector<6x10x10x4xbf16>
    %31 = vector.extract_strided_slice %30 {offsets = [0, 0, 0, 0], sizes = [6, 8, 8, 4], strides = [1, 1, 1, 1]} : vector<6x10x10x4xbf16> to vector<6x8x8x4xbf16>
    %32 = vector.extract_strided_slice %30 {offsets = [0, 0, 1, 0], sizes = [6, 8, 8, 4], strides = [1, 1, 1, 1]} : vector<6x10x10x4xbf16> to vector<6x8x8x4xbf16>
    %33 = vector.extract_strided_slice %30 {offsets = [0, 0, 2, 0], sizes = [6, 8, 8, 4], strides = [1, 1, 1, 1]} : vector<6x10x10x4xbf16> to vector<6x8x8x4xbf16>
    %34 = vector.extract_strided_slice %30 {offsets = [0, 1, 0, 0], sizes = [6, 8, 8, 4], strides = [1, 1, 1, 1]} : vector<6x10x10x4xbf16> to vector<6x8x8x4xbf16>
    %35 = vector.extract_strided_slice %30 {offsets = [0, 1, 1, 0], sizes = [6, 8, 8, 4], strides = [1, 1, 1, 1]} : vector<6x10x10x4xbf16> to vector<6x8x8x4xbf16>
    %36 = vector.extract_strided_slice %30 {offsets = [0, 1, 2, 0], sizes = [6, 8, 8, 4], strides = [1, 1, 1, 1]} : vector<6x10x10x4xbf16> to vector<6x8x8x4xbf16>
    %37 = vector.extract_strided_slice %30 {offsets = [0, 2, 0, 0], sizes = [6, 8, 8, 4], strides = [1, 1, 1, 1]} : vector<6x10x10x4xbf16> to vector<6x8x8x4xbf16>
    %38 = vector.extract_strided_slice %30 {offsets = [0, 2, 1, 0], sizes = [6, 8, 8, 4], strides = [1, 1, 1, 1]} : vector<6x10x10x4xbf16> to vector<6x8x8x4xbf16>
    %39 = vector.extract_strided_slice %30 {offsets = [0, 2, 2, 0], sizes = [6, 8, 8, 4], strides = [1, 1, 1, 1]} : vector<6x10x10x4xbf16> to vector<6x8x8x4xbf16>
    %40 = tpu.concatenate %5, %6, %7, %8, %9, %10, %11, %12, %13, %18, %19, %20, %21, %22, %23, %24 in 3 : vector<6x8x8x4xbf16>, vector<6x8x8x4xbf16>, vector<6x8x8x4xbf16>, vector<6x8x8x4xbf16>, vector<6x8x8x4xbf16>, vector<6x8x8x4xbf16>, vector<6x8x8x4xbf16>, vector<6x8x8x4xbf16>, vector<6x8x8x4xbf16>, vector<6x8x8x4xbf16>, vector<6x8x8x4xbf16>, vector<6x8x8x4xbf16>, vector<6x8x8x4xbf16>, vector<6x8x8x4xbf16>, vector<6x8x8x4xbf16>, vector<6x8x8x4xbf16> -> vector<6x8x8x64xbf16>
    %41 = tpu.concatenate %25, %26, %31, %32, %33, %34, %35, %36, %37, %38, %39 in 3 : vector<6x8x8x4xbf16>, vector<6x8x8x4xbf16>, vector<6x8x8x4xbf16>, vector<6x8x8x4xbf16>, vector<6x8x8x4xbf16>, vector<6x8x8x4xbf16>, vector<6x8x8x4xbf16>, vector<6x8x8x4xbf16>, vector<6x8x8x4xbf16>, vector<6x8x8x4xbf16>, vector<6x8x8x4xbf16> -> vector<6x8x8x44xbf16>
    %42 = tpu.concatenate %40, %41 in 3 : vector<6x8x8x64xbf16>, vector<6x8x8x44xbf16> -> vector<6x8x8x108xbf16>
    %43 = vector.shape_cast %42 : vector<6x8x8x108xbf16> to vector<384x108xbf16>
    %c0_11 = arith.constant 0 : index
    %c0_12 = arith.constant 0 : index
    %44 = vector.load %arg3[%c0_11, %c0_12] : memref<108x128xbf16, #tpu.memory_space<vmem>>, vector<108x128xbf16>
    %cst = arith.constant dense<0.000000e+00> : vector<384x128xf32>
    %45 = tpu.matmul %43, %44, %cst {dimension_numbers = #tpu.dot_dimension_numbers<[1], [0], [0], [1], [0, 0, 1, 1], [], []>} : vector<384x108xbf16>, vector<108x128xbf16>, vector<384x128xf32> -> vector<384x128xf32>
    %c0_13 = arith.constant 0 : index
    %c0_14 = arith.constant 0 : index
    %46 = vector.load %arg4[%c0_13, %c0_14] : memref<1x128xf32, #tpu.memory_space<vmem>>, vector<1x128xf32>
    %47 = vector.shape_cast %46 : vector<1x128xf32> to vector<128xf32>
    %48 = vector.shape_cast %47 : vector<128xf32> to vector<1x128xf32>
    %49 = vector.broadcast %48 : vector<1x128xf32> to vector<384x128xf32>
    %50 = arith.addf %45, %49 : vector<384x128xf32>
    %51 = vector.shape_cast %50 : vector<384x128xf32> to vector<6x8x8x128xf32>
    %c0_15 = arith.constant 0 : index
    %c0_16 = arith.constant 0 : index
    %c0_17 = arith.constant 0 : index
    %c0_18 = arith.constant 0 : index
    %c0_19 = arith.constant 0 : index
    %52 = vector.load %arg5[%c0_15, %c0_16, %c0_17, %c0_18, %c0_19] : memref<1x6x8x8x128xf32, #tpu.memory_space<vmem>>, vector<1x6x8x8x128xf32>
    %53 = vector.shape_cast %52 : vector<1x6x8x8x128xf32> to vector<6x8x8x128xf32>
    %54 = vector.shape_cast %51 : vector<6x8x8x128xf32> to vector<1x6x8x8x128xf32>
    tpu.vector_store %arg5[%c0_15, %c0_16, %c0_17, %c0_18, %c0_19], %54 {strides = array<i32>} : memref<1x6x8x8x128xf32, #tpu.memory_space<vmem>>, vector<1x6x8x8x128xf32>,
    return
  }
  func.func @transform_0(%arg0: i32, %arg1: i32) -> (i32, i32, i32, i32, i32) {
    %c0_i32 = arith.constant 0 : i32
    %c0_i32_0 = arith.constant 0 : i32
    %c0_i32_1 = arith.constant 0 : i32
    %c0_i32_2 = arith.constant 0 : i32
    %c0_i32_3 = arith.constant 0 : i32
    return %arg0, %c0_i32, %c0_i32_0, %c0_i32_1, %c0_i32_2 : i32, i32, i32, i32, i32
  }
  func.func @transform_1(%arg0: i32, %arg1: i32) -> (i32, i32) {
    %c0_i32 = arith.constant 0 : i32
    %c0_i32_0 = arith.constant 0 : i32
    %c0_i32_1 = arith.constant 0 : i32
    return %c0_i32, %c0_i32_0 : i32, i32
  }
  func.func @transform_2(%arg0: i32, %arg1: i32) -> (i32, i32) {
    %c0_i32 = arith.constant 0 : i32
    %c0_i32_0 = arith.constant 0 : i32
    %c0_i32_1 = arith.constant 0 : i32
    return %c0_i32, %c0_i32_0 : i32, i32
  }
  func.func @transform_3(%arg0: i32, %arg1: i32) -> (i32, i32, i32, i32, i32) {
    %c0_i32 = arith.constant 0 : i32
    %c0_i32_0 = arith.constant 0 : i32
    %c0_i32_1 = arith.constant 0 : i32
    %c0_i32_2 = arith.constant 0 : i32
    return %arg0, %arg1, %c0_i32, %c0_i32_0, %c0_i32_1 : i32, i32, i32, i32, i32
  }
}

</mosaic_0001>

<llo_original>
// kernel: tpu_custom_call.1
$region0: #{tpu_custom_call.1}
  #allocation0 [shape = 'u32[]', space=smem, size = 0x4, offset = 0x4, fixed_abs, tag = 'smem constant byte address 0x4 - core index']
  #allocation1 [shape = 'u32[72,128]{1,0:T(1,128)}', space=vmem, size = 0x9000, scoped, tag = 'internal scratch']
  %s0 = inlined_call_operand.vmem [shape: bf16[2,8,10,10,4], index: 0, kind: input, shape index: {}]
  %s1 = inlined_call_operand.vmem [shape: bf16[108,128], index: 1, kind: input, shape index: {}]
  %s2 = inlined_call_operand.vmem [shape: f32[1,128], index: 2, kind: input, shape index: {}]
  %s3 = inlined_call_operand.hbm [shape: f32[2,6,8,8,128], index: 3, kind: output, shape index: {}]
  %s4 = sld [smem:[#allocation0]]
  $region45: #{tpu_custom_call.1} parent=0
    _
  %s6 = ssub.s32 1, %s4
  %s7 = scalar_select 0, %s6, %s4
  $region1: #{tpu_custom_call.1} parent=0
    #allocation2 [shape = 'u8[393216]{0}', space=vmem, size = 0x60000, scoped, tag = 'output window, operand 0']
    #allocation3 [shape = 's32[2]{0}', space=sflag, size = 0x8, scoped, tag = 'scoped memory for tpu_custom_call.1']
    %8 = vsyncpa [#allocation3], 0
    %s9 = scalar_lea.sflag [#allocation3], 1
    %10 = vsyncpa %s9, 0
    loop: start=0, step=1, limit=4
    $region2: #{tpu_custom_call.1} parent=1 // loop_pre_header
      _
    $region3: #{tpu_custom_call.1} parent=1 // loop_header
      %s12 = sphi 0, %s16
      %p13 = scmp.ge.s32.totalorder %s12, 4
      %s19 = sphi 0, %s31
      %s20 = sphi 0, %s27
      %s21 = sphi 0, %s19
      %s22 = sphi 0, %s20
      %s23 = sphi 0, %s21
      %s24 = sphi 0, %s22
      %s34 = sphi 0, %s36
      %s37 = sphi 0, %s34
      %s38 = sphi 0, %s37
      %s54 = sphi 0, %s38
      %s58 = sphi 0, %s58
      %s60 = sphi 0, %s58
      %s61 = sphi 0, %s60
      %s75 = sphi 0, %s61
      %s79 = sphi 0, %s79
      %s81 = sphi 0, %s79
      %s82 = sphi 0, %s81
      %s96 = sphi 0, %s82
      %s104 = sphi 0, %s106
      %s107 = sphi 0, %s104
      %s108 = sphi 0, %s107
      %s124 = sphi 0, %s108
    $region4: #{tpu_custom_call.1} parent=1 // loop_header_branch
      %15 = sbr.rel (%p13) target = $region8
    $region5: #{tpu_custom_call.1} parent=1 // loop_body
      %s17 = ssub.s32 %s12, 1
      %s18 = ssub.s32 %s12, 2
      %s25 = sadd.s32 1, %s20
      %p26 = scmp.ge.s32.totalorder %s25, 1
      %s27 = scalar_select %p26, 0, %s25
      %s28 = sadd.s32 1, %s19
      %s29 = scalar_select %p26, %s28, %s19
      %p30 = scmp.ge.s32.totalorder %s29, 2
      %s31 = scalar_select %p30, 0, %s29
      %s32 = ssub.s32 %s19, %s31
      %p33 = scmp.eq.s32.totalorder %s32, 0
      %s35 = sadd.s32 %s34, 1
      %s36 = scalar_select %p33, %s34, %s35
      %p39 = pneg %p33
      %p40 = scmp.eq.s32.totalorder %s12, 1
      %p41 = por %p39, %p40
      %p42 = scmp.ne.s32.totalorder %s34, %s37
      %p43 = scmp.eq.s32.totalorder %s12, 0
      %p44 = por %p42, %p43
      %p45 = scmp.ne.s32.totalorder %s34, %s37
      %p46 = scmp.eq.s32.totalorder %s17, 1
      %p47 = por %p45, %p46
      %p48 = scmp.ne.s32.totalorder %s37, %s38
      %p49 = scmp.eq.s32.totalorder %s17, 0
      %p50 = por %p48, %p49
      %p51 = scmp.ne.s32.totalorder %s37, %s38
      %p52 = scmp.eq.s32.totalorder %s18, 1
      %p53 = por %p51, %p52
      %p55 = scmp.ne.s32.totalorder %s38, %s54
      %p56 = scmp.eq.s32.totalorder %s18, 0
      %p57 = por %p55, %p56
      %s59 = sadd.s32 %s58, 1
      %p62 = scmp.eq.s32.totalorder %s12, 1
      %p63 = scmp.ne.s32.totalorder %s58, %s60
      %p64 = scmp.eq.s32.totalorder %s12, 0
      %p65 = por %p63, %p64
      %p66 = scmp.ne.s32.totalorder %s58, %s60
      %p67 = scmp.eq.s32.totalorder %s17, 1
      %p68 = por %p66, %p67
      %p69 = scmp.ne.s32.totalorder %s60, %s61
      %p70 = scmp.eq.s32.totalorder %s17, 0
      %p71 = por %p69, %p70
      %p72 = scmp.ne.s32.totalorder %s60, %s61
      %p73 = scmp.eq.s32.totalorder %s18, 1
      %p74 = por %p72, %p73
      %p76 = scmp.ne.s32.totalorder %s61, %s75
      %p77 = scmp.eq.s32.totalorder %s18, 0
      %p78 = por %p76, %p77
      %s80 = sadd.s32 %s79, 1
      %p83 = scmp.eq.s32.totalorder %s12, 1
      %p84 = scmp.ne.s32.totalorder %s79, %s81
      %p85 = scmp.eq.s32.totalorder %s12, 0
      %p86 = por %p84, %p85
      %p87 = scmp.ne.s32.totalorder %s79, %s81
      %p88 = scmp.eq.s32.totalorder %s17, 1
      %p89 = por %p87, %p88
      %p90 = scmp.ne.s32.totalorder %s81, %s82
      %p91 = scmp.eq.s32.totalorder %s17, 0
      %p92 = por %p90, %p91
      %p93 = scmp.ne.s32.totalorder %s81, %s82
      %p94 = scmp.eq.s32.totalorder %s18, 1
      %p95 = por %p93, %p94
      %p97 = scmp.ne.s32.totalorder %s82, %s96
      %p98 = scmp.eq.s32.totalorder %s18, 0
      %p99 = por %p97, %p98
      %s100 = ssub.s32 %s19, %s31
      %s101 = ssub.s32 %s20, %s27
      %s102 = sor.u32 %s100, %s101
      %p103 = scmp.eq.s32.totalorder %s102, 0
      %s105 = sadd.s32 %s104, 1
      %s106 = scalar_select %p103, %s104, %s105
      %p109 = pneg %p103
      %p110 = scmp.eq.s32.totalorder %s12, 1
      %p111 = por %p109, %p110
      %p112 = scmp.ne.s32.totalorder %s104, %s107
      %p113 = scmp.eq.s32.totalorder %s12, 0
      %p114 = por %p112, %p113
      %p115 = scmp.ne.s32.totalorder %s104, %s107
      %p116 = scmp.eq.s32.totalorder %s17, 1
      %p117 = por %p115, %p116
      %p118 = scmp.ne.s32.totalorder %s107, %s108
      %p119 = scmp.eq.s32.totalorder %s17, 0
      %p120 = por %p118, %p119
      %p121 = scmp.ne.s32.totalorder %s107, %s108
      %p122 = scmp.eq.s32.totalorder %s18, 1
      %p123 = por %p121, %p122
      %p125 = scmp.ne.s32.totalorder %s108, %s124
      %p126 = scmp.eq.s32.totalorder %s18, 0
      %p127 = por %p125, %p126
      %p128 = scmp.le.s32.totalorder 1, %s12
      %p129 = scmp.lt.s32.totalorder %s12, 3
      %p130 = pnand %p128, %p129
      %p131 = pneg %p130
      // Predicated region
      $region9: #{tpu_custom_call.1} parent=5 // pred_check
        _
      $region10: #{tpu_custom_call.1} parent=5 // pred_check_branch
        %133 = sbr.rel (%p130) target = $region12
      $region11: #{tpu_custom_call.1} parent=5 // pred_region
        %s134 = ssub.s32 %s12, 1
        // Predicated region
        $region13: #{tpu_custom_call.1} parent=11 // pred_check
          %p135 = pneg %p71
        $region14: #{tpu_custom_call.1} parent=11 // pred_check_branch
          %137 = sbr.rel (%p135) target = $region16
        $region15: #{tpu_custom_call.1} parent=11 // pred_region
          _
        $region16: #{tpu_custom_call.1} parent=11 // pred_fallthru
          _
        // Predicated region
        $region17: #{tpu_custom_call.1} parent=11 // pred_check
          %p138 = pneg %p92
        $region18: #{tpu_custom_call.1} parent=11 // pred_check_branch
          %140 = sbr.rel (%p138) target = $region20
        $region19: #{tpu_custom_call.1} parent=11 // pred_region
          _
        $region20: #{tpu_custom_call.1} parent=11 // pred_fallthru
          _
      $region12: #{tpu_custom_call.1} parent=5 // pred_fallthru
        _
      %p141 = scmp.lt.s32.totalorder %s12, 2
      // Predicated region
      $region21: #{tpu_custom_call.1} parent=5 // pred_check
        %p142 = pneg %p141
      $region22: #{tpu_custom_call.1} parent=5 // pred_check_branch
        %144 = sbr.rel (%p142) target = $region24
      $region23: #{tpu_custom_call.1} parent=5 // pred_region
        // Predicated region
        $region25: #{tpu_custom_call.1} parent=23 // pred_check
          %p145 = pneg %p44
        $region26: #{tpu_custom_call.1} parent=23 // pred_check_branch
          %147 = sbr.rel (%p145) target = $region28
        $region27: #{tpu_custom_call.1} parent=23 // pred_region
          %p148 = scmp.lt.s32.totalorder %s19, 1
          %s149 = scalar_select %p148, %s19, 1
          %s150 = smul.addr %s149, 160
          %s151 = smul.addr %s150, 4
          %s152 = scalar_lea.vmem %s0, %s151
        $region28: #{tpu_custom_call.1} parent=23 // pred_fallthru
          _
      $region24: #{tpu_custom_call.1} parent=5 // pred_fallthru
        _
      %p153 = scmp.le.s32.totalorder 1, %s12
      %p154 = scmp.lt.s32.totalorder %s12, 3
      %p155 = pnand %p153, %p154
      %p156 = pneg %p155
      // Predicated region
      $region29: #{tpu_custom_call.1} parent=5 // pred_check
        _
      $region30: #{tpu_custom_call.1} parent=5 // pred_check_branch
        %158 = sbr.rel (%p155) target = $region32
      $region31: #{tpu_custom_call.1} parent=5 // pred_region
        %s159 = ssub.s32 %s12, 1
        %p160 = scmp.lt.s32.totalorder %s21, 1
        %s161 = scalar_select %p160, %s21, 1
        %s162 = smul.addr %s161, 160
        %s163 = smul.addr %s162, 4
        %s164 = scalar_lea.vmem %s0, %s163
        %p165 = pneg %p50
        %p166 = pneg %p47
        %p167 = pneg %p71
        %p168 = pneg %p68
        %p169 = pneg %p92
        %p170 = pneg %p89
        %p171 = pneg %p120
        %p172 = pneg %p117
        %s173 = sand.u32 %s107, 1
        %s174 = scalar_lea.sflag [#allocation3], %s173
        %s175 = sand.u32 %s107, 1
        %s176 = smul.addr %s175, 384
        %s177 = scalar_lea.vmem [#allocation2], %s176
        %p178 = scmp.lt.s32.totalorder %s21, 1
        %s179 = scalar_select %p178, %s21, 1
        %s180 = smul.addr %s179, 160
        %s181 = smul.addr %s180, 4
        %s182 = scalar_lea.vmem %s0, %s181
        %s183 = smul.u32 6, %s22
        %s185 = smul.u32 %s22, 6
        %s186 = smul.u32 %s185, 20
        %s187 = smul.addr %s186, 4
        %s188 = scalar_lea.vmem %s182, %s187
        %v189 = vld [vmem:[%s188] sm:$0xf]
        %v190 = vld [vmem:[%s188 + $0x4] sm:$0x1]
        %v191 = vld [vmem:[%s188 + $0x8] sm:$0xf]
        %v192 = vld [vmem:[%s188 + $0xc] sm:$0x1]
        %v193 = vld [vmem:[%s188 + $0x10] sm:$0xf]
        %v194 = vld [vmem:[%s188 + $0x14] sm:$0x1]
        %v195 = vld [vmem:[%s188 + $0x18] sm:$0xf]
        %v196 = vld [vmem:[%s188 + $0x1c] sm:$0x1]
        %v197 = vld [vmem:[%s188 + $0x20] sm:$0xf]
        %v198 = vld [vmem:[%s188 + $0x24] sm:$0x1]
        %v199 = vld [vmem:[%s188 + $0x28] sm:$0xf]
        %v200 = vld [vmem:[%s188 + $0x2c] sm:$0x1]
        %v201 = vld [vmem:[%s188 + $0x30] sm:$0xf]
        %v202 = vld [vmem:[%s188 + $0x34] sm:$0x1]
        %v203 = vld [vmem:[%s188 + $0x38] sm:$0xf]
        %v204 = vld [vmem:[%s188 + $0x3c] sm:$0x1]
        %v205 = vld [vmem:[%s188 + $0x40] sm:$0xf]
        %v206 = vld [vmem:[%s188 + $0x44] sm:$0x1]
        %v207 = vld [vmem:[%s188 + $0x48] sm:$0xf]
        %v208 = vld [vmem:[%s188 + $0x4c] sm:$0x1]
        %v209 = vld [vmem:[%s188 + $0x50] sm:$0xf]
        %v210 = vld [vmem:[%s188 + $0x54] sm:$0x1]
        %v211 = vld [vmem:[%s188 + $0x58] sm:$0xf]
        %v212 = vld [vmem:[%s188 + $0x5c] sm:$0x1]
        %v213 = vld [vmem:[%s188 + $0x60] sm:$0xf]
        %v214 = vld [vmem:[%s188 + $0x64] sm:$0x1]
        %v215 = vld [vmem:[%s188 + $0x68] sm:$0xf]
        %v216 = vld [vmem:[%s188 + $0x6c] sm:$0x1]
        %v217 = vld [vmem:[%s188 + $0x70] sm:$0xf]
        %v218 = vld [vmem:[%s188 + $0x74] sm:$0x1]
        %v219 = vld [vmem:[%s188 + $0x78] sm:$0xf]
        %v220 = vld [vmem:[%s188 + $0x7c] sm:$0x1]
        %v221 = vld [vmem:[%s188 + $0x80] sm:$0xf]
        %v222 = vld [vmem:[%s188 + $0x84] sm:$0x1]
        %v223 = vld [vmem:[%s188 + $0x88] sm:$0xf]
        %v224 = vld [vmem:[%s188 + $0x8c] sm:$0x1]
        %v225 = vld [vmem:[%s188 + $0x90] sm:$0xf]
        %v226 = vld [vmem:[%s188 + $0x94] sm:$0x1]
        %v227 = vld [vmem:[%s188 + $0x98] sm:$0xf]
        %v228 = vld [vmem:[%s188 + $0x9c] sm:$0x1]
        %v229 = vld [vmem:[%s188 + $0xa0] sm:$0xf]
        %v230 = vld [vmem:[%s188 + $0xa4] sm:$0x1]
        %v231 = vld [vmem:[%s188 + $0xa8] sm:$0xf]
        %v232 = vld [vmem:[%s188 + $0xac] sm:$0x1]
        %v233 = vld [vmem:[%s188 + $0xb0] sm:$0xf]
        %v234 = vld [vmem:[%s188 + $0xb4] sm:$0x1]
        %v235 = vld [vmem:[%s188 + $0xb8] sm:$0xf]
        %v236 = vld [vmem:[%s188 + $0xbc] sm:$0x1]
        %v237 = vld [vmem:[%s188 + $0xc0] sm:$0xf]
        %v238 = vld [vmem:[%s188 + $0xc4] sm:$0x1]
        %v239 = vld [vmem:[%s188 + $0xc8] sm:$0xf]
        %v240 = vld [vmem:[%s188 + $0xcc] sm:$0x1]
        %v241 = vld [vmem:[%s188 + $0xd0] sm:$0xf]
        %v242 = vld [vmem:[%s188 + $0xd4] sm:$0x1]
        %v243 = vld [vmem:[%s188 + $0xd8] sm:$0xf]
        %v244 = vld [vmem:[%s188 + $0xdc] sm:$0x1]
        %v245 = vld [vmem:[%s188 + $0xe0] sm:$0xf]
        %v246 = vld [vmem:[%s188 + $0xe4] sm:$0x1]
        %v247 = vld [vmem:[%s188 + $0xe8] sm:$0xf]
        %v248 = vld [vmem:[%s188 + $0xec] sm:$0x1]
        %v249 = vld [vmem:[%s188 + $0xf0] sm:$0xf]
        %v250 = vld [vmem:[%s188 + $0xf4] sm:$0x1]
        %v251 = vld [vmem:[%s188 + $0xf8] sm:$0xf]
        %v252 = vld [vmem:[%s188 + $0xfc] sm:$0x1]
        %v253 = vld [vmem:[%s188 + $0x100] sm:$0xf]
        %v254 = vld [vmem:[%s188 + $0x104] sm:$0x1]
        %v255 = vld [vmem:[%s188 + $0x108] sm:$0xf]
        %v256 = vld [vmem:[%s188 + $0x10c] sm:$0x1]
        %v257 = vld [vmem:[%s188 + $0x110] sm:$0xf]
        %v258 = vld [vmem:[%s188 + $0x114] sm:$0x1]
        %v259 = vld [vmem:[%s188 + $0x118] sm:$0xf]
        %v260 = vld [vmem:[%s188 + $0x11c] sm:$0x1]
        %v261 = vld [vmem:[%s188 + $0x120] sm:$0xf]
        %v262 = vld [vmem:[%s188 + $0x124] sm:$0x1]
        %v263 = vld [vmem:[%s188 + $0x128] sm:$0xf]
        %v264 = vld [vmem:[%s188 + $0x12c] sm:$0x1]
        %v265 = vld [vmem:[%s188 + $0x130] sm:$0xf]
        %v266 = vld [vmem:[%s188 + $0x134] sm:$0x1]
        %v267 = vld [vmem:[%s188 + $0x138] sm:$0xf]
        %v268 = vld [vmem:[%s188 + $0x13c] sm:$0x1]
        %v269 = vld [vmem:[%s188 + $0x140] sm:$0xf]
        %v270 = vld [vmem:[%s188 + $0x144] sm:$0x1]
        %v271 = vld [vmem:[%s188 + $0x148] sm:$0xf]
        %v272 = vld [vmem:[%s188 + $0x14c] sm:$0x1]
        %v273 = vld [vmem:[%s188 + $0x150] sm:$0xf]
        %v274 = vld [vmem:[%s188 + $0x154] sm:$0x1]
        %v275 = vld [vmem:[%s188 + $0x158] sm:$0xf]
        %v276 = vld [vmem:[%s188 + $0x15c] sm:$0x1]
        %v277 = vld [vmem:[%s188 + $0x160] sm:$0xf]
        %v278 = vld [vmem:[%s188 + $0x164] sm:$0x1]
        %v279 = vld [vmem:[%s188 + $0x168] sm:$0xf]
        %v280 = vld [vmem:[%s188 + $0x16c] sm:$0x1]
        %v281 = vld [vmem:[%s188 + $0x170] sm:$0xf]
        %v282 = vld [vmem:[%s188 + $0x174] sm:$0x1]
        %v283 = vld [vmem:[%s188 + $0x178] sm:$0xf]
        %v284 = vld [vmem:[%s188 + $0x17c] sm:$0x1]
        %v285 = vld [vmem:[%s188 + $0x180] sm:$0xf]
        %v286 = vld [vmem:[%s188 + $0x184] sm:$0x1]
        %v287 = vld [vmem:[%s188 + $0x188] sm:$0xf]
        %v288 = vld [vmem:[%s188 + $0x18c] sm:$0x1]
        %v289 = vld [vmem:[%s188 + $0x190] sm:$0xf]
        %v290 = vld [vmem:[%s188 + $0x194] sm:$0x1]
        %v291 = vld [vmem:[%s188 + $0x198] sm:$0xf]
        %v292 = vld [vmem:[%s188 + $0x19c] sm:$0x1]
        %v293 = vld [vmem:[%s188 + $0x1a0] sm:$0xf]
        %v294 = vld [vmem:[%s188 + $0x1a4] sm:$0x1]
        %v295 = vld [vmem:[%s188 + $0x1a8] sm:$0xf]
        %v296 = vld [vmem:[%s188 + $0x1ac] sm:$0x1]
        %v297 = vld [vmem:[%s188 + $0x1b0] sm:$0xf]
        %v298 = vld [vmem:[%s188 + $0x1b4] sm:$0x1]
        %v299 = vld [vmem:[%s188 + $0x1b8] sm:$0xf]
        %v300 = vld [vmem:[%s188 + $0x1bc] sm:$0x1]
        %v301 = vld [vmem:[%s188 + $0x1c0] sm:$0xf]
        %v302 = vld [vmem:[%s188 + $0x1c4] sm:$0x1]
        %v303 = vld [vmem:[%s188 + $0x1c8] sm:$0xf]
        %v304 = vld [vmem:[%s188 + $0x1cc] sm:$0x1]
        %v305 = vld [vmem:[%s188 + $0x1d0] sm:$0xf]
        %v306 = vld [vmem:[%s188 + $0x1d4] sm:$0x1]
        %v307 = vld [vmem:[%s188 + $0x1d8] sm:$0xf]
        %v308 = vld [vmem:[%s188 + $0x1dc] sm:$0x1]
        %s309 = sadd.s32 %s185, 1
        %s310 = smul.u32 %s309, 20
        %s311 = smul.addr %s310, 4
        %s312 = scalar_lea.vmem %s182, %s311
        %v313 = vld [vmem:[%s312] sm:$0xf]
        %v314 = vld [vmem:[%s312 + $0x4] sm:$0x1]
        %v315 = vld [vmem:[%s312 + $0x8] sm:$0xf]
        %v316 = vld [vmem:[%s312 + $0xc] sm:$0x1]
        %v317 = vld [vmem:[%s312 + $0x10] sm:$0xf]
        %v318 = vld [vmem:[%s312 + $0x14] sm:$0x1]
        %v319 = vld [vmem:[%s312 + $0x18] sm:$0xf]
        %v320 = vld [vmem:[%s312 + $0x1c] sm:$0x1]
        %v321 = vld [vmem:[%s312 + $0x20] sm:$0xf]
        %v322 = vld [vmem:[%s312 + $0x24] sm:$0x1]
        %v323 = vld [vmem:[%s312 + $0x28] sm:$0xf]
        %v324 = vld [vmem:[%s312 + $0x2c] sm:$0x1]
        %v325 = vld [vmem:[%s312 + $0x30] sm:$0xf]
        %v326 = vld [vmem:[%s312 + $0x34] sm:$0x1]
        %v327 = vld [vmem:[%s312 + $0x38] sm:$0xf]
        %v328 = vld [vmem:[%s312 + $0x3c] sm:$0x1]
        %v329 = vld [vmem:[%s312 + $0x40] sm:$0xf]
        %v330 = vld [vmem:[%s312 + $0x44] sm:$0x1]
        %v331 = vld [vmem:[%s312 + $0x48] sm:$0xf]
        %v332 = vld [vmem:[%s312 + $0x4c] sm:$0x1]
        %v333 = vld [vmem:[%s312 + $0x50] sm:$0xf]
        %v334 = vld [vmem:[%s312 + $0x54] sm:$0x1]
        %v335 = vld [vmem:[%s312 + $0x58] sm:$0xf]
        %v336 = vld [vmem:[%s312 + $0x5c] sm:$0x1]
        %v337 = vld [vmem:[%s312 + $0x60] sm:$0xf]
        %v338 = vld [vmem:[%s312 + $0x64] sm:$0x1]
        %v339 = vld [vmem:[%s312 + $0x68] sm:$0xf]
        %v340 = vld [vmem:[%s312 + $0x6c] sm:$0x1]
        %v341 = vld [vmem:[%s312 + $0x70] sm:$0xf]
        %v342 = vld [vmem:[%s312 + $0x74] sm:$0x1]
        %v343 = vld [vmem:[%s312 + $0x78] sm:$0xf]
        %v344 = vld [vmem:[%s312 + $0x7c] sm:$0x1]
        %v345 = vld [vmem:[%s312 + $0x80] sm:$0xf]
        %v346 = vld [vmem:[%s312 + $0x84] sm:$0x1]
        %v347 = vld [vmem:[%s312 + $0x88] sm:$0xf]
        %v348 = vld [vmem:[%s312 + $0x8c] sm:$0x1]
        %v349 = vld [vmem:[%s312 + $0x90] sm:$0xf]
        %v350 = vld [vmem:[%s312 + $0x94] sm:$0x1]
        %v351 = vld [vmem:[%s312 + $0x98] sm:$0xf]
        %v352 = vld [vmem:[%s312 + $0x9c] sm:$0x1]
        %v353 = vld [vmem:[%s312 + $0xa0] sm:$0xf]
        %v354 = vld [vmem:[%s312 + $0xa4] sm:$0x1]
        %v355 = vld [vmem:[%s312 + $0xa8] sm:$0xf]
        %v356 = vld [vmem:[%s312 + $0xac] sm:$0x1]
        %v357 = vld [vmem:[%s312 + $0xb0] sm:$0xf]
        %v358 = vld [vmem:[%s312 + $0xb4] sm:$0x1]
        %v359 = vld [vmem:[%s312 + $0xb8] sm:$0xf]
        %v360 = vld [vmem:[%s312 + $0xbc] sm:$0x1]
        %v361 = vld [vmem:[%s312 + $0xc0] sm:$0xf]
        %v362 = vld [vmem:[%s312 + $0xc4] sm:$0x1]
        %v363 = vld [vmem:[%s312 + $0xc8] sm:$0xf]
        %v364 = vld [vmem:[%s312 + $0xcc] sm:$0x1]
        %v365 = vld [vmem:[%s312 + $0xd0] sm:$0xf]
        %v366 = vld [vmem:[%s312 + $0xd4] sm:$0x1]
        %v367 = vld [vmem:[%s312 + $0xd8] sm:$0xf]
        %v368 = vld [vmem:[%s312 + $0xdc] sm:$0x1]
        %v369 = vld [vmem:[%s312 + $0xe0] sm:$0xf]
        %v370 = vld [vmem:[%s312 + $0xe4] sm:$0x1]
        %v371 = vld [vmem:[%s312 + $0xe8] sm:$0xf]
        %v372 = vld [vmem:[%s312 + $0xec] sm:$0x1]
        %v373 = vld [vmem:[%s312 + $0xf0] sm:$0xf]
        %v374 = vld [vmem:[%s312 + $0xf4] sm:$0x1]
        %v375 = vld [vmem:[%s312 + $0xf8] sm:$0xf]
        %v376 = vld [vmem:[%s312 + $0xfc] sm:$0x1]
        %v377 = vld [vmem:[%s312 + $0x100] sm:$0xf]
        %v378 = vld [vmem:[%s312 + $0x104] sm:$0x1]
        %v379 = vld [vmem:[%s312 + $0x108] sm:$0xf]
        %v380 = vld [vmem:[%s312 + $0x10c] sm:$0x1]
        %v381 = vld [vmem:[%s312 + $0x110] sm:$0xf]
        %v382 = vld [vmem:[%s312 + $0x114] sm:$0x1]
        %v383 = vld [vmem:[%s312 + $0x118] sm:$0xf]
        %v384 = vld [vmem:[%s312 + $0x11c] sm:$0x1]
        %v385 = vld [vmem:[%s312 + $0x120] sm:$0xf]
        %v386 = vld [vmem:[%s312 + $0x124] sm:$0x1]
        %v387 = vld [vmem:[%s312 + $0x128] sm:$0xf]
        %v388 = vld [vmem:[%s312 + $0x12c] sm:$0x1]
        %v389 = vld [vmem:[%s312 + $0x130] sm:$0xf]
        %v390 = vld [vmem:[%s312 + $0x134] sm:$0x1]
        %v391 = vld [vmem:[%s312 + $0x138] sm:$0xf]
        %v392 = vld [vmem:[%s312 + $0x13c] sm:$0x1]
        %v393 = vld [vmem:[%s312 + $0x140] sm:$0xf]
        %v394 = vld [vmem:[%s312 + $0x144] sm:$0x1]
        %v395 = vld [vmem:[%s312 + $0x148] sm:$0xf]
        %v396 = vld [vmem:[%s312 + $0x14c] sm:$0x1]
        %v397 = vld [vmem:[%s312 + $0x150] sm:$0xf]
        %v398 = vld [vmem:[%s312 + $0x154] sm:$0x1]
        %v399 = vld [vmem:[%s312 + $0x158] sm:$0xf]
        %v400 = vld [vmem:[%s312 + $0x15c] sm:$0x1]
        %v401 = vld [vmem:[%s312 + $0x160] sm:$0xf]
        %v402 = vld [vmem:[%s312 + $0x164] sm:$0x1]
        %v403 = vld [vmem:[%s312 + $0x168] sm:$0xf]
        %v404 = vld [vmem:[%s312 + $0x16c] sm:$0x1]
        %v405 = vld [vmem:[%s312 + $0x170] sm:$0xf]
        %v406 = vld [vmem:[%s312 + $0x174] sm:$0x1]
        %v407 = vld [vmem:[%s312 + $0x178] sm:$0xf]
        %v408 = vld [vmem:[%s312 + $0x17c] sm:$0x1]
        %v409 = vld [vmem:[%s312 + $0x180] sm:$0xf]
        %v410 = vld [vmem:[%s312 + $0x184] sm:$0x1]
        %v411 = vld [vmem:[%s312 + $0x188] sm:$0xf]
        %v412 = vld [vmem:[%s312 + $0x18c] sm:$0x1]
        %v413 = vld [vmem:[%s312 + $0x190] sm:$0xf]
        %v414 = vld [vmem:[%s312 + $0x194] sm:$0x1]
        %v415 = vld [vmem:[%s312 + $0x198] sm:$0xf]
        %v416 = vld [vmem:[%s312 + $0x19c] sm:$0x1]
        %v417 = vld [vmem:[%s312 + $0x1a0] sm:$0xf]
        %v418 = vld [vmem:[%s312 + $0x1a4] sm:$0x1]
        %v419 = vld [vmem:[%s312 + $0x1a8] sm:$0xf]
        %v420 = vld [vmem:[%s312 + $0x1ac] sm:$0x1]
        %v421 = vld [vmem:[%s312 + $0x1b0] sm:$0xf]
        %v422 = vld [vmem:[%s312 + $0x1b4] sm:$0x1]
        %v423 = vld [vmem:[%s312 + $0x1b8] sm:$0xf]
        %v424 = vld [vmem:[%s312 + $0x1bc] sm:$0x1]
        %v425 = vld [vmem:[%s312 + $0x1c0] sm:$0xf]
        %v426 = vld [vmem:[%s312 + $0x1c4] sm:$0x1]
        %v427 = vld [vmem:[%s312 + $0x1c8] sm:$0xf]
        %v428 = vld [vmem:[%s312 + $0x1cc] sm:$0x1]
        %v429 = vld [vmem:[%s312 + $0x1d0] sm:$0xf]
        %v430 = vld [vmem:[%s312 + $0x1d4] sm:$0x1]
        %v431 = vld [vmem:[%s312 + $0x1d8] sm:$0xf]
        %v432 = vld [vmem:[%s312 + $0x1dc] sm:$0x1]
        %s433 = sadd.s32 %s185, 2
        %s434 = smul.u32 %s433, 20
        %s435 = smul.addr %s434, 4
        %s436 = scalar_lea.vmem %s182, %s435
        %v437 = vld [vmem:[%s436] sm:$0xf]
        %v438 = vld [vmem:[%s436 + $0x4] sm:$0x1]
        %v439 = vld [vmem:[%s436 + $0x8] sm:$0xf]
        %v440 = vld [vmem:[%s436 + $0xc] sm:$0x1]
        %v441 = vld [vmem:[%s436 + $0x10] sm:$0xf]
        %v442 = vld [vmem:[%s436 + $0x14] sm:$0x1]
        %v443 = vld [vmem:[%s436 + $0x18] sm:$0xf]
        %v444 = vld [vmem:[%s436 + $0x1c] sm:$0x1]
        %v445 = vld [vmem:[%s436 + $0x20] sm:$0xf]
        %v446 = vld [vmem:[%s436 + $0x24] sm:$0x1]
        %v447 = vld [vmem:[%s436 + $0x28] sm:$0xf]
        %v448 = vld [vmem:[%s436 + $0x2c] sm:$0x1]
        %v449 = vld [vmem:[%s436 + $0x30] sm:$0xf]
        %v450 = vld [vmem:[%s436 + $0x34] sm:$0x1]
        %v451 = vld [vmem:[%s436 + $0x38] sm:$0xf]
        %v452 = vld [vmem:[%s436 + $0x3c] sm:$0x1]
        %v453 = vld [vmem:[%s436 + $0x40] sm:$0xf]
        %v454 = vld [vmem:[%s436 + $0x44] sm:$0x1]
        %v455 = vld [vmem:[%s436 + $0x48] sm:$0xf]
        %v456 = vld [vmem:[%s436 + $0x4c] sm:$0x1]
        %v457 = vld [vmem:[%s436 + $0x50] sm:$0xf]
        %v458 = vld [vmem:[%s436 + $0x54] sm:$0x1]
        %v459 = vld [vmem:[%s436 + $0x58] sm:$0xf]
        %v460 = vld [vmem:[%s436 + $0x5c] sm:$0x1]
        %v461 = vld [vmem:[%s436 + $0x60] sm:$0xf]
        %v462 = vld [vmem:[%s436 + $0x64] sm:$0x1]
        %v463 = vld [vmem:[%s436 + $0x68] sm:$0xf]
        %v464 = vld [vmem:[%s436 + $0x6c] sm:$0x1]
        %v465 = vld [vmem:[%s436 + $0x70] sm:$0xf]
        %v466 = vld [vmem:[%s436 + $0x74] sm:$0x1]
        %v467 = vld [vmem:[%s436 + $0x78] sm:$0xf]
        %v468 = vld [vmem:[%s436 + $0x7c] sm:$0x1]
        %v469 = vld [vmem:[%s436 + $0x80] sm:$0xf]
        %v470 = vld [vmem:[%s436 + $0x84] sm:$0x1]
        %v471 = vld [vmem:[%s436 + $0x88] sm:$0xf]
        %v472 = vld [vmem:[%s436 + $0x8c] sm:$0x1]
        %v473 = vld [vmem:[%s436 + $0x90] sm:$0xf]
        %v474 = vld [vmem:[%s436 + $0x94] sm:$0x1]
        %v475 = vld [vmem:[%s436 + $0x98] sm:$0xf]
        %v476 = vld [vmem:[%s436 + $0x9c] sm:$0x1]
        %v477 = vld [vmem:[%s436 + $0xa0] sm:$0xf]
        %v478 = vld [vmem:[%s436 + $0xa4] sm:$0x1]
        %v479 = vld [vmem:[%s436 + $0xa8] sm:$0xf]
        %v480 = vld [vmem:[%s436 + $0xac] sm:$0x1]
        %v481 = vld [vmem:[%s436 + $0xb0] sm:$0xf]
        %v482 = vld [vmem:[%s436 + $0xb4] sm:$0x1]
        %v483 = vld [vmem:[%s436 + $0xb8] sm:$0xf]
        %v484 = vld [vmem:[%s436 + $0xbc] sm:$0x1]
        %v485 = vld [vmem:[%s436 + $0xc0] sm:$0xf]
        %v486 = vld [vmem:[%s436 + $0xc4] sm:$0x1]
        %v487 = vld [vmem:[%s436 + $0xc8] sm:$0xf]
        %v488 = vld [vmem:[%s436 + $0xcc] sm:$0x1]
        %v489 = vld [vmem:[%s436 + $0xd0] sm:$0xf]
        %v490 = vld [vmem:[%s436 + $0xd4] sm:$0x1]
        %v491 = vld [vmem:[%s436 + $0xd8] sm:$0xf]
        %v492 = vld [vmem:[%s436 + $0xdc] sm:$0x1]
        %v493 = vld [vmem:[%s436 + $0xe0] sm:$0xf]
        %v494 = vld [vmem:[%s436 + $0xe4] sm:$0x1]
        %v495 = vld [vmem:[%s436 + $0xe8] sm:$0xf]
        %v496 = vld [vmem:[%s436 + $0xec] sm:$0x1]
        %v497 = vld [vmem:[%s436 + $0xf0] sm:$0xf]
        %v498 = vld [vmem:[%s436 + $0xf4] sm:$0x1]
        %v499 = vld [vmem:[%s436 + $0xf8] sm:$0xf]
        %v500 = vld [vmem:[%s436 + $0xfc] sm:$0x1]
        %v501 = vld [vmem:[%s436 + $0x100] sm:$0xf]
        %v502 = vld [vmem:[%s436 + $0x104] sm:$0x1]
        %v503 = vld [vmem:[%s436 + $0x108] sm:$0xf]
        %v504 = vld [vmem:[%s436 + $0x10c] sm:$0x1]
        %v505 = vld [vmem:[%s436 + $0x110] sm:$0xf]
        %v506 = vld [vmem:[%s436 + $0x114] sm:$0x1]
        %v507 = vld [vmem:[%s436 + $0x118] sm:$0xf]
        %v508 = vld [vmem:[%s436 + $0x11c] sm:$0x1]
        %v509 = vld [vmem:[%s436 + $0x120] sm:$0xf]
        %v510 = vld [vmem:[%s436 + $0x124] sm:$0x1]
        %v511 = vld [vmem:[%s436 + $0x128] sm:$0xf]
        %v512 = vld [vmem:[%s436 + $0x12c] sm:$0x1]
        %v513 = vld [vmem:[%s436 + $0x130] sm:$0xf]
        %v514 = vld [vmem:[%s436 + $0x134] sm:$0x1]
        %v515 = vld [vmem:[%s436 + $0x138] sm:$0xf]
        %v516 = vld [vmem:[%s436 + $0x13c] sm:$0x1]
        %v517 = vld [vmem:[%s436 + $0x140] sm:$0xf]
        %v518 = vld [vmem:[%s436 + $0x144] sm:$0x1]
        %v519 = vld [vmem:[%s436 + $0x148] sm:$0xf]
        %v520 = vld [vmem:[%s436 + $0x14c] sm:$0x1]
        %v521 = vld [vmem:[%s436 + $0x150] sm:$0xf]
        %v522 = vld [vmem:[%s436 + $0x154] sm:$0x1]
        %v523 = vld [vmem:[%s436 + $0x158] sm:$0xf]
        %v524 = vld [vmem:[%s436 + $0x15c] sm:$0x1]
        %v525 = vld [vmem:[%s436 + $0x160] sm:$0xf]
        %v526 = vld [vmem:[%s436 + $0x164] sm:$0x1]
        %v527 = vld [vmem:[%s436 + $0x168] sm:$0xf]
        %v528 = vld [vmem:[%s436 + $0x16c] sm:$0x1]
        %v529 = vld [vmem:[%s436 + $0x170] sm:$0xf]
        %v530 = vld [vmem:[%s436 + $0x174] sm:$0x1]
        %v531 = vld [vmem:[%s436 + $0x178] sm:$0xf]
        %v532 = vld [vmem:[%s436 + $0x17c] sm:$0x1]
        %v533 = vld [vmem:[%s436 + $0x180] sm:$0xf]
        %v534 = vld [vmem:[%s436 + $0x184] sm:$0x1]
        %v535 = vld [vmem:[%s436 + $0x188] sm:$0xf]
        %v536 = vld [vmem:[%s436 + $0x18c] sm:$0x1]
        %v537 = vld [vmem:[%s436 + $0x190] sm:$0xf]
        %v538 = vld [vmem:[%s436 + $0x194] sm:$0x1]
        %v539 = vld [vmem:[%s436 + $0x198] sm:$0xf]
        %v540 = vld [vmem:[%s436 + $0x19c] sm:$0x1]
        %v541 = vld [vmem:[%s436 + $0x1a0] sm:$0xf]
        %v542 = vld [vmem:[%s436 + $0x1a4] sm:$0x1]
        %v543 = vld [vmem:[%s436 + $0x1a8] sm:$0xf]
        %v544 = vld [vmem:[%s436 + $0x1ac] sm:$0x1]
        %v545 = vld [vmem:[%s436 + $0x1b0] sm:$0xf]
        %v546 = vld [vmem:[%s436 + $0x1b4] sm:$0x1]
        %v547 = vld [vmem:[%s436 + $0x1b8] sm:$0xf]
        %v548 = vld [vmem:[%s436 + $0x1bc] sm:$0x1]
        %v549 = vld [vmem:[%s436 + $0x1c0] sm:$0xf]
        %v550 = vld [vmem:[%s436 + $0x1c4] sm:$0x1]
        %v551 = vld [vmem:[%s436 + $0x1c8] sm:$0xf]
        %v552 = vld [vmem:[%s436 + $0x1cc] sm:$0x1]
        %v553 = vld [vmem:[%s436 + $0x1d0] sm:$0xf]
        %v554 = vld [vmem:[%s436 + $0x1d4] sm:$0x1]
        %v555 = vld [vmem:[%s436 + $0x1d8] sm:$0xf]
        %v556 = vld [vmem:[%s436 + $0x1dc] sm:$0x1]
        %v653 = vunpack.c.l.b16 %v189
        %v654 = vunpack.c.l.b16 %v190
        %v655 = vunpack.c.l.b16 %v191
        %v656 = vunpack.c.l.b16 %v192
        %v657 = vunpack.c.l.b16 %v193
        %v658 = vunpack.c.l.b16 %v194
        %v659 = vunpack.c.l.b16 %v195
        %v660 = vunpack.c.l.b16 %v196
        %v661 = vunpack.c.l.b16 %v197
        %v662 = vunpack.c.l.b16 %v198
        %v663 = vunpack.c.l.b16 %v199
        %v664 = vunpack.c.l.b16 %v200
        %v665 = vunpack.c.l.b16 %v201
        %v666 = vunpack.c.l.b16 %v202
        %v667 = vunpack.c.l.b16 %v203
        %v668 = vunpack.c.l.b16 %v204
        %v669 = vunpack.c.l.b16 %v209
        %v670 = vunpack.c.l.b16 %v210
        %v671 = vunpack.c.l.b16 %v211
        %v672 = vunpack.c.l.b16 %v212
        %v673 = vunpack.c.l.b16 %v213
        %v674 = vunpack.c.l.b16 %v214
        %v675 = vunpack.c.l.b16 %v215
        %v676 = vunpack.c.l.b16 %v216
        %v677 = vunpack.c.l.b16 %v217
        %v678 = vunpack.c.l.b16 %v218
        %v679 = vunpack.c.l.b16 %v219
        %v680 = vunpack.c.l.b16 %v220
        %v681 = vunpack.c.l.b16 %v221
        %v682 = vunpack.c.l.b16 %v222
        %v683 = vunpack.c.l.b16 %v223
        %v684 = vunpack.c.l.b16 %v224
        %v685 = vunpack.c.l.b16 %v229
        %v686 = vunpack.c.l.b16 %v230
        %v687 = vunpack.c.l.b16 %v231
        %v688 = vunpack.c.l.b16 %v232
        %v689 = vunpack.c.l.b16 %v233
        %v690 = vunpack.c.l.b16 %v234
        %v691 = vunpack.c.l.b16 %v235
        %v692 = vunpack.c.l.b16 %v236
        %v693 = vunpack.c.l.b16 %v237
        %v694 = vunpack.c.l.b16 %v238
        %v695 = vunpack.c.l.b16 %v239
        %v696 = vunpack.c.l.b16 %v240
        %v697 = vunpack.c.l.b16 %v241
        %v698 = vunpack.c.l.b16 %v242
        %v699 = vunpack.c.l.b16 %v243
        %v700 = vunpack.c.l.b16 %v244
        %v701 = vunpack.c.l.b16 %v249
        %v702 = vunpack.c.l.b16 %v250
        %v703 = vunpack.c.l.b16 %v251
        %v704 = vunpack.c.l.b16 %v252
        %v705 = vunpack.c.l.b16 %v253
        %v706 = vunpack.c.l.b16 %v254
        %v707 = vunpack.c.l.b16 %v255
        %v708 = vunpack.c.l.b16 %v256
        %v709 = vunpack.c.l.b16 %v257
        %v710 = vunpack.c.l.b16 %v258
        %v711 = vunpack.c.l.b16 %v259
        %v712 = vunpack.c.l.b16 %v260
        %v713 = vunpack.c.l.b16 %v261
        %v714 = vunpack.c.l.b16 %v262
        %v715 = vunpack.c.l.b16 %v263
        %v716 = vunpack.c.l.b16 %v264
        %v717 = vunpack.c.l.b16 %v269
        %v718 = vunpack.c.l.b16 %v270
        %v719 = vunpack.c.l.b16 %v271
        %v720 = vunpack.c.l.b16 %v272
        %v721 = vunpack.c.l.b16 %v273
        %v722 = vunpack.c.l.b16 %v274
        %v723 = vunpack.c.l.b16 %v275
        %v724 = vunpack.c.l.b16 %v276
        %v725 = vunpack.c.l.b16 %v277
        %v726 = vunpack.c.l.b16 %v278
        %v727 = vunpack.c.l.b16 %v279
        %v728 = vunpack.c.l.b16 %v280
        %v729 = vunpack.c.l.b16 %v281
        %v730 = vunpack.c.l.b16 %v282
        %v731 = vunpack.c.l.b16 %v283
        %v732 = vunpack.c.l.b16 %v284
        %v733 = vunpack.c.l.b16 %v289
        %v734 = vunpack.c.l.b16 %v290
        %v735 = vunpack.c.l.b16 %v291
        %v736 = vunpack.c.l.b16 %v292
        %v737 = vunpack.c.l.b16 %v293
        %v738 = vunpack.c.l.b16 %v294
        %v739 = vunpack.c.l.b16 %v295
        %v740 = vunpack.c.l.b16 %v296
        %v741 = vunpack.c.l.b16 %v297
        %v742 = vunpack.c.l.b16 %v298
        %v743 = vunpack.c.l.b16 %v299
        %v744 = vunpack.c.l.b16 %v300
        %v745 = vunpack.c.l.b16 %v301
        %v746 = vunpack.c.l.b16 %v302
        %v747 = vunpack.c.l.b16 %v303
        %v748 = vunpack.c.l.b16 %v304
        %v749 = vpack.c.b16 %v654, %v653
        %v750 = vpack.c.b16 %v656, %v655
        %v751 = vpack.c.b16 %v658, %v657
        %v752 = vpack.c.b16 %v660, %v659
        %v753 = vpack.c.b16 %v662, %v661
        %v754 = vpack.c.b16 %v664, %v663
        %v755 = vpack.c.b16 %v666, %v665
        %v756 = vpack.c.b16 %v668, %v667
        %v757 = vpack.c.b16 %v670, %v669
        %v758 = vpack.c.b16 %v672, %v671
        %v759 = vpack.c.b16 %v674, %v673
        %v760 = vpack.c.b16 %v676, %v675
        %v761 = vpack.c.b16 %v678, %v677
        %v762 = vpack.c.b16 %v680, %v679
        %v763 = vpack.c.b16 %v682, %v681
        %v764 = vpack.c.b16 %v684, %v683
        %v765 = vpack.c.b16 %v686, %v685
        %v766 = vpack.c.b16 %v688, %v687
        %v767 = vpack.c.b16 %v690, %v689
        %v768 = vpack.c.b16 %v692, %v691
        %v769 = vpack.c.b16 %v694, %v693
        %v770 = vpack.c.b16 %v696, %v695
        %v771 = vpack.c.b16 %v698, %v697
        %v772 = vpack.c.b16 %v700, %v699
        %v773 = vpack.c.b16 %v702, %v701
        %v774 = vpack.c.b16 %v704, %v703
        %v775 = vpack.c.b16 %v706, %v705
        %v776 = vpack.c.b16 %v708, %v707
        %v777 = vpack.c.b16 %v710, %v709
        %v778 = vpack.c.b16 %v712, %v711
        %v779 = vpack.c.b16 %v714, %v713
        %v780 = vpack.c.b16 %v716, %v715
        %v781 = vpack.c.b16 %v718, %v717
        %v782 = vpack.c.b16 %v720, %v719
        %v783 = vpack.c.b16 %v722, %v721
        %v784 = vpack.c.b16 %v724, %v723
        %v785 = vpack.c.b16 %v726, %v725
        %v786 = vpack.c.b16 %v728, %v727
        %v787 = vpack.c.b16 %v730, %v729
        %v788 = vpack.c.b16 %v732, %v731
        %v789 = vpack.c.b16 %v734, %v733
        %v790 = vpack.c.b16 %v736, %v735
        %v791 = vpack.c.b16 %v738, %v737
        %v792 = vpack.c.b16 %v740, %v739
        %v793 = vpack.c.b16 %v742, %v741
        %v794 = vpack.c.b16 %v744, %v743
        %v795 = vpack.c.b16 %v746, %v745
        %v796 = vpack.c.b16 %v748, %v747
        %v798 = vshrl.u32 %v749, 16
        %v800 = vshll.u32 %v749, 16
        %v802 = vrot.slane %v800, 1
        %v803 = vor.u32 %v798, %v802
        %v805 = vshrl.u32 %v750, 16
        %v807 = vshll.u32 %v750, 16
        %v809 = vrot.slane %v807, 1
        %v810 = vor.u32 %v805, %v809
        %v812 = vshrl.u32 %v751, 16
        %v814 = vshll.u32 %v751, 16
        %v816 = vrot.slane %v814, 1
        %v817 = vor.u32 %v812, %v816
        %v819 = vshrl.u32 %v752, 16
        %v821 = vshll.u32 %v752, 16
        %v823 = vrot.slane %v821, 1
        %v824 = vor.u32 %v819, %v823
        %v826 = vshrl.u32 %v753, 16
        %v828 = vshll.u32 %v753, 16
        %v830 = vrot.slane %v828, 1
        %v831 = vor.u32 %v826, %v830
        %v833 = vshrl.u32 %v754, 16
        %v835 = vshll.u32 %v754, 16
        %v837 = vrot.slane %v835, 1
        %v838 = vor.u32 %v833, %v837
        %v840 = vshrl.u32 %v755, 16
        %v842 = vshll.u32 %v755, 16
        %v844 = vrot.slane %v842, 1
        %v845 = vor.u32 %v840, %v844
        %v847 = vshrl.u32 %v756, 16
        %v849 = vshll.u32 %v756, 16
        %v851 = vrot.slane %v849, 1
        %v852 = vor.u32 %v847, %v851
        %v854 = vshrl.u32 %v757, 16
        %v856 = vshll.u32 %v757, 16
        %v858 = vrot.slane %v856, 1
        %v859 = vor.u32 %v854, %v858
        %v861 = vshrl.u32 %v758, 16
        %v863 = vshll.u32 %v758, 16
        %v865 = vrot.slane %v863, 1
        %v866 = vor.u32 %v861, %v865
        %v868 = vshrl.u32 %v759, 16
        %v870 = vshll.u32 %v759, 16
        %v872 = vrot.slane %v870, 1
        %v873 = vor.u32 %v868, %v872
        %v875 = vshrl.u32 %v760, 16
        %v877 = vshll.u32 %v760, 16
        %v879 = vrot.slane %v877, 1
        %v880 = vor.u32 %v875, %v879
        %v882 = vshrl.u32 %v761, 16
        %v884 = vshll.u32 %v761, 16
        %v886 = vrot.slane %v884, 1
        %v887 = vor.u32 %v882, %v886
        %v889 = vshrl.u32 %v762, 16
        %v891 = vshll.u32 %v762, 16
        %v893 = vrot.slane %v891, 1
        %v894 = vor.u32 %v889, %v893
        %v896 = vshrl.u32 %v763, 16
        %v898 = vshll.u32 %v763, 16
        %v900 = vrot.slane %v898, 1
        %v901 = vor.u32 %v896, %v900
        %v903 = vshrl.u32 %v764, 16
        %v905 = vshll.u32 %v764, 16
        %v907 = vrot.slane %v905, 1
        %v908 = vor.u32 %v903, %v907
        %v910 = vshrl.u32 %v765, 16
        %v912 = vshll.u32 %v765, 16
        %v914 = vrot.slane %v912, 1
        %v915 = vor.u32 %v910, %v914
        %v917 = vshrl.u32 %v766, 16
        %v919 = vshll.u32 %v766, 16
        %v921 = vrot.slane %v919, 1
        %v922 = vor.u32 %v917, %v921
        %v924 = vshrl.u32 %v767, 16
        %v926 = vshll.u32 %v767, 16
        %v928 = vrot.slane %v926, 1
        %v929 = vor.u32 %v924, %v928
        %v931 = vshrl.u32 %v768, 16
        %v933 = vshll.u32 %v768, 16
        %v935 = vrot.slane %v933, 1
        %v936 = vor.u32 %v931, %v935
        %v938 = vshrl.u32 %v769, 16
        %v940 = vshll.u32 %v769, 16
        %v942 = vrot.slane %v940, 1
        %v943 = vor.u32 %v938, %v942
        %v945 = vshrl.u32 %v770, 16
        %v947 = vshll.u32 %v770, 16
        %v949 = vrot.slane %v947, 1
        %v950 = vor.u32 %v945, %v949
        %v952 = vshrl.u32 %v771, 16
        %v954 = vshll.u32 %v771, 16
        %v956 = vrot.slane %v954, 1
        %v957 = vor.u32 %v952, %v956
        %v959 = vshrl.u32 %v772, 16
        %v961 = vshll.u32 %v772, 16
        %v963 = vrot.slane %v961, 1
        %v964 = vor.u32 %v959, %v963
        %v966 = vshrl.u32 %v773, 16
        %v968 = vshll.u32 %v773, 16
        %v970 = vrot.slane %v968, 1
        %v971 = vor.u32 %v966, %v970
        %v973 = vshrl.u32 %v774, 16
        %v975 = vshll.u32 %v774, 16
        %v977 = vrot.slane %v975, 1
        %v978 = vor.u32 %v973, %v977
        %v980 = vshrl.u32 %v775, 16
        %v982 = vshll.u32 %v775, 16
        %v984 = vrot.slane %v982, 1
        %v985 = vor.u32 %v980, %v984
        %v987 = vshrl.u32 %v776, 16
        %v989 = vshll.u32 %v776, 16
        %v991 = vrot.slane %v989, 1
        %v992 = vor.u32 %v987, %v991
        %v994 = vshrl.u32 %v777, 16
        %v996 = vshll.u32 %v777, 16
        %v998 = vrot.slane %v996, 1
        %v999 = vor.u32 %v994, %v998
        %v1001 = vshrl.u32 %v778, 16
        %v1003 = vshll.u32 %v778, 16
        %v1005 = vrot.slane %v1003, 1
        %v1006 = vor.u32 %v1001, %v1005
        %v1008 = vshrl.u32 %v779, 16
        %v1010 = vshll.u32 %v779, 16
        %v1012 = vrot.slane %v1010, 1
        %v1013 = vor.u32 %v1008, %v1012
        %v1015 = vshrl.u32 %v780, 16
        %v1017 = vshll.u32 %v780, 16
        %v1019 = vrot.slane %v1017, 1
        %v1020 = vor.u32 %v1015, %v1019
        %v1022 = vshrl.u32 %v781, 16
        %v1024 = vshll.u32 %v781, 16
        %v1026 = vrot.slane %v1024, 1
        %v1027 = vor.u32 %v1022, %v1026
        %v1029 = vshrl.u32 %v782, 16
        %v1031 = vshll.u32 %v782, 16
        %v1033 = vrot.slane %v1031, 1
        %v1034 = vor.u32 %v1029, %v1033
        %v1036 = vshrl.u32 %v783, 16
        %v1038 = vshll.u32 %v783, 16
        %v1040 = vrot.slane %v1038, 1
        %v1041 = vor.u32 %v1036, %v1040
        %v1043 = vshrl.u32 %v784, 16
        %v1045 = vshll.u32 %v784, 16
        %v1047 = vrot.slane %v1045, 1
        %v1048 = vor.u32 %v1043, %v1047
        %v1050 = vshrl.u32 %v785, 16
        %v1052 = vshll.u32 %v785, 16
        %v1054 = vrot.slane %v1052, 1
        %v1055 = vor.u32 %v1050, %v1054
        %v1057 = vshrl.u32 %v786, 16
        %v1059 = vshll.u32 %v786, 16
        %v1061 = vrot.slane %v1059, 1
        %v1062 = vor.u32 %v1057, %v1061
        %v1064 = vshrl.u32 %v787, 16
        %v1066 = vshll.u32 %v787, 16
        %v1068 = vrot.slane %v1066, 1
        %v1069 = vor.u32 %v1064, %v1068
        %v1071 = vshrl.u32 %v788, 16
        %v1073 = vshll.u32 %v788, 16
        %v1075 = vrot.slane %v1073, 1
        %v1076 = vor.u32 %v1071, %v1075
        %v1078 = vshrl.u32 %v789, 16
        %v1080 = vshll.u32 %v789, 16
        %v1082 = vrot.slane %v1080, 1
        %v1083 = vor.u32 %v1078, %v1082
        %v1085 = vshrl.u32 %v790, 16
        %v1087 = vshll.u32 %v790, 16
        %v1089 = vrot.slane %v1087, 1
        %v1090 = vor.u32 %v1085, %v1089
        %v1092 = vshrl.u32 %v791, 16
        %v1094 = vshll.u32 %v791, 16
        %v1096 = vrot.slane %v1094, 1
        %v1097 = vor.u32 %v1092, %v1096
        %v1099 = vshrl.u32 %v792, 16
        %v1101 = vshll.u32 %v792, 16
        %v1103 = vrot.slane %v1101, 1
        %v1104 = vor.u32 %v1099, %v1103
        %v1106 = vshrl.u32 %v793, 16
        %v1108 = vshll.u32 %v793, 16
        %v1110 = vrot.slane %v1108, 1
        %v1111 = vor.u32 %v1106, %v1110
        %v1113 = vshrl.u32 %v794, 16
        %v1115 = vshll.u32 %v794, 16
        %v1117 = vrot.slane %v1115, 1
        %v1118 = vor.u32 %v1113, %v1117
        %v1120 = vshrl.u32 %v795, 16
        %v1122 = vshll.u32 %v795, 16
        %v1124 = vrot.slane %v1122, 1
        %v1125 = vor.u32 %v1120, %v1124
        %v1127 = vshrl.u32 %v796, 16
        %v1129 = vshll.u32 %v796, 16
        %v1131 = vrot.slane %v1129, 1
        %v1132 = vor.u32 %v1127, %v1131
        %1133 = vrot.lane.b32.xlu0 %v803, 4
        %v1134 = vpop.permute.xlu0 %1133
        %1135 = vrot.lane.b32.xlu0 %v810, 4
        %v1136 = vpop.permute.xlu0 %1135
        %1137 = vrot.lane.b32.xlu0 %v817, 4
        %v1138 = vpop.permute.xlu0 %1137
        %1139 = vrot.lane.b32.xlu0 %v824, 4
        %v1140 = vpop.permute.xlu0 %1139
        %1141 = vrot.lane.b32.xlu0 %v831, 4
        %v1142 = vpop.permute.xlu0 %1141
        %1143 = vrot.lane.b32.xlu0 %v838, 4
        %v1144 = vpop.permute.xlu0 %1143
        %1145 = vrot.lane.b32.xlu0 %v845, 4
        %v1146 = vpop.permute.xlu0 %1145
        %1147 = vrot.lane.b32.xlu0 %v852, 4
        %v1148 = vpop.permute.xlu0 %1147
        %1149 = vrot.lane.b32.xlu0 %v859, 4
        %v1150 = vpop.permute.xlu0 %1149
        %1151 = vrot.lane.b32.xlu0 %v866, 4
        %v1152 = vpop.permute.xlu0 %1151
        %1153 = vrot.lane.b32.xlu0 %v873, 4
        %v1154 = vpop.permute.xlu0 %1153
        %1155 = vrot.lane.b32.xlu0 %v880, 4
        %v1156 = vpop.permute.xlu0 %1155
        %1157 = vrot.lane.b32.xlu0 %v887, 4
        %v1158 = vpop.permute.xlu0 %1157
        %1159 = vrot.lane.b32.xlu0 %v894, 4
        %v1160 = vpop.permute.xlu0 %1159
        %1161 = vrot.lane.b32.xlu0 %v901, 4
        %v1162 = vpop.permute.xlu0 %1161
        %1163 = vrot.lane.b32.xlu0 %v908, 4
        %v1164 = vpop.permute.xlu0 %1163
        %1165 = vrot.lane.b32.xlu0 %v915, 4
        %v1166 = vpop.permute.xlu0 %1165
        %1167 = vrot.lane.b32.xlu0 %v922, 4
        %v1168 = vpop.permute.xlu0 %1167
        %1169 = vrot.lane.b32.xlu0 %v929, 4
        %v1170 = vpop.permute.xlu0 %1169
        %1171 = vrot.lane.b32.xlu0 %v936, 4
        %v1172 = vpop.permute.xlu0 %1171
        %1173 = vrot.lane.b32.xlu0 %v943, 4
        %v1174 = vpop.permute.xlu0 %1173
        %1175 = vrot.lane.b32.xlu0 %v950, 4
        %v1176 = vpop.permute.xlu0 %1175
        %1177 = vrot.lane.b32.xlu0 %v957, 4
        %v1178 = vpop.permute.xlu0 %1177
        %1179 = vrot.lane.b32.xlu0 %v964, 4
        %v1180 = vpop.permute.xlu0 %1179
        %1181 = vrot.lane.b32.xlu0 %v971, 4
        %v1182 = vpop.permute.xlu0 %1181
        %1183 = vrot.lane.b32.xlu0 %v978, 4
        %v1184 = vpop.permute.xlu0 %1183
        %1185 = vrot.lane.b32.xlu0 %v985, 4
        %v1186 = vpop.permute.xlu0 %1185
        %1187 = vrot.lane.b32.xlu0 %v992, 4
        %v1188 = vpop.permute.xlu0 %1187
        %1189 = vrot.lane.b32.xlu0 %v999, 4
        %v1190 = vpop.permute.xlu0 %1189
        %1191 = vrot.lane.b32.xlu0 %v1006, 4
        %v1192 = vpop.permute.xlu0 %1191
        %1193 = vrot.lane.b32.xlu0 %v1013, 4
        %v1194 = vpop.permute.xlu0 %1193
        %1195 = vrot.lane.b32.xlu0 %v1020, 4
        %v1196 = vpop.permute.xlu0 %1195
        %1197 = vrot.lane.b32.xlu0 %v1027, 4
        %v1198 = vpop.permute.xlu0 %1197
        %1199 = vrot.lane.b32.xlu0 %v1034, 4
        %v1200 = vpop.permute.xlu0 %1199
        %1201 = vrot.lane.b32.xlu0 %v1041, 4
        %v1202 = vpop.permute.xlu0 %1201
        %1203 = vrot.lane.b32.xlu0 %v1048, 4
        %v1204 = vpop.permute.xlu0 %1203
        %1205 = vrot.lane.b32.xlu0 %v1055, 4
        %v1206 = vpop.permute.xlu0 %1205
        %1207 = vrot.lane.b32.xlu0 %v1062, 4
        %v1208 = vpop.permute.xlu0 %1207
        %1209 = vrot.lane.b32.xlu0 %v1069, 4
        %v1210 = vpop.permute.xlu0 %1209
        %1211 = vrot.lane.b32.xlu0 %v1076, 4
        %v1212 = vpop.permute.xlu0 %1211
        %1213 = vrot.lane.b32.xlu0 %v1083, 4
        %v1214 = vpop.permute.xlu0 %1213
        %1215 = vrot.lane.b32.xlu0 %v1090, 4
        %v1216 = vpop.permute.xlu0 %1215
        %1217 = vrot.lane.b32.xlu0 %v1097, 4
        %v1218 = vpop.permute.xlu0 %1217
        %1219 = vrot.lane.b32.xlu0 %v1104, 4
        %v1220 = vpop.permute.xlu0 %1219
        %1221 = vrot.lane.b32.xlu0 %v1111, 4
        %v1222 = vpop.permute.xlu0 %1221
        %1223 = vrot.lane.b32.xlu0 %v1118, 4
        %v1224 = vpop.permute.xlu0 %1223
        %1225 = vrot.lane.b32.xlu0 %v1125, 4
        %v1226 = vpop.permute.xlu0 %1225
        %1227 = vrot.lane.b32.xlu0 %v1132, 4
        %v1228 = vpop.permute.xlu0 %1227
        %v1229 = vrot.slane %v749, 1
        %v1230 = vrot.slane %v750, 1
        %v1231 = vrot.slane %v751, 1
        %v1232 = vrot.slane %v752, 1
        %v1233 = vrot.slane %v753, 1
        %v1234 = vrot.slane %v754, 1
        %v1235 = vrot.slane %v755, 1
        %v1236 = vrot.slane %v756, 1
        %v1237 = vrot.slane %v757, 1
        %v1238 = vrot.slane %v758, 1
        %v1239 = vrot.slane %v759, 1
        %v1240 = vrot.slane %v760, 1
        %v1241 = vrot.slane %v761, 1
        %v1242 = vrot.slane %v762, 1
        %v1243 = vrot.slane %v763, 1
        %v1244 = vrot.slane %v764, 1
        %v1245 = vrot.slane %v765, 1
        %v1246 = vrot.slane %v766, 1
        %v1247 = vrot.slane %v767, 1
        %v1248 = vrot.slane %v768, 1
        %v1249 = vrot.slane %v769, 1
        %v1250 = vrot.slane %v770, 1
        %v1251 = vrot.slane %v771, 1
        %v1252 = vrot.slane %v772, 1
        %v1253 = vrot.slane %v773, 1
        %v1254 = vrot.slane %v774, 1
        %v1255 = vrot.slane %v775, 1
        %v1256 = vrot.slane %v776, 1
        %v1257 = vrot.slane %v777, 1
        %v1258 = vrot.slane %v778, 1
        %v1259 = vrot.slane %v779, 1
        %v1260 = vrot.slane %v780, 1
        %v1261 = vrot.slane %v781, 1
        %v1262 = vrot.slane %v782, 1
        %v1263 = vrot.slane %v783, 1
        %v1264 = vrot.slane %v784, 1
        %v1265 = vrot.slane %v785, 1
        %v1266 = vrot.slane %v786, 1
        %v1267 = vrot.slane %v787, 1
        %v1268 = vrot.slane %v788, 1
        %v1269 = vrot.slane %v789, 1
        %v1270 = vrot.slane %v790, 1
        %v1271 = vrot.slane %v791, 1
        %v1272 = vrot.slane %v792, 1
        %v1273 = vrot.slane %v793, 1
        %v1274 = vrot.slane %v794, 1
        %v1275 = vrot.slane %v795, 1
        %v1276 = vrot.slane %v796, 1
        %1277 = vrot.lane.b32.xlu0 %v1229, 8
        %v1278 = vpop.permute.xlu0 %1277
        %1279 = vrot.lane.b32.xlu0 %v1230, 8
        %v1280 = vpop.permute.xlu0 %1279
        %1281 = vrot.lane.b32.xlu0 %v1231, 8
        %v1282 = vpop.permute.xlu0 %1281
        %1283 = vrot.lane.b32.xlu0 %v1232, 8
        %v1284 = vpop.permute.xlu0 %1283
        %1285 = vrot.lane.b32.xlu0 %v1233, 8
        %v1286 = vpop.permute.xlu0 %1285
        %1287 = vrot.lane.b32.xlu0 %v1234, 8
        %v1288 = vpop.permute.xlu0 %1287
        %1289 = vrot.lane.b32.xlu0 %v1235, 8
        %v1290 = vpop.permute.xlu0 %1289
        %1291 = vrot.lane.b32.xlu0 %v1236, 8
        %v1292 = vpop.permute.xlu0 %1291
        %1293 = vrot.lane.b32.xlu0 %v1237, 8
        %v1294 = vpop.permute.xlu0 %1293
        %1295 = vrot.lane.b32.xlu0 %v1238, 8
        %v1296 = vpop.permute.xlu0 %1295
        %1297 = vrot.lane.b32.xlu0 %v1239, 8
        %v1298 = vpop.permute.xlu0 %1297
        %1299 = vrot.lane.b32.xlu0 %v1240, 8
        %v1300 = vpop.permute.xlu0 %1299
        %1301 = vrot.lane.b32.xlu0 %v1241, 8
        %v1302 = vpop.permute.xlu0 %1301
        %1303 = vrot.lane.b32.xlu0 %v1242, 8
        %v1304 = vpop.permute.xlu0 %1303
        %1305 = vrot.lane.b32.xlu0 %v1243, 8
        %v1306 = vpop.permute.xlu0 %1305
        %1307 = vrot.lane.b32.xlu0 %v1244, 8
        %v1308 = vpop.permute.xlu0 %1307
        %1309 = vrot.lane.b32.xlu0 %v1245, 8
        %v1310 = vpop.permute.xlu0 %1309
        %1311 = vrot.lane.b32.xlu0 %v1246, 8
        %v1312 = vpop.permute.xlu0 %1311
        %1313 = vrot.lane.b32.xlu0 %v1247, 8
        %v1314 = vpop.permute.xlu0 %1313
        %1315 = vrot.lane.b32.xlu0 %v1248, 8
        %v1316 = vpop.permute.xlu0 %1315
        %1317 = vrot.lane.b32.xlu0 %v1249, 8
        %v1318 = vpop.permute.xlu0 %1317
        %1319 = vrot.lane.b32.xlu0 %v1250, 8
        %v1320 = vpop.permute.xlu0 %1319
        %1321 = vrot.lane.b32.xlu0 %v1251, 8
        %v1322 = vpop.permute.xlu0 %1321
        %1323 = vrot.lane.b32.xlu0 %v1252, 8
        %v1324 = vpop.permute.xlu0 %1323
        %1325 = vrot.lane.b32.xlu0 %v1253, 8
        %v1326 = vpop.permute.xlu0 %1325
        %1327 = vrot.lane.b32.xlu0 %v1254, 8
        %v1328 = vpop.permute.xlu0 %1327
        %1329 = vrot.lane.b32.xlu0 %v1255, 8
        %v1330 = vpop.permute.xlu0 %1329
        %1331 = vrot.lane.b32.xlu0 %v1256, 8
        %v1332 = vpop.permute.xlu0 %1331
        %1333 = vrot.lane.b32.xlu0 %v1257, 8
        %v1334 = vpop.permute.xlu0 %1333
        %1335 = vrot.lane.b32.xlu0 %v1258, 8
        %v1336 = vpop.permute.xlu0 %1335
        %1337 = vrot.lane.b32.xlu0 %v1259, 8
        %v1338 = vpop.permute.xlu0 %1337
        %1339 = vrot.lane.b32.xlu0 %v1260, 8
        %v1340 = vpop.permute.xlu0 %1339
        %1341 = vrot.lane.b32.xlu0 %v1261, 8
        %v1342 = vpop.permute.xlu0 %1341
        %1343 = vrot.lane.b32.xlu0 %v1262, 8
        %v1344 = vpop.permute.xlu0 %1343
        %1345 = vrot.lane.b32.xlu0 %v1263, 8
        %v1346 = vpop.permute.xlu0 %1345
        %1347 = vrot.lane.b32.xlu0 %v1264, 8
        %v1348 = vpop.permute.xlu0 %1347
        %1349 = vrot.lane.b32.xlu0 %v1265, 8
        %v1350 = vpop.permute.xlu0 %1349
        %1351 = vrot.lane.b32.xlu0 %v1266, 8
        %v1352 = vpop.permute.xlu0 %1351
        %1353 = vrot.lane.b32.xlu0 %v1267, 8
        %v1354 = vpop.permute.xlu0 %1353
        %1355 = vrot.lane.b32.xlu0 %v1268, 8
        %v1356 = vpop.permute.xlu0 %1355
        %1357 = vrot.lane.b32.xlu0 %v1269, 8
        %v1358 = vpop.permute.xlu0 %1357
        %1359 = vrot.lane.b32.xlu0 %v1270, 8
        %v1360 = vpop.permute.xlu0 %1359
        %1361 = vrot.lane.b32.xlu0 %v1271, 8
        %v1362 = vpop.permute.xlu0 %1361
        %1363 = vrot.lane.b32.xlu0 %v1272, 8
        %v1364 = vpop.permute.xlu0 %1363
        %1365 = vrot.lane.b32.xlu0 %v1273, 8
        %v1366 = vpop.permute.xlu0 %1365
        %1367 = vrot.lane.b32.xlu0 %v1274, 8
        %v1368 = vpop.permute.xlu0 %1367
        %1369 = vrot.lane.b32.xlu0 %v1275, 8
        %v1370 = vpop.permute.xlu0 %1369
        %1371 = vrot.lane.b32.xlu0 %v1276, 8
        %v1372 = vpop.permute.xlu0 %1371
        %v1379 = vunpack.c.l.b16 %v205
        %v1380 = vunpack.c.l.b16 %v225
        %v1381 = vunpack.c.l.b16 %v245
        %v1382 = vunpack.c.l.b16 %v265
        %v1383 = vunpack.c.l.b16 %v285
        %v1384 = vunpack.c.l.b16 %v305
        %v1385 = vpack.c.b16 %v655, %v655
        %v1386 = vpack.c.b16 %v657, %v657
        %v1387 = vpack.c.b16 %v659, %v659
        %v1388 = vpack.c.b16 %v661, %v661
        %v1389 = vpack.c.b16 %v663, %v663
        %v1390 = vpack.c.b16 %v665, %v665
        %v1391 = vpack.c.b16 %v667, %v667
        %v1392 = vpack.c.b16 %v1379, %v1379
        %v1393 = vpack.c.b16 %v671, %v671
        %v1394 = vpack.c.b16 %v673, %v673
        %v1395 = vpack.c.b16 %v675, %v675
        %v1396 = vpack.c.b16 %v677, %v677
        %v1397 = vpack.c.b16 %v679, %v679
        %v1398 = vpack.c.b16 %v681, %v681
        %v1399 = vpack.c.b16 %v683, %v683
        %v1400 = vpack.c.b16 %v1380, %v1380
        %v1401 = vpack.c.b16 %v687, %v687
        %v1402 = vpack.c.b16 %v689, %v689
        %v1403 = vpack.c.b16 %v691, %v691
        %v1404 = vpack.c.b16 %v693, %v693
        %v1405 = vpack.c.b16 %v695, %v695
        %v1406 = vpack.c.b16 %v697, %v697
        %v1407 = vpack.c.b16 %v699, %v699
        %v1408 = vpack.c.b16 %v1381, %v1381
        %v1409 = vpack.c.b16 %v703, %v703
        %v1410 = vpack.c.b16 %v705, %v705
        %v1411 = vpack.c.b16 %v707, %v707
        %v1412 = vpack.c.b16 %v709, %v709
        %v1413 = vpack.c.b16 %v711, %v711
        %v1414 = vpack.c.b16 %v713, %v713
        %v1415 = vpack.c.b16 %v715, %v715
        %v1416 = vpack.c.b16 %v1382, %v1382
        %v1417 = vpack.c.b16 %v719, %v719
        %v1418 = vpack.c.b16 %v721, %v721
        %v1419 = vpack.c.b16 %v723, %v723
        %v1420 = vpack.c.b16 %v725, %v725
        %v1421 = vpack.c.b16 %v727, %v727
        %v1422 = vpack.c.b16 %v729, %v729
        %v1423 = vpack.c.b16 %v731, %v731
        %v1424 = vpack.c.b16 %v1383, %v1383
        %v1425 = vpack.c.b16 %v735, %v735
        %v1426 = vpack.c.b16 %v737, %v737
        %v1427 = vpack.c.b16 %v739, %v739
        %v1428 = vpack.c.b16 %v741, %v741
        %v1429 = vpack.c.b16 %v743, %v743
        %v1430 = vpack.c.b16 %v745, %v745
        %v1431 = vpack.c.b16 %v747, %v747
        %v1432 = vpack.c.b16 %v1384, %v1384
        %1433 = vrot.lane.b32.xlu0 %v1385, 12
        %v1434 = vpop.permute.xlu0 %1433
        %1435 = vrot.lane.b32.xlu0 %v1386, 12
        %v1436 = vpop.permute.xlu0 %1435
        %1437 = vrot.lane.b32.xlu0 %v1387, 12
        %v1438 = vpop.permute.xlu0 %1437
        %1439 = vrot.lane.b32.xlu0 %v1388, 12
        %v1440 = vpop.permute.xlu0 %1439
        %1441 = vrot.lane.b32.xlu0 %v1389, 12
        %v1442 = vpop.permute.xlu0 %1441
        %1443 = vrot.lane.b32.xlu0 %v1390, 12
        %v1444 = vpop.permute.xlu0 %1443
        %1445 = vrot.lane.b32.xlu0 %v1391, 12
        %v1446 = vpop.permute.xlu0 %1445
        %1447 = vrot.lane.b32.xlu0 %v1392, 12
        %v1448 = vpop.permute.xlu0 %1447
        %1449 = vrot.lane.b32.xlu0 %v1393, 12
        %v1450 = vpop.permute.xlu0 %1449
        %1451 = vrot.lane.b32.xlu0 %v1394, 12
        %v1452 = vpop.permute.xlu0 %1451
        %1453 = vrot.lane.b32.xlu0 %v1395, 12
        %v1454 = vpop.permute.xlu0 %1453
        %1455 = vrot.lane.b32.xlu0 %v1396, 12
        %v1456 = vpop.permute.xlu0 %1455
        %1457 = vrot.lane.b32.xlu0 %v1397, 12
        %v1458 = vpop.permute.xlu0 %1457
        %1459 = vrot.lane.b32.xlu0 %v1398, 12
        %v1460 = vpop.permute.xlu0 %1459
        %1461 = vrot.lane.b32.xlu0 %v1399, 12
        %v1462 = vpop.permute.xlu0 %1461
        %1463 = vrot.lane.b32.xlu0 %v1400, 12
        %v1464 = vpop.permute.xlu0 %1463
        %1465 = vrot.lane.b32.xlu0 %v1401, 12
        %v1466 = vpop.permute.xlu0 %1465
        %1467 = vrot.lane.b32.xlu0 %v1402, 12
        %v1468 = vpop.permute.xlu0 %1467
        %1469 = vrot.lane.b32.xlu0 %v1403, 12
        %v1470 = vpop.permute.xlu0 %1469
        %1471 = vrot.lane.b32.xlu0 %v1404, 12
        %v1472 = vpop.permute.xlu0 %1471
        %1473 = vrot.lane.b32.xlu0 %v1405, 12
        %v1474 = vpop.permute.xlu0 %1473
        %1475 = vrot.lane.b32.xlu0 %v1406, 12
        %v1476 = vpop.permute.xlu0 %1475
        %1477 = vrot.lane.b32.xlu0 %v1407, 12
        %v1478 = vpop.permute.xlu0 %1477
        %1479 = vrot.lane.b32.xlu0 %v1408, 12
        %v1480 = vpop.permute.xlu0 %1479
        %1481 = vrot.lane.b32.xlu0 %v1409, 12
        %v1482 = vpop.permute.xlu0 %1481
        %1483 = vrot.lane.b32.xlu0 %v1410, 12
        %v1484 = vpop.permute.xlu0 %1483
        %1485 = vrot.lane.b32.xlu0 %v1411, 12
        %v1486 = vpop.permute.xlu0 %1485
        %1487 = vrot.lane.b32.xlu0 %v1412, 12
        %v1488 = vpop.permute.xlu0 %1487
        %1489 = vrot.lane.b32.xlu0 %v1413, 12
        %v1490 = vpop.permute.xlu0 %1489
        %1491 = vrot.lane.b32.xlu0 %v1414, 12
        %v1492 = vpop.permute.xlu0 %1491
        %1493 = vrot.lane.b32.xlu0 %v1415, 12
        %v1494 = vpop.permute.xlu0 %1493
        %1495 = vrot.lane.b32.xlu0 %v1416, 12
        %v1496 = vpop.permute.xlu0 %1495
        %1497 = vrot.lane.b32.xlu0 %v1417, 12
        %v1498 = vpop.permute.xlu0 %1497
        %1499 = vrot.lane.b32.xlu0 %v1418, 12
        %v1500 = vpop.permute.xlu0 %1499
        %1501 = vrot.lane.b32.xlu0 %v1419, 12
        %v1502 = vpop.permute.xlu0 %1501
        %1503 = vrot.lane.b32.xlu0 %v1420, 12
        %v1504 = vpop.permute.xlu0 %1503
        %1505 = vrot.lane.b32.xlu0 %v1421, 12
        %v1506 = vpop.permute.xlu0 %1505
        %1507 = vrot.lane.b32.xlu0 %v1422, 12
        %v1508 = vpop.permute.xlu0 %1507
        %1509 = vrot.lane.b32.xlu0 %v1423, 12
        %v1510 = vpop.permute.xlu0 %1509
        %1511 = vrot.lane.b32.xlu0 %v1424, 12
        %v1512 = vpop.permute.xlu0 %1511
        %1513 = vrot.lane.b32.xlu0 %v1425, 12
        %v1514 = vpop.permute.xlu0 %1513
        %1515 = vrot.lane.b32.xlu0 %v1426, 12
        %v1516 = vpop.permute.xlu0 %1515
        %1517 = vrot.lane.b32.xlu0 %v1427, 12
        %v1518 = vpop.permute.xlu0 %1517
        %1519 = vrot.lane.b32.xlu0 %v1428, 12
        %v1520 = vpop.permute.xlu0 %1519
        %1521 = vrot.lane.b32.xlu0 %v1429, 12
        %v1522 = vpop.permute.xlu0 %1521
        %1523 = vrot.lane.b32.xlu0 %v1430, 12
        %v1524 = vpop.permute.xlu0 %1523
        %1525 = vrot.lane.b32.xlu0 %v1431, 12
        %v1526 = vpop.permute.xlu0 %1525
        %1527 = vrot.lane.b32.xlu0 %v1432, 12
        %v1528 = vpop.permute.xlu0 %1527
        %v1535 = vunpack.c.l.b16 %v206
        %v1536 = vunpack.c.l.b16 %v226
        %v1537 = vunpack.c.l.b16 %v246
        %v1538 = vunpack.c.l.b16 %v266
        %v1539 = vunpack.c.l.b16 %v286
        %v1540 = vunpack.c.l.b16 %v306
        %v1541 = vpack.c.b16 %v1535, %v1379
        %v1542 = vpack.c.b16 %v1536, %v1380
        %v1543 = vpack.c.b16 %v1537, %v1381
        %v1544 = vpack.c.b16 %v1538, %v1382
        %v1545 = vpack.c.b16 %v1539, %v1383
        %v1546 = vpack.c.b16 %v1540, %v1384
        %v1548 = vshrl.u32 %v1541, 16
        %v1550 = vshll.u32 %v1541, 16
        %v1552 = vrot.slane %v1550, 1
        %v1553 = vor.u32 %v1548, %v1552
        %v1555 = vshrl.u32 %v1542, 16
        %v1557 = vshll.u32 %v1542, 16
        %v1559 = vrot.slane %v1557, 1
        %v1560 = vor.u32 %v1555, %v1559
        %v1562 = vshrl.u32 %v1543, 16
        %v1564 = vshll.u32 %v1543, 16
        %v1566 = vrot.slane %v1564, 1
        %v1567 = vor.u32 %v1562, %v1566
        %v1569 = vshrl.u32 %v1544, 16
        %v1571 = vshll.u32 %v1544, 16
        %v1573 = vrot.slane %v1571, 1
        %v1574 = vor.u32 %v1569, %v1573
        %v1576 = vshrl.u32 %v1545, 16
        %v1578 = vshll.u32 %v1545, 16
        %v1580 = vrot.slane %v1578, 1
        %v1581 = vor.u32 %v1576, %v1580
        %v1583 = vshrl.u32 %v1546, 16
        %v1585 = vshll.u32 %v1546, 16
        %v1587 = vrot.slane %v1585, 1
        %v1588 = vor.u32 %v1583, %v1587
        %1589 = vrot.lane.b32.xlu0 %v810, 16
        %v1590 = vpop.permute.xlu0 %1589
        %1591 = vrot.lane.b32.xlu0 %v817, 16
        %v1592 = vpop.permute.xlu0 %1591
        %1593 = vrot.lane.b32.xlu0 %v824, 16
        %v1594 = vpop.permute.xlu0 %1593
        %1595 = vrot.lane.b32.xlu0 %v831, 16
        %v1596 = vpop.permute.xlu0 %1595
        %1597 = vrot.lane.b32.xlu0 %v838, 16
        %v1598 = vpop.permute.xlu0 %1597
        %1599 = vrot.lane.b32.xlu0 %v845, 16
        %v1600 = vpop.permute.xlu0 %1599
        %1601 = vrot.lane.b32.xlu0 %v852, 16
        %v1602 = vpop.permute.xlu0 %1601
        %1603 = vrot.lane.b32.xlu0 %v1553, 16
        %v1604 = vpop.permute.xlu0 %1603
        %1605 = vrot.lane.b32.xlu0 %v866, 16
        %v1606 = vpop.permute.xlu0 %1605
        %1607 = vrot.lane.b32.xlu0 %v873, 16
        %v1608 = vpop.permute.xlu0 %1607
        %1609 = vrot.lane.b32.xlu0 %v880, 16
        %v1610 = vpop.permute.xlu0 %1609
        %1611 = vrot.lane.b32.xlu0 %v887, 16
        %v1612 = vpop.permute.xlu0 %1611
        %1613 = vrot.lane.b32.xlu0 %v894, 16
        %v1614 = vpop.permute.xlu0 %1613
        %1615 = vrot.lane.b32.xlu0 %v901, 16
        %v1616 = vpop.permute.xlu0 %1615
        %1617 = vrot.lane.b32.xlu0 %v908, 16
        %v1618 = vpop.permute.xlu0 %1617
        %1619 = vrot.lane.b32.xlu0 %v1560, 16
        %v1620 = vpop.permute.xlu0 %1619
        %1621 = vrot.lane.b32.xlu0 %v922, 16
        %v1622 = vpop.permute.xlu0 %1621
        %1623 = vrot.lane.b32.xlu0 %v929, 16
        %v1624 = vpop.permute.xlu0 %1623
        %1625 = vrot.lane.b32.xlu0 %v936, 16
        %v1626 = vpop.permute.xlu0 %1625
        %1627 = vrot.lane.b32.xlu0 %v943, 16
        %v1628 = vpop.permute.xlu0 %1627
        %1629 = vrot.lane.b32.xlu0 %v950, 16
        %v1630 = vpop.permute.xlu0 %1629
        %1631 = vrot.lane.b32.xlu0 %v957, 16
        %v1632 = vpop.permute.xlu0 %1631
        %1633 = vrot.lane.b32.xlu0 %v964, 16
        %v1634 = vpop.permute.xlu0 %1633
        %1635 = vrot.lane.b32.xlu0 %v1567, 16
        %v1636 = vpop.permute.xlu0 %1635
        %1637 = vrot.lane.b32.xlu0 %v978, 16
        %v1638 = vpop.permute.xlu0 %1637
        %1639 = vrot.lane.b32.xlu0 %v985, 16
        %v1640 = vpop.permute.xlu0 %1639
        %1641 = vrot.lane.b32.xlu0 %v992, 16
        %v1642 = vpop.permute.xlu0 %1641
        %1643 = vrot.lane.b32.xlu0 %v999, 16
        %v1644 = vpop.permute.xlu0 %1643
        %1645 = vrot.lane.b32.xlu0 %v1006, 16
        %v1646 = vpop.permute.xlu0 %1645
        %1647 = vrot.lane.b32.xlu0 %v1013, 16
        %v1648 = vpop.permute.xlu0 %1647
        %1649 = vrot.lane.b32.xlu0 %v1020, 16
        %v1650 = vpop.permute.xlu0 %1649
        %1651 = vrot.lane.b32.xlu0 %v1574, 16
        %v1652 = vpop.permute.xlu0 %1651
        %1653 = vrot.lane.b32.xlu0 %v1034, 16
        %v1654 = vpop.permute.xlu0 %1653
        %1655 = vrot.lane.b32.xlu0 %v1041, 16
        %v1656 = vpop.permute.xlu0 %1655
        %1657 = vrot.lane.b32.xlu0 %v1048, 16
        %v1658 = vpop.permute.xlu0 %1657
        %1659 = vrot.lane.b32.xlu0 %v1055, 16
        %v1660 = vpop.permute.xlu0 %1659
        %1661 = vrot.lane.b32.xlu0 %v1062, 16
        %v1662 = vpop.permute.xlu0 %1661
        %1663 = vrot.lane.b32.xlu0 %v1069, 16
        %v1664 = vpop.permute.xlu0 %1663
        %1665 = vrot.lane.b32.xlu0 %v1076, 16
        %v1666 = vpop.permute.xlu0 %1665
        %1667 = vrot.lane.b32.xlu0 %v1581, 16
        %v1668 = vpop.permute.xlu0 %1667
        %1669 = vrot.lane.b32.xlu0 %v1090, 16
        %v1670 = vpop.permute.xlu0 %1669
        %1671 = vrot.lane.b32.xlu0 %v1097, 16
        %v1672 = vpop.permute.xlu0 %1671
        %1673 = vrot.lane.b32.xlu0 %v1104, 16
        %v1674 = vpop.permute.xlu0 %1673
        %1675 = vrot.lane.b32.xlu0 %v1111, 16
        %v1676 = vpop.permute.xlu0 %1675
        %1677 = vrot.lane.b32.xlu0 %v1118, 16
        %v1678 = vpop.permute.xlu0 %1677
        %1679 = vrot.lane.b32.xlu0 %v1125, 16
        %v1680 = vpop.permute.xlu0 %1679
        %1681 = vrot.lane.b32.xlu0 %v1132, 16
        %v1682 = vpop.permute.xlu0 %1681
        %1683 = vrot.lane.b32.xlu0 %v1588, 16
        %v1684 = vpop.permute.xlu0 %1683
        %v1685 = vrot.slane %v1541, 1
        %v1686 = vrot.slane %v1542, 1
        %v1687 = vrot.slane %v1543, 1
        %v1688 = vrot.slane %v1544, 1
        %v1689 = vrot.slane %v1545, 1
        %v1690 = vrot.slane %v1546, 1
        %1691 = vrot.lane.b32.xlu0 %v1230, 20
        %v1692 = vpop.permute.xlu0 %1691
        %1693 = vrot.lane.b32.xlu0 %v1231, 20
        %v1694 = vpop.permute.xlu0 %1693
        %1695 = vrot.lane.b32.xlu0 %v1232, 20
        %v1696 = vpop.permute.xlu0 %1695
        %1697 = vrot.lane.b32.xlu0 %v1233, 20
        %v1698 = vpop.permute.xlu0 %1697
        %1699 = vrot.lane.b32.xlu0 %v1234, 20
        %v1700 = vpop.permute.xlu0 %1699
        %1701 = vrot.lane.b32.xlu0 %v1235, 20
        %v1702 = vpop.permute.xlu0 %1701
        %1703 = vrot.lane.b32.xlu0 %v1236, 20
        %v1704 = vpop.permute.xlu0 %1703
        %1705 = vrot.lane.b32.xlu0 %v1685, 20
        %v1706 = vpop.permute.xlu0 %1705
        %1707 = vrot.lane.b32.xlu0 %v1238, 20
        %v1708 = vpop.permute.xlu0 %1707
        %1709 = vrot.lane.b32.xlu0 %v1239, 20
        %v1710 = vpop.permute.xlu0 %1709
        %1711 = vrot.lane.b32.xlu0 %v1240, 20
        %v1712 = vpop.permute.xlu0 %1711
        %1713 = vrot.lane.b32.xlu0 %v1241, 20
        %v1714 = vpop.permute.xlu0 %1713
        %1715 = vrot.lane.b32.xlu0 %v1242, 20
        %v1716 = vpop.permute.xlu0 %1715
        %1717 = vrot.lane.b32.xlu0 %v1243, 20
        %v1718 = vpop.permute.xlu0 %1717
        %1719 = vrot.lane.b32.xlu0 %v1244, 20
        %v1720 = vpop.permute.xlu0 %1719
        %1721 = vrot.lane.b32.xlu0 %v1686, 20
        %v1722 = vpop.permute.xlu0 %1721
        %1723 = vrot.lane.b32.xlu0 %v1246, 20
        %v1724 = vpop.permute.xlu0 %1723
        %1725 = vrot.lane.b32.xlu0 %v1247, 20
        %v1726 = vpop.permute.xlu0 %1725
        %1727 = vrot.lane.b32.xlu0 %v1248, 20
        %v1728 = vpop.permute.xlu0 %1727
        %1729 = vrot.lane.b32.xlu0 %v1249, 20
        %v1730 = vpop.permute.xlu0 %1729
        %1731 = vrot.lane.b32.xlu0 %v1250, 20
        %v1732 = vpop.permute.xlu0 %1731
        %1733 = vrot.lane.b32.xlu0 %v1251, 20
        %v1734 = vpop.permute.xlu0 %1733
        %1735 = vrot.lane.b32.xlu0 %v1252, 20
        %v1736 = vpop.permute.xlu0 %1735
        %1737 = vrot.lane.b32.xlu0 %v1687, 20
        %v1738 = vpop.permute.xlu0 %1737
        %1739 = vrot.lane.b32.xlu0 %v1254, 20
        %v1740 = vpop.permute.xlu0 %1739
        %1741 = vrot.lane.b32.xlu0 %v1255, 20
        %v1742 = vpop.permute.xlu0 %1741
        %1743 = vrot.lane.b32.xlu0 %v1256, 20
        %v1744 = vpop.permute.xlu0 %1743
        %1745 = vrot.lane.b32.xlu0 %v1257, 20
        %v1746 = vpop.permute.xlu0 %1745
        %1747 = vrot.lane.b32.xlu0 %v1258, 20
        %v1748 = vpop.permute.xlu0 %1747
        %1749 = vrot.lane.b32.xlu0 %v1259, 20
        %v1750 = vpop.permute.xlu0 %1749
        %1751 = vrot.lane.b32.xlu0 %v1260, 20
        %v1752 = vpop.permute.xlu0 %1751
        %1753 = vrot.lane.b32.xlu0 %v1688, 20
        %v1754 = vpop.permute.xlu0 %1753
        %1755 = vrot.lane.b32.xlu0 %v1262, 20
        %v1756 = vpop.permute.xlu0 %1755
        %1757 = vrot.lane.b32.xlu0 %v1263, 20
        %v1758 = vpop.permute.xlu0 %1757
        %1759 = vrot.lane.b32.xlu0 %v1264, 20
        %v1760 = vpop.permute.xlu0 %1759
        %1761 = vrot.lane.b32.xlu0 %v1265, 20
        %v1762 = vpop.permute.xlu0 %1761
        %1763 = vrot.lane.b32.xlu0 %v1266, 20
        %v1764 = vpop.permute.xlu0 %1763
        %1765 = vrot.lane.b32.xlu0 %v1267, 20
        %v1766 = vpop.permute.xlu0 %1765
        %1767 = vrot.lane.b32.xlu0 %v1268, 20
        %v1768 = vpop.permute.xlu0 %1767
        %1769 = vrot.lane.b32.xlu0 %v1689, 20
        %v1770 = vpop.permute.xlu0 %1769
        %1771 = vrot.lane.b32.xlu0 %v1270, 20
        %v1772 = vpop.permute.xlu0 %1771
        %1773 = vrot.lane.b32.xlu0 %v1271, 20
        %v1774 = vpop.permute.xlu0 %1773
        %1775 = vrot.lane.b32.xlu0 %v1272, 20
        %v1776 = vpop.permute.xlu0 %1775
        %1777 = vrot.lane.b32.xlu0 %v1273, 20
        %v1778 = vpop.permute.xlu0 %1777
        %1779 = vrot.lane.b32.xlu0 %v1274, 20
        %v1780 = vpop.permute.xlu0 %1779
        %1781 = vrot.lane.b32.xlu0 %v1275, 20
        %v1782 = vpop.permute.xlu0 %1781
        %1783 = vrot.lane.b32.xlu0 %v1276, 20
        %v1784 = vpop.permute.xlu0 %1783
        %1785 = vrot.lane.b32.xlu0 %v1690, 20
        %v1786 = vpop.permute.xlu0 %1785
        %v1793 = vunpack.c.l.b16 %v207
        %v1794 = vunpack.c.l.b16 %v227
        %v1795 = vunpack.c.l.b16 %v247
        %v1796 = vunpack.c.l.b16 %v267
        %v1797 = vunpack.c.l.b16 %v287
        %v1798 = vunpack.c.l.b16 %v307
        %v1799 = vpack.c.b16 %v1793, %v1793
        %v1800 = vpack.c.b16 %v1794, %v1794
        %v1801 = vpack.c.b16 %v1795, %v1795
        %v1802 = vpack.c.b16 %v1796, %v1796
        %v1803 = vpack.c.b16 %v1797, %v1797
        %v1804 = vpack.c.b16 %v1798, %v1798
        %1805 = vrot.lane.b32.xlu0 %v1386, 24
        %v1806 = vpop.permute.xlu0 %1805
        %1807 = vrot.lane.b32.xlu0 %v1387, 24
        %v1808 = vpop.permute.xlu0 %1807
        %1809 = vrot.lane.b32.xlu0 %v1388, 24
        %v1810 = vpop.permute.xlu0 %1809
        %1811 = vrot.lane.b32.xlu0 %v1389, 24
        %v1812 = vpop.permute.xlu0 %1811
        %1813 = vrot.lane.b32.xlu0 %v1390, 24
        %v1814 = vpop.permute.xlu0 %1813
        %1815 = vrot.lane.b32.xlu0 %v1391, 24
        %v1816 = vpop.permute.xlu0 %1815
        %1817 = vrot.lane.b32.xlu0 %v1392, 24
        %v1818 = vpop.permute.xlu0 %1817
        %1819 = vrot.lane.b32.xlu0 %v1799, 24
        %v1820 = vpop.permute.xlu0 %1819
        %1821 = vrot.lane.b32.xlu0 %v1394, 24
        %v1822 = vpop.permute.xlu0 %1821
        %1823 = vrot.lane.b32.xlu0 %v1395, 24
        %v1824 = vpop.permute.xlu0 %1823
        %1825 = vrot.lane.b32.xlu0 %v1396, 24
        %v1826 = vpop.permute.xlu0 %1825
        %1827 = vrot.lane.b32.xlu0 %v1397, 24
        %v1828 = vpop.permute.xlu0 %1827
        %1829 = vrot.lane.b32.xlu0 %v1398, 24
        %v1830 = vpop.permute.xlu0 %1829
        %1831 = vrot.lane.b32.xlu0 %v1399, 24
        %v1832 = vpop.permute.xlu0 %1831
        %1833 = vrot.lane.b32.xlu0 %v1400, 24
        %v1834 = vpop.permute.xlu0 %1833
        %1835 = vrot.lane.b32.xlu0 %v1800, 24
        %v1836 = vpop.permute.xlu0 %1835
        %1837 = vrot.lane.b32.xlu0 %v1402, 24
        %v1838 = vpop.permute.xlu0 %1837
        %1839 = vrot.lane.b32.xlu0 %v1403, 24
        %v1840 = vpop.permute.xlu0 %1839
        %1841 = vrot.lane.b32.xlu0 %v1404, 24
        %v1842 = vpop.permute.xlu0 %1841
        %1843 = vrot.lane.b32.xlu0 %v1405, 24
        %v1844 = vpop.permute.xlu0 %1843
        %1845 = vrot.lane.b32.xlu0 %v1406, 24
        %v1846 = vpop.permute.xlu0 %1845
        %1847 = vrot.lane.b32.xlu0 %v1407, 24
        %v1848 = vpop.permute.xlu0 %1847
        %1849 = vrot.lane.b32.xlu0 %v1408, 24
        %v1850 = vpop.permute.xlu0 %1849
        %1851 = vrot.lane.b32.xlu0 %v1801, 24
        %v1852 = vpop.permute.xlu0 %1851
        %1853 = vrot.lane.b32.xlu0 %v1410, 24
        %v1854 = vpop.permute.xlu0 %1853
        %1855 = vrot.lane.b32.xlu0 %v1411, 24
        %v1856 = vpop.permute.xlu0 %1855
        %1857 = vrot.lane.b32.xlu0 %v1412, 24
        %v1858 = vpop.permute.xlu0 %1857
        %1859 = vrot.lane.b32.xlu0 %v1413, 24
        %v1860 = vpop.permute.xlu0 %1859
        %1861 = vrot.lane.b32.xlu0 %v1414, 24
        %v1862 = vpop.permute.xlu0 %1861
        %1863 = vrot.lane.b32.xlu0 %v1415, 24
        %v1864 = vpop.permute.xlu0 %1863
        %1865 = vrot.lane.b32.xlu0 %v1416, 24
        %v1866 = vpop.permute.xlu0 %1865
        %1867 = vrot.lane.b32.xlu0 %v1802, 24
        %v1868 = vpop.permute.xlu0 %1867
        %1869 = vrot.lane.b32.xlu0 %v1418, 24
        %v1870 = vpop.permute.xlu0 %1869
        %1871 = vrot.lane.b32.xlu0 %v1419, 24
        %v1872 = vpop.permute.xlu0 %1871
        %1873 = vrot.lane.b32.xlu0 %v1420, 24
        %v1874 = vpop.permute.xlu0 %1873
        %1875 = vrot.lane.b32.xlu0 %v1421, 24
        %v1876 = vpop.permute.xlu0 %1875
        %1877 = vrot.lane.b32.xlu0 %v1422, 24
        %v1878 = vpop.permute.xlu0 %1877
        %1879 = vrot.lane.b32.xlu0 %v1423, 24
        %v1880 = vpop.permute.xlu0 %1879
        %1881 = vrot.lane.b32.xlu0 %v1424, 24
        %v1882 = vpop.permute.xlu0 %1881
        %1883 = vrot.lane.b32.xlu0 %v1803, 24
        %v1884 = vpop.permute.xlu0 %1883
        %1885 = vrot.lane.b32.xlu0 %v1426, 24
        %v1886 = vpop.permute.xlu0 %1885
        %1887 = vrot.lane.b32.xlu0 %v1427, 24
        %v1888 = vpop.permute.xlu0 %1887
        %1889 = vrot.lane.b32.xlu0 %v1428, 24
        %v1890 = vpop.permute.xlu0 %1889
        %1891 = vrot.lane.b32.xlu0 %v1429, 24
        %v1892 = vpop.permute.xlu0 %1891
        %1893 = vrot.lane.b32.xlu0 %v1430, 24
        %v1894 = vpop.permute.xlu0 %1893
        %1895 = vrot.lane.b32.xlu0 %v1431, 24
        %v1896 = vpop.permute.xlu0 %1895
        %1897 = vrot.lane.b32.xlu0 %v1432, 24
        %v1898 = vpop.permute.xlu0 %1897
        %1899 = vrot.lane.b32.xlu0 %v1804, 24
        %v1900 = vpop.permute.xlu0 %1899
        %v1907 = vunpack.c.l.b16 %v208
        %v1908 = vunpack.c.l.b16 %v228
        %v1909 = vunpack.c.l.b16 %v248
        %v1910 = vunpack.c.l.b16 %v268
        %v1911 = vunpack.c.l.b16 %v288
        %v1912 = vunpack.c.l.b16 %v308
        %v1913 = vpack.c.b16 %v1907, %v1793
        %v1914 = vpack.c.b16 %v1908, %v1794
        %v1915 = vpack.c.b16 %v1909, %v1795
        %v1916 = vpack.c.b16 %v1910, %v1796
        %v1917 = vpack.c.b16 %v1911, %v1797
        %v1918 = vpack.c.b16 %v1912, %v1798
        %v1920 = vshrl.u32 %v1913, 16
        %v1922 = vshll.u32 %v1913, 16
        %v1924 = vrot.slane %v1922, 1
        %v1925 = vor.u32 %v1920, %v1924
        %v1927 = vshrl.u32 %v1914, 16
        %v1929 = vshll.u32 %v1914, 16
        %v1931 = vrot.slane %v1929, 1
        %v1932 = vor.u32 %v1927, %v1931
        %v1934 = vshrl.u32 %v1915, 16
        %v1936 = vshll.u32 %v1915, 16
        %v1938 = vrot.slane %v1936, 1
        %v1939 = vor.u32 %v1934, %v1938
        %v1941 = vshrl.u32 %v1916, 16
        %v1943 = vshll.u32 %v1916, 16
        %v1945 = vrot.slane %v1943, 1
        %v1946 = vor.u32 %v1941, %v1945
        %v1948 = vshrl.u32 %v1917, 16
        %v1950 = vshll.u32 %v1917, 16
        %v1952 = vrot.slane %v1950, 1
        %v1953 = vor.u32 %v1948, %v1952
        %v1955 = vshrl.u32 %v1918, 16
        %v1957 = vshll.u32 %v1918, 16
        %v1959 = vrot.slane %v1957, 1
        %v1960 = vor.u32 %v1955, %v1959
        %1961 = vrot.lane.b32.xlu0 %v817, 28
        %v1962 = vpop.permute.xlu0 %1961
        %1963 = vrot.lane.b32.xlu0 %v824, 28
        %v1964 = vpop.permute.xlu0 %1963
        %1965 = vrot.lane.b32.xlu0 %v831, 28
        %v1966 = vpop.permute.xlu0 %1965
        %1967 = vrot.lane.b32.xlu0 %v838, 28
        %v1968 = vpop.permute.xlu0 %1967
        %1969 = vrot.lane.b32.xlu0 %v845, 28
        %v1970 = vpop.permute.xlu0 %1969
        %1971 = vrot.lane.b32.xlu0 %v852, 28
        %v1972 = vpop.permute.xlu0 %1971
        %1973 = vrot.lane.b32.xlu0 %v1553, 28
        %v1974 = vpop.permute.xlu0 %1973
        %1975 = vrot.lane.b32.xlu0 %v1925, 28
        %v1976 = vpop.permute.xlu0 %1975
        %1977 = vrot.lane.b32.xlu0 %v873, 28
        %v1978 = vpop.permute.xlu0 %1977
        %1979 = vrot.lane.b32.xlu0 %v880, 28
        %v1980 = vpop.permute.xlu0 %1979
        %1981 = vrot.lane.b32.xlu0 %v887, 28
        %v1982 = vpop.permute.xlu0 %1981
        %1983 = vrot.lane.b32.xlu0 %v894, 28
        %v1984 = vpop.permute.xlu0 %1983
        %1985 = vrot.lane.b32.xlu0 %v901, 28
        %v1986 = vpop.permute.xlu0 %1985
        %1987 = vrot.lane.b32.xlu0 %v908, 28
        %v1988 = vpop.permute.xlu0 %1987
        %1989 = vrot.lane.b32.xlu0 %v1560, 28
        %v1990 = vpop.permute.xlu0 %1989
        %1991 = vrot.lane.b32.xlu0 %v1932, 28
        %v1992 = vpop.permute.xlu0 %1991
        %1993 = vrot.lane.b32.xlu0 %v929, 28
        %v1994 = vpop.permute.xlu0 %1993
        %1995 = vrot.lane.b32.xlu0 %v936, 28
        %v1996 = vpop.permute.xlu0 %1995
        %1997 = vrot.lane.b32.xlu0 %v943, 28
        %v1998 = vpop.permute.xlu0 %1997
        %1999 = vrot.lane.b32.xlu0 %v950, 28
        %v2000 = vpop.permute.xlu0 %1999
        %2001 = vrot.lane.b32.xlu0 %v957, 28
        %v2002 = vpop.permute.xlu0 %2001
        %2003 = vrot.lane.b32.xlu0 %v964, 28
        %v2004 = vpop.permute.xlu0 %2003
        %2005 = vrot.lane.b32.xlu0 %v1567, 28
        %v2006 = vpop.permute.xlu0 %2005
        %2007 = vrot.lane.b32.xlu0 %v1939, 28
        %v2008 = vpop.permute.xlu0 %2007
        %2009 = vrot.lane.b32.xlu0 %v985, 28
        %v2010 = vpop.permute.xlu0 %2009
        %2011 = vrot.lane.b32.xlu0 %v992, 28
        %v2012 = vpop.permute.xlu0 %2011
        %2013 = vrot.lane.b32.xlu0 %v999, 28
        %v2014 = vpop.permute.xlu0 %2013
        %2015 = vrot.lane.b32.xlu0 %v1006, 28
        %v2016 = vpop.permute.xlu0 %2015
        %2017 = vrot.lane.b32.xlu0 %v1013, 28
        %v2018 = vpop.permute.xlu0 %2017
        %2019 = vrot.lane.b32.xlu0 %v1020, 28
        %v2020 = vpop.permute.xlu0 %2019
        %2021 = vrot.lane.b32.xlu0 %v1574, 28
        %v2022 = vpop.permute.xlu0 %2021
        %2023 = vrot.lane.b32.xlu0 %v1946, 28
        %v2024 = vpop.permute.xlu0 %2023
        %2025 = vrot.lane.b32.xlu0 %v1041, 28
        %v2026 = vpop.permute.xlu0 %2025
        %2027 = vrot.lane.b32.xlu0 %v1048, 28
        %v2028 = vpop.permute.xlu0 %2027
        %2029 = vrot.lane.b32.xlu0 %v1055, 28
        %v2030 = vpop.permute.xlu0 %2029
        %2031 = vrot.lane.b32.xlu0 %v1062, 28
        %v2032 = vpop.permute.xlu0 %2031
        %2033 = vrot.lane.b32.xlu0 %v1069, 28
        %v2034 = vpop.permute.xlu0 %2033
        %2035 = vrot.lane.b32.xlu0 %v1076, 28
        %v2036 = vpop.permute.xlu0 %2035
        %2037 = vrot.lane.b32.xlu0 %v1581, 28
        %v2038 = vpop.permute.xlu0 %2037
        %2039 = vrot.lane.b32.xlu0 %v1953, 28
        %v2040 = vpop.permute.xlu0 %2039
        %2041 = vrot.lane.b32.xlu0 %v1097, 28
        %v2042 = vpop.permute.xlu0 %2041
        %2043 = vrot.lane.b32.xlu0 %v1104, 28
        %v2044 = vpop.permute.xlu0 %2043
        %2045 = vrot.lane.b32.xlu0 %v1111, 28
        %v2046 = vpop.permute.xlu0 %2045
        %2047 = vrot.lane.b32.xlu0 %v1118, 28
        %v2048 = vpop.permute.xlu0 %2047
        %2049 = vrot.lane.b32.xlu0 %v1125, 28
        %v2050 = vpop.permute.xlu0 %2049
        %2051 = vrot.lane.b32.xlu0 %v1132, 28
        %v2052 = vpop.permute.xlu0 %2051
        %2053 = vrot.lane.b32.xlu0 %v1588, 28
        %v2054 = vpop.permute.xlu0 %2053
        %2055 = vrot.lane.b32.xlu0 %v1960, 28
        %v2056 = vpop.permute.xlu0 %2055
        %v2057 = vrot.slane %v1913, 1
        %v2058 = vrot.slane %v1914, 1
        %v2059 = vrot.slane %v1915, 1
        %v2060 = vrot.slane %v1916, 1
        %v2061 = vrot.slane %v1917, 1
        %v2062 = vrot.slane %v1918, 1
        %2063 = vrot.lane.b32.xlu0 %v1231, 32
        %v2064 = vpop.permute.xlu0 %2063
        %2065 = vrot.lane.b32.xlu0 %v1232, 32
        %v2066 = vpop.permute.xlu0 %2065
        %2067 = vrot.lane.b32.xlu0 %v1233, 32
        %v2068 = vpop.permute.xlu0 %2067
        %2069 = vrot.lane.b32.xlu0 %v1234, 32
        %v2070 = vpop.permute.xlu0 %2069
        %2071 = vrot.lane.b32.xlu0 %v1235, 32
        %v2072 = vpop.permute.xlu0 %2071
        %2073 = vrot.lane.b32.xlu0 %v1236, 32
        %v2074 = vpop.permute.xlu0 %2073
        %2075 = vrot.lane.b32.xlu0 %v1685, 32
        %v2076 = vpop.permute.xlu0 %2075
        %2077 = vrot.lane.b32.xlu0 %v2057, 32
        %v2078 = vpop.permute.xlu0 %2077
        %2079 = vrot.lane.b32.xlu0 %v1239, 32
        %v2080 = vpop.permute.xlu0 %2079
        %2081 = vrot.lane.b32.xlu0 %v1240, 32
        %v2082 = vpop.permute.xlu0 %2081
        %2083 = vrot.lane.b32.xlu0 %v1241, 32
        %v2084 = vpop.permute.xlu0 %2083
        %2085 = vrot.lane.b32.xlu0 %v1242, 32
        %v2086 = vpop.permute.xlu0 %2085
        %2087 = vrot.lane.b32.xlu0 %v1243, 32
        %v2088 = vpop.permute.xlu0 %2087
        %2089 = vrot.lane.b32.xlu0 %v1244, 32
        %v2090 = vpop.permute.xlu0 %2089
        %2091 = vrot.lane.b32.xlu0 %v1686, 32
        %v2092 = vpop.permute.xlu0 %2091
        %2093 = vrot.lane.b32.xlu0 %v2058, 32
        %v2094 = vpop.permute.xlu0 %2093
        %2095 = vrot.lane.b32.xlu0 %v1247, 32
        %v2096 = vpop.permute.xlu0 %2095
        %2097 = vrot.lane.b32.xlu0 %v1248, 32
        %v2098 = vpop.permute.xlu0 %2097
        %2099 = vrot.lane.b32.xlu0 %v1249, 32
        %v2100 = vpop.permute.xlu0 %2099
        %2101 = vrot.lane.b32.xlu0 %v1250, 32
        %v2102 = vpop.permute.xlu0 %2101
        %2103 = vrot.lane.b32.xlu0 %v1251, 32
        %v2104 = vpop.permute.xlu0 %2103
        %2105 = vrot.lane.b32.xlu0 %v1252, 32
        %v2106 = vpop.permute.xlu0 %2105
        %2107 = vrot.lane.b32.xlu0 %v1687, 32
        %v2108 = vpop.permute.xlu0 %2107
        %2109 = vrot.lane.b32.xlu0 %v2059, 32
        %v2110 = vpop.permute.xlu0 %2109
        %2111 = vrot.lane.b32.xlu0 %v1255, 32
        %v2112 = vpop.permute.xlu0 %2111
        %2113 = vrot.lane.b32.xlu0 %v1256, 32
        %v2114 = vpop.permute.xlu0 %2113
        %2115 = vrot.lane.b32.xlu0 %v1257, 32
        %v2116 = vpop.permute.xlu0 %2115
        %2117 = vrot.lane.b32.xlu0 %v1258, 32
        %v2118 = vpop.permute.xlu0 %2117
        %2119 = vrot.lane.b32.xlu0 %v1259, 32
        %v2120 = vpop.permute.xlu0 %2119
        %2121 = vrot.lane.b32.xlu0 %v1260, 32
        %v2122 = vpop.permute.xlu0 %2121
        %2123 = vrot.lane.b32.xlu0 %v1688, 32
        %v2124 = vpop.permute.xlu0 %2123
        %2125 = vrot.lane.b32.xlu0 %v2060, 32
        %v2126 = vpop.permute.xlu0 %2125
        %2127 = vrot.lane.b32.xlu0 %v1263, 32
        %v2128 = vpop.permute.xlu0 %2127
        %2129 = vrot.lane.b32.xlu0 %v1264, 32
        %v2130 = vpop.permute.xlu0 %2129
        %2131 = vrot.lane.b32.xlu0 %v1265, 32
        %v2132 = vpop.permute.xlu0 %2131
        %2133 = vrot.lane.b32.xlu0 %v1266, 32
        %v2134 = vpop.permute.xlu0 %2133
        %2135 = vrot.lane.b32.xlu0 %v1267, 32
        %v2136 = vpop.permute.xlu0 %2135
        %2137 = vrot.lane.b32.xlu0 %v1268, 32
        %v2138 = vpop.permute.xlu0 %2137
        %2139 = vrot.lane.b32.xlu0 %v1689, 32
        %v2140 = vpop.permute.xlu0 %2139
        %2141 = vrot.lane.b32.xlu0 %v2061, 32
        %v2142 = vpop.permute.xlu0 %2141
        %2143 = vrot.lane.b32.xlu0 %v1271, 32
        %v2144 = vpop.permute.xlu0 %2143
        %2145 = vrot.lane.b32.xlu0 %v1272, 32
        %v2146 = vpop.permute.xlu0 %2145
        %2147 = vrot.lane.b32.xlu0 %v1273, 32
        %v2148 = vpop.permute.xlu0 %2147
        %2149 = vrot.lane.b32.xlu0 %v1274, 32
        %v2150 = vpop.permute.xlu0 %2149
        %2151 = vrot.lane.b32.xlu0 %v1275, 32
        %v2152 = vpop.permute.xlu0 %2151
        %2153 = vrot.lane.b32.xlu0 %v1276, 32
        %v2154 = vpop.permute.xlu0 %2153
        %2155 = vrot.lane.b32.xlu0 %v1690, 32
        %v2156 = vpop.permute.xlu0 %2155
        %2157 = vrot.lane.b32.xlu0 %v2062, 32
        %v2158 = vpop.permute.xlu0 %2157
        %v2207 = vunpack.c.l.b16 %v313
        %v2208 = vunpack.c.l.b16 %v315
        %v2209 = vunpack.c.l.b16 %v317
        %v2210 = vunpack.c.l.b16 %v319
        %v2211 = vunpack.c.l.b16 %v321
        %v2212 = vunpack.c.l.b16 %v323
        %v2213 = vunpack.c.l.b16 %v325
        %v2214 = vunpack.c.l.b16 %v327
        %v2215 = vunpack.c.l.b16 %v333
        %v2216 = vunpack.c.l.b16 %v335
        %v2217 = vunpack.c.l.b16 %v337
        %v2218 = vunpack.c.l.b16 %v339
        %v2219 = vunpack.c.l.b16 %v341
        %v2220 = vunpack.c.l.b16 %v343
        %v2221 = vunpack.c.l.b16 %v345
        %v2222 = vunpack.c.l.b16 %v347
        %v2223 = vunpack.c.l.b16 %v353
        %v2224 = vunpack.c.l.b16 %v355
        %v2225 = vunpack.c.l.b16 %v357
        %v2226 = vunpack.c.l.b16 %v359
        %v2227 = vunpack.c.l.b16 %v361
        %v2228 = vunpack.c.l.b16 %v363
        %v2229 = vunpack.c.l.b16 %v365
        %v2230 = vunpack.c.l.b16 %v367
        %v2231 = vunpack.c.l.b16 %v373
        %v2232 = vunpack.c.l.b16 %v375
        %v2233 = vunpack.c.l.b16 %v377
        %v2234 = vunpack.c.l.b16 %v379
        %v2235 = vunpack.c.l.b16 %v381
        %v2236 = vunpack.c.l.b16 %v383
        %v2237 = vunpack.c.l.b16 %v385
        %v2238 = vunpack.c.l.b16 %v387
        %v2239 = vunpack.c.l.b16 %v393
        %v2240 = vunpack.c.l.b16 %v395
        %v2241 = vunpack.c.l.b16 %v397
        %v2242 = vunpack.c.l.b16 %v399
        %v2243 = vunpack.c.l.b16 %v401
        %v2244 = vunpack.c.l.b16 %v403
        %v2245 = vunpack.c.l.b16 %v405
        %v2246 = vunpack.c.l.b16 %v407
        %v2247 = vunpack.c.l.b16 %v413
        %v2248 = vunpack.c.l.b16 %v415
        %v2249 = vunpack.c.l.b16 %v417
        %v2250 = vunpack.c.l.b16 %v419
        %v2251 = vunpack.c.l.b16 %v421
        %v2252 = vunpack.c.l.b16 %v423
        %v2253 = vunpack.c.l.b16 %v425
        %v2254 = vunpack.c.l.b16 %v427
        %v2255 = vpack.c.b16 %v2207, %v2207
        %v2256 = vpack.c.b16 %v2208, %v2208
        %v2257 = vpack.c.b16 %v2209, %v2209
        %v2258 = vpack.c.b16 %v2210, %v2210
        %v2259 = vpack.c.b16 %v2211, %v2211
        %v2260 = vpack.c.b16 %v2212, %v2212
        %v2261 = vpack.c.b16 %v2213, %v2213
        %v2262 = vpack.c.b16 %v2214, %v2214
        %v2263 = vpack.c.b16 %v2215, %v2215
        %v2264 = vpack.c.b16 %v2216, %v2216
        %v2265 = vpack.c.b16 %v2217, %v2217
        %v2266 = vpack.c.b16 %v2218, %v2218
        %v2267 = vpack.c.b16 %v2219, %v2219
        %v2268 = vpack.c.b16 %v2220, %v2220
        %v2269 = vpack.c.b16 %v2221, %v2221
        %v2270 = vpack.c.b16 %v2222, %v2222
        %v2271 = vpack.c.b16 %v2223, %v2223
        %v2272 = vpack.c.b16 %v2224, %v2224
        %v2273 = vpack.c.b16 %v2225, %v2225
        %v2274 = vpack.c.b16 %v2226, %v2226
        %v2275 = vpack.c.b16 %v2227, %v2227
        %v2276 = vpack.c.b16 %v2228, %v2228
        %v2277 = vpack.c.b16 %v2229, %v2229
        %v2278 = vpack.c.b16 %v2230, %v2230
        %v2279 = vpack.c.b16 %v2231, %v2231
        %v2280 = vpack.c.b16 %v2232, %v2232
        %v2281 = vpack.c.b16 %v2233, %v2233
        %v2282 = vpack.c.b16 %v2234, %v2234
        %v2283 = vpack.c.b16 %v2235, %v2235
        %v2284 = vpack.c.b16 %v2236, %v2236
        %v2285 = vpack.c.b16 %v2237, %v2237
        %v2286 = vpack.c.b16 %v2238, %v2238
        %v2287 = vpack.c.b16 %v2239, %v2239
        %v2288 = vpack.c.b16 %v2240, %v2240
        %v2289 = vpack.c.b16 %v2241, %v2241
        %v2290 = vpack.c.b16 %v2242, %v2242
        %v2291 = vpack.c.b16 %v2243, %v2243
        %v2292 = vpack.c.b16 %v2244, %v2244
        %v2293 = vpack.c.b16 %v2245, %v2245
        %v2294 = vpack.c.b16 %v2246, %v2246
        %v2295 = vpack.c.b16 %v2247, %v2247
        %v2296 = vpack.c.b16 %v2248, %v2248
        %v2297 = vpack.c.b16 %v2249, %v2249
        %v2298 = vpack.c.b16 %v2250, %v2250
        %v2299 = vpack.c.b16 %v2251, %v2251
        %v2300 = vpack.c.b16 %v2252, %v2252
        %v2301 = vpack.c.b16 %v2253, %v2253
        %v2302 = vpack.c.b16 %v2254, %v2254
        %2303 = vrot.lane.b32.xlu0 %v2255, 36
        %v2304 = vpop.permute.xlu0 %2303
        %2305 = vrot.lane.b32.xlu0 %v2256, 36
        %v2306 = vpop.permute.xlu0 %2305
        %2307 = vrot.lane.b32.xlu0 %v2257, 36
        %v2308 = vpop.permute.xlu0 %2307
        %2309 = vrot.lane.b32.xlu0 %v2258, 36
        %v2310 = vpop.permute.xlu0 %2309
        %2311 = vrot.lane.b32.xlu0 %v2259, 36
        %v2312 = vpop.permute.xlu0 %2311
        %2313 = vrot.lane.b32.xlu0 %v2260, 36
        %v2314 = vpop.permute.xlu0 %2313
        %2315 = vrot.lane.b32.xlu0 %v2261, 36
        %v2316 = vpop.permute.xlu0 %2315
        %2317 = vrot.lane.b32.xlu0 %v2262, 36
        %v2318 = vpop.permute.xlu0 %2317
        %2319 = vrot.lane.b32.xlu0 %v2263, 36
        %v2320 = vpop.permute.xlu0 %2319
        %2321 = vrot.lane.b32.xlu0 %v2264, 36
        %v2322 = vpop.permute.xlu0 %2321
        %2323 = vrot.lane.b32.xlu0 %v2265, 36
        %v2324 = vpop.permute.xlu0 %2323
        %2325 = vrot.lane.b32.xlu0 %v2266, 36
        %v2326 = vpop.permute.xlu0 %2325
        %2327 = vrot.lane.b32.xlu0 %v2267, 36
        %v2328 = vpop.permute.xlu0 %2327
        %2329 = vrot.lane.b32.xlu0 %v2268, 36
        %v2330 = vpop.permute.xlu0 %2329
        %2331 = vrot.lane.b32.xlu0 %v2269, 36
        %v2332 = vpop.permute.xlu0 %2331
        %2333 = vrot.lane.b32.xlu0 %v2270, 36
        %v2334 = vpop.permute.xlu0 %2333
        %2335 = vrot.lane.b32.xlu0 %v2271, 36
        %v2336 = vpop.permute.xlu0 %2335
        %2337 = vrot.lane.b32.xlu0 %v2272, 36
        %v2338 = vpop.permute.xlu0 %2337
        %2339 = vrot.lane.b32.xlu0 %v2273, 36
        %v2340 = vpop.permute.xlu0 %2339
        %2341 = vrot.lane.b32.xlu0 %v2274, 36
        %v2342 = vpop.permute.xlu0 %2341
        %2343 = vrot.lane.b32.xlu0 %v2275, 36
        %v2344 = vpop.permute.xlu0 %2343
        %2345 = vrot.lane.b32.xlu0 %v2276, 36
        %v2346 = vpop.permute.xlu0 %2345
        %2347 = vrot.lane.b32.xlu0 %v2277, 36
        %v2348 = vpop.permute.xlu0 %2347
        %2349 = vrot.lane.b32.xlu0 %v2278, 36
        %v2350 = vpop.permute.xlu0 %2349
        %2351 = vrot.lane.b32.xlu0 %v2279, 36
        %v2352 = vpop.permute.xlu0 %2351
        %2353 = vrot.lane.b32.xlu0 %v2280, 36
        %v2354 = vpop.permute.xlu0 %2353
        %2355 = vrot.lane.b32.xlu0 %v2281, 36
        %v2356 = vpop.permute.xlu0 %2355
        %2357 = vrot.lane.b32.xlu0 %v2282, 36
        %v2358 = vpop.permute.xlu0 %2357
        %2359 = vrot.lane.b32.xlu0 %v2283, 36
        %v2360 = vpop.permute.xlu0 %2359
        %2361 = vrot.lane.b32.xlu0 %v2284, 36
        %v2362 = vpop.permute.xlu0 %2361
        %2363 = vrot.lane.b32.xlu0 %v2285, 36
        %v2364 = vpop.permute.xlu0 %2363
        %2365 = vrot.lane.b32.xlu0 %v2286, 36
        %v2366 = vpop.permute.xlu0 %2365
        %2367 = vrot.lane.b32.xlu0 %v2287, 36
        %v2368 = vpop.permute.xlu0 %2367
        %2369 = vrot.lane.b32.xlu0 %v2288, 36
        %v2370 = vpop.permute.xlu0 %2369
        %2371 = vrot.lane.b32.xlu0 %v2289, 36
        %v2372 = vpop.permute.xlu0 %2371
        %2373 = vrot.lane.b32.xlu0 %v2290, 36
        %v2374 = vpop.permute.xlu0 %2373
        %2375 = vrot.lane.b32.xlu0 %v2291, 36
        %v2376 = vpop.permute.xlu0 %2375
        %2377 = vrot.lane.b32.xlu0 %v2292, 36
        %v2378 = vpop.permute.xlu0 %2377
        %2379 = vrot.lane.b32.xlu0 %v2293, 36
        %v2380 = vpop.permute.xlu0 %2379
        %2381 = vrot.lane.b32.xlu0 %v2294, 36
        %v2382 = vpop.permute.xlu0 %2381
        %2383 = vrot.lane.b32.xlu0 %v2295, 36
        %v2384 = vpop.permute.xlu0 %2383
        %2385 = vrot.lane.b32.xlu0 %v2296, 36
        %v2386 = vpop.permute.xlu0 %2385
        %2387 = vrot.lane.b32.xlu0 %v2297, 36
        %v2388 = vpop.permute.xlu0 %2387
        %2389 = vrot.lane.b32.xlu0 %v2298, 36
        %v2390 = vpop.permute.xlu0 %2389
        %2391 = vrot.lane.b32.xlu0 %v2299, 36
        %v2392 = vpop.permute.xlu0 %2391
        %2393 = vrot.lane.b32.xlu0 %v2300, 36
        %v2394 = vpop.permute.xlu0 %2393
        %2395 = vrot.lane.b32.xlu0 %v2301, 36
        %v2396 = vpop.permute.xlu0 %2395
        %2397 = vrot.lane.b32.xlu0 %v2302, 36
        %v2398 = vpop.permute.xlu0 %2397
        %v2447 = vunpack.c.l.b16 %v314
        %v2448 = vunpack.c.l.b16 %v316
        %v2449 = vunpack.c.l.b16 %v318
        %v2450 = vunpack.c.l.b16 %v320
        %v2451 = vunpack.c.l.b16 %v322
        %v2452 = vunpack.c.l.b16 %v324
        %v2453 = vunpack.c.l.b16 %v326
        %v2454 = vunpack.c.l.b16 %v328
        %v2455 = vunpack.c.l.b16 %v334
        %v2456 = vunpack.c.l.b16 %v336
        %v2457 = vunpack.c.l.b16 %v338
        %v2458 = vunpack.c.l.b16 %v340
        %v2459 = vunpack.c.l.b16 %v342
        %v2460 = vunpack.c.l.b16 %v344
        %v2461 = vunpack.c.l.b16 %v346
        %v2462 = vunpack.c.l.b16 %v348
        %v2463 = vunpack.c.l.b16 %v354
        %v2464 = vunpack.c.l.b16 %v356
        %v2465 = vunpack.c.l.b16 %v358
        %v2466 = vunpack.c.l.b16 %v360
        %v2467 = vunpack.c.l.b16 %v362
        %v2468 = vunpack.c.l.b16 %v364
        %v2469 = vunpack.c.l.b16 %v366
        %v2470 = vunpack.c.l.b16 %v368
        %v2471 = vunpack.c.l.b16 %v374
        %v2472 = vunpack.c.l.b16 %v376
        %v2473 = vunpack.c.l.b16 %v378
        %v2474 = vunpack.c.l.b16 %v380
        %v2475 = vunpack.c.l.b16 %v382
        %v2476 = vunpack.c.l.b16 %v384
        %v2477 = vunpack.c.l.b16 %v386
        %v2478 = vunpack.c.l.b16 %v388
        %v2479 = vunpack.c.l.b16 %v394
        %v2480 = vunpack.c.l.b16 %v396
        %v2481 = vunpack.c.l.b16 %v398
        %v2482 = vunpack.c.l.b16 %v400
        %v2483 = vunpack.c.l.b16 %v402
        %v2484 = vunpack.c.l.b16 %v404
        %v2485 = vunpack.c.l.b16 %v406
        %v2486 = vunpack.c.l.b16 %v408
        %v2487 = vunpack.c.l.b16 %v414
        %v2488 = vunpack.c.l.b16 %v416
        %v2489 = vunpack.c.l.b16 %v418
        %v2490 = vunpack.c.l.b16 %v420
        %v2491 = vunpack.c.l.b16 %v422
        %v2492 = vunpack.c.l.b16 %v424
        %v2493 = vunpack.c.l.b16 %v426
        %v2494 = vunpack.c.l.b16 %v428
        %v2495 = vpack.c.b16 %v2447, %v2207
        %v2496 = vpack.c.b16 %v2448, %v2208
        %v2497 = vpack.c.b16 %v2449, %v2209
        %v2498 = vpack.c.b16 %v2450, %v2210
        %v2499 = vpack.c.b16 %v2451, %v2211
        %v2500 = vpack.c.b16 %v2452, %v2212
        %v2501 = vpack.c.b16 %v2453, %v2213
        %v2502 = vpack.c.b16 %v2454, %v2214
        %v2503 = vpack.c.b16 %v2455, %v2215
        %v2504 = vpack.c.b16 %v2456, %v2216
        %v2505 = vpack.c.b16 %v2457, %v2217
        %v2506 = vpack.c.b16 %v2458, %v2218
        %v2507 = vpack.c.b16 %v2459, %v2219
        %v2508 = vpack.c.b16 %v2460, %v2220
        %v2509 = vpack.c.b16 %v2461, %v2221
        %v2510 = vpack.c.b16 %v2462, %v2222
        %v2511 = vpack.c.b16 %v2463, %v2223
        %v2512 = vpack.c.b16 %v2464, %v2224
        %v2513 = vpack.c.b16 %v2465, %v2225
        %v2514 = vpack.c.b16 %v2466, %v2226
        %v2515 = vpack.c.b16 %v2467, %v2227
        %v2516 = vpack.c.b16 %v2468, %v2228
        %v2517 = vpack.c.b16 %v2469, %v2229
        %v2518 = vpack.c.b16 %v2470, %v2230
        %v2519 = vpack.c.b16 %v2471, %v2231
        %v2520 = vpack.c.b16 %v2472, %v2232
        %v2521 = vpack.c.b16 %v2473, %v2233
        %v2522 = vpack.c.b16 %v2474, %v2234
        %v2523 = vpack.c.b16 %v2475, %v2235
        %v2524 = vpack.c.b16 %v2476, %v2236
        %v2525 = vpack.c.b16 %v2477, %v2237
        %v2526 = vpack.c.b16 %v2478, %v2238
        %v2527 = vpack.c.b16 %v2479, %v2239
        %v2528 = vpack.c.b16 %v2480, %v2240
        %v2529 = vpack.c.b16 %v2481, %v2241
        %v2530 = vpack.c.b16 %v2482, %v2242
        %v2531 = vpack.c.b16 %v2483, %v2243
        %v2532 = vpack.c.b16 %v2484, %v2244
        %v2533 = vpack.c.b16 %v2485, %v2245
        %v2534 = vpack.c.b16 %v2486, %v2246
        %v2535 = vpack.c.b16 %v2487, %v2247
        %v2536 = vpack.c.b16 %v2488, %v2248
        %v2537 = vpack.c.b16 %v2489, %v2249
        %v2538 = vpack.c.b16 %v2490, %v2250
        %v2539 = vpack.c.b16 %v2491, %v2251
        %v2540 = vpack.c.b16 %v2492, %v2252
        %v2541 = vpack.c.b16 %v2493, %v2253
        %v2542 = vpack.c.b16 %v2494, %v2254
        %v2544 = vshrl.u32 %v2495, 16
        %v2546 = vshll.u32 %v2495, 16
        %v2548 = vrot.slane %v2546, 1
        %v2549 = vor.u32 %v2544, %v2548
        %v2551 = vshrl.u32 %v2496, 16
        %v2553 = vshll.u32 %v2496, 16
        %v2555 = vrot.slane %v2553, 1
        %v2556 = vor.u32 %v2551, %v2555
        %v2558 = vshrl.u32 %v2497, 16
        %v2560 = vshll.u32 %v2497, 16
        %v2562 = vrot.slane %v2560, 1
        %v2563 = vor.u32 %v2558, %v2562
        %v2565 = vshrl.u32 %v2498, 16
        %v2567 = vshll.u32 %v2498, 16
        %v2569 = vrot.slane %v2567, 1
        %v2570 = vor.u32 %v2565, %v2569
        %v2572 = vshrl.u32 %v2499, 16
        %v2574 = vshll.u32 %v2499, 16
        %v2576 = vrot.slane %v2574, 1
        %v2577 = vor.u32 %v2572, %v2576
        %v2579 = vshrl.u32 %v2500, 16
        %v2581 = vshll.u32 %v2500, 16
        %v2583 = vrot.slane %v2581, 1
        %v2584 = vor.u32 %v2579, %v2583
        %v2586 = vshrl.u32 %v2501, 16
        %v2588 = vshll.u32 %v2501, 16
        %v2590 = vrot.slane %v2588, 1
        %v2591 = vor.u32 %v2586, %v2590
        %v2593 = vshrl.u32 %v2502, 16
        %v2595 = vshll.u32 %v2502, 16
        %v2597 = vrot.slane %v2595, 1
        %v2598 = vor.u32 %v2593, %v2597
        %v2600 = vshrl.u32 %v2503, 16
        %v2602 = vshll.u32 %v2503, 16
        %v2604 = vrot.slane %v2602, 1
        %v2605 = vor.u32 %v2600, %v2604
        %v2607 = vshrl.u32 %v2504, 16
        %v2609 = vshll.u32 %v2504, 16
        %v2611 = vrot.slane %v2609, 1
        %v2612 = vor.u32 %v2607, %v2611
        %v2614 = vshrl.u32 %v2505, 16
        %v2616 = vshll.u32 %v2505, 16
        %v2618 = vrot.slane %v2616, 1
        %v2619 = vor.u32 %v2614, %v2618
        %v2621 = vshrl.u32 %v2506, 16
        %v2623 = vshll.u32 %v2506, 16
        %v2625 = vrot.slane %v2623, 1
        %v2626 = vor.u32 %v2621, %v2625
        %v2628 = vshrl.u32 %v2507, 16
        %v2630 = vshll.u32 %v2507, 16
        %v2632 = vrot.slane %v2630, 1
        %v2633 = vor.u32 %v2628, %v2632
        %v2635 = vshrl.u32 %v2508, 16
        %v2637 = vshll.u32 %v2508, 16
        %v2639 = vrot.slane %v2637, 1
        %v2640 = vor.u32 %v2635, %v2639
        %v2642 = vshrl.u32 %v2509, 16
        %v2644 = vshll.u32 %v2509, 16
        %v2646 = vrot.slane %v2644, 1
        %v2647 = vor.u32 %v2642, %v2646
        %v2649 = vshrl.u32 %v2510, 16
        %v2651 = vshll.u32 %v2510, 16
        %v2653 = vrot.slane %v2651, 1
        %v2654 = vor.u32 %v2649, %v2653
        %v2656 = vshrl.u32 %v2511, 16
        %v2658 = vshll.u32 %v2511, 16
        %v2660 = vrot.slane %v2658, 1
        %v2661 = vor.u32 %v2656, %v2660
        %v2663 = vshrl.u32 %v2512, 16
        %v2665 = vshll.u32 %v2512, 16
        %v2667 = vrot.slane %v2665, 1
        %v2668 = vor.u32 %v2663, %v2667
        %v2670 = vshrl.u32 %v2513, 16
        %v2672 = vshll.u32 %v2513, 16
        %v2674 = vrot.slane %v2672, 1
        %v2675 = vor.u32 %v2670, %v2674
        %v2677 = vshrl.u32 %v2514, 16
        %v2679 = vshll.u32 %v2514, 16
        %v2681 = vrot.slane %v2679, 1
        %v2682 = vor.u32 %v2677, %v2681
        %v2684 = vshrl.u32 %v2515, 16
        %v2686 = vshll.u32 %v2515, 16
        %v2688 = vrot.slane %v2686, 1
        %v2689 = vor.u32 %v2684, %v2688
        %v2691 = vshrl.u32 %v2516, 16
        %v2693 = vshll.u32 %v2516, 16
        %v2695 = vrot.slane %v2693, 1
        %v2696 = vor.u32 %v2691, %v2695
        %v2698 = vshrl.u32 %v2517, 16
        %v2700 = vshll.u32 %v2517, 16
        %v2702 = vrot.slane %v2700, 1
        %v2703 = vor.u32 %v2698, %v2702
        %v2705 = vshrl.u32 %v2518, 16
        %v2707 = vshll.u32 %v2518, 16
        %v2709 = vrot.slane %v2707, 1
        %v2710 = vor.u32 %v2705, %v2709
        %v2712 = vshrl.u32 %v2519, 16
        %v2714 = vshll.u32 %v2519, 16
        %v2716 = vrot.slane %v2714, 1
        %v2717 = vor.u32 %v2712, %v2716
        %v2719 = vshrl.u32 %v2520, 16
        %v2721 = vshll.u32 %v2520, 16
        %v2723 = vrot.slane %v2721, 1
        %v2724 = vor.u32 %v2719, %v2723
        %v2726 = vshrl.u32 %v2521, 16
        %v2728 = vshll.u32 %v2521, 16
        %v2730 = vrot.slane %v2728, 1
        %v2731 = vor.u32 %v2726, %v2730
        %v2733 = vshrl.u32 %v2522, 16
        %v2735 = vshll.u32 %v2522, 16
        %v2737 = vrot.slane %v2735, 1
        %v2738 = vor.u32 %v2733, %v2737
        %v2740 = vshrl.u32 %v2523, 16
        %v2742 = vshll.u32 %v2523, 16
        %v2744 = vrot.slane %v2742, 1
        %v2745 = vor.u32 %v2740, %v2744
        %v2747 = vshrl.u32 %v2524, 16
        %v2749 = vshll.u32 %v2524, 16
        %v2751 = vrot.slane %v2749, 1
        %v2752 = vor.u32 %v2747, %v2751
        %v2754 = vshrl.u32 %v2525, 16
        %v2756 = vshll.u32 %v2525, 16
        %v2758 = vrot.slane %v2756, 1
        %v2759 = vor.u32 %v2754, %v2758
        %v2761 = vshrl.u32 %v2526, 16
        %v2763 = vshll.u32 %v2526, 16
        %v2765 = vrot.slane %v2763, 1
        %v2766 = vor.u32 %v2761, %v2765
        %v2768 = vshrl.u32 %v2527, 16
        %v2770 = vshll.u32 %v2527, 16
        %v2772 = vrot.slane %v2770, 1
        %v2773 = vor.u32 %v2768, %v2772
        %v2775 = vshrl.u32 %v2528, 16
        %v2777 = vshll.u32 %v2528, 16
        %v2779 = vrot.slane %v2777, 1
        %v2780 = vor.u32 %v2775, %v2779
        %v2782 = vshrl.u32 %v2529, 16
        %v2784 = vshll.u32 %v2529, 16
        %v2786 = vrot.slane %v2784, 1
        %v2787 = vor.u32 %v2782, %v2786
        %v2789 = vshrl.u32 %v2530, 16
        %v2791 = vshll.u32 %v2530, 16
        %v2793 = vrot.slane %v2791, 1
        %v2794 = vor.u32 %v2789, %v2793
        %v2796 = vshrl.u32 %v2531, 16
        %v2798 = vshll.u32 %v2531, 16
        %v2800 = vrot.slane %v2798, 1
        %v2801 = vor.u32 %v2796, %v2800
        %v2803 = vshrl.u32 %v2532, 16
        %v2805 = vshll.u32 %v2532, 16
        %v2807 = vrot.slane %v2805, 1
        %v2808 = vor.u32 %v2803, %v2807
        %v2810 = vshrl.u32 %v2533, 16
        %v2812 = vshll.u32 %v2533, 16
        %v2814 = vrot.slane %v2812, 1
        %v2815 = vor.u32 %v2810, %v2814
        %v2817 = vshrl.u32 %v2534, 16
        %v2819 = vshll.u32 %v2534, 16
        %v2821 = vrot.slane %v2819, 1
        %v2822 = vor.u32 %v2817, %v2821
        %v2824 = vshrl.u32 %v2535, 16
        %v2826 = vshll.u32 %v2535, 16
        %v2828 = vrot.slane %v2826, 1
        %v2829 = vor.u32 %v2824, %v2828
        %v2831 = vshrl.u32 %v2536, 16
        %v2833 = vshll.u32 %v2536, 16
        %v2835 = vrot.slane %v2833, 1
        %v2836 = vor.u32 %v2831, %v2835
        %v2838 = vshrl.u32 %v2537, 16
        %v2840 = vshll.u32 %v2537, 16
        %v2842 = vrot.slane %v2840, 1
        %v2843 = vor.u32 %v2838, %v2842
        %v2845 = vshrl.u32 %v2538, 16
        %v2847 = vshll.u32 %v2538, 16
        %v2849 = vrot.slane %v2847, 1
        %v2850 = vor.u32 %v2845, %v2849
        %v2852 = vshrl.u32 %v2539, 16
        %v2854 = vshll.u32 %v2539, 16
        %v2856 = vrot.slane %v2854, 1
        %v2857 = vor.u32 %v2852, %v2856
        %v2859 = vshrl.u32 %v2540, 16
        %v2861 = vshll.u32 %v2540, 16
        %v2863 = vrot.slane %v2861, 1
        %v2864 = vor.u32 %v2859, %v2863
        %v2866 = vshrl.u32 %v2541, 16
        %v2868 = vshll.u32 %v2541, 16
        %v2870 = vrot.slane %v2868, 1
        %v2871 = vor.u32 %v2866, %v2870
        %v2873 = vshrl.u32 %v2542, 16
        %v2875 = vshll.u32 %v2542, 16
        %v2877 = vrot.slane %v2875, 1
        %v2878 = vor.u32 %v2873, %v2877
        %2879 = vrot.lane.b32.xlu0 %v2549, 40
        %v2880 = vpop.permute.xlu0 %2879
        %2881 = vrot.lane.b32.xlu0 %v2556, 40
        %v2882 = vpop.permute.xlu0 %2881
        %2883 = vrot.lane.b32.xlu0 %v2563, 40
        %v2884 = vpop.permute.xlu0 %2883
        %2885 = vrot.lane.b32.xlu0 %v2570, 40
        %v2886 = vpop.permute.xlu0 %2885
        %2887 = vrot.lane.b32.xlu0 %v2577, 40
        %v2888 = vpop.permute.xlu0 %2887
        %2889 = vrot.lane.b32.xlu0 %v2584, 40
        %v2890 = vpop.permute.xlu0 %2889
        %2891 = vrot.lane.b32.xlu0 %v2591, 40
        %v2892 = vpop.permute.xlu0 %2891
        %2893 = vrot.lane.b32.xlu0 %v2598, 40
        %v2894 = vpop.permute.xlu0 %2893
        %2895 = vrot.lane.b32.xlu0 %v2605, 40
        %v2896 = vpop.permute.xlu0 %2895
        %2897 = vrot.lane.b32.xlu0 %v2612, 40
        %v2898 = vpop.permute.xlu0 %2897
        %2899 = vrot.lane.b32.xlu0 %v2619, 40
        %v2900 = vpop.permute.xlu0 %2899
        %2901 = vrot.lane.b32.xlu0 %v2626, 40
        %v2902 = vpop.permute.xlu0 %2901
        %2903 = vrot.lane.b32.xlu0 %v2633, 40
        %v2904 = vpop.permute.xlu0 %2903
        %2905 = vrot.lane.b32.xlu0 %v2640, 40
        %v2906 = vpop.permute.xlu0 %2905
        %2907 = vrot.lane.b32.xlu0 %v2647, 40
        %v2908 = vpop.permute.xlu0 %2907
        %2909 = vrot.lane.b32.xlu0 %v2654, 40
        %v2910 = vpop.permute.xlu0 %2909
        %2911 = vrot.lane.b32.xlu0 %v2661, 40
        %v2912 = vpop.permute.xlu0 %2911
        %2913 = vrot.lane.b32.xlu0 %v2668, 40
        %v2914 = vpop.permute.xlu0 %2913
        %2915 = vrot.lane.b32.xlu0 %v2675, 40
        %v2916 = vpop.permute.xlu0 %2915
        %2917 = vrot.lane.b32.xlu0 %v2682, 40
        %v2918 = vpop.permute.xlu0 %2917
        %2919 = vrot.lane.b32.xlu0 %v2689, 40
        %v2920 = vpop.permute.xlu0 %2919
        %2921 = vrot.lane.b32.xlu0 %v2696, 40
        %v2922 = vpop.permute.xlu0 %2921
        %2923 = vrot.lane.b32.xlu0 %v2703, 40
        %v2924 = vpop.permute.xlu0 %2923
        %2925 = vrot.lane.b32.xlu0 %v2710, 40
        %v2926 = vpop.permute.xlu0 %2925
        %2927 = vrot.lane.b32.xlu0 %v2717, 40
        %v2928 = vpop.permute.xlu0 %2927
        %2929 = vrot.lane.b32.xlu0 %v2724, 40
        %v2930 = vpop.permute.xlu0 %2929
        %2931 = vrot.lane.b32.xlu0 %v2731, 40
        %v2932 = vpop.permute.xlu0 %2931
        %2933 = vrot.lane.b32.xlu0 %v2738, 40
        %v2934 = vpop.permute.xlu0 %2933
        %2935 = vrot.lane.b32.xlu0 %v2745, 40
        %v2936 = vpop.permute.xlu0 %2935
        %2937 = vrot.lane.b32.xlu0 %v2752, 40
        %v2938 = vpop.permute.xlu0 %2937
        %2939 = vrot.lane.b32.xlu0 %v2759, 40
        %v2940 = vpop.permute.xlu0 %2939
        %2941 = vrot.lane.b32.xlu0 %v2766, 40
        %v2942 = vpop.permute.xlu0 %2941
        %2943 = vrot.lane.b32.xlu0 %v2773, 40
        %v2944 = vpop.permute.xlu0 %2943
        %2945 = vrot.lane.b32.xlu0 %v2780, 40
        %v2946 = vpop.permute.xlu0 %2945
        %2947 = vrot.lane.b32.xlu0 %v2787, 40
        %v2948 = vpop.permute.xlu0 %2947
        %2949 = vrot.lane.b32.xlu0 %v2794, 40
        %v2950 = vpop.permute.xlu0 %2949
        %2951 = vrot.lane.b32.xlu0 %v2801, 40
        %v2952 = vpop.permute.xlu0 %2951
        %2953 = vrot.lane.b32.xlu0 %v2808, 40
        %v2954 = vpop.permute.xlu0 %2953
        %2955 = vrot.lane.b32.xlu0 %v2815, 40
        %v2956 = vpop.permute.xlu0 %2955
        %2957 = vrot.lane.b32.xlu0 %v2822, 40
        %v2958 = vpop.permute.xlu0 %2957
        %2959 = vrot.lane.b32.xlu0 %v2829, 40
        %v2960 = vpop.permute.xlu0 %2959
        %2961 = vrot.lane.b32.xlu0 %v2836, 40
        %v2962 = vpop.permute.xlu0 %2961
        %2963 = vrot.lane.b32.xlu0 %v2843, 40
        %v2964 = vpop.permute.xlu0 %2963
        %2965 = vrot.lane.b32.xlu0 %v2850, 40
        %v2966 = vpop.permute.xlu0 %2965
        %2967 = vrot.lane.b32.xlu0 %v2857, 40
        %v2968 = vpop.permute.xlu0 %2967
        %2969 = vrot.lane.b32.xlu0 %v2864, 40
        %v2970 = vpop.permute.xlu0 %2969
        %2971 = vrot.lane.b32.xlu0 %v2871, 40
        %v2972 = vpop.permute.xlu0 %2971
        %2973 = vrot.lane.b32.xlu0 %v2878, 40
        %v2974 = vpop.permute.xlu0 %2973
        %v2975 = vrot.slane %v2495, 1
        %v2976 = vrot.slane %v2496, 1
        %v2977 = vrot.slane %v2497, 1
        %v2978 = vrot.slane %v2498, 1
        %v2979 = vrot.slane %v2499, 1
        %v2980 = vrot.slane %v2500, 1
        %v2981 = vrot.slane %v2501, 1
        %v2982 = vrot.slane %v2502, 1
        %v2983 = vrot.slane %v2503, 1
        %v2984 = vrot.slane %v2504, 1
        %v2985 = vrot.slane %v2505, 1
        %v2986 = vrot.slane %v2506, 1
        %v2987 = vrot.slane %v2507, 1
        %v2988 = vrot.slane %v2508, 1
        %v2989 = vrot.slane %v2509, 1
        %v2990 = vrot.slane %v2510, 1
        %v2991 = vrot.slane %v2511, 1
        %v2992 = vrot.slane %v2512, 1
        %v2993 = vrot.slane %v2513, 1
        %v2994 = vrot.slane %v2514, 1
        %v2995 = vrot.slane %v2515, 1
        %v2996 = vrot.slane %v2516, 1
        %v2997 = vrot.slane %v2517, 1
        %v2998 = vrot.slane %v2518, 1
        %v2999 = vrot.slane %v2519, 1
        %v3000 = vrot.slane %v2520, 1
        %v3001 = vrot.slane %v2521, 1
        %v3002 = vrot.slane %v2522, 1
        %v3003 = vrot.slane %v2523, 1
        %v3004 = vrot.slane %v2524, 1
        %v3005 = vrot.slane %v2525, 1
        %v3006 = vrot.slane %v2526, 1
        %v3007 = vrot.slane %v2527, 1
        %v3008 = vrot.slane %v2528, 1
        %v3009 = vrot.slane %v2529, 1
        %v3010 = vrot.slane %v2530, 1
        %v3011 = vrot.slane %v2531, 1
        %v3012 = vrot.slane %v2532, 1
        %v3013 = vrot.slane %v2533, 1
        %v3014 = vrot.slane %v2534, 1
        %v3015 = vrot.slane %v2535, 1
        %v3016 = vrot.slane %v2536, 1
        %v3017 = vrot.slane %v2537, 1
        %v3018 = vrot.slane %v2538, 1
        %v3019 = vrot.slane %v2539, 1
        %v3020 = vrot.slane %v2540, 1
        %v3021 = vrot.slane %v2541, 1
        %v3022 = vrot.slane %v2542, 1
        %3023 = vrot.lane.b32.xlu0 %v2975, 44
        %v3024 = vpop.permute.xlu0 %3023
        %3025 = vrot.lane.b32.xlu0 %v2976, 44
        %v3026 = vpop.permute.xlu0 %3025
        %3027 = vrot.lane.b32.xlu0 %v2977, 44
        %v3028 = vpop.permute.xlu0 %3027
        %3029 = vrot.lane.b32.xlu0 %v2978, 44
        %v3030 = vpop.permute.xlu0 %3029
        %3031 = vrot.lane.b32.xlu0 %v2979, 44
        %v3032 = vpop.permute.xlu0 %3031
        %3033 = vrot.lane.b32.xlu0 %v2980, 44
        %v3034 = vpop.permute.xlu0 %3033
        %3035 = vrot.lane.b32.xlu0 %v2981, 44
        %v3036 = vpop.permute.xlu0 %3035
        %3037 = vrot.lane.b32.xlu0 %v2982, 44
        %v3038 = vpop.permute.xlu0 %3037
        %3039 = vrot.lane.b32.xlu0 %v2983, 44
        %v3040 = vpop.permute.xlu0 %3039
        %3041 = vrot.lane.b32.xlu0 %v2984, 44
        %v3042 = vpop.permute.xlu0 %3041
        %3043 = vrot.lane.b32.xlu0 %v2985, 44
        %v3044 = vpop.permute.xlu0 %3043
        %3045 = vrot.lane.b32.xlu0 %v2986, 44
        %v3046 = vpop.permute.xlu0 %3045
        %3047 = vrot.lane.b32.xlu0 %v2987, 44
        %v3048 = vpop.permute.xlu0 %3047
        %3049 = vrot.lane.b32.xlu0 %v2988, 44
        %v3050 = vpop.permute.xlu0 %3049
        %3051 = vrot.lane.b32.xlu0 %v2989, 44
        %v3052 = vpop.permute.xlu0 %3051
        %3053 = vrot.lane.b32.xlu0 %v2990, 44
        %v3054 = vpop.permute.xlu0 %3053
        %3055 = vrot.lane.b32.xlu0 %v2991, 44
        %v3056 = vpop.permute.xlu0 %3055
        %3057 = vrot.lane.b32.xlu0 %v2992, 44
        %v3058 = vpop.permute.xlu0 %3057
        %3059 = vrot.lane.b32.xlu0 %v2993, 44
        %v3060 = vpop.permute.xlu0 %3059
        %3061 = vrot.lane.b32.xlu0 %v2994, 44
        %v3062 = vpop.permute.xlu0 %3061
        %3063 = vrot.lane.b32.xlu0 %v2995, 44
        %v3064 = vpop.permute.xlu0 %3063
        %3065 = vrot.lane.b32.xlu0 %v2996, 44
        %v3066 = vpop.permute.xlu0 %3065
        %3067 = vrot.lane.b32.xlu0 %v2997, 44
        %v3068 = vpop.permute.xlu0 %3067
        %3069 = vrot.lane.b32.xlu0 %v2998, 44
        %v3070 = vpop.permute.xlu0 %3069
        %3071 = vrot.lane.b32.xlu0 %v2999, 44
        %v3072 = vpop.permute.xlu0 %3071
        %3073 = vrot.lane.b32.xlu0 %v3000, 44
        %v3074 = vpop.permute.xlu0 %3073
        %3075 = vrot.lane.b32.xlu0 %v3001, 44
        %v3076 = vpop.permute.xlu0 %3075
        %3077 = vrot.lane.b32.xlu0 %v3002, 44
        %v3078 = vpop.permute.xlu0 %3077
        %3079 = vrot.lane.b32.xlu0 %v3003, 44
        %v3080 = vpop.permute.xlu0 %3079
        %3081 = vrot.lane.b32.xlu0 %v3004, 44
        %v3082 = vpop.permute.xlu0 %3081
        %3083 = vrot.lane.b32.xlu0 %v3005, 44
        %v3084 = vpop.permute.xlu0 %3083
        %3085 = vrot.lane.b32.xlu0 %v3006, 44
        %v3086 = vpop.permute.xlu0 %3085
        %3087 = vrot.lane.b32.xlu0 %v3007, 44
        %v3088 = vpop.permute.xlu0 %3087
        %3089 = vrot.lane.b32.xlu0 %v3008, 44
        %v3090 = vpop.permute.xlu0 %3089
        %3091 = vrot.lane.b32.xlu0 %v3009, 44
        %v3092 = vpop.permute.xlu0 %3091
        %3093 = vrot.lane.b32.xlu0 %v3010, 44
        %v3094 = vpop.permute.xlu0 %3093
        %3095 = vrot.lane.b32.xlu0 %v3011, 44
        %v3096 = vpop.permute.xlu0 %3095
        %3097 = vrot.lane.b32.xlu0 %v3012, 44
        %v3098 = vpop.permute.xlu0 %3097
        %3099 = vrot.lane.b32.xlu0 %v3013, 44
        %v3100 = vpop.permute.xlu0 %3099
        %3101 = vrot.lane.b32.xlu0 %v3014, 44
        %v3102 = vpop.permute.xlu0 %3101
        %3103 = vrot.lane.b32.xlu0 %v3015, 44
        %v3104 = vpop.permute.xlu0 %3103
        %3105 = vrot.lane.b32.xlu0 %v3016, 44
        %v3106 = vpop.permute.xlu0 %3105
        %3107 = vrot.lane.b32.xlu0 %v3017, 44
        %v3108 = vpop.permute.xlu0 %3107
        %3109 = vrot.lane.b32.xlu0 %v3018, 44
        %v3110 = vpop.permute.xlu0 %3109
        %3111 = vrot.lane.b32.xlu0 %v3019, 44
        %v3112 = vpop.permute.xlu0 %3111
        %3113 = vrot.lane.b32.xlu0 %v3020, 44
        %v3114 = vpop.permute.xlu0 %3113
        %3115 = vrot.lane.b32.xlu0 %v3021, 44
        %v3116 = vpop.permute.xlu0 %3115
        %3117 = vrot.lane.b32.xlu0 %v3022, 44
        %v3118 = vpop.permute.xlu0 %3117
        %v3125 = vunpack.c.l.b16 %v329
        %v3126 = vunpack.c.l.b16 %v349
        %v3127 = vunpack.c.l.b16 %v369
        %v3128 = vunpack.c.l.b16 %v389
        %v3129 = vunpack.c.l.b16 %v409
        %v3130 = vunpack.c.l.b16 %v429
        %v3131 = vpack.c.b16 %v3125, %v3125
        %v3132 = vpack.c.b16 %v3126, %v3126
        %v3133 = vpack.c.b16 %v3127, %v3127
        %v3134 = vpack.c.b16 %v3128, %v3128
        %v3135 = vpack.c.b16 %v3129, %v3129
        %v3136 = vpack.c.b16 %v3130, %v3130
        %3137 = vrot.lane.b32.xlu0 %v2256, 48
        %v3138 = vpop.permute.xlu0 %3137
        %3139 = vrot.lane.b32.xlu0 %v2257, 48
        %v3140 = vpop.permute.xlu0 %3139
        %3141 = vrot.lane.b32.xlu0 %v2258, 48
        %v3142 = vpop.permute.xlu0 %3141
        %3143 = vrot.lane.b32.xlu0 %v2259, 48
        %v3144 = vpop.permute.xlu0 %3143
        %3145 = vrot.lane.b32.xlu0 %v2260, 48
        %v3146 = vpop.permute.xlu0 %3145
        %3147 = vrot.lane.b32.xlu0 %v2261, 48
        %v3148 = vpop.permute.xlu0 %3147
        %3149 = vrot.lane.b32.xlu0 %v2262, 48
        %v3150 = vpop.permute.xlu0 %3149
        %3151 = vrot.lane.b32.xlu0 %v3131, 48
        %v3152 = vpop.permute.xlu0 %3151
        %3153 = vrot.lane.b32.xlu0 %v2264, 48
        %v3154 = vpop.permute.xlu0 %3153
        %3155 = vrot.lane.b32.xlu0 %v2265, 48
        %v3156 = vpop.permute.xlu0 %3155
        %3157 = vrot.lane.b32.xlu0 %v2266, 48
        %v3158 = vpop.permute.xlu0 %3157
        %3159 = vrot.lane.b32.xlu0 %v2267, 48
        %v3160 = vpop.permute.xlu0 %3159
        %3161 = vrot.lane.b32.xlu0 %v2268, 48
        %v3162 = vpop.permute.xlu0 %3161
        %3163 = vrot.lane.b32.xlu0 %v2269, 48
        %v3164 = vpop.permute.xlu0 %3163
        %3165 = vrot.lane.b32.xlu0 %v2270, 48
        %v3166 = vpop.permute.xlu0 %3165
        %3167 = vrot.lane.b32.xlu0 %v3132, 48
        %v3168 = vpop.permute.xlu0 %3167
        %3169 = vrot.lane.b32.xlu0 %v2272, 48
        %v3170 = vpop.permute.xlu0 %3169
        %3171 = vrot.lane.b32.xlu0 %v2273, 48
        %v3172 = vpop.permute.xlu0 %3171
        %3173 = vrot.lane.b32.xlu0 %v2274, 48
        %v3174 = vpop.permute.xlu0 %3173
        %3175 = vrot.lane.b32.xlu0 %v2275, 48
        %v3176 = vpop.permute.xlu0 %3175
        %3177 = vrot.lane.b32.xlu0 %v2276, 48
        %v3178 = vpop.permute.xlu0 %3177
        %3179 = vrot.lane.b32.xlu0 %v2277, 48
        %v3180 = vpop.permute.xlu0 %3179
        %3181 = vrot.lane.b32.xlu0 %v2278, 48
        %v3182 = vpop.permute.xlu0 %3181
        %3183 = vrot.lane.b32.xlu0 %v3133, 48
        %v3184 = vpop.permute.xlu0 %3183
        %3185 = vrot.lane.b32.xlu0 %v2280, 48
        %v3186 = vpop.permute.xlu0 %3185
        %3187 = vrot.lane.b32.xlu0 %v2281, 48
        %v3188 = vpop.permute.xlu0 %3187
        %3189 = vrot.lane.b32.xlu0 %v2282, 48
        %v3190 = vpop.permute.xlu0 %3189
        %3191 = vrot.lane.b32.xlu0 %v2283, 48
        %v3192 = vpop.permute.xlu0 %3191
        %3193 = vrot.lane.b32.xlu0 %v2284, 48
        %v3194 = vpop.permute.xlu0 %3193
        %3195 = vrot.lane.b32.xlu0 %v2285, 48
        %v3196 = vpop.permute.xlu0 %3195
        %3197 = vrot.lane.b32.xlu0 %v2286, 48
        %v3198 = vpop.permute.xlu0 %3197
        %3199 = vrot.lane.b32.xlu0 %v3134, 48
        %v3200 = vpop.permute.xlu0 %3199
        %3201 = vrot.lane.b32.xlu0 %v2288, 48
        %v3202 = vpop.permute.xlu0 %3201
        %3203 = vrot.lane.b32.xlu0 %v2289, 48
        %v3204 = vpop.permute.xlu0 %3203
        %3205 = vrot.lane.b32.xlu0 %v2290, 48
        %v3206 = vpop.permute.xlu0 %3205
        %3207 = vrot.lane.b32.xlu0 %v2291, 48
        %v3208 = vpop.permute.xlu0 %3207
        %3209 = vrot.lane.b32.xlu0 %v2292, 48
        %v3210 = vpop.permute.xlu0 %3209
        %3211 = vrot.lane.b32.xlu0 %v2293, 48
        %v3212 = vpop.permute.xlu0 %3211
        %3213 = vrot.lane.b32.xlu0 %v2294, 48
        %v3214 = vpop.permute.xlu0 %3213
        %3215 = vrot.lane.b32.xlu0 %v3135, 48
        %v3216 = vpop.permute.xlu0 %3215
        %3217 = vrot.lane.b32.xlu0 %v2296, 48
        %v3218 = vpop.permute.xlu0 %3217
        %3219 = vrot.lane.b32.xlu0 %v2297, 48
        %v3220 = vpop.permute.xlu0 %3219
        %3221 = vrot.lane.b32.xlu0 %v2298, 48
        %v3222 = vpop.permute.xlu0 %3221
        %3223 = vrot.lane.b32.xlu0 %v2299, 48
        %v3224 = vpop.permute.xlu0 %3223
        %3225 = vrot.lane.b32.xlu0 %v2300, 48
        %v3226 = vpop.permute.xlu0 %3225
        %3227 = vrot.lane.b32.xlu0 %v2301, 48
        %v3228 = vpop.permute.xlu0 %3227
        %3229 = vrot.lane.b32.xlu0 %v2302, 48
        %v3230 = vpop.permute.xlu0 %3229
        %3231 = vrot.lane.b32.xlu0 %v3136, 48
        %v3232 = vpop.permute.xlu0 %3231
        %v3239 = vunpack.c.l.b16 %v330
        %v3240 = vunpack.c.l.b16 %v350
        %v3241 = vunpack.c.l.b16 %v370
        %v3242 = vunpack.c.l.b16 %v390
        %v3243 = vunpack.c.l.b16 %v410
        %v3244 = vunpack.c.l.b16 %v430
        %v3245 = vpack.c.b16 %v3239, %v3125
        %v3246 = vpack.c.b16 %v3240, %v3126
        %v3247 = vpack.c.b16 %v3241, %v3127
        %v3248 = vpack.c.b16 %v3242, %v3128
        %v3249 = vpack.c.b16 %v3243, %v3129
        %v3250 = vpack.c.b16 %v3244, %v3130
        %v3252 = vshrl.u32 %v3245, 16
        %v3254 = vshll.u32 %v3245, 16
        %v3256 = vrot.slane %v3254, 1
        %v3257 = vor.u32 %v3252, %v3256
        %v3259 = vshrl.u32 %v3246, 16
        %v3261 = vshll.u32 %v3246, 16
        %v3263 = vrot.slane %v3261, 1
        %v3264 = vor.u32 %v3259, %v3263
        %v3266 = vshrl.u32 %v3247, 16
        %v3268 = vshll.u32 %v3247, 16
        %v3270 = vrot.slane %v3268, 1
        %v3271 = vor.u32 %v3266, %v3270
        %v3273 = vshrl.u32 %v3248, 16
        %v3275 = vshll.u32 %v3248, 16
        %v3277 = vrot.slane %v3275, 1
        %v3278 = vor.u32 %v3273, %v3277
        %v3280 = vshrl.u32 %v3249, 16
        %v3282 = vshll.u32 %v3249, 16
        %v3284 = vrot.slane %v3282, 1
        %v3285 = vor.u32 %v3280, %v3284
        %v3287 = vshrl.u32 %v3250, 16
        %v3289 = vshll.u32 %v3250, 16
        %v3291 = vrot.slane %v3289, 1
        %v3292 = vor.u32 %v3287, %v3291
        %3293 = vrot.lane.b32.xlu0 %v2556, 52
        %v3294 = vpop.permute.xlu0 %3293
        %3295 = vrot.lane.b32.xlu0 %v2563, 52
        %v3296 = vpop.permute.xlu0 %3295
        %3297 = vrot.lane.b32.xlu0 %v2570, 52
        %v3298 = vpop.permute.xlu0 %3297
        %3299 = vrot.lane.b32.xlu0 %v2577, 52
        %v3300 = vpop.permute.xlu0 %3299
        %3301 = vrot.lane.b32.xlu0 %v2584, 52
        %v3302 = vpop.permute.xlu0 %3301
        %3303 = vrot.lane.b32.xlu0 %v2591, 52
        %v3304 = vpop.permute.xlu0 %3303
        %3305 = vrot.lane.b32.xlu0 %v2598, 52
        %v3306 = vpop.permute.xlu0 %3305
        %3307 = vrot.lane.b32.xlu0 %v3257, 52
        %v3308 = vpop.permute.xlu0 %3307
        %3309 = vrot.lane.b32.xlu0 %v2612, 52
        %v3310 = vpop.permute.xlu0 %3309
        %3311 = vrot.lane.b32.xlu0 %v2619, 52
        %v3312 = vpop.permute.xlu0 %3311
        %3313 = vrot.lane.b32.xlu0 %v2626, 52
        %v3314 = vpop.permute.xlu0 %3313
        %3315 = vrot.lane.b32.xlu0 %v2633, 52
        %v3316 = vpop.permute.xlu0 %3315
        %3317 = vrot.lane.b32.xlu0 %v2640, 52
        %v3318 = vpop.permute.xlu0 %3317
        %3319 = vrot.lane.b32.xlu0 %v2647, 52
        %v3320 = vpop.permute.xlu0 %3319
        %3321 = vrot.lane.b32.xlu0 %v2654, 52
        %v3322 = vpop.permute.xlu0 %3321
        %3323 = vrot.lane.b32.xlu0 %v3264, 52
        %v3324 = vpop.permute.xlu0 %3323
        %3325 = vrot.lane.b32.xlu0 %v2668, 52
        %v3326 = vpop.permute.xlu0 %3325
        %3327 = vrot.lane.b32.xlu0 %v2675, 52
        %v3328 = vpop.permute.xlu0 %3327
        %3329 = vrot.lane.b32.xlu0 %v2682, 52
        %v3330 = vpop.permute.xlu0 %3329
        %3331 = vrot.lane.b32.xlu0 %v2689, 52
        %v3332 = vpop.permute.xlu0 %3331
        %3333 = vrot.lane.b32.xlu0 %v2696, 52
        %v3334 = vpop.permute.xlu0 %3333
        %3335 = vrot.lane.b32.xlu0 %v2703, 52
        %v3336 = vpop.permute.xlu0 %3335
        %3337 = vrot.lane.b32.xlu0 %v2710, 52
        %v3338 = vpop.permute.xlu0 %3337
        %3339 = vrot.lane.b32.xlu0 %v3271, 52
        %v3340 = vpop.permute.xlu0 %3339
        %3341 = vrot.lane.b32.xlu0 %v2724, 52
        %v3342 = vpop.permute.xlu0 %3341
        %3343 = vrot.lane.b32.xlu0 %v2731, 52
        %v3344 = vpop.permute.xlu0 %3343
        %3345 = vrot.lane.b32.xlu0 %v2738, 52
        %v3346 = vpop.permute.xlu0 %3345
        %3347 = vrot.lane.b32.xlu0 %v2745, 52
        %v3348 = vpop.permute.xlu0 %3347
        %3349 = vrot.lane.b32.xlu0 %v2752, 52
        %v3350 = vpop.permute.xlu0 %3349
        %3351 = vrot.lane.b32.xlu0 %v2759, 52
        %v3352 = vpop.permute.xlu0 %3351
        %3353 = vrot.lane.b32.xlu0 %v2766, 52
        %v3354 = vpop.permute.xlu0 %3353
        %3355 = vrot.lane.b32.xlu0 %v3278, 52
        %v3356 = vpop.permute.xlu0 %3355
        %3357 = vrot.lane.b32.xlu0 %v2780, 52
        %v3358 = vpop.permute.xlu0 %3357
        %3359 = vrot.lane.b32.xlu0 %v2787, 52
        %v3360 = vpop.permute.xlu0 %3359
        %3361 = vrot.lane.b32.xlu0 %v2794, 52
        %v3362 = vpop.permute.xlu0 %3361
        %3363 = vrot.lane.b32.xlu0 %v2801, 52
        %v3364 = vpop.permute.xlu0 %3363
        %3365 = vrot.lane.b32.xlu0 %v2808, 52
        %v3366 = vpop.permute.xlu0 %3365
        %3367 = vrot.lane.b32.xlu0 %v2815, 52
        %v3368 = vpop.permute.xlu0 %3367
        %3369 = vrot.lane.b32.xlu0 %v2822, 52
        %v3370 = vpop.permute.xlu0 %3369
        %3371 = vrot.lane.b32.xlu0 %v3285, 52
        %v3372 = vpop.permute.xlu0 %3371
        %3373 = vrot.lane.b32.xlu0 %v2836, 52
        %v3374 = vpop.permute.xlu0 %3373
        %3375 = vrot.lane.b32.xlu0 %v2843, 52
        %v3376 = vpop.permute.xlu0 %3375
        %3377 = vrot.lane.b32.xlu0 %v2850, 52
        %v3378 = vpop.permute.xlu0 %3377
        %3379 = vrot.lane.b32.xlu0 %v2857, 52
        %v3380 = vpop.permute.xlu0 %3379
        %3381 = vrot.lane.b32.xlu0 %v2864, 52
        %v3382 = vpop.permute.xlu0 %3381
        %3383 = vrot.lane.b32.xlu0 %v2871, 52
        %v3384 = vpop.permute.xlu0 %3383
        %3385 = vrot.lane.b32.xlu0 %v2878, 52
        %v3386 = vpop.permute.xlu0 %3385
        %3387 = vrot.lane.b32.xlu0 %v3292, 52
        %v3388 = vpop.permute.xlu0 %3387
        %v3389 = vrot.slane %v3245, 1
        %v3390 = vrot.slane %v3246, 1
        %v3391 = vrot.slane %v3247, 1
        %v3392 = vrot.slane %v3248, 1
        %v3393 = vrot.slane %v3249, 1
        %v3394 = vrot.slane %v3250, 1
        %3395 = vrot.lane.b32.xlu0 %v2976, 56
        %v3396 = vpop.permute.xlu0 %3395
        %3397 = vrot.lane.b32.xlu0 %v2977, 56
        %v3398 = vpop.permute.xlu0 %3397
        %3399 = vrot.lane.b32.xlu0 %v2978, 56
        %v3400 = vpop.permute.xlu0 %3399
        %3401 = vrot.lane.b32.xlu0 %v2979, 56
        %v3402 = vpop.permute.xlu0 %3401
        %3403 = vrot.lane.b32.xlu0 %v2980, 56
        %v3404 = vpop.permute.xlu0 %3403
        %3405 = vrot.lane.b32.xlu0 %v2981, 56
        %v3406 = vpop.permute.xlu0 %3405
        %3407 = vrot.lane.b32.xlu0 %v2982, 56
        %v3408 = vpop.permute.xlu0 %3407
        %3409 = vrot.lane.b32.xlu0 %v3389, 56
        %v3410 = vpop.permute.xlu0 %3409
        %3411 = vrot.lane.b32.xlu0 %v2984, 56
        %v3412 = vpop.permute.xlu0 %3411
        %3413 = vrot.lane.b32.xlu0 %v2985, 56
        %v3414 = vpop.permute.xlu0 %3413
        %3415 = vrot.lane.b32.xlu0 %v2986, 56
        %v3416 = vpop.permute.xlu0 %3415
        %3417 = vrot.lane.b32.xlu0 %v2987, 56
        %v3418 = vpop.permute.xlu0 %3417
        %3419 = vrot.lane.b32.xlu0 %v2988, 56
        %v3420 = vpop.permute.xlu0 %3419
        %3421 = vrot.lane.b32.xlu0 %v2989, 56
        %v3422 = vpop.permute.xlu0 %3421
        %3423 = vrot.lane.b32.xlu0 %v2990, 56
        %v3424 = vpop.permute.xlu0 %3423
        %3425 = vrot.lane.b32.xlu0 %v3390, 56
        %v3426 = vpop.permute.xlu0 %3425
        %3427 = vrot.lane.b32.xlu0 %v2992, 56
        %v3428 = vpop.permute.xlu0 %3427
        %3429 = vrot.lane.b32.xlu0 %v2993, 56
        %v3430 = vpop.permute.xlu0 %3429
        %3431 = vrot.lane.b32.xlu0 %v2994, 56
        %v3432 = vpop.permute.xlu0 %3431
        %3433 = vrot.lane.b32.xlu0 %v2995, 56
        %v3434 = vpop.permute.xlu0 %3433
        %3435 = vrot.lane.b32.xlu0 %v2996, 56
        %v3436 = vpop.permute.xlu0 %3435
        %3437 = vrot.lane.b32.xlu0 %v2997, 56
        %v3438 = vpop.permute.xlu0 %3437
        %3439 = vrot.lane.b32.xlu0 %v2998, 56
        %v3440 = vpop.permute.xlu0 %3439
        %3441 = vrot.lane.b32.xlu0 %v3391, 56
        %v3442 = vpop.permute.xlu0 %3441
        %3443 = vrot.lane.b32.xlu0 %v3000, 56
        %v3444 = vpop.permute.xlu0 %3443
        %3445 = vrot.lane.b32.xlu0 %v3001, 56
        %v3446 = vpop.permute.xlu0 %3445
        %3447 = vrot.lane.b32.xlu0 %v3002, 56
        %v3448 = vpop.permute.xlu0 %3447
        %3449 = vrot.lane.b32.xlu0 %v3003, 56
        %v3450 = vpop.permute.xlu0 %3449
        %3451 = vrot.lane.b32.xlu0 %v3004, 56
        %v3452 = vpop.permute.xlu0 %3451
        %3453 = vrot.lane.b32.xlu0 %v3005, 56
        %v3454 = vpop.permute.xlu0 %3453
        %3455 = vrot.lane.b32.xlu0 %v3006, 56
        %v3456 = vpop.permute.xlu0 %3455
        %3457 = vrot.lane.b32.xlu0 %v3392, 56
        %v3458 = vpop.permute.xlu0 %3457
        %3459 = vrot.lane.b32.xlu0 %v3008, 56
        %v3460 = vpop.permute.xlu0 %3459
        %3461 = vrot.lane.b32.xlu0 %v3009, 56
        %v3462 = vpop.permute.xlu0 %3461
        %3463 = vrot.lane.b32.xlu0 %v3010, 56
        %v3464 = vpop.permute.xlu0 %3463
        %3465 = vrot.lane.b32.xlu0 %v3011, 56
        %v3466 = vpop.permute.xlu0 %3465
        %3467 = vrot.lane.b32.xlu0 %v3012, 56
        %v3468 = vpop.permute.xlu0 %3467
        %3469 = vrot.lane.b32.xlu0 %v3013, 56
        %v3470 = vpop.permute.xlu0 %3469
        %3471 = vrot.lane.b32.xlu0 %v3014, 56
        %v3472 = vpop.permute.xlu0 %3471
        %3473 = vrot.lane.b32.xlu0 %v3393, 56
        %v3474 = vpop.permute.xlu0 %3473
        %3475 = vrot.lane.b32.xlu0 %v3016, 56
        %v3476 = vpop.permute.xlu0 %3475
        %3477 = vrot.lane.b32.xlu0 %v3017, 56
        %v3478 = vpop.permute.xlu0 %3477
        %3479 = vrot.lane.b32.xlu0 %v3018, 56
        %v3480 = vpop.permute.xlu0 %3479
        %3481 = vrot.lane.b32.xlu0 %v3019, 56
        %v3482 = vpop.permute.xlu0 %3481
        %3483 = vrot.lane.b32.xlu0 %v3020, 56
        %v3484 = vpop.permute.xlu0 %3483
        %3485 = vrot.lane.b32.xlu0 %v3021, 56
        %v3486 = vpop.permute.xlu0 %3485
        %3487 = vrot.lane.b32.xlu0 %v3022, 56
        %v3488 = vpop.permute.xlu0 %3487
        %3489 = vrot.lane.b32.xlu0 %v3394, 56
        %v3490 = vpop.permute.xlu0 %3489
        %v3497 = vunpack.c.l.b16 %v331
        %v3498 = vunpack.c.l.b16 %v351
        %v3499 = vunpack.c.l.b16 %v371
        %v3500 = vunpack.c.l.b16 %v391
        %v3501 = vunpack.c.l.b16 %v411
        %v3502 = vunpack.c.l.b16 %v431
        %v3503 = vpack.c.b16 %v3497, %v3497
        %v3504 = vpack.c.b16 %v3498, %v3498
        %v3505 = vpack.c.b16 %v3499, %v3499
        %v3506 = vpack.c.b16 %v3500, %v3500
        %v3507 = vpack.c.b16 %v3501, %v3501
        %v3508 = vpack.c.b16 %v3502, %v3502
        %3509 = vrot.lane.b32.xlu0 %v2257, 60
        %v3510 = vpop.permute.xlu0 %3509
        %3511 = vrot.lane.b32.xlu0 %v2258, 60
        %v3512 = vpop.permute.xlu0 %3511
        %3513 = vrot.lane.b32.xlu0 %v2259, 60
        %v3514 = vpop.permute.xlu0 %3513
        %3515 = vrot.lane.b32.xlu0 %v2260, 60
        %v3516 = vpop.permute.xlu0 %3515
        %3517 = vrot.lane.b32.xlu0 %v2261, 60
        %v3518 = vpop.permute.xlu0 %3517
        %3519 = vrot.lane.b32.xlu0 %v2262, 60
        %v3520 = vpop.permute.xlu0 %3519
        %3521 = vrot.lane.b32.xlu0 %v3131, 60
        %v3522 = vpop.permute.xlu0 %3521
        %3523 = vrot.lane.b32.xlu0 %v3503, 60
        %v3524 = vpop.permute.xlu0 %3523
        %3525 = vrot.lane.b32.xlu0 %v2265, 60
        %v3526 = vpop.permute.xlu0 %3525
        %3527 = vrot.lane.b32.xlu0 %v2266, 60
        %v3528 = vpop.permute.xlu0 %3527
        %3529 = vrot.lane.b32.xlu0 %v2267, 60
        %v3530 = vpop.permute.xlu0 %3529
        %3531 = vrot.lane.b32.xlu0 %v2268, 60
        %v3532 = vpop.permute.xlu0 %3531
        %3533 = vrot.lane.b32.xlu0 %v2269, 60
        %v3534 = vpop.permute.xlu0 %3533
        %3535 = vrot.lane.b32.xlu0 %v2270, 60
        %v3536 = vpop.permute.xlu0 %3535
        %3537 = vrot.lane.b32.xlu0 %v3132, 60
        %v3538 = vpop.permute.xlu0 %3537
        %3539 = vrot.lane.b32.xlu0 %v3504, 60
        %v3540 = vpop.permute.xlu0 %3539
        %3541 = vrot.lane.b32.xlu0 %v2273, 60
        %v3542 = vpop.permute.xlu0 %3541
        %3543 = vrot.lane.b32.xlu0 %v2274, 60
        %v3544 = vpop.permute.xlu0 %3543
        %3545 = vrot.lane.b32.xlu0 %v2275, 60
        %v3546 = vpop.permute.xlu0 %3545
        %3547 = vrot.lane.b32.xlu0 %v2276, 60
        %v3548 = vpop.permute.xlu0 %3547
        %3549 = vrot.lane.b32.xlu0 %v2277, 60
        %v3550 = vpop.permute.xlu0 %3549
        %3551 = vrot.lane.b32.xlu0 %v2278, 60
        %v3552 = vpop.permute.xlu0 %3551
        %3553 = vrot.lane.b32.xlu0 %v3133, 60
        %v3554 = vpop.permute.xlu0 %3553
        %3555 = vrot.lane.b32.xlu0 %v3505, 60
        %v3556 = vpop.permute.xlu0 %3555
        %3557 = vrot.lane.b32.xlu0 %v2281, 60
        %v3558 = vpop.permute.xlu0 %3557
        %3559 = vrot.lane.b32.xlu0 %v2282, 60
        %v3560 = vpop.permute.xlu0 %3559
        %3561 = vrot.lane.b32.xlu0 %v2283, 60
        %v3562 = vpop.permute.xlu0 %3561
        %3563 = vrot.lane.b32.xlu0 %v2284, 60
        %v3564 = vpop.permute.xlu0 %3563
        %3565 = vrot.lane.b32.xlu0 %v2285, 60
        %v3566 = vpop.permute.xlu0 %3565
        %3567 = vrot.lane.b32.xlu0 %v2286, 60
        %v3568 = vpop.permute.xlu0 %3567
        %3569 = vrot.lane.b32.xlu0 %v3134, 60
        %v3570 = vpop.permute.xlu0 %3569
        %3571 = vrot.lane.b32.xlu0 %v3506, 60
        %v3572 = vpop.permute.xlu0 %3571
        %3573 = vrot.lane.b32.xlu0 %v2289, 60
        %v3574 = vpop.permute.xlu0 %3573
        %3575 = vrot.lane.b32.xlu0 %v2290, 60
        %v3576 = vpop.permute.xlu0 %3575
        %3577 = vrot.lane.b32.xlu0 %v2291, 60
        %v3578 = vpop.permute.xlu0 %3577
        %3579 = vrot.lane.b32.xlu0 %v2292, 60
        %v3580 = vpop.permute.xlu0 %3579
        %3581 = vrot.lane.b32.xlu0 %v2293, 60
        %v3582 = vpop.permute.xlu0 %3581
        %3583 = vrot.lane.b32.xlu0 %v2294, 60
        %v3584 = vpop.permute.xlu0 %3583
        %3585 = vrot.lane.b32.xlu0 %v3135, 60
        %v3586 = vpop.permute.xlu0 %3585
        %3587 = vrot.lane.b32.xlu0 %v3507, 60
        %v3588 = vpop.permute.xlu0 %3587
        %3589 = vrot.lane.b32.xlu0 %v2297, 60
        %v3590 = vpop.permute.xlu0 %3589
        %3591 = vrot.lane.b32.xlu0 %v2298, 60
        %v3592 = vpop.permute.xlu0 %3591
        %3593 = vrot.lane.b32.xlu0 %v2299, 60
        %v3594 = vpop.permute.xlu0 %3593
        %3595 = vrot.lane.b32.xlu0 %v2300, 60
        %v3596 = vpop.permute.xlu0 %3595
        %3597 = vrot.lane.b32.xlu0 %v2301, 60
        %v3598 = vpop.permute.xlu0 %3597
        %3599 = vrot.lane.b32.xlu0 %v2302, 60
        %v3600 = vpop.permute.xlu0 %3599
        %3601 = vrot.lane.b32.xlu0 %v3136, 60
        %v3602 = vpop.permute.xlu0 %3601
        %3603 = vrot.lane.b32.xlu0 %v3508, 60
        %v3604 = vpop.permute.xlu0 %3603
        %vm3605 = vcmask 31744
        %v3608 = vsel %vm3605, %v189, %v1134
        %v3611 = vsel %vm3605, %v191, %v1136
        %v3614 = vsel %vm3605, %v193, %v1138
        %v3617 = vsel %vm3605, %v195, %v1140
        %v3620 = vsel %vm3605, %v197, %v1142
        %v3623 = vsel %vm3605, %v199, %v1144
        %v3626 = vsel %vm3605, %v201, %v1146
        %v3629 = vsel %vm3605, %v203, %v1148
        %v3632 = vsel %vm3605, %v209, %v1150
        %v3635 = vsel %vm3605, %v211, %v1152
        %v3638 = vsel %vm3605, %v213, %v1154
        %v3641 = vsel %vm3605, %v215, %v1156
        %v3644 = vsel %vm3605, %v217, %v1158
        %v3647 = vsel %vm3605, %v219, %v1160
        %v3650 = vsel %vm3605, %v221, %v1162
        %v3653 = vsel %vm3605, %v223, %v1164
        %v3656 = vsel %vm3605, %v229, %v1166
        %v3659 = vsel %vm3605, %v231, %v1168
        %v3662 = vsel %vm3605, %v233, %v1170
        %v3665 = vsel %vm3605, %v235, %v1172
        %v3668 = vsel %vm3605, %v237, %v1174
        %v3671 = vsel %vm3605, %v239, %v1176
        %v3674 = vsel %vm3605, %v241, %v1178
        %v3677 = vsel %vm3605, %v243, %v1180
        %v3680 = vsel %vm3605, %v249, %v1182
        %v3683 = vsel %vm3605, %v251, %v1184
        %v3686 = vsel %vm3605, %v253, %v1186
        %v3689 = vsel %vm3605, %v255, %v1188
        %v3692 = vsel %vm3605, %v257, %v1190
        %v3695 = vsel %vm3605, %v259, %v1192
        %v3698 = vsel %vm3605, %v261, %v1194
        %v3701 = vsel %vm3605, %v263, %v1196
        %v3704 = vsel %vm3605, %v269, %v1198
        %v3707 = vsel %vm3605, %v271, %v1200
        %v3710 = vsel %vm3605, %v273, %v1202
        %v3713 = vsel %vm3605, %v275, %v1204
        %v3716 = vsel %vm3605, %v277, %v1206
        %v3719 = vsel %vm3605, %v279, %v1208
        %v3722 = vsel %vm3605, %v281, %v1210
        %v3725 = vsel %vm3605, %v283, %v1212
        %v3728 = vsel %vm3605, %v289, %v1214
        %v3731 = vsel %vm3605, %v291, %v1216
        %v3734 = vsel %vm3605, %v293, %v1218
        %v3737 = vsel %vm3605, %v295, %v1220
        %v3740 = vsel %vm3605, %v297, %v1222
        %v3743 = vsel %vm3605, %v299, %v1224
        %v3746 = vsel %vm3605, %v301, %v1226
        %v3749 = vsel %vm3605, %v303, %v1228
        %vm3750 = vcmask 64512
        %v3752 = vsel %vm3750, %v3608, %v1278
        %v3754 = vsel %vm3750, %v3611, %v1280
        %v3756 = vsel %vm3750, %v3614, %v1282
        %v3758 = vsel %vm3750, %v3617, %v1284
        %v3760 = vsel %vm3750, %v3620, %v1286
        %v3762 = vsel %vm3750, %v3623, %v1288
        %v3764 = vsel %vm3750, %v3626, %v1290
        %v3766 = vsel %vm3750, %v3629, %v1292
        %v3768 = vsel %vm3750, %v3632, %v1294
        %v3770 = vsel %vm3750, %v3635, %v1296
        %v3772 = vsel %vm3750, %v3638, %v1298
        %v3774 = vsel %vm3750, %v3641, %v1300
        %v3776 = vsel %vm3750, %v3644, %v1302
        %v3778 = vsel %vm3750, %v3647, %v1304
        %v3780 = vsel %vm3750, %v3650, %v1306
        %v3782 = vsel %vm3750, %v3653, %v1308
        %v3784 = vsel %vm3750, %v3656, %v1310
        %v3786 = vsel %vm3750, %v3659, %v1312
        %v3788 = vsel %vm3750, %v3662, %v1314
        %v3790 = vsel %vm3750, %v3665, %v1316
        %v3792 = vsel %vm3750, %v3668, %v1318
        %v3794 = vsel %vm3750, %v3671, %v1320
        %v3796 = vsel %vm3750, %v3674, %v1322
        %v3798 = vsel %vm3750, %v3677, %v1324
        %v3800 = vsel %vm3750, %v3680, %v1326
        %v3802 = vsel %vm3750, %v3683, %v1328
        %v3804 = vsel %vm3750, %v3686, %v1330
        %v3806 = vsel %vm3750, %v3689, %v1332
        %v3808 = vsel %vm3750, %v3692, %v1334
        %v3810 = vsel %vm3750, %v3695, %v1336
        %v3812 = vsel %vm3750, %v3698, %v1338
        %v3814 = vsel %vm3750, %v3701, %v1340
        %v3816 = vsel %vm3750, %v3704, %v1342
        %v3818 = vsel %vm3750, %v3707, %v1344
        %v3820 = vsel %vm3750, %v3710, %v1346
        %v3822 = vsel %vm3750, %v3713, %v1348
        %v3824 = vsel %vm3750, %v3716, %v1350
        %v3826 = vsel %vm3750, %v3719, %v1352
        %v3828 = vsel %vm3750, %v3722, %v1354
        %v3830 = vsel %vm3750, %v3725, %v1356
        %v3832 = vsel %vm3750, %v3728, %v1358
        %v3834 = vsel %vm3750, %v3731, %v1360
        %v3836 = vsel %vm3750, %v3734, %v1362
        %v3838 = vsel %vm3750, %v3737, %v1364
        %v3840 = vsel %vm3750, %v3740, %v1366
        %v3842 = vsel %vm3750, %v3743, %v1368
        %v3844 = vsel %vm3750, %v3746, %v1370
        %v3846 = vsel %vm3750, %v3749, %v1372
        %vm3847 = vcmask 97280
        %v3849 = vsel %vm3847, %v3752, %v1434
        %v3851 = vsel %vm3847, %v3754, %v1436
        %v3853 = vsel %vm3847, %v3756, %v1438
        %v3855 = vsel %vm3847, %v3758, %v1440
        %v3857 = vsel %vm3847, %v3760, %v1442
        %v3859 = vsel %vm3847, %v3762, %v1444
        %v3861 = vsel %vm3847, %v3764, %v1446
        %v3863 = vsel %vm3847, %v3766, %v1448
        %v3865 = vsel %vm3847, %v3768, %v1450
        %v3867 = vsel %vm3847, %v3770, %v1452
        %v3869 = vsel %vm3847, %v3772, %v1454
        %v3871 = vsel %vm3847, %v3774, %v1456
        %v3873 = vsel %vm3847, %v3776, %v1458
        %v3875 = vsel %vm3847, %v3778, %v1460
        %v3877 = vsel %vm3847, %v3780, %v1462
        %v3879 = vsel %vm3847, %v3782, %v1464
        %v3881 = vsel %vm3847, %v3784, %v1466
        %v3883 = vsel %vm3847, %v3786, %v1468
        %v3885 = vsel %vm3847, %v3788, %v1470
        %v3887 = vsel %vm3847, %v3790, %v1472
        %v3889 = vsel %vm3847, %v3792, %v1474
        %v3891 = vsel %vm3847, %v3794, %v1476
        %v3893 = vsel %vm3847, %v3796, %v1478
        %v3895 = vsel %vm3847, %v3798, %v1480
        %v3897 = vsel %vm3847, %v3800, %v1482
        %v3899 = vsel %vm3847, %v3802, %v1484
        %v3901 = vsel %vm3847, %v3804, %v1486
        %v3903 = vsel %vm3847, %v3806, %v1488
        %v3905 = vsel %vm3847, %v3808, %v1490
        %v3907 = vsel %vm3847, %v3810, %v1492
        %v3909 = vsel %vm3847, %v3812, %v1494
        %v3911 = vsel %vm3847, %v3814, %v1496
        %v3913 = vsel %vm3847, %v3816, %v1498
        %v3915 = vsel %vm3847, %v3818, %v1500
        %v3917 = vsel %vm3847, %v3820, %v1502
        %v3919 = vsel %vm3847, %v3822, %v1504
        %v3921 = vsel %vm3847, %v3824, %v1506
        %v3923 = vsel %vm3847, %v3826, %v1508
        %v3925 = vsel %vm3847, %v3828, %v1510
        %v3927 = vsel %vm3847, %v3830, %v1512
        %v3929 = vsel %vm3847, %v3832, %v1514
        %v3931 = vsel %vm3847, %v3834, %v1516
        %v3933 = vsel %vm3847, %v3836, %v1518
        %v3935 = vsel %vm3847, %v3838, %v1520
        %v3937 = vsel %vm3847, %v3840, %v1522
        %v3939 = vsel %vm3847, %v3842, %v1524
        %v3941 = vsel %vm3847, %v3844, %v1526
        %v3943 = vsel %vm3847, %v3846, %v1528
        %vm3944 = vcmask 130048
        %v3946 = vsel %vm3944, %v3849, %v1590
        %v3948 = vsel %vm3944, %v3851, %v1592
        %v3950 = vsel %vm3944, %v3853, %v1594
        %v3952 = vsel %vm3944, %v3855, %v1596
        %v3954 = vsel %vm3944, %v3857, %v1598
        %v3956 = vsel %vm3944, %v3859, %v1600
        %v3958 = vsel %vm3944, %v3861, %v1602
        %v3960 = vsel %vm3944, %v3863, %v1604
        %v3962 = vsel %vm3944, %v3865, %v1606
        %v3964 = vsel %vm3944, %v3867, %v1608
        %v3966 = vsel %vm3944, %v3869, %v1610
        %v3968 = vsel %vm3944, %v3871, %v1612
        %v3970 = vsel %vm3944, %v3873, %v1614
        %v3972 = vsel %vm3944, %v3875, %v1616
        %v3974 = vsel %vm3944, %v3877, %v1618
        %v3976 = vsel %vm3944, %v3879, %v1620
        %v3978 = vsel %vm3944, %v3881, %v1622
        %v3980 = vsel %vm3944, %v3883, %v1624
        %v3982 = vsel %vm3944, %v3885, %v1626
        %v3984 = vsel %vm3944, %v3887, %v1628
        %v3986 = vsel %vm3944, %v3889, %v1630
        %v3988 = vsel %vm3944, %v3891, %v1632
        %v3990 = vsel %vm3944, %v3893, %v1634
        %v3992 = vsel %vm3944, %v3895, %v1636
        %v3994 = vsel %vm3944, %v3897, %v1638
        %v3996 = vsel %vm3944, %v3899, %v1640
        %v3998 = vsel %vm3944, %v3901, %v1642
        %v4000 = vsel %vm3944, %v3903, %v1644
        %v4002 = vsel %vm3944, %v3905, %v1646
        %v4004 = vsel %vm3944, %v3907, %v1648
        %v4006 = vsel %vm3944, %v3909, %v1650
        %v4008 = vsel %vm3944, %v3911, %v1652
        %v4010 = vsel %vm3944, %v3913, %v1654
        %v4012 = vsel %vm3944, %v3915, %v1656
        %v4014 = vsel %vm3944, %v3917, %v1658
        %v4016 = vsel %vm3944, %v3919, %v1660
        %v4018 = vsel %vm3944, %v3921, %v1662
        %v4020 = vsel %vm3944, %v3923, %v1664
        %v4022 = vsel %vm3944, %v3925, %v1666
        %v4024 = vsel %vm3944, %v3927, %v1668
        %v4026 = vsel %vm3944, %v3929, %v1670
        %v4028 = vsel %vm3944, %v3931, %v1672
        %v4030 = vsel %vm3944, %v3933, %v1674
        %v4032 = vsel %vm3944, %v3935, %v1676
        %v4034 = vsel %vm3944, %v3937, %v1678
        %v4036 = vsel %vm3944, %v3939, %v1680
        %v4038 = vsel %vm3944, %v3941, %v1682
        %v4040 = vsel %vm3944, %v3943, %v1684
        %vm4041 = vcmask 162816
        %v4043 = vsel %vm4041, %v3946, %v1692
        %v4045 = vsel %vm4041, %v3948, %v1694
        %v4047 = vsel %vm4041, %v3950, %v1696
        %v4049 = vsel %vm4041, %v3952, %v1698
        %v4051 = vsel %vm4041, %v3954, %v1700
        %v4053 = vsel %vm4041, %v3956, %v1702
        %v4055 = vsel %vm4041, %v3958, %v1704
        %v4057 = vsel %vm4041, %v3960, %v1706
        %v4059 = vsel %vm4041, %v3962, %v1708
        %v4061 = vsel %vm4041, %v3964, %v1710
        %v4063 = vsel %vm4041, %v3966, %v1712
        %v4065 = vsel %vm4041, %v3968, %v1714
        %v4067 = vsel %vm4041, %v3970, %v1716
        %v4069 = vsel %vm4041, %v3972, %v1718
        %v4071 = vsel %vm4041, %v3974, %v1720
        %v4073 = vsel %vm4041, %v3976, %v1722
        %v4075 = vsel %vm4041, %v3978, %v1724
        %v4077 = vsel %vm4041, %v3980, %v1726
        %v4079 = vsel %vm4041, %v3982, %v1728
        %v4081 = vsel %vm4041, %v3984, %v1730
        %v4083 = vsel %vm4041, %v3986, %v1732
        %v4085 = vsel %vm4041, %v3988, %v1734
        %v4087 = vsel %vm4041, %v3990, %v1736
        %v4089 = vsel %vm4041, %v3992, %v1738
        %v4091 = vsel %vm4041, %v3994, %v1740
        %v4093 = vsel %vm4041, %v3996, %v1742
        %v4095 = vsel %vm4041, %v3998, %v1744
        %v4097 = vsel %vm4041, %v4000, %v1746
        %v4099 = vsel %vm4041, %v4002, %v1748
        %v4101 = vsel %vm4041, %v4004, %v1750
        %v4103 = vsel %vm4041, %v4006, %v1752
        %v4105 = vsel %vm4041, %v4008, %v1754
        %v4107 = vsel %vm4041, %v4010, %v1756
        %v4109 = vsel %vm4041, %v4012, %v1758
        %v4111 = vsel %vm4041, %v4014, %v1760
        %v4113 = vsel %vm4041, %v4016, %v1762
        %v4115 = vsel %vm4041, %v4018, %v1764
        %v4117 = vsel %vm4041, %v4020, %v1766
        %v4119 = vsel %vm4041, %v4022, %v1768
        %v4121 = vsel %vm4041, %v4024, %v1770
        %v4123 = vsel %vm4041, %v4026, %v1772
        %v4125 = vsel %vm4041, %v4028, %v1774
        %v4127 = vsel %vm4041, %v4030, %v1776
        %v4129 = vsel %vm4041, %v4032, %v1778
        %v4131 = vsel %vm4041, %v4034, %v1780
        %v4133 = vsel %vm4041, %v4036, %v1782
        %v4135 = vsel %vm4041, %v4038, %v1784
        %v4137 = vsel %vm4041, %v4040, %v1786
        %vm4138 = vcmask 195584
        %v4140 = vsel %vm4138, %v4043, %v1806
        %v4142 = vsel %vm4138, %v4045, %v1808
        %v4144 = vsel %vm4138, %v4047, %v1810
        %v4146 = vsel %vm4138, %v4049, %v1812
        %v4148 = vsel %vm4138, %v4051, %v1814
        %v4150 = vsel %vm4138, %v4053, %v1816
        %v4152 = vsel %vm4138, %v4055, %v1818
        %v4154 = vsel %vm4138, %v4057, %v1820
        %v4156 = vsel %vm4138, %v4059, %v1822
        %v4158 = vsel %vm4138, %v4061, %v1824
        %v4160 = vsel %vm4138, %v4063, %v1826
        %v4162 = vsel %vm4138, %v4065, %v1828
        %v4164 = vsel %vm4138, %v4067, %v1830
        %v4166 = vsel %vm4138, %v4069, %v1832
        %v4168 = vsel %vm4138, %v4071, %v1834
        %v4170 = vsel %vm4138, %v4073, %v1836
        %v4172 = vsel %vm4138, %v4075, %v1838
        %v4174 = vsel %vm4138, %v4077, %v1840
        %v4176 = vsel %vm4138, %v4079, %v1842
        %v4178 = vsel %vm4138, %v4081, %v1844
        %v4180 = vsel %vm4138, %v4083, %v1846
        %v4182 = vsel %vm4138, %v4085, %v1848
        %v4184 = vsel %vm4138, %v4087, %v1850
        %v4186 = vsel %vm4138, %v4089, %v1852
        %v4188 = vsel %vm4138, %v4091, %v1854
        %v4190 = vsel %vm4138, %v4093, %v1856
        %v4192 = vsel %vm4138, %v4095, %v1858
        %v4194 = vsel %vm4138, %v4097, %v1860
        %v4196 = vsel %vm4138, %v4099, %v1862
        %v4198 = vsel %vm4138, %v4101, %v1864
        %v4200 = vsel %vm4138, %v4103, %v1866
        %v4202 = vsel %vm4138, %v4105, %v1868
        %v4204 = vsel %vm4138, %v4107, %v1870
        %v4206 = vsel %vm4138, %v4109, %v1872
        %v4208 = vsel %vm4138, %v4111, %v1874
        %v4210 = vsel %vm4138, %v4113, %v1876
        %v4212 = vsel %vm4138, %v4115, %v1878
        %v4214 = vsel %vm4138, %v4117, %v1880
        %v4216 = vsel %vm4138, %v4119, %v1882
        %v4218 = vsel %vm4138, %v4121, %v1884
        %v4220 = vsel %vm4138, %v4123, %v1886
        %v4222 = vsel %vm4138, %v4125, %v1888
        %v4224 = vsel %vm4138, %v4127, %v1890
        %v4226 = vsel %vm4138, %v4129, %v1892
        %v4228 = vsel %vm4138, %v4131, %v1894
        %v4230 = vsel %vm4138, %v4133, %v1896
        %v4232 = vsel %vm4138, %v4135, %v1898
        %v4234 = vsel %vm4138, %v4137, %v1900
        %vm4235 = vcmask 228352
        %v4237 = vsel %vm4235, %v4140, %v1962
        %v4239 = vsel %vm4235, %v4142, %v1964
        %v4241 = vsel %vm4235, %v4144, %v1966
        %v4243 = vsel %vm4235, %v4146, %v1968
        %v4245 = vsel %vm4235, %v4148, %v1970
        %v4247 = vsel %vm4235, %v4150, %v1972
        %v4249 = vsel %vm4235, %v4152, %v1974
        %v4251 = vsel %vm4235, %v4154, %v1976
        %v4253 = vsel %vm4235, %v4156, %v1978
        %v4255 = vsel %vm4235, %v4158, %v1980
        %v4257 = vsel %vm4235, %v4160, %v1982
        %v4259 = vsel %vm4235, %v4162, %v1984
        %v4261 = vsel %vm4235, %v4164, %v1986
        %v4263 = vsel %vm4235, %v4166, %v1988
        %v4265 = vsel %vm4235, %v4168, %v1990
        %v4267 = vsel %vm4235, %v4170, %v1992
        %v4269 = vsel %vm4235, %v4172, %v1994
        %v4271 = vsel %vm4235, %v4174, %v1996
        %v4273 = vsel %vm4235, %v4176, %v1998
        %v4275 = vsel %vm4235, %v4178, %v2000
        %v4277 = vsel %vm4235, %v4180, %v2002
        %v4279 = vsel %vm4235, %v4182, %v2004
        %v4281 = vsel %vm4235, %v4184, %v2006
        %v4283 = vsel %vm4235, %v4186, %v2008
        %v4285 = vsel %vm4235, %v4188, %v2010
        %v4287 = vsel %vm4235, %v4190, %v2012
        %v4289 = vsel %vm4235, %v4192, %v2014
        %v4291 = vsel %vm4235, %v4194, %v2016
        %v4293 = vsel %vm4235, %v4196, %v2018
        %v4295 = vsel %vm4235, %v4198, %v2020
        %v4297 = vsel %vm4235, %v4200, %v2022
        %v4299 = vsel %vm4235, %v4202, %v2024
        %v4301 = vsel %vm4235, %v4204, %v2026
        %v4303 = vsel %vm4235, %v4206, %v2028
        %v4305 = vsel %vm4235, %v4208, %v2030
        %v4307 = vsel %vm4235, %v4210, %v2032
        %v4309 = vsel %vm4235, %v4212, %v2034
        %v4311 = vsel %vm4235, %v4214, %v2036
        %v4313 = vsel %vm4235, %v4216, %v2038
        %v4315 = vsel %vm4235, %v4218, %v2040
        %v4317 = vsel %vm4235, %v4220, %v2042
        %v4319 = vsel %vm4235, %v4222, %v2044
        %v4321 = vsel %vm4235, %v4224, %v2046
        %v4323 = vsel %vm4235, %v4226, %v2048
        %v4325 = vsel %vm4235, %v4228, %v2050
        %v4327 = vsel %vm4235, %v4230, %v2052
        %v4329 = vsel %vm4235, %v4232, %v2054
        %v4331 = vsel %vm4235, %v4234, %v2056
        %vm4332 = vcmask 261120
        %v4334 = vsel %vm4332, %v4237, %v2064
        %v4336 = vsel %vm4332, %v4239, %v2066
        %v4338 = vsel %vm4332, %v4241, %v2068
        %v4340 = vsel %vm4332, %v4243, %v2070
        %v4342 = vsel %vm4332, %v4245, %v2072
        %v4344 = vsel %vm4332, %v4247, %v2074
        %v4346 = vsel %vm4332, %v4249, %v2076
        %v4348 = vsel %vm4332, %v4251, %v2078
        %v4350 = vsel %vm4332, %v4253, %v2080
        %v4352 = vsel %vm4332, %v4255, %v2082
        %v4354 = vsel %vm4332, %v4257, %v2084
        %v4356 = vsel %vm4332, %v4259, %v2086
        %v4358 = vsel %vm4332, %v4261, %v2088
        %v4360 = vsel %vm4332, %v4263, %v2090
        %v4362 = vsel %vm4332, %v4265, %v2092
        %v4364 = vsel %vm4332, %v4267, %v2094
        %v4366 = vsel %vm4332, %v4269, %v2096
        %v4368 = vsel %vm4332, %v4271, %v2098
        %v4370 = vsel %vm4332, %v4273, %v2100
        %v4372 = vsel %vm4332, %v4275, %v2102
        %v4374 = vsel %vm4332, %v4277, %v2104
        %v4376 = vsel %vm4332, %v4279, %v2106
        %v4378 = vsel %vm4332, %v4281, %v2108
        %v4380 = vsel %vm4332, %v4283, %v2110
        %v4382 = vsel %vm4332, %v4285, %v2112
        %v4384 = vsel %vm4332, %v4287, %v2114
        %v4386 = vsel %vm4332, %v4289, %v2116
        %v4388 = vsel %vm4332, %v4291, %v2118
        %v4390 = vsel %vm4332, %v4293, %v2120
        %v4392 = vsel %vm4332, %v4295, %v2122
        %v4394 = vsel %vm4332, %v4297, %v2124
        %v4396 = vsel %vm4332, %v4299, %v2126
        %v4398 = vsel %vm4332, %v4301, %v2128
        %v4400 = vsel %vm4332, %v4303, %v2130
        %v4402 = vsel %vm4332, %v4305, %v2132
        %v4404 = vsel %vm4332, %v4307, %v2134
        %v4406 = vsel %vm4332, %v4309, %v2136
        %v4408 = vsel %vm4332, %v4311, %v2138
        %v4410 = vsel %vm4332, %v4313, %v2140
        %v4412 = vsel %vm4332, %v4315, %v2142
        %v4414 = vsel %vm4332, %v4317, %v2144
        %v4416 = vsel %vm4332, %v4319, %v2146
        %v4418 = vsel %vm4332, %v4321, %v2148
        %v4420 = vsel %vm4332, %v4323, %v2150
        %v4422 = vsel %vm4332, %v4325, %v2152
        %v4424 = vsel %vm4332, %v4327, %v2154
        %v4426 = vsel %vm4332, %v4329, %v2156
        %v4428 = vsel %vm4332, %v4331, %v2158
        %vm4429 = vcmask 293888
        %v4431 = vsel %vm4429, %v4334, %v2304
        %v4433 = vsel %vm4429, %v4336, %v2306
        %v4435 = vsel %vm4429, %v4338, %v2308
        %v4437 = vsel %vm4429, %v4340, %v2310
        %v4439 = vsel %vm4429, %v4342, %v2312
        %v4441 = vsel %vm4429, %v4344, %v2314
        %v4443 = vsel %vm4429, %v4346, %v2316
        %v4445 = vsel %vm4429, %v4348, %v2318
        %v4447 = vsel %vm4429, %v4350, %v2320
        %v4449 = vsel %vm4429, %v4352, %v2322
        %v4451 = vsel %vm4429, %v4354, %v2324
        %v4453 = vsel %vm4429, %v4356, %v2326
        %v4455 = vsel %vm4429, %v4358, %v2328
        %v4457 = vsel %vm4429, %v4360, %v2330
        %v4459 = vsel %vm4429, %v4362, %v2332
        %v4461 = vsel %vm4429, %v4364, %v2334
        %v4463 = vsel %vm4429, %v4366, %v2336
        %v4465 = vsel %vm4429, %v4368, %v2338
        %v4467 = vsel %vm4429, %v4370, %v2340
        %v4469 = vsel %vm4429, %v4372, %v2342
        %v4471 = vsel %vm4429, %v4374, %v2344
        %v4473 = vsel %vm4429, %v4376, %v2346
        %v4475 = vsel %vm4429, %v4378, %v2348
        %v4477 = vsel %vm4429, %v4380, %v2350
        %v4479 = vsel %vm4429, %v4382, %v2352
        %v4481 = vsel %vm4429, %v4384, %v2354
        %v4483 = vsel %vm4429, %v4386, %v2356
        %v4485 = vsel %vm4429, %v4388, %v2358
        %v4487 = vsel %vm4429, %v4390, %v2360
        %v4489 = vsel %vm4429, %v4392, %v2362
        %v4491 = vsel %vm4429, %v4394, %v2364
        %v4493 = vsel %vm4429, %v4396, %v2366
        %v4495 = vsel %vm4429, %v4398, %v2368
        %v4497 = vsel %vm4429, %v4400, %v2370
        %v4499 = vsel %vm4429, %v4402, %v2372
        %v4501 = vsel %vm4429, %v4404, %v2374
        %v4503 = vsel %vm4429, %v4406, %v2376
        %v4505 = vsel %vm4429, %v4408, %v2378
        %v4507 = vsel %vm4429, %v4410, %v2380
        %v4509 = vsel %vm4429, %v4412, %v2382
        %v4511 = vsel %vm4429, %v4414, %v2384
        %v4513 = vsel %vm4429, %v4416, %v2386
        %v4515 = vsel %vm4429, %v4418, %v2388
        %v4517 = vsel %vm4429, %v4420, %v2390
        %v4519 = vsel %vm4429, %v4422, %v2392
        %v4521 = vsel %vm4429, %v4424, %v2394
        %v4523 = vsel %vm4429, %v4426, %v2396
        %v4525 = vsel %vm4429, %v4428, %v2398
        %vm4526 = vcmask 326656
        %v4528 = vsel %vm4526, %v4431, %v2880
        %v4530 = vsel %vm4526, %v4433, %v2882
        %v4532 = vsel %vm4526, %v4435, %v2884
        %v4534 = vsel %vm4526, %v4437, %v2886
        %v4536 = vsel %vm4526, %v4439, %v2888
        %v4538 = vsel %vm4526, %v4441, %v2890
        %v4540 = vsel %vm4526, %v4443, %v2892
        %v4542 = vsel %vm4526, %v4445, %v2894
        %v4544 = vsel %vm4526, %v4447, %v2896
        %v4546 = vsel %vm4526, %v4449, %v2898
        %v4548 = vsel %vm4526, %v4451, %v2900
        %v4550 = vsel %vm4526, %v4453, %v2902
        %v4552 = vsel %vm4526, %v4455, %v2904
        %v4554 = vsel %vm4526, %v4457, %v2906
        %v4556 = vsel %vm4526, %v4459, %v2908
        %v4558 = vsel %vm4526, %v4461, %v2910
        %v4560 = vsel %vm4526, %v4463, %v2912
        %v4562 = vsel %vm4526, %v4465, %v2914
        %v4564 = vsel %vm4526, %v4467, %v2916
        %v4566 = vsel %vm4526, %v4469, %v2918
        %v4568 = vsel %vm4526, %v4471, %v2920
        %v4570 = vsel %vm4526, %v4473, %v2922
        %v4572 = vsel %vm4526, %v4475, %v2924
        %v4574 = vsel %vm4526, %v4477, %v2926
        %v4576 = vsel %vm4526, %v4479, %v2928
        %v4578 = vsel %vm4526, %v4481, %v2930
        %v4580 = vsel %vm4526, %v4483, %v2932
        %v4582 = vsel %vm4526, %v4485, %v2934
        %v4584 = vsel %vm4526, %v4487, %v2936
        %v4586 = vsel %vm4526, %v4489, %v2938
        %v4588 = vsel %vm4526, %v4491, %v2940
        %v4590 = vsel %vm4526, %v4493, %v2942
        %v4592 = vsel %vm4526, %v4495, %v2944
        %v4594 = vsel %vm4526, %v4497, %v2946
        %v4596 = vsel %vm4526, %v4499, %v2948
        %v4598 = vsel %vm4526, %v4501, %v2950
        %v4600 = vsel %vm4526, %v4503, %v2952
        %v4602 = vsel %vm4526, %v4505, %v2954
        %v4604 = vsel %vm4526, %v4507, %v2956
        %v4606 = vsel %vm4526, %v4509, %v2958
        %v4608 = vsel %vm4526, %v4511, %v2960
        %v4610 = vsel %vm4526, %v4513, %v2962
        %v4612 = vsel %vm4526, %v4515, %v2964
        %v4614 = vsel %vm4526, %v4517, %v2966
        %v4616 = vsel %vm4526, %v4519, %v2968
        %v4618 = vsel %vm4526, %v4521, %v2970
        %v4620 = vsel %vm4526, %v4523, %v2972
        %v4622 = vsel %vm4526, %v4525, %v2974
        %vm4623 = vcmask 359424
        %v4625 = vsel %vm4623, %v4528, %v3024
        %v4627 = vsel %vm4623, %v4530, %v3026
        %v4629 = vsel %vm4623, %v4532, %v3028
        %v4631 = vsel %vm4623, %v4534, %v3030
        %v4633 = vsel %vm4623, %v4536, %v3032
        %v4635 = vsel %vm4623, %v4538, %v3034
        %v4637 = vsel %vm4623, %v4540, %v3036
        %v4639 = vsel %vm4623, %v4542, %v3038
        %v4641 = vsel %vm4623, %v4544, %v3040
        %v4643 = vsel %vm4623, %v4546, %v3042
        %v4645 = vsel %vm4623, %v4548, %v3044
        %v4647 = vsel %vm4623, %v4550, %v3046
        %v4649 = vsel %vm4623, %v4552, %v3048
        %v4651 = vsel %vm4623, %v4554, %v3050
        %v4653 = vsel %vm4623, %v4556, %v3052
        %v4655 = vsel %vm4623, %v4558, %v3054
        %v4657 = vsel %vm4623, %v4560, %v3056
        %v4659 = vsel %vm4623, %v4562, %v3058
        %v4661 = vsel %vm4623, %v4564, %v3060
        %v4663 = vsel %vm4623, %v4566, %v3062
        %v4665 = vsel %vm4623, %v4568, %v3064
        %v4667 = vsel %vm4623, %v4570, %v3066
        %v4669 = vsel %vm4623, %v4572, %v3068
        %v4671 = vsel %vm4623, %v4574, %v3070
        %v4673 = vsel %vm4623, %v4576, %v3072
        %v4675 = vsel %vm4623, %v4578, %v3074
        %v4677 = vsel %vm4623, %v4580, %v3076
        %v4679 = vsel %vm4623, %v4582, %v3078
        %v4681 = vsel %vm4623, %v4584, %v3080
        %v4683 = vsel %vm4623, %v4586, %v3082
        %v4685 = vsel %vm4623, %v4588, %v3084
        %v4687 = vsel %vm4623, %v4590, %v3086
        %v4689 = vsel %vm4623, %v4592, %v3088
        %v4691 = vsel %vm4623, %v4594, %v3090
        %v4693 = vsel %vm4623, %v4596, %v3092
        %v4695 = vsel %vm4623, %v4598, %v3094
        %v4697 = vsel %vm4623, %v4600, %v3096
        %v4699 = vsel %vm4623, %v4602, %v3098
        %v4701 = vsel %vm4623, %v4604, %v3100
        %v4703 = vsel %vm4623, %v4606, %v3102
        %v4705 = vsel %vm4623, %v4608, %v3104
        %v4707 = vsel %vm4623, %v4610, %v3106
        %v4709 = vsel %vm4623, %v4612, %v3108
        %v4711 = vsel %vm4623, %v4614, %v3110
        %v4713 = vsel %vm4623, %v4616, %v3112
        %v4715 = vsel %vm4623, %v4618, %v3114
        %v4717 = vsel %vm4623, %v4620, %v3116
        %v4719 = vsel %vm4623, %v4622, %v3118
        %vm4720 = vcmask 392192
        %v4722 = vsel %vm4720, %v4625, %v3138
        %v4724 = vsel %vm4720, %v4627, %v3140
        %v4726 = vsel %vm4720, %v4629, %v3142
        %v4728 = vsel %vm4720, %v4631, %v3144
        %v4730 = vsel %vm4720, %v4633, %v3146
        %v4732 = vsel %vm4720, %v4635, %v3148
        %v4734 = vsel %vm4720, %v4637, %v3150
        %v4736 = vsel %vm4720, %v4639, %v3152
        %v4738 = vsel %vm4720, %v4641, %v3154
        %v4740 = vsel %vm4720, %v4643, %v3156
        %v4742 = vsel %vm4720, %v4645, %v3158
        %v4744 = vsel %vm4720, %v4647, %v3160
        %v4746 = vsel %vm4720, %v4649, %v3162
        %v4748 = vsel %vm4720, %v4651, %v3164
        %v4750 = vsel %vm4720, %v4653, %v3166
        %v4752 = vsel %vm4720, %v4655, %v3168
        %v4754 = vsel %vm4720, %v4657, %v3170
        %v4756 = vsel %vm4720, %v4659, %v3172
        %v4758 = vsel %vm4720, %v4661, %v3174
        %v4760 = vsel %vm4720, %v4663, %v3176
        %v4762 = vsel %vm4720, %v4665, %v3178
        %v4764 = vsel %vm4720, %v4667, %v3180
        %v4766 = vsel %vm4720, %v4669, %v3182
        %v4768 = vsel %vm4720, %v4671, %v3184
        %v4770 = vsel %vm4720, %v4673, %v3186
        %v4772 = vsel %vm4720, %v4675, %v3188
        %v4774 = vsel %vm4720, %v4677, %v3190
        %v4776 = vsel %vm4720, %v4679, %v3192
        %v4778 = vsel %vm4720, %v4681, %v3194
        %v4780 = vsel %vm4720, %v4683, %v3196
        %v4782 = vsel %vm4720, %v4685, %v3198
        %v4784 = vsel %vm4720, %v4687, %v3200
        %v4786 = vsel %vm4720, %v4689, %v3202
        %v4788 = vsel %vm4720, %v4691, %v3204
        %v4790 = vsel %vm4720, %v4693, %v3206
        %v4792 = vsel %vm4720, %v4695, %v3208
        %v4794 = vsel %vm4720, %v4697, %v3210
        %v4796 = vsel %vm4720, %v4699, %v3212
        %v4798 = vsel %vm4720, %v4701, %v3214
        %v4800 = vsel %vm4720, %v4703, %v3216
        %v4802 = vsel %vm4720, %v4705, %v3218
        %v4804 = vsel %vm4720, %v4707, %v3220
        %v4806 = vsel %vm4720, %v4709, %v3222
        %v4808 = vsel %vm4720, %v4711, %v3224
        %v4810 = vsel %vm4720, %v4713, %v3226
        %v4812 = vsel %vm4720, %v4715, %v3228
        %v4814 = vsel %vm4720, %v4717, %v3230
        %v4816 = vsel %vm4720, %v4719, %v3232
        %vm4817 = vcmask 424960
        %v4819 = vsel %vm4817, %v4722, %v3294
        %v4821 = vsel %vm4817, %v4724, %v3296
        %v4823 = vsel %vm4817, %v4726, %v3298
        %v4825 = vsel %vm4817, %v4728, %v3300
        %v4827 = vsel %vm4817, %v4730, %v3302
        %v4829 = vsel %vm4817, %v4732, %v3304
        %v4831 = vsel %vm4817, %v4734, %v3306
        %v4833 = vsel %vm4817, %v4736, %v3308
        %v4835 = vsel %vm4817, %v4738, %v3310
        %v4837 = vsel %vm4817, %v4740, %v3312
        %v4839 = vsel %vm4817, %v4742, %v3314
        %v4841 = vsel %vm4817, %v4744, %v3316
        %v4843 = vsel %vm4817, %v4746, %v3318
        %v4845 = vsel %vm4817, %v4748, %v3320
        %v4847 = vsel %vm4817, %v4750, %v3322
        %v4849 = vsel %vm4817, %v4752, %v3324
        %v4851 = vsel %vm4817, %v4754, %v3326
        %v4853 = vsel %vm4817, %v4756, %v3328
        %v4855 = vsel %vm4817, %v4758, %v3330
        %v4857 = vsel %vm4817, %v4760, %v3332
        %v4859 = vsel %vm4817, %v4762, %v3334
        %v4861 = vsel %vm4817, %v4764, %v3336
        %v4863 = vsel %vm4817, %v4766, %v3338
        %v4865 = vsel %vm4817, %v4768, %v3340
        %v4867 = vsel %vm4817, %v4770, %v3342
        %v4869 = vsel %vm4817, %v4772, %v3344
        %v4871 = vsel %vm4817, %v4774, %v3346
        %v4873 = vsel %vm4817, %v4776, %v3348
        %v4875 = vsel %vm4817, %v4778, %v3350
        %v4877 = vsel %vm4817, %v4780, %v3352
        %v4879 = vsel %vm4817, %v4782, %v3354
        %v4881 = vsel %vm4817, %v4784, %v3356
        %v4883 = vsel %vm4817, %v4786, %v3358
        %v4885 = vsel %vm4817, %v4788, %v3360
        %v4887 = vsel %vm4817, %v4790, %v3362
        %v4889 = vsel %vm4817, %v4792, %v3364
        %v4891 = vsel %vm4817, %v4794, %v3366
        %v4893 = vsel %vm4817, %v4796, %v3368
        %v4895 = vsel %vm4817, %v4798, %v3370
        %v4897 = vsel %vm4817, %v4800, %v3372
        %v4899 = vsel %vm4817, %v4802, %v3374
        %v4901 = vsel %vm4817, %v4804, %v3376
        %v4903 = vsel %vm4817, %v4806, %v3378
        %v4905 = vsel %vm4817, %v4808, %v3380
        %v4907 = vsel %vm4817, %v4810, %v3382
        %v4909 = vsel %vm4817, %v4812, %v3384
        %v4911 = vsel %vm4817, %v4814, %v3386
        %v4913 = vsel %vm4817, %v4816, %v3388
        %vm4914 = vcmask 457728
        %v4916 = vsel %vm4914, %v4819, %v3396
        %v4918 = vsel %vm4914, %v4821, %v3398
        %v4920 = vsel %vm4914, %v4823, %v3400
        %v4922 = vsel %vm4914, %v4825, %v3402
        %v4924 = vsel %vm4914, %v4827, %v3404
        %v4926 = vsel %vm4914, %v4829, %v3406
        %v4928 = vsel %vm4914, %v4831, %v3408
        %v4930 = vsel %vm4914, %v4833, %v3410
        %v4932 = vsel %vm4914, %v4835, %v3412
        %v4934 = vsel %vm4914, %v4837, %v3414
        %v4936 = vsel %vm4914, %v4839, %v3416
        %v4938 = vsel %vm4914, %v4841, %v3418
        %v4940 = vsel %vm4914, %v4843, %v3420
        %v4942 = vsel %vm4914, %v4845, %v3422
        %v4944 = vsel %vm4914, %v4847, %v3424
        %v4946 = vsel %vm4914, %v4849, %v3426
        %v4948 = vsel %vm4914, %v4851, %v3428
        %v4950 = vsel %vm4914, %v4853, %v3430
        %v4952 = vsel %vm4914, %v4855, %v3432
        %v4954 = vsel %vm4914, %v4857, %v3434
        %v4956 = vsel %vm4914, %v4859, %v3436
        %v4958 = vsel %vm4914, %v4861, %v3438
        %v4960 = vsel %vm4914, %v4863, %v3440
        %v4962 = vsel %vm4914, %v4865, %v3442
        %v4964 = vsel %vm4914, %v4867, %v3444
        %v4966 = vsel %vm4914, %v4869, %v3446
        %v4968 = vsel %vm4914, %v4871, %v3448
        %v4970 = vsel %vm4914, %v4873, %v3450
        %v4972 = vsel %vm4914, %v4875, %v3452
        %v4974 = vsel %vm4914, %v4877, %v3454
        %v4976 = vsel %vm4914, %v4879, %v3456
        %v4978 = vsel %vm4914, %v4881, %v3458
        %v4980 = vsel %vm4914, %v4883, %v3460
        %v4982 = vsel %vm4914, %v4885, %v3462
        %v4984 = vsel %vm4914, %v4887, %v3464
        %v4986 = vsel %vm4914, %v4889, %v3466
        %v4988 = vsel %vm4914, %v4891, %v3468
        %v4990 = vsel %vm4914, %v4893, %v3470
        %v4992 = vsel %vm4914, %v4895, %v3472
        %v4994 = vsel %vm4914, %v4897, %v3474
        %v4996 = vsel %vm4914, %v4899, %v3476
        %v4998 = vsel %vm4914, %v4901, %v3478
        %v5000 = vsel %vm4914, %v4903, %v3480
        %v5002 = vsel %vm4914, %v4905, %v3482
        %v5004 = vsel %vm4914, %v4907, %v3484
        %v5006 = vsel %vm4914, %v4909, %v3486
        %v5008 = vsel %vm4914, %v4911, %v3488
        %v5010 = vsel %vm4914, %v4913, %v3490
        %vm5011 = vcmask 490496
        %v5013 = vsel %vm5011, %v4916, %v3510
        %v5015 = vsel %vm5011, %v4918, %v3512
        %v5017 = vsel %vm5011, %v4920, %v3514
        %v5019 = vsel %vm5011, %v4922, %v3516
        %v5021 = vsel %vm5011, %v4924, %v3518
        %v5023 = vsel %vm5011, %v4926, %v3520
        %v5025 = vsel %vm5011, %v4928, %v3522
        %v5027 = vsel %vm5011, %v4930, %v3524
        %v5029 = vsel %vm5011, %v4932, %v3526
        %v5031 = vsel %vm5011, %v4934, %v3528
        %v5033 = vsel %vm5011, %v4936, %v3530
        %v5035 = vsel %vm5011, %v4938, %v3532
        %v5037 = vsel %vm5011, %v4940, %v3534
        %v5039 = vsel %vm5011, %v4942, %v3536
        %v5041 = vsel %vm5011, %v4944, %v3538
        %v5043 = vsel %vm5011, %v4946, %v3540
        %v5045 = vsel %vm5011, %v4948, %v3542
        %v5047 = vsel %vm5011, %v4950, %v3544
        %v5049 = vsel %vm5011, %v4952, %v3546
        %v5051 = vsel %vm5011, %v4954, %v3548
        %v5053 = vsel %vm5011, %v4956, %v3550
        %v5055 = vsel %vm5011, %v4958, %v3552
        %v5057 = vsel %vm5011, %v4960, %v3554
        %v5059 = vsel %vm5011, %v4962, %v3556
        %v5061 = vsel %vm5011, %v4964, %v3558
        %v5063 = vsel %vm5011, %v4966, %v3560
        %v5065 = vsel %vm5011, %v4968, %v3562
        %v5067 = vsel %vm5011, %v4970, %v3564
        %v5069 = vsel %vm5011, %v4972, %v3566
        %v5071 = vsel %vm5011, %v4974, %v3568
        %v5073 = vsel %vm5011, %v4976, %v3570
        %v5075 = vsel %vm5011, %v4978, %v3572
        %v5077 = vsel %vm5011, %v4980, %v3574
        %v5079 = vsel %vm5011, %v4982, %v3576
        %v5081 = vsel %vm5011, %v4984, %v3578
        %v5083 = vsel %vm5011, %v4986, %v3580
        %v5085 = vsel %vm5011, %v4988, %v3582
        %v5087 = vsel %vm5011, %v4990, %v3584
        %v5089 = vsel %vm5011, %v4992, %v3586
        %v5091 = vsel %vm5011, %v4994, %v3588
        %v5093 = vsel %vm5011, %v4996, %v3590
        %v5095 = vsel %vm5011, %v4998, %v3592
        %v5097 = vsel %vm5011, %v5000, %v3594
        %v5099 = vsel %vm5011, %v5002, %v3596
        %v5101 = vsel %vm5011, %v5004, %v3598
        %v5103 = vsel %vm5011, %v5006, %v3600
        %v5105 = vsel %vm5011, %v5008, %v3602
        %v5107 = vsel %vm5011, %v5010, %v3604
        %v5114 = vunpack.c.l.b16 %v332
        %v5115 = vunpack.c.l.b16 %v352
        %v5116 = vunpack.c.l.b16 %v372
        %v5117 = vunpack.c.l.b16 %v392
        %v5118 = vunpack.c.l.b16 %v412
        %v5119 = vunpack.c.l.b16 %v432
        %v5120 = vpack.c.b16 %v5114, %v3497
        %v5121 = vpack.c.b16 %v5115, %v3498
        %v5122 = vpack.c.b16 %v5116, %v3499
        %v5123 = vpack.c.b16 %v5117, %v3500
        %v5124 = vpack.c.b16 %v5118, %v3501
        %v5125 = vpack.c.b16 %v5119, %v3502
        %v5127 = vshrl.u32 %v5120, 16
        %v5129 = vshll.u32 %v5120, 16
        %v5131 = vrot.slane %v5129, 1
        %v5132 = vor.u32 %v5127, %v5131
        %v5134 = vshrl.u32 %v5121, 16
        %v5136 = vshll.u32 %v5121, 16
        %v5138 = vrot.slane %v5136, 1
        %v5139 = vor.u32 %v5134, %v5138
        %v5141 = vshrl.u32 %v5122, 16
        %v5143 = vshll.u32 %v5122, 16
        %v5145 = vrot.slane %v5143, 1
        %v5146 = vor.u32 %v5141, %v5145
        %v5148 = vshrl.u32 %v5123, 16
        %v5150 = vshll.u32 %v5123, 16
        %v5152 = vrot.slane %v5150, 1
        %v5153 = vor.u32 %v5148, %v5152
        %v5155 = vshrl.u32 %v5124, 16
        %v5157 = vshll.u32 %v5124, 16
        %v5159 = vrot.slane %v5157, 1
        %v5160 = vor.u32 %v5155, %v5159
        %v5162 = vshrl.u32 %v5125, 16
        %v5164 = vshll.u32 %v5125, 16
        %v5166 = vrot.slane %v5164, 1
        %v5167 = vor.u32 %v5162, %v5166
        %5168 = vrot.lane.b32.xlu0 %v2563, 4
        %v5169 = vpop.permute.xlu0 %5168
        %5170 = vrot.lane.b32.xlu0 %v2570, 4
        %v5171 = vpop.permute.xlu0 %5170
        %5172 = vrot.lane.b32.xlu0 %v2577, 4
        %v5173 = vpop.permute.xlu0 %5172
        %5174 = vrot.lane.b32.xlu0 %v2584, 4
        %v5175 = vpop.permute.xlu0 %5174
        %5176 = vrot.lane.b32.xlu0 %v2591, 4
        %v5177 = vpop.permute.xlu0 %5176
        %5178 = vrot.lane.b32.xlu0 %v2598, 4
        %v5179 = vpop.permute.xlu0 %5178
        %5180 = vrot.lane.b32.xlu0 %v3257, 4
        %v5181 = vpop.permute.xlu0 %5180
        %5182 = vrot.lane.b32.xlu0 %v5132, 4
        %v5183 = vpop.permute.xlu0 %5182
        %5184 = vrot.lane.b32.xlu0 %v2619, 4
        %v5185 = vpop.permute.xlu0 %5184
        %5186 = vrot.lane.b32.xlu0 %v2626, 4
        %v5187 = vpop.permute.xlu0 %5186
        %5188 = vrot.lane.b32.xlu0 %v2633, 4
        %v5189 = vpop.permute.xlu0 %5188
        %5190 = vrot.lane.b32.xlu0 %v2640, 4
        %v5191 = vpop.permute.xlu0 %5190
        %5192 = vrot.lane.b32.xlu0 %v2647, 4
        %v5193 = vpop.permute.xlu0 %5192
        %5194 = vrot.lane.b32.xlu0 %v2654, 4
        %v5195 = vpop.permute.xlu0 %5194
        %5196 = vrot.lane.b32.xlu0 %v3264, 4
        %v5197 = vpop.permute.xlu0 %5196
        %5198 = vrot.lane.b32.xlu0 %v5139, 4
        %v5199 = vpop.permute.xlu0 %5198
        %5200 = vrot.lane.b32.xlu0 %v2675, 4
        %v5201 = vpop.permute.xlu0 %5200
        %5202 = vrot.lane.b32.xlu0 %v2682, 4
        %v5203 = vpop.permute.xlu0 %5202
        %5204 = vrot.lane.b32.xlu0 %v2689, 4
        %v5205 = vpop.permute.xlu0 %5204
        %5206 = vrot.lane.b32.xlu0 %v2696, 4
        %v5207 = vpop.permute.xlu0 %5206
        %5208 = vrot.lane.b32.xlu0 %v2703, 4
        %v5209 = vpop.permute.xlu0 %5208
        %5210 = vrot.lane.b32.xlu0 %v2710, 4
        %v5211 = vpop.permute.xlu0 %5210
        %5212 = vrot.lane.b32.xlu0 %v3271, 4
        %v5213 = vpop.permute.xlu0 %5212
        %5214 = vrot.lane.b32.xlu0 %v5146, 4
        %v5215 = vpop.permute.xlu0 %5214
        %5216 = vrot.lane.b32.xlu0 %v2731, 4
        %v5217 = vpop.permute.xlu0 %5216
        %5218 = vrot.lane.b32.xlu0 %v2738, 4
        %v5219 = vpop.permute.xlu0 %5218
        %5220 = vrot.lane.b32.xlu0 %v2745, 4
        %v5221 = vpop.permute.xlu0 %5220
        %5222 = vrot.lane.b32.xlu0 %v2752, 4
        %v5223 = vpop.permute.xlu0 %5222
        %5224 = vrot.lane.b32.xlu0 %v2759, 4
        %v5225 = vpop.permute.xlu0 %5224
        %5226 = vrot.lane.b32.xlu0 %v2766, 4
        %v5227 = vpop.permute.xlu0 %5226
        %5228 = vrot.lane.b32.xlu0 %v3278, 4
        %v5229 = vpop.permute.xlu0 %5228
        %5230 = vrot.lane.b32.xlu0 %v5153, 4
        %v5231 = vpop.permute.xlu0 %5230
        %5232 = vrot.lane.b32.xlu0 %v2787, 4
        %v5233 = vpop.permute.xlu0 %5232
        %5234 = vrot.lane.b32.xlu0 %v2794, 4
        %v5235 = vpop.permute.xlu0 %5234
        %5236 = vrot.lane.b32.xlu0 %v2801, 4
        %v5237 = vpop.permute.xlu0 %5236
        %5238 = vrot.lane.b32.xlu0 %v2808, 4
        %v5239 = vpop.permute.xlu0 %5238
        %5240 = vrot.lane.b32.xlu0 %v2815, 4
        %v5241 = vpop.permute.xlu0 %5240
        %5242 = vrot.lane.b32.xlu0 %v2822, 4
        %v5243 = vpop.permute.xlu0 %5242
        %5244 = vrot.lane.b32.xlu0 %v3285, 4
        %v5245 = vpop.permute.xlu0 %5244
        %5246 = vrot.lane.b32.xlu0 %v5160, 4
        %v5247 = vpop.permute.xlu0 %5246
        %5248 = vrot.lane.b32.xlu0 %v2843, 4
        %v5249 = vpop.permute.xlu0 %5248
        %5250 = vrot.lane.b32.xlu0 %v2850, 4
        %v5251 = vpop.permute.xlu0 %5250
        %5252 = vrot.lane.b32.xlu0 %v2857, 4
        %v5253 = vpop.permute.xlu0 %5252
        %5254 = vrot.lane.b32.xlu0 %v2864, 4
        %v5255 = vpop.permute.xlu0 %5254
        %5256 = vrot.lane.b32.xlu0 %v2871, 4
        %v5257 = vpop.permute.xlu0 %5256
        %5258 = vrot.lane.b32.xlu0 %v2878, 4
        %v5259 = vpop.permute.xlu0 %5258
        %5260 = vrot.lane.b32.xlu0 %v3292, 4
        %v5261 = vpop.permute.xlu0 %5260
        %5262 = vrot.lane.b32.xlu0 %v5167, 4
        %v5263 = vpop.permute.xlu0 %5262
        %v5312 = vunpack.c.l.b16 %v437
        %v5313 = vunpack.c.l.b16 %v439
        %v5314 = vunpack.c.l.b16 %v441
        %v5315 = vunpack.c.l.b16 %v443
        %v5316 = vunpack.c.l.b16 %v445
        %v5317 = vunpack.c.l.b16 %v447
        %v5318 = vunpack.c.l.b16 %v449
        %v5319 = vunpack.c.l.b16 %v451
        %v5320 = vunpack.c.l.b16 %v457
        %v5321 = vunpack.c.l.b16 %v459
        %v5322 = vunpack.c.l.b16 %v461
        %v5323 = vunpack.c.l.b16 %v463
        %v5324 = vunpack.c.l.b16 %v465
        %v5325 = vunpack.c.l.b16 %v467
        %v5326 = vunpack.c.l.b16 %v469
        %v5327 = vunpack.c.l.b16 %v471
        %v5328 = vunpack.c.l.b16 %v477
        %v5329 = vunpack.c.l.b16 %v479
        %v5330 = vunpack.c.l.b16 %v481
        %v5331 = vunpack.c.l.b16 %v483
        %v5332 = vunpack.c.l.b16 %v485
        %v5333 = vunpack.c.l.b16 %v487
        %v5334 = vunpack.c.l.b16 %v489
        %v5335 = vunpack.c.l.b16 %v491
        %v5336 = vunpack.c.l.b16 %v497
        %v5337 = vunpack.c.l.b16 %v499
        %v5338 = vunpack.c.l.b16 %v501
        %v5339 = vunpack.c.l.b16 %v503
        %v5340 = vunpack.c.l.b16 %v505
        %v5341 = vunpack.c.l.b16 %v507
        %v5342 = vunpack.c.l.b16 %v509
        %v5343 = vunpack.c.l.b16 %v511
        %v5344 = vunpack.c.l.b16 %v517
        %v5345 = vunpack.c.l.b16 %v519
        %v5346 = vunpack.c.l.b16 %v521
        %v5347 = vunpack.c.l.b16 %v523
        %v5348 = vunpack.c.l.b16 %v525
        %v5349 = vunpack.c.l.b16 %v527
        %v5350 = vunpack.c.l.b16 %v529
        %v5351 = vunpack.c.l.b16 %v531
        %v5352 = vunpack.c.l.b16 %v537
        %v5353 = vunpack.c.l.b16 %v539
        %v5354 = vunpack.c.l.b16 %v541
        %v5355 = vunpack.c.l.b16 %v543
        %v5356 = vunpack.c.l.b16 %v545
        %v5357 = vunpack.c.l.b16 %v547
        %v5358 = vunpack.c.l.b16 %v549
        %v5359 = vunpack.c.l.b16 %v551
        %v5360 = vpack.c.b16 %v5312, %v5312
        %v5361 = vpack.c.b16 %v5313, %v5313
        %v5362 = vpack.c.b16 %v5314, %v5314
        %v5363 = vpack.c.b16 %v5315, %v5315
        %v5364 = vpack.c.b16 %v5316, %v5316
        %v5365 = vpack.c.b16 %v5317, %v5317
        %v5366 = vpack.c.b16 %v5318, %v5318
        %v5367 = vpack.c.b16 %v5319, %v5319
        %v5368 = vpack.c.b16 %v5320, %v5320
        %v5369 = vpack.c.b16 %v5321, %v5321
        %v5370 = vpack.c.b16 %v5322, %v5322
        %v5371 = vpack.c.b16 %v5323, %v5323
        %v5372 = vpack.c.b16 %v5324, %v5324
        %v5373 = vpack.c.b16 %v5325, %v5325
        %v5374 = vpack.c.b16 %v5326, %v5326
        %v5375 = vpack.c.b16 %v5327, %v5327
        %v5376 = vpack.c.b16 %v5328, %v5328
        %v5377 = vpack.c.b16 %v5329, %v5329
        %v5378 = vpack.c.b16 %v5330, %v5330
        %v5379 = vpack.c.b16 %v5331, %v5331
        %v5380 = vpack.c.b16 %v5332, %v5332
        %v5381 = vpack.c.b16 %v5333, %v5333
        %v5382 = vpack.c.b16 %v5334, %v5334
        %v5383 = vpack.c.b16 %v5335, %v5335
        %v5384 = vpack.c.b16 %v5336, %v5336
        %v5385 = vpack.c.b16 %v5337, %v5337
        %v5386 = vpack.c.b16 %v5338, %v5338
        %v5387 = vpack.c.b16 %v5339, %v5339
        %v5388 = vpack.c.b16 %v5340, %v5340
        %v5389 = vpack.c.b16 %v5341, %v5341
        %v5390 = vpack.c.b16 %v5342, %v5342
        %v5391 = vpack.c.b16 %v5343, %v5343
        %v5392 = vpack.c.b16 %v5344, %v5344
        %v5393 = vpack.c.b16 %v5345, %v5345
        %v5394 = vpack.c.b16 %v5346, %v5346
        %v5395 = vpack.c.b16 %v5347, %v5347
        %v5396 = vpack.c.b16 %v5348, %v5348
        %v5397 = vpack.c.b16 %v5349, %v5349
        %v5398 = vpack.c.b16 %v5350, %v5350
        %v5399 = vpack.c.b16 %v5351, %v5351
        %v5400 = vpack.c.b16 %v5352, %v5352
        %v5401 = vpack.c.b16 %v5353, %v5353
        %v5402 = vpack.c.b16 %v5354, %v5354
        %v5403 = vpack.c.b16 %v5355, %v5355
        %v5404 = vpack.c.b16 %v5356, %v5356
        %v5405 = vpack.c.b16 %v5357, %v5357
        %v5406 = vpack.c.b16 %v5358, %v5358
        %v5407 = vpack.c.b16 %v5359, %v5359
        %v5409 = vshrl.u32 %v5360, 16
        %v5411 = vrot.slane %v5409, 7
        %v5412 = vshll.u32 %v5360, 16
        %v5414 = vor.u32 %v5411, %v5412
        %v5416 = vshrl.u32 %v5361, 16
        %v5418 = vrot.slane %v5416, 7
        %v5419 = vshll.u32 %v5361, 16
        %v5421 = vor.u32 %v5418, %v5419
        %v5423 = vshrl.u32 %v5362, 16
        %v5425 = vrot.slane %v5423, 7
        %v5426 = vshll.u32 %v5362, 16
        %v5428 = vor.u32 %v5425, %v5426
        %v5430 = vshrl.u32 %v5363, 16
        %v5432 = vrot.slane %v5430, 7
        %v5433 = vshll.u32 %v5363, 16
        %v5435 = vor.u32 %v5432, %v5433
        %v5437 = vshrl.u32 %v5364, 16
        %v5439 = vrot.slane %v5437, 7
        %v5440 = vshll.u32 %v5364, 16
        %v5442 = vor.u32 %v5439, %v5440
        %v5444 = vshrl.u32 %v5365, 16
        %v5446 = vrot.slane %v5444, 7
        %v5447 = vshll.u32 %v5365, 16
        %v5449 = vor.u32 %v5446, %v5447
        %v5451 = vshrl.u32 %v5366, 16
        %v5453 = vrot.slane %v5451, 7
        %v5454 = vshll.u32 %v5366, 16
        %v5456 = vor.u32 %v5453, %v5454
        %v5458 = vshrl.u32 %v5367, 16
        %v5460 = vrot.slane %v5458, 7
        %v5461 = vshll.u32 %v5367, 16
        %v5463 = vor.u32 %v5460, %v5461
        %v5465 = vshrl.u32 %v5368, 16
        %v5467 = vrot.slane %v5465, 7
        %v5468 = vshll.u32 %v5368, 16
        %v5470 = vor.u32 %v5467, %v5468
        %v5472 = vshrl.u32 %v5369, 16
        %v5474 = vrot.slane %v5472, 7
        %v5475 = vshll.u32 %v5369, 16
        %v5477 = vor.u32 %v5474, %v5475
        %v5479 = vshrl.u32 %v5370, 16
        %v5481 = vrot.slane %v5479, 7
        %v5482 = vshll.u32 %v5370, 16
        %v5484 = vor.u32 %v5481, %v5482
        %v5486 = vshrl.u32 %v5371, 16
        %v5488 = vrot.slane %v5486, 7
        %v5489 = vshll.u32 %v5371, 16
        %v5491 = vor.u32 %v5488, %v5489
        %v5493 = vshrl.u32 %v5372, 16
        %v5495 = vrot.slane %v5493, 7
        %v5496 = vshll.u32 %v5372, 16
        %v5498 = vor.u32 %v5495, %v5496
        %v5500 = vshrl.u32 %v5373, 16
        %v5502 = vrot.slane %v5500, 7
        %v5503 = vshll.u32 %v5373, 16
        %v5505 = vor.u32 %v5502, %v5503
        %v5507 = vshrl.u32 %v5374, 16
        %v5509 = vrot.slane %v5507, 7
        %v5510 = vshll.u32 %v5374, 16
        %v5512 = vor.u32 %v5509, %v5510
        %v5514 = vshrl.u32 %v5375, 16
        %v5516 = vrot.slane %v5514, 7
        %v5517 = vshll.u32 %v5375, 16
        %v5519 = vor.u32 %v5516, %v5517
        %v5521 = vshrl.u32 %v5376, 16
        %v5523 = vrot.slane %v5521, 7
        %v5524 = vshll.u32 %v5376, 16
        %v5526 = vor.u32 %v5523, %v5524
        %v5528 = vshrl.u32 %v5377, 16
        %v5530 = vrot.slane %v5528, 7
        %v5531 = vshll.u32 %v5377, 16
        %v5533 = vor.u32 %v5530, %v5531
        %v5535 = vshrl.u32 %v5378, 16
        %v5537 = vrot.slane %v5535, 7
        %v5538 = vshll.u32 %v5378, 16
        %v5540 = vor.u32 %v5537, %v5538
        %v5542 = vshrl.u32 %v5379, 16
        %v5544 = vrot.slane %v5542, 7
        %v5545 = vshll.u32 %v5379, 16
        %v5547 = vor.u32 %v5544, %v5545
        %v5549 = vshrl.u32 %v5380, 16
        %v5551 = vrot.slane %v5549, 7
        %v5552 = vshll.u32 %v5380, 16
        %v5554 = vor.u32 %v5551, %v5552
        %v5556 = vshrl.u32 %v5381, 16
        %v5558 = vrot.slane %v5556, 7
        %v5559 = vshll.u32 %v5381, 16
        %v5561 = vor.u32 %v5558, %v5559
        %v5563 = vshrl.u32 %v5382, 16
        %v5565 = vrot.slane %v5563, 7
        %v5566 = vshll.u32 %v5382, 16
        %v5568 = vor.u32 %v5565, %v5566
        %v5570 = vshrl.u32 %v5383, 16
        %v5572 = vrot.slane %v5570, 7
        %v5573 = vshll.u32 %v5383, 16
        %v5575 = vor.u32 %v5572, %v5573
        %v5577 = vshrl.u32 %v5384, 16
        %v5579 = vrot.slane %v5577, 7
        %v5580 = vshll.u32 %v5384, 16
        %v5582 = vor.u32 %v5579, %v5580
        %v5584 = vshrl.u32 %v5385, 16
        %v5586 = vrot.slane %v5584, 7
        %v5587 = vshll.u32 %v5385, 16
        %v5589 = vor.u32 %v5586, %v5587
        %v5591 = vshrl.u32 %v5386, 16
        %v5593 = vrot.slane %v5591, 7
        %v5594 = vshll.u32 %v5386, 16
        %v5596 = vor.u32 %v5593, %v5594
        %v5598 = vshrl.u32 %v5387, 16
        %v5600 = vrot.slane %v5598, 7
        %v5601 = vshll.u32 %v5387, 16
        %v5603 = vor.u32 %v5600, %v5601
        %v5605 = vshrl.u32 %v5388, 16
        %v5607 = vrot.slane %v5605, 7
        %v5608 = vshll.u32 %v5388, 16
        %v5610 = vor.u32 %v5607, %v5608
        %v5612 = vshrl.u32 %v5389, 16
        %v5614 = vrot.slane %v5612, 7
        %v5615 = vshll.u32 %v5389, 16
        %v5617 = vor.u32 %v5614, %v5615
        %v5619 = vshrl.u32 %v5390, 16
        %v5621 = vrot.slane %v5619, 7
        %v5622 = vshll.u32 %v5390, 16
        %v5624 = vor.u32 %v5621, %v5622
        %v5626 = vshrl.u32 %v5391, 16
        %v5628 = vrot.slane %v5626, 7
        %v5629 = vshll.u32 %v5391, 16
        %v5631 = vor.u32 %v5628, %v5629
        %v5633 = vshrl.u32 %v5392, 16
        %v5635 = vrot.slane %v5633, 7
        %v5636 = vshll.u32 %v5392, 16
        %v5638 = vor.u32 %v5635, %v5636
        %v5640 = vshrl.u32 %v5393, 16
        %v5642 = vrot.slane %v5640, 7
        %v5643 = vshll.u32 %v5393, 16
        %v5645 = vor.u32 %v5642, %v5643
        %v5647 = vshrl.u32 %v5394, 16
        %v5649 = vrot.slane %v5647, 7
        %v5650 = vshll.u32 %v5394, 16
        %v5652 = vor.u32 %v5649, %v5650
        %v5654 = vshrl.u32 %v5395, 16
        %v5656 = vrot.slane %v5654, 7
        %v5657 = vshll.u32 %v5395, 16
        %v5659 = vor.u32 %v5656, %v5657
        %v5661 = vshrl.u32 %v5396, 16
        %v5663 = vrot.slane %v5661, 7
        %v5664 = vshll.u32 %v5396, 16
        %v5666 = vor.u32 %v5663, %v5664
        %v5668 = vshrl.u32 %v5397, 16
        %v5670 = vrot.slane %v5668, 7
        %v5671 = vshll.u32 %v5397, 16
        %v5673 = vor.u32 %v5670, %v5671
        %v5675 = vshrl.u32 %v5398, 16
        %v5677 = vrot.slane %v5675, 7
        %v5678 = vshll.u32 %v5398, 16
        %v5680 = vor.u32 %v5677, %v5678
        %v5682 = vshrl.u32 %v5399, 16
        %v5684 = vrot.slane %v5682, 7
        %v5685 = vshll.u32 %v5399, 16
        %v5687 = vor.u32 %v5684, %v5685
        %v5689 = vshrl.u32 %v5400, 16
        %v5691 = vrot.slane %v5689, 7
        %v5692 = vshll.u32 %v5400, 16
        %v5694 = vor.u32 %v5691, %v5692
        %v5696 = vshrl.u32 %v5401, 16
        %v5698 = vrot.slane %v5696, 7
        %v5699 = vshll.u32 %v5401, 16
        %v5701 = vor.u32 %v5698, %v5699
        %v5703 = vshrl.u32 %v5402, 16
        %v5705 = vrot.slane %v5703, 7
        %v5706 = vshll.u32 %v5402, 16
        %v5708 = vor.u32 %v5705, %v5706
        %v5710 = vshrl.u32 %v5403, 16
        %v5712 = vrot.slane %v5710, 7
        %v5713 = vshll.u32 %v5403, 16
        %v5715 = vor.u32 %v5712, %v5713
        %v5717 = vshrl.u32 %v5404, 16
        %v5719 = vrot.slane %v5717, 7
        %v5720 = vshll.u32 %v5404, 16
        %v5722 = vor.u32 %v5719, %v5720
        %v5724 = vshrl.u32 %v5405, 16
        %v5726 = vrot.slane %v5724, 7
        %v5727 = vshll.u32 %v5405, 16
        %v5729 = vor.u32 %v5726, %v5727
        %v5731 = vshrl.u32 %v5406, 16
        %v5733 = vrot.slane %v5731, 7
        %v5734 = vshll.u32 %v5406, 16
        %v5736 = vor.u32 %v5733, %v5734
        %v5738 = vshrl.u32 %v5407, 16
        %v5740 = vrot.slane %v5738, 7
        %v5741 = vshll.u32 %v5407, 16
        %v5743 = vor.u32 %v5740, %v5741
        %5744 = vrot.lane.b32.xlu0 %v5414, 8
        %v5745 = vpop.permute.xlu0 %5744
        %5746 = vrot.lane.b32.xlu0 %v5421, 8
        %v5747 = vpop.permute.xlu0 %5746
        %5748 = vrot.lane.b32.xlu0 %v5428, 8
        %v5749 = vpop.permute.xlu0 %5748
        %5750 = vrot.lane.b32.xlu0 %v5435, 8
        %v5751 = vpop.permute.xlu0 %5750
        %5752 = vrot.lane.b32.xlu0 %v5442, 8
        %v5753 = vpop.permute.xlu0 %5752
        %5754 = vrot.lane.b32.xlu0 %v5449, 8
        %v5755 = vpop.permute.xlu0 %5754
        %5756 = vrot.lane.b32.xlu0 %v5456, 8
        %v5757 = vpop.permute.xlu0 %5756
        %5758 = vrot.lane.b32.xlu0 %v5463, 8
        %v5759 = vpop.permute.xlu0 %5758
        %5760 = vrot.lane.b32.xlu0 %v5470, 8
        %v5761 = vpop.permute.xlu0 %5760
        %5762 = vrot.lane.b32.xlu0 %v5477, 8
        %v5763 = vpop.permute.xlu0 %5762
        %5764 = vrot.lane.b32.xlu0 %v5484, 8
        %v5765 = vpop.permute.xlu0 %5764
        %5766 = vrot.lane.b32.xlu0 %v5491, 8
        %v5767 = vpop.permute.xlu0 %5766
        %5768 = vrot.lane.b32.xlu0 %v5498, 8
        %v5769 = vpop.permute.xlu0 %5768
        %5770 = vrot.lane.b32.xlu0 %v5505, 8
        %v5771 = vpop.permute.xlu0 %5770
        %5772 = vrot.lane.b32.xlu0 %v5512, 8
        %v5773 = vpop.permute.xlu0 %5772
        %5774 = vrot.lane.b32.xlu0 %v5519, 8
        %v5775 = vpop.permute.xlu0 %5774
        %5776 = vrot.lane.b32.xlu0 %v5526, 8
        %v5777 = vpop.permute.xlu0 %5776
        %5778 = vrot.lane.b32.xlu0 %v5533, 8
        %v5779 = vpop.permute.xlu0 %5778
        %5780 = vrot.lane.b32.xlu0 %v5540, 8
        %v5781 = vpop.permute.xlu0 %5780
        %5782 = vrot.lane.b32.xlu0 %v5547, 8
        %v5783 = vpop.permute.xlu0 %5782
        %5784 = vrot.lane.b32.xlu0 %v5554, 8
        %v5785 = vpop.permute.xlu0 %5784
        %5786 = vrot.lane.b32.xlu0 %v5561, 8
        %v5787 = vpop.permute.xlu0 %5786
        %5788 = vrot.lane.b32.xlu0 %v5568, 8
        %v5789 = vpop.permute.xlu0 %5788
        %5790 = vrot.lane.b32.xlu0 %v5575, 8
        %v5791 = vpop.permute.xlu0 %5790
        %5792 = vrot.lane.b32.xlu0 %v5582, 8
        %v5793 = vpop.permute.xlu0 %5792
        %5794 = vrot.lane.b32.xlu0 %v5589, 8
        %v5795 = vpop.permute.xlu0 %5794
        %5796 = vrot.lane.b32.xlu0 %v5596, 8
        %v5797 = vpop.permute.xlu0 %5796
        %5798 = vrot.lane.b32.xlu0 %v5603, 8
        %v5799 = vpop.permute.xlu0 %5798
        %5800 = vrot.lane.b32.xlu0 %v5610, 8
        %v5801 = vpop.permute.xlu0 %5800
        %5802 = vrot.lane.b32.xlu0 %v5617, 8
        %v5803 = vpop.permute.xlu0 %5802
        %5804 = vrot.lane.b32.xlu0 %v5624, 8
        %v5805 = vpop.permute.xlu0 %5804
        %5806 = vrot.lane.b32.xlu0 %v5631, 8
        %v5807 = vpop.permute.xlu0 %5806
        %5808 = vrot.lane.b32.xlu0 %v5638, 8
        %v5809 = vpop.permute.xlu0 %5808
        %5810 = vrot.lane.b32.xlu0 %v5645, 8
        %v5811 = vpop.permute.xlu0 %5810
        %5812 = vrot.lane.b32.xlu0 %v5652, 8
        %v5813 = vpop.permute.xlu0 %5812
        %5814 = vrot.lane.b32.xlu0 %v5659, 8
        %v5815 = vpop.permute.xlu0 %5814
        %5816 = vrot.lane.b32.xlu0 %v5666, 8
        %v5817 = vpop.permute.xlu0 %5816
        %5818 = vrot.lane.b32.xlu0 %v5673, 8
        %v5819 = vpop.permute.xlu0 %5818
        %5820 = vrot.lane.b32.xlu0 %v5680, 8
        %v5821 = vpop.permute.xlu0 %5820
        %5822 = vrot.lane.b32.xlu0 %v5687, 8
        %v5823 = vpop.permute.xlu0 %5822
        %5824 = vrot.lane.b32.xlu0 %v5694, 8
        %v5825 = vpop.permute.xlu0 %5824
        %5826 = vrot.lane.b32.xlu0 %v5701, 8
        %v5827 = vpop.permute.xlu0 %5826
        %5828 = vrot.lane.b32.xlu0 %v5708, 8
        %v5829 = vpop.permute.xlu0 %5828
        %5830 = vrot.lane.b32.xlu0 %v5715, 8
        %v5831 = vpop.permute.xlu0 %5830
        %5832 = vrot.lane.b32.xlu0 %v5722, 8
        %v5833 = vpop.permute.xlu0 %5832
        %5834 = vrot.lane.b32.xlu0 %v5729, 8
        %v5835 = vpop.permute.xlu0 %5834
        %5836 = vrot.lane.b32.xlu0 %v5736, 8
        %v5837 = vpop.permute.xlu0 %5836
        %5838 = vrot.lane.b32.xlu0 %v5743, 8
        %v5839 = vpop.permute.xlu0 %5838
        %v5888 = vunpack.c.l.b16 %v438
        %v5889 = vunpack.c.l.b16 %v440
        %v5890 = vunpack.c.l.b16 %v442
        %v5891 = vunpack.c.l.b16 %v444
        %v5892 = vunpack.c.l.b16 %v446
        %v5893 = vunpack.c.l.b16 %v448
        %v5894 = vunpack.c.l.b16 %v450
        %v5895 = vunpack.c.l.b16 %v452
        %v5896 = vunpack.c.l.b16 %v458
        %v5897 = vunpack.c.l.b16 %v460
        %v5898 = vunpack.c.l.b16 %v462
        %v5899 = vunpack.c.l.b16 %v464
        %v5900 = vunpack.c.l.b16 %v466
        %v5901 = vunpack.c.l.b16 %v468
        %v5902 = vunpack.c.l.b16 %v470
        %v5903 = vunpack.c.l.b16 %v472
        %v5904 = vunpack.c.l.b16 %v478
        %v5905 = vunpack.c.l.b16 %v480
        %v5906 = vunpack.c.l.b16 %v482
        %v5907 = vunpack.c.l.b16 %v484
        %v5908 = vunpack.c.l.b16 %v486
        %v5909 = vunpack.c.l.b16 %v488
        %v5910 = vunpack.c.l.b16 %v490
        %v5911 = vunpack.c.l.b16 %v492
        %v5912 = vunpack.c.l.b16 %v498
        %v5913 = vunpack.c.l.b16 %v500
        %v5914 = vunpack.c.l.b16 %v502
        %v5915 = vunpack.c.l.b16 %v504
        %v5916 = vunpack.c.l.b16 %v506
        %v5917 = vunpack.c.l.b16 %v508
        %v5918 = vunpack.c.l.b16 %v510
        %v5919 = vunpack.c.l.b16 %v512
        %v5920 = vunpack.c.l.b16 %v518
        %v5921 = vunpack.c.l.b16 %v520
        %v5922 = vunpack.c.l.b16 %v522
        %v5923 = vunpack.c.l.b16 %v524
        %v5924 = vunpack.c.l.b16 %v526
        %v5925 = vunpack.c.l.b16 %v528
        %v5926 = vunpack.c.l.b16 %v530
        %v5927 = vunpack.c.l.b16 %v532
        %v5928 = vunpack.c.l.b16 %v538
        %v5929 = vunpack.c.l.b16 %v540
        %v5930 = vunpack.c.l.b16 %v542
        %v5931 = vunpack.c.l.b16 %v544
        %v5932 = vunpack.c.l.b16 %v546
        %v5933 = vunpack.c.l.b16 %v548
        %v5934 = vunpack.c.l.b16 %v550
        %v5935 = vunpack.c.l.b16 %v552
        %v5936 = vpack.c.b16 %v5888, %v5312
        %v5937 = vpack.c.b16 %v5889, %v5313
        %v5938 = vpack.c.b16 %v5890, %v5314
        %v5939 = vpack.c.b16 %v5891, %v5315
        %v5940 = vpack.c.b16 %v5892, %v5316
        %v5941 = vpack.c.b16 %v5893, %v5317
        %v5942 = vpack.c.b16 %v5894, %v5318
        %v5943 = vpack.c.b16 %v5895, %v5319
        %v5944 = vpack.c.b16 %v5896, %v5320
        %v5945 = vpack.c.b16 %v5897, %v5321
        %v5946 = vpack.c.b16 %v5898, %v5322
        %v5947 = vpack.c.b16 %v5899, %v5323
        %v5948 = vpack.c.b16 %v5900, %v5324
        %v5949 = vpack.c.b16 %v5901, %v5325
        %v5950 = vpack.c.b16 %v5902, %v5326
        %v5951 = vpack.c.b16 %v5903, %v5327
        %v5952 = vpack.c.b16 %v5904, %v5328
        %v5953 = vpack.c.b16 %v5905, %v5329
        %v5954 = vpack.c.b16 %v5906, %v5330
        %v5955 = vpack.c.b16 %v5907, %v5331
        %v5956 = vpack.c.b16 %v5908, %v5332
        %v5957 = vpack.c.b16 %v5909, %v5333
        %v5958 = vpack.c.b16 %v5910, %v5334
        %v5959 = vpack.c.b16 %v5911, %v5335
        %v5960 = vpack.c.b16 %v5912, %v5336
        %v5961 = vpack.c.b16 %v5913, %v5337
        %v5962 = vpack.c.b16 %v5914, %v5338
        %v5963 = vpack.c.b16 %v5915, %v5339
        %v5964 = vpack.c.b16 %v5916, %v5340
        %v5965 = vpack.c.b16 %v5917, %v5341
        %v5966 = vpack.c.b16 %v5918, %v5342
        %v5967 = vpack.c.b16 %v5919, %v5343
        %v5968 = vpack.c.b16 %v5920, %v5344
        %v5969 = vpack.c.b16 %v5921, %v5345
        %v5970 = vpack.c.b16 %v5922, %v5346
        %v5971 = vpack.c.b16 %v5923, %v5347
        %v5972 = vpack.c.b16 %v5924, %v5348
        %v5973 = vpack.c.b16 %v5925, %v5349
        %v5974 = vpack.c.b16 %v5926, %v5350
        %v5975 = vpack.c.b16 %v5927, %v5351
        %v5976 = vpack.c.b16 %v5928, %v5352
        %v5977 = vpack.c.b16 %v5929, %v5353
        %v5978 = vpack.c.b16 %v5930, %v5354
        %v5979 = vpack.c.b16 %v5931, %v5355
        %v5980 = vpack.c.b16 %v5932, %v5356
        %v5981 = vpack.c.b16 %v5933, %v5357
        %v5982 = vpack.c.b16 %v5934, %v5358
        %v5983 = vpack.c.b16 %v5935, %v5359
        %5984 = vrot.lane.b32.xlu0 %v5936, 12
        %v5985 = vpop.permute.xlu0 %5984
        %5986 = vrot.lane.b32.xlu0 %v5937, 12
        %v5987 = vpop.permute.xlu0 %5986
        %5988 = vrot.lane.b32.xlu0 %v5938, 12
        %v5989 = vpop.permute.xlu0 %5988
        %5990 = vrot.lane.b32.xlu0 %v5939, 12
        %v5991 = vpop.permute.xlu0 %5990
        %5992 = vrot.lane.b32.xlu0 %v5940, 12
        %v5993 = vpop.permute.xlu0 %5992
        %5994 = vrot.lane.b32.xlu0 %v5941, 12
        %v5995 = vpop.permute.xlu0 %5994
        %5996 = vrot.lane.b32.xlu0 %v5942, 12
        %v5997 = vpop.permute.xlu0 %5996
        %5998 = vrot.lane.b32.xlu0 %v5943, 12
        %v5999 = vpop.permute.xlu0 %5998
        %6000 = vrot.lane.b32.xlu0 %v5944, 12
        %v6001 = vpop.permute.xlu0 %6000
        %6002 = vrot.lane.b32.xlu0 %v5945, 12
        %v6003 = vpop.permute.xlu0 %6002
        %6004 = vrot.lane.b32.xlu0 %v5946, 12
        %v6005 = vpop.permute.xlu0 %6004
        %6006 = vrot.lane.b32.xlu0 %v5947, 12
        %v6007 = vpop.permute.xlu0 %6006
        %6008 = vrot.lane.b32.xlu0 %v5948, 12
        %v6009 = vpop.permute.xlu0 %6008
        %6010 = vrot.lane.b32.xlu0 %v5949, 12
        %v6011 = vpop.permute.xlu0 %6010
        %6012 = vrot.lane.b32.xlu0 %v5950, 12
        %v6013 = vpop.permute.xlu0 %6012
        %6014 = vrot.lane.b32.xlu0 %v5951, 12
        %v6015 = vpop.permute.xlu0 %6014
        %6016 = vrot.lane.b32.xlu0 %v5952, 12
        %v6017 = vpop.permute.xlu0 %6016
        %6018 = vrot.lane.b32.xlu0 %v5953, 12
        %v6019 = vpop.permute.xlu0 %6018
        %6020 = vrot.lane.b32.xlu0 %v5954, 12
        %v6021 = vpop.permute.xlu0 %6020
        %6022 = vrot.lane.b32.xlu0 %v5955, 12
        %v6023 = vpop.permute.xlu0 %6022
        %6024 = vrot.lane.b32.xlu0 %v5956, 12
        %v6025 = vpop.permute.xlu0 %6024
        %6026 = vrot.lane.b32.xlu0 %v5957, 12
        %v6027 = vpop.permute.xlu0 %6026
        %6028 = vrot.lane.b32.xlu0 %v5958, 12
        %v6029 = vpop.permute.xlu0 %6028
        %6030 = vrot.lane.b32.xlu0 %v5959, 12
        %v6031 = vpop.permute.xlu0 %6030
        %6032 = vrot.lane.b32.xlu0 %v5960, 12
        %v6033 = vpop.permute.xlu0 %6032
        %6034 = vrot.lane.b32.xlu0 %v5961, 12
        %v6035 = vpop.permute.xlu0 %6034
        %6036 = vrot.lane.b32.xlu0 %v5962, 12
        %v6037 = vpop.permute.xlu0 %6036
        %6038 = vrot.lane.b32.xlu0 %v5963, 12
        %v6039 = vpop.permute.xlu0 %6038
        %6040 = vrot.lane.b32.xlu0 %v5964, 12
        %v6041 = vpop.permute.xlu0 %6040
        %6042 = vrot.lane.b32.xlu0 %v5965, 12
        %v6043 = vpop.permute.xlu0 %6042
        %6044 = vrot.lane.b32.xlu0 %v5966, 12
        %v6045 = vpop.permute.xlu0 %6044
        %6046 = vrot.lane.b32.xlu0 %v5967, 12
        %v6047 = vpop.permute.xlu0 %6046
        %6048 = vrot.lane.b32.xlu0 %v5968, 12
        %v6049 = vpop.permute.xlu0 %6048
        %6050 = vrot.lane.b32.xlu0 %v5969, 12
        %v6051 = vpop.permute.xlu0 %6050
        %6052 = vrot.lane.b32.xlu0 %v5970, 12
        %v6053 = vpop.permute.xlu0 %6052
        %6054 = vrot.lane.b32.xlu0 %v5971, 12
        %v6055 = vpop.permute.xlu0 %6054
        %6056 = vrot.lane.b32.xlu0 %v5972, 12
        %v6057 = vpop.permute.xlu0 %6056
        %6058 = vrot.lane.b32.xlu0 %v5973, 12
        %v6059 = vpop.permute.xlu0 %6058
        %6060 = vrot.lane.b32.xlu0 %v5974, 12
        %v6061 = vpop.permute.xlu0 %6060
        %6062 = vrot.lane.b32.xlu0 %v5975, 12
        %v6063 = vpop.permute.xlu0 %6062
        %6064 = vrot.lane.b32.xlu0 %v5976, 12
        %v6065 = vpop.permute.xlu0 %6064
        %6066 = vrot.lane.b32.xlu0 %v5977, 12
        %v6067 = vpop.permute.xlu0 %6066
        %6068 = vrot.lane.b32.xlu0 %v5978, 12
        %v6069 = vpop.permute.xlu0 %6068
        %6070 = vrot.lane.b32.xlu0 %v5979, 12
        %v6071 = vpop.permute.xlu0 %6070
        %6072 = vrot.lane.b32.xlu0 %v5980, 12
        %v6073 = vpop.permute.xlu0 %6072
        %6074 = vrot.lane.b32.xlu0 %v5981, 12
        %v6075 = vpop.permute.xlu0 %6074
        %6076 = vrot.lane.b32.xlu0 %v5982, 12
        %v6077 = vpop.permute.xlu0 %6076
        %6078 = vrot.lane.b32.xlu0 %v5983, 12
        %v6079 = vpop.permute.xlu0 %6078
        %v6081 = vshrl.u32 %v5936, 16
        %v6083 = vshll.u32 %v5936, 16
        %v6085 = vrot.slane %v6083, 1
        %v6086 = vor.u32 %v6081, %v6085
        %v6088 = vshrl.u32 %v5937, 16
        %v6090 = vshll.u32 %v5937, 16
        %v6092 = vrot.slane %v6090, 1
        %v6093 = vor.u32 %v6088, %v6092
        %v6095 = vshrl.u32 %v5938, 16
        %v6097 = vshll.u32 %v5938, 16
        %v6099 = vrot.slane %v6097, 1
        %v6100 = vor.u32 %v6095, %v6099
        %v6102 = vshrl.u32 %v5939, 16
        %v6104 = vshll.u32 %v5939, 16
        %v6106 = vrot.slane %v6104, 1
        %v6107 = vor.u32 %v6102, %v6106
        %v6109 = vshrl.u32 %v5940, 16
        %v6111 = vshll.u32 %v5940, 16
        %v6113 = vrot.slane %v6111, 1
        %v6114 = vor.u32 %v6109, %v6113
        %v6116 = vshrl.u32 %v5941, 16
        %v6118 = vshll.u32 %v5941, 16
        %v6120 = vrot.slane %v6118, 1
        %v6121 = vor.u32 %v6116, %v6120
        %v6123 = vshrl.u32 %v5942, 16
        %v6125 = vshll.u32 %v5942, 16
        %v6127 = vrot.slane %v6125, 1
        %v6128 = vor.u32 %v6123, %v6127
        %v6130 = vshrl.u32 %v5943, 16
        %v6132 = vshll.u32 %v5943, 16
        %v6134 = vrot.slane %v6132, 1
        %v6135 = vor.u32 %v6130, %v6134
        %v6137 = vshrl.u32 %v5944, 16
        %v6139 = vshll.u32 %v5944, 16
        %v6141 = vrot.slane %v6139, 1
        %v6142 = vor.u32 %v6137, %v6141
        %v6144 = vshrl.u32 %v5945, 16
        %v6146 = vshll.u32 %v5945, 16
        %v6148 = vrot.slane %v6146, 1
        %v6149 = vor.u32 %v6144, %v6148
        %v6151 = vshrl.u32 %v5946, 16
        %v6153 = vshll.u32 %v5946, 16
        %v6155 = vrot.slane %v6153, 1
        %v6156 = vor.u32 %v6151, %v6155
        %v6158 = vshrl.u32 %v5947, 16
        %v6160 = vshll.u32 %v5947, 16
        %v6162 = vrot.slane %v6160, 1
        %v6163 = vor.u32 %v6158, %v6162
        %v6165 = vshrl.u32 %v5948, 16
        %v6167 = vshll.u32 %v5948, 16
        %v6169 = vrot.slane %v6167, 1
        %v6170 = vor.u32 %v6165, %v6169
        %v6172 = vshrl.u32 %v5949, 16
        %v6174 = vshll.u32 %v5949, 16
        %v6176 = vrot.slane %v6174, 1
        %v6177 = vor.u32 %v6172, %v6176
        %v6179 = vshrl.u32 %v5950, 16
        %v6181 = vshll.u32 %v5950, 16
        %v6183 = vrot.slane %v6181, 1
        %v6184 = vor.u32 %v6179, %v6183
        %v6186 = vshrl.u32 %v5951, 16
        %v6188 = vshll.u32 %v5951, 16
        %v6190 = vrot.slane %v6188, 1
        %v6191 = vor.u32 %v6186, %v6190
        %v6193 = vshrl.u32 %v5952, 16
        %v6195 = vshll.u32 %v5952, 16
        %v6197 = vrot.slane %v6195, 1
        %v6198 = vor.u32 %v6193, %v6197
        %v6200 = vshrl.u32 %v5953, 16
        %v6202 = vshll.u32 %v5953, 16
        %v6204 = vrot.slane %v6202, 1
        %v6205 = vor.u32 %v6200, %v6204
        %v6207 = vshrl.u32 %v5954, 16
        %v6209 = vshll.u32 %v5954, 16
        %v6211 = vrot.slane %v6209, 1
        %v6212 = vor.u32 %v6207, %v6211
        %v6214 = vshrl.u32 %v5955, 16
        %v6216 = vshll.u32 %v5955, 16
        %v6218 = vrot.slane %v6216, 1
        %v6219 = vor.u32 %v6214, %v6218
        %v6221 = vshrl.u32 %v5956, 16
        %v6223 = vshll.u32 %v5956, 16
        %v6225 = vrot.slane %v6223, 1
        %v6226 = vor.u32 %v6221, %v6225
        %v6228 = vshrl.u32 %v5957, 16
        %v6230 = vshll.u32 %v5957, 16
        %v6232 = vrot.slane %v6230, 1
        %v6233 = vor.u32 %v6228, %v6232
        %v6235 = vshrl.u32 %v5958, 16
        %v6237 = vshll.u32 %v5958, 16
        %v6239 = vrot.slane %v6237, 1
        %v6240 = vor.u32 %v6235, %v6239
        %v6242 = vshrl.u32 %v5959, 16
        %v6244 = vshll.u32 %v5959, 16
        %v6246 = vrot.slane %v6244, 1
        %v6247 = vor.u32 %v6242, %v6246
        %v6249 = vshrl.u32 %v5960, 16
        %v6251 = vshll.u32 %v5960, 16
        %v6253 = vrot.slane %v6251, 1
        %v6254 = vor.u32 %v6249, %v6253
        %v6256 = vshrl.u32 %v5961, 16
        %v6258 = vshll.u32 %v5961, 16
        %v6260 = vrot.slane %v6258, 1
        %v6261 = vor.u32 %v6256, %v6260
        %v6263 = vshrl.u32 %v5962, 16
        %v6265 = vshll.u32 %v5962, 16
        %v6267 = vrot.slane %v6265, 1
        %v6268 = vor.u32 %v6263, %v6267
        %v6270 = vshrl.u32 %v5963, 16
        %v6272 = vshll.u32 %v5963, 16
        %v6274 = vrot.slane %v6272, 1
        %v6275 = vor.u32 %v6270, %v6274
        %v6277 = vshrl.u32 %v5964, 16
        %v6279 = vshll.u32 %v5964, 16
        %v6281 = vrot.slane %v6279, 1
        %v6282 = vor.u32 %v6277, %v6281
        %v6284 = vshrl.u32 %v5965, 16
        %v6286 = vshll.u32 %v5965, 16
        %v6288 = vrot.slane %v6286, 1
        %v6289 = vor.u32 %v6284, %v6288
        %v6291 = vshrl.u32 %v5966, 16
        %v6293 = vshll.u32 %v5966, 16
        %v6295 = vrot.slane %v6293, 1
        %v6296 = vor.u32 %v6291, %v6295
        %v6298 = vshrl.u32 %v5967, 16
        %v6300 = vshll.u32 %v5967, 16
        %v6302 = vrot.slane %v6300, 1
        %v6303 = vor.u32 %v6298, %v6302
        %v6305 = vshrl.u32 %v5968, 16
        %v6307 = vshll.u32 %v5968, 16
        %v6309 = vrot.slane %v6307, 1
        %v6310 = vor.u32 %v6305, %v6309
        %v6312 = vshrl.u32 %v5969, 16
        %v6314 = vshll.u32 %v5969, 16
        %v6316 = vrot.slane %v6314, 1
        %v6317 = vor.u32 %v6312, %v6316
        %v6319 = vshrl.u32 %v5970, 16
        %v6321 = vshll.u32 %v5970, 16
        %v6323 = vrot.slane %v6321, 1
        %v6324 = vor.u32 %v6319, %v6323
        %v6326 = vshrl.u32 %v5971, 16
        %v6328 = vshll.u32 %v5971, 16
        %v6330 = vrot.slane %v6328, 1
        %v6331 = vor.u32 %v6326, %v6330
        %v6333 = vshrl.u32 %v5972, 16
        %v6335 = vshll.u32 %v5972, 16
        %v6337 = vrot.slane %v6335, 1
        %v6338 = vor.u32 %v6333, %v6337
        %v6340 = vshrl.u32 %v5973, 16
        %v6342 = vshll.u32 %v5973, 16
        %v6344 = vrot.slane %v6342, 1
        %v6345 = vor.u32 %v6340, %v6344
        %v6347 = vshrl.u32 %v5974, 16
        %v6349 = vshll.u32 %v5974, 16
        %v6351 = vrot.slane %v6349, 1
        %v6352 = vor.u32 %v6347, %v6351
        %v6354 = vshrl.u32 %v5975, 16
        %v6356 = vshll.u32 %v5975, 16
        %v6358 = vrot.slane %v6356, 1
        %v6359 = vor.u32 %v6354, %v6358
        %v6361 = vshrl.u32 %v5976, 16
        %v6363 = vshll.u32 %v5976, 16
        %v6365 = vrot.slane %v6363, 1
        %v6366 = vor.u32 %v6361, %v6365
        %v6368 = vshrl.u32 %v5977, 16
        %v6370 = vshll.u32 %v5977, 16
        %v6372 = vrot.slane %v6370, 1
        %v6373 = vor.u32 %v6368, %v6372
        %v6375 = vshrl.u32 %v5978, 16
        %v6377 = vshll.u32 %v5978, 16
        %v6379 = vrot.slane %v6377, 1
        %v6380 = vor.u32 %v6375, %v6379
        %v6382 = vshrl.u32 %v5979, 16
        %v6384 = vshll.u32 %v5979, 16
        %v6386 = vrot.slane %v6384, 1
        %v6387 = vor.u32 %v6382, %v6386
        %v6389 = vshrl.u32 %v5980, 16
        %v6391 = vshll.u32 %v5980, 16
        %v6393 = vrot.slane %v6391, 1
        %v6394 = vor.u32 %v6389, %v6393
        %v6396 = vshrl.u32 %v5981, 16
        %v6398 = vshll.u32 %v5981, 16
        %v6400 = vrot.slane %v6398, 1
        %v6401 = vor.u32 %v6396, %v6400
        %v6403 = vshrl.u32 %v5982, 16
        %v6405 = vshll.u32 %v5982, 16
        %v6407 = vrot.slane %v6405, 1
        %v6408 = vor.u32 %v6403, %v6407
        %v6410 = vshrl.u32 %v5983, 16
        %v6412 = vshll.u32 %v5983, 16
        %v6414 = vrot.slane %v6412, 1
        %v6415 = vor.u32 %v6410, %v6414
        %6416 = vrot.lane.b32.xlu0 %v6086, 16
        %v6417 = vpop.permute.xlu0 %6416
        %6418 = vrot.lane.b32.xlu0 %v6093, 16
        %v6419 = vpop.permute.xlu0 %6418
        %6420 = vrot.lane.b32.xlu0 %v6100, 16
        %v6421 = vpop.permute.xlu0 %6420
        %6422 = vrot.lane.b32.xlu0 %v6107, 16
        %v6423 = vpop.permute.xlu0 %6422
        %6424 = vrot.lane.b32.xlu0 %v6114, 16
        %v6425 = vpop.permute.xlu0 %6424
        %6426 = vrot.lane.b32.xlu0 %v6121, 16
        %v6427 = vpop.permute.xlu0 %6426
        %6428 = vrot.lane.b32.xlu0 %v6128, 16
        %v6429 = vpop.permute.xlu0 %6428
        %6430 = vrot.lane.b32.xlu0 %v6135, 16
        %v6431 = vpop.permute.xlu0 %6430
        %6432 = vrot.lane.b32.xlu0 %v6142, 16
        %v6433 = vpop.permute.xlu0 %6432
        %6434 = vrot.lane.b32.xlu0 %v6149, 16
        %v6435 = vpop.permute.xlu0 %6434
        %6436 = vrot.lane.b32.xlu0 %v6156, 16
        %v6437 = vpop.permute.xlu0 %6436
        %6438 = vrot.lane.b32.xlu0 %v6163, 16
        %v6439 = vpop.permute.xlu0 %6438
        %6440 = vrot.lane.b32.xlu0 %v6170, 16
        %v6441 = vpop.permute.xlu0 %6440
        %6442 = vrot.lane.b32.xlu0 %v6177, 16
        %v6443 = vpop.permute.xlu0 %6442
        %6444 = vrot.lane.b32.xlu0 %v6184, 16
        %v6445 = vpop.permute.xlu0 %6444
        %6446 = vrot.lane.b32.xlu0 %v6191, 16
        %v6447 = vpop.permute.xlu0 %6446
        %6448 = vrot.lane.b32.xlu0 %v6198, 16
        %v6449 = vpop.permute.xlu0 %6448
        %6450 = vrot.lane.b32.xlu0 %v6205, 16
        %v6451 = vpop.permute.xlu0 %6450
        %6452 = vrot.lane.b32.xlu0 %v6212, 16
        %v6453 = vpop.permute.xlu0 %6452
        %6454 = vrot.lane.b32.xlu0 %v6219, 16
        %v6455 = vpop.permute.xlu0 %6454
        %6456 = vrot.lane.b32.xlu0 %v6226, 16
        %v6457 = vpop.permute.xlu0 %6456
        %6458 = vrot.lane.b32.xlu0 %v6233, 16
        %v6459 = vpop.permute.xlu0 %6458
        %6460 = vrot.lane.b32.xlu0 %v6240, 16
        %v6461 = vpop.permute.xlu0 %6460
        %6462 = vrot.lane.b32.xlu0 %v6247, 16
        %v6463 = vpop.permute.xlu0 %6462
        %6464 = vrot.lane.b32.xlu0 %v6254, 16
        %v6465 = vpop.permute.xlu0 %6464
        %6466 = vrot.lane.b32.xlu0 %v6261, 16
        %v6467 = vpop.permute.xlu0 %6466
        %6468 = vrot.lane.b32.xlu0 %v6268, 16
        %v6469 = vpop.permute.xlu0 %6468
        %6470 = vrot.lane.b32.xlu0 %v6275, 16
        %v6471 = vpop.permute.xlu0 %6470
        %6472 = vrot.lane.b32.xlu0 %v6282, 16
        %v6473 = vpop.permute.xlu0 %6472
        %6474 = vrot.lane.b32.xlu0 %v6289, 16
        %v6475 = vpop.permute.xlu0 %6474
        %6476 = vrot.lane.b32.xlu0 %v6296, 16
        %v6477 = vpop.permute.xlu0 %6476
        %6478 = vrot.lane.b32.xlu0 %v6303, 16
        %v6479 = vpop.permute.xlu0 %6478
        %6480 = vrot.lane.b32.xlu0 %v6310, 16
        %v6481 = vpop.permute.xlu0 %6480
        %6482 = vrot.lane.b32.xlu0 %v6317, 16
        %v6483 = vpop.permute.xlu0 %6482
        %6484 = vrot.lane.b32.xlu0 %v6324, 16
        %v6485 = vpop.permute.xlu0 %6484
        %6486 = vrot.lane.b32.xlu0 %v6331, 16
        %v6487 = vpop.permute.xlu0 %6486
        %6488 = vrot.lane.b32.xlu0 %v6338, 16
        %v6489 = vpop.permute.xlu0 %6488
        %6490 = vrot.lane.b32.xlu0 %v6345, 16
        %v6491 = vpop.permute.xlu0 %6490
        %6492 = vrot.lane.b32.xlu0 %v6352, 16
        %v6493 = vpop.permute.xlu0 %6492
        %6494 = vrot.lane.b32.xlu0 %v6359, 16
        %v6495 = vpop.permute.xlu0 %6494
        %6496 = vrot.lane.b32.xlu0 %v6366, 16
        %v6497 = vpop.permute.xlu0 %6496
        %6498 = vrot.lane.b32.xlu0 %v6373, 16
        %v6499 = vpop.permute.xlu0 %6498
        %6500 = vrot.lane.b32.xlu0 %v6380, 16
        %v6501 = vpop.permute.xlu0 %6500
        %6502 = vrot.lane.b32.xlu0 %v6387, 16
        %v6503 = vpop.permute.xlu0 %6502
        %6504 = vrot.lane.b32.xlu0 %v6394, 16
        %v6505 = vpop.permute.xlu0 %6504
        %6506 = vrot.lane.b32.xlu0 %v6401, 16
        %v6507 = vpop.permute.xlu0 %6506
        %6508 = vrot.lane.b32.xlu0 %v6408, 16
        %v6509 = vpop.permute.xlu0 %6508
        %6510 = vrot.lane.b32.xlu0 %v6415, 16
        %v6511 = vpop.permute.xlu0 %6510
        %v6518 = vunpack.c.l.b16 %v453
        %v6519 = vunpack.c.l.b16 %v473
        %v6520 = vunpack.c.l.b16 %v493
        %v6521 = vunpack.c.l.b16 %v513
        %v6522 = vunpack.c.l.b16 %v533
        %v6523 = vunpack.c.l.b16 %v553
        %v6524 = vpack.c.b16 %v6518, %v6518
        %v6525 = vpack.c.b16 %v6519, %v6519
        %v6526 = vpack.c.b16 %v6520, %v6520
        %v6527 = vpack.c.b16 %v6521, %v6521
        %v6528 = vpack.c.b16 %v6522, %v6522
        %v6529 = vpack.c.b16 %v6523, %v6523
        %v6531 = vshrl.u32 %v6524, 16
        %v6533 = vrot.slane %v6531, 7
        %v6534 = vshll.u32 %v6524, 16
        %v6536 = vor.u32 %v6533, %v6534
        %v6538 = vshrl.u32 %v6525, 16
        %v6540 = vrot.slane %v6538, 7
        %v6541 = vshll.u32 %v6525, 16
        %v6543 = vor.u32 %v6540, %v6541
        %v6545 = vshrl.u32 %v6526, 16
        %v6547 = vrot.slane %v6545, 7
        %v6548 = vshll.u32 %v6526, 16
        %v6550 = vor.u32 %v6547, %v6548
        %v6552 = vshrl.u32 %v6527, 16
        %v6554 = vrot.slane %v6552, 7
        %v6555 = vshll.u32 %v6527, 16
        %v6557 = vor.u32 %v6554, %v6555
        %v6559 = vshrl.u32 %v6528, 16
        %v6561 = vrot.slane %v6559, 7
        %v6562 = vshll.u32 %v6528, 16
        %v6564 = vor.u32 %v6561, %v6562
        %v6566 = vshrl.u32 %v6529, 16
        %v6568 = vrot.slane %v6566, 7
        %v6569 = vshll.u32 %v6529, 16
        %v6571 = vor.u32 %v6568, %v6569
        %6572 = vrot.lane.b32.xlu0 %v5421, 20
        %v6573 = vpop.permute.xlu0 %6572
        %6574 = vrot.lane.b32.xlu0 %v5428, 20
        %v6575 = vpop.permute.xlu0 %6574
        %6576 = vrot.lane.b32.xlu0 %v5435, 20
        %v6577 = vpop.permute.xlu0 %6576
        %6578 = vrot.lane.b32.xlu0 %v5442, 20
        %v6579 = vpop.permute.xlu0 %6578
        %6580 = vrot.lane.b32.xlu0 %v5449, 20
        %v6581 = vpop.permute.xlu0 %6580
        %6582 = vrot.lane.b32.xlu0 %v5456, 20
        %v6583 = vpop.permute.xlu0 %6582
        %6584 = vrot.lane.b32.xlu0 %v5463, 20
        %v6585 = vpop.permute.xlu0 %6584
        %6586 = vrot.lane.b32.xlu0 %v6536, 20
        %v6587 = vpop.permute.xlu0 %6586
        %6588 = vrot.lane.b32.xlu0 %v5477, 20
        %v6589 = vpop.permute.xlu0 %6588
        %6590 = vrot.lane.b32.xlu0 %v5484, 20
        %v6591 = vpop.permute.xlu0 %6590
        %6592 = vrot.lane.b32.xlu0 %v5491, 20
        %v6593 = vpop.permute.xlu0 %6592
        %6594 = vrot.lane.b32.xlu0 %v5498, 20
        %v6595 = vpop.permute.xlu0 %6594
        %6596 = vrot.lane.b32.xlu0 %v5505, 20
        %v6597 = vpop.permute.xlu0 %6596
        %6598 = vrot.lane.b32.xlu0 %v5512, 20
        %v6599 = vpop.permute.xlu0 %6598
        %6600 = vrot.lane.b32.xlu0 %v5519, 20
        %v6601 = vpop.permute.xlu0 %6600
        %6602 = vrot.lane.b32.xlu0 %v6543, 20
        %v6603 = vpop.permute.xlu0 %6602
        %6604 = vrot.lane.b32.xlu0 %v5533, 20
        %v6605 = vpop.permute.xlu0 %6604
        %6606 = vrot.lane.b32.xlu0 %v5540, 20
        %v6607 = vpop.permute.xlu0 %6606
        %6608 = vrot.lane.b32.xlu0 %v5547, 20
        %v6609 = vpop.permute.xlu0 %6608
        %6610 = vrot.lane.b32.xlu0 %v5554, 20
        %v6611 = vpop.permute.xlu0 %6610
        %6612 = vrot.lane.b32.xlu0 %v5561, 20
        %v6613 = vpop.permute.xlu0 %6612
        %6614 = vrot.lane.b32.xlu0 %v5568, 20
        %v6615 = vpop.permute.xlu0 %6614
        %6616 = vrot.lane.b32.xlu0 %v5575, 20
        %v6617 = vpop.permute.xlu0 %6616
        %6618 = vrot.lane.b32.xlu0 %v6550, 20
        %v6619 = vpop.permute.xlu0 %6618
        %6620 = vrot.lane.b32.xlu0 %v5589, 20
        %v6621 = vpop.permute.xlu0 %6620
        %6622 = vrot.lane.b32.xlu0 %v5596, 20
        %v6623 = vpop.permute.xlu0 %6622
        %6624 = vrot.lane.b32.xlu0 %v5603, 20
        %v6625 = vpop.permute.xlu0 %6624
        %6626 = vrot.lane.b32.xlu0 %v5610, 20
        %v6627 = vpop.permute.xlu0 %6626
        %6628 = vrot.lane.b32.xlu0 %v5617, 20
        %v6629 = vpop.permute.xlu0 %6628
        %6630 = vrot.lane.b32.xlu0 %v5624, 20
        %v6631 = vpop.permute.xlu0 %6630
        %6632 = vrot.lane.b32.xlu0 %v5631, 20
        %v6633 = vpop.permute.xlu0 %6632
        %6634 = vrot.lane.b32.xlu0 %v6557, 20
        %v6635 = vpop.permute.xlu0 %6634
        %6636 = vrot.lane.b32.xlu0 %v5645, 20
        %v6637 = vpop.permute.xlu0 %6636
        %6638 = vrot.lane.b32.xlu0 %v5652, 20
        %v6639 = vpop.permute.xlu0 %6638
        %6640 = vrot.lane.b32.xlu0 %v5659, 20
        %v6641 = vpop.permute.xlu0 %6640
        %6642 = vrot.lane.b32.xlu0 %v5666, 20
        %v6643 = vpop.permute.xlu0 %6642
        %6644 = vrot.lane.b32.xlu0 %v5673, 20
        %v6645 = vpop.permute.xlu0 %6644
        %6646 = vrot.lane.b32.xlu0 %v5680, 20
        %v6647 = vpop.permute.xlu0 %6646
        %6648 = vrot.lane.b32.xlu0 %v5687, 20
        %v6649 = vpop.permute.xlu0 %6648
        %6650 = vrot.lane.b32.xlu0 %v6564, 20
        %v6651 = vpop.permute.xlu0 %6650
        %6652 = vrot.lane.b32.xlu0 %v5701, 20
        %v6653 = vpop.permute.xlu0 %6652
        %6654 = vrot.lane.b32.xlu0 %v5708, 20
        %v6655 = vpop.permute.xlu0 %6654
        %6656 = vrot.lane.b32.xlu0 %v5715, 20
        %v6657 = vpop.permute.xlu0 %6656
        %6658 = vrot.lane.b32.xlu0 %v5722, 20
        %v6659 = vpop.permute.xlu0 %6658
        %6660 = vrot.lane.b32.xlu0 %v5729, 20
        %v6661 = vpop.permute.xlu0 %6660
        %6662 = vrot.lane.b32.xlu0 %v5736, 20
        %v6663 = vpop.permute.xlu0 %6662
        %6664 = vrot.lane.b32.xlu0 %v5743, 20
        %v6665 = vpop.permute.xlu0 %6664
        %6666 = vrot.lane.b32.xlu0 %v6571, 20
        %v6667 = vpop.permute.xlu0 %6666
        %v6674 = vunpack.c.l.b16 %v454
        %v6675 = vunpack.c.l.b16 %v474
        %v6676 = vunpack.c.l.b16 %v494
        %v6677 = vunpack.c.l.b16 %v514
        %v6678 = vunpack.c.l.b16 %v534
        %v6679 = vunpack.c.l.b16 %v554
        %v6680 = vpack.c.b16 %v6674, %v6518
        %v6681 = vpack.c.b16 %v6675, %v6519
        %v6682 = vpack.c.b16 %v6676, %v6520
        %v6683 = vpack.c.b16 %v6677, %v6521
        %v6684 = vpack.c.b16 %v6678, %v6522
        %v6685 = vpack.c.b16 %v6679, %v6523
        %6686 = vrot.lane.b32.xlu0 %v5937, 24
        %v6687 = vpop.permute.xlu0 %6686
        %6688 = vrot.lane.b32.xlu0 %v5938, 24
        %v6689 = vpop.permute.xlu0 %6688
        %6690 = vrot.lane.b32.xlu0 %v5939, 24
        %v6691 = vpop.permute.xlu0 %6690
        %6692 = vrot.lane.b32.xlu0 %v5940, 24
        %v6693 = vpop.permute.xlu0 %6692
        %6694 = vrot.lane.b32.xlu0 %v5941, 24
        %v6695 = vpop.permute.xlu0 %6694
        %6696 = vrot.lane.b32.xlu0 %v5942, 24
        %v6697 = vpop.permute.xlu0 %6696
        %6698 = vrot.lane.b32.xlu0 %v5943, 24
        %v6699 = vpop.permute.xlu0 %6698
        %6700 = vrot.lane.b32.xlu0 %v6680, 24
        %v6701 = vpop.permute.xlu0 %6700
        %6702 = vrot.lane.b32.xlu0 %v5945, 24
        %v6703 = vpop.permute.xlu0 %6702
        %6704 = vrot.lane.b32.xlu0 %v5946, 24
        %v6705 = vpop.permute.xlu0 %6704
        %6706 = vrot.lane.b32.xlu0 %v5947, 24
        %v6707 = vpop.permute.xlu0 %6706
        %6708 = vrot.lane.b32.xlu0 %v5948, 24
        %v6709 = vpop.permute.xlu0 %6708
        %6710 = vrot.lane.b32.xlu0 %v5949, 24
        %v6711 = vpop.permute.xlu0 %6710
        %6712 = vrot.lane.b32.xlu0 %v5950, 24
        %v6713 = vpop.permute.xlu0 %6712
        %6714 = vrot.lane.b32.xlu0 %v5951, 24
        %v6715 = vpop.permute.xlu0 %6714
        %6716 = vrot.lane.b32.xlu0 %v6681, 24
        %v6717 = vpop.permute.xlu0 %6716
        %6718 = vrot.lane.b32.xlu0 %v5953, 24
        %v6719 = vpop.permute.xlu0 %6718
        %6720 = vrot.lane.b32.xlu0 %v5954, 24
        %v6721 = vpop.permute.xlu0 %6720
        %6722 = vrot.lane.b32.xlu0 %v5955, 24
        %v6723 = vpop.permute.xlu0 %6722
        %6724 = vrot.lane.b32.xlu0 %v5956, 24
        %v6725 = vpop.permute.xlu0 %6724
        %6726 = vrot.lane.b32.xlu0 %v5957, 24
        %v6727 = vpop.permute.xlu0 %6726
        %6728 = vrot.lane.b32.xlu0 %v5958, 24
        %v6729 = vpop.permute.xlu0 %6728
        %6730 = vrot.lane.b32.xlu0 %v5959, 24
        %v6731 = vpop.permute.xlu0 %6730
        %6732 = vrot.lane.b32.xlu0 %v6682, 24
        %v6733 = vpop.permute.xlu0 %6732
        %6734 = vrot.lane.b32.xlu0 %v5961, 24
        %v6735 = vpop.permute.xlu0 %6734
        %6736 = vrot.lane.b32.xlu0 %v5962, 24
        %v6737 = vpop.permute.xlu0 %6736
        %6738 = vrot.lane.b32.xlu0 %v5963, 24
        %v6739 = vpop.permute.xlu0 %6738
        %6740 = vrot.lane.b32.xlu0 %v5964, 24
        %v6741 = vpop.permute.xlu0 %6740
        %6742 = vrot.lane.b32.xlu0 %v5965, 24
        %v6743 = vpop.permute.xlu0 %6742
        %6744 = vrot.lane.b32.xlu0 %v5966, 24
        %v6745 = vpop.permute.xlu0 %6744
        %6746 = vrot.lane.b32.xlu0 %v5967, 24
        %v6747 = vpop.permute.xlu0 %6746
        %6748 = vrot.lane.b32.xlu0 %v6683, 24
        %v6749 = vpop.permute.xlu0 %6748
        %6750 = vrot.lane.b32.xlu0 %v5969, 24
        %v6751 = vpop.permute.xlu0 %6750
        %6752 = vrot.lane.b32.xlu0 %v5970, 24
        %v6753 = vpop.permute.xlu0 %6752
        %6754 = vrot.lane.b32.xlu0 %v5971, 24
        %v6755 = vpop.permute.xlu0 %6754
        %6756 = vrot.lane.b32.xlu0 %v5972, 24
        %v6757 = vpop.permute.xlu0 %6756
        %6758 = vrot.lane.b32.xlu0 %v5973, 24
        %v6759 = vpop.permute.xlu0 %6758
        %6760 = vrot.lane.b32.xlu0 %v5974, 24
        %v6761 = vpop.permute.xlu0 %6760
        %6762 = vrot.lane.b32.xlu0 %v5975, 24
        %v6763 = vpop.permute.xlu0 %6762
        %6764 = vrot.lane.b32.xlu0 %v6684, 24
        %v6765 = vpop.permute.xlu0 %6764
        %6766 = vrot.lane.b32.xlu0 %v5977, 24
        %v6767 = vpop.permute.xlu0 %6766
        %6768 = vrot.lane.b32.xlu0 %v5978, 24
        %v6769 = vpop.permute.xlu0 %6768
        %6770 = vrot.lane.b32.xlu0 %v5979, 24
        %v6771 = vpop.permute.xlu0 %6770
        %6772 = vrot.lane.b32.xlu0 %v5980, 24
        %v6773 = vpop.permute.xlu0 %6772
        %6774 = vrot.lane.b32.xlu0 %v5981, 24
        %v6775 = vpop.permute.xlu0 %6774
        %6776 = vrot.lane.b32.xlu0 %v5982, 24
        %v6777 = vpop.permute.xlu0 %6776
        %6778 = vrot.lane.b32.xlu0 %v5983, 24
        %v6779 = vpop.permute.xlu0 %6778
        %6780 = vrot.lane.b32.xlu0 %v6685, 24
        %v6781 = vpop.permute.xlu0 %6780
        %v6783 = vshrl.u32 %v6680, 16
        %v6785 = vshll.u32 %v6680, 16
        %v6787 = vrot.slane %v6785, 1
        %v6788 = vor.u32 %v6783, %v6787
        %v6790 = vshrl.u32 %v6681, 16
        %v6792 = vshll.u32 %v6681, 16
        %v6794 = vrot.slane %v6792, 1
        %v6795 = vor.u32 %v6790, %v6794
        %v6797 = vshrl.u32 %v6682, 16
        %v6799 = vshll.u32 %v6682, 16
        %v6801 = vrot.slane %v6799, 1
        %v6802 = vor.u32 %v6797, %v6801
        %v6804 = vshrl.u32 %v6683, 16
        %v6806 = vshll.u32 %v6683, 16
        %v6808 = vrot.slane %v6806, 1
        %v6809 = vor.u32 %v6804, %v6808
        %v6811 = vshrl.u32 %v6684, 16
        %v6813 = vshll.u32 %v6684, 16
        %v6815 = vrot.slane %v6813, 1
        %v6816 = vor.u32 %v6811, %v6815
        %v6818 = vshrl.u32 %v6685, 16
        %v6820 = vshll.u32 %v6685, 16
        %v6822 = vrot.slane %v6820, 1
        %v6823 = vor.u32 %v6818, %v6822
        %6824 = vrot.lane.b32.xlu0 %v6093, 28
        %v6825 = vpop.permute.xlu0 %6824
        %6826 = vrot.lane.b32.xlu0 %v6100, 28
        %v6827 = vpop.permute.xlu0 %6826
        %6828 = vrot.lane.b32.xlu0 %v6107, 28
        %v6829 = vpop.permute.xlu0 %6828
        %6830 = vrot.lane.b32.xlu0 %v6114, 28
        %v6831 = vpop.permute.xlu0 %6830
        %6832 = vrot.lane.b32.xlu0 %v6121, 28
        %v6833 = vpop.permute.xlu0 %6832
        %6834 = vrot.lane.b32.xlu0 %v6128, 28
        %v6835 = vpop.permute.xlu0 %6834
        %6836 = vrot.lane.b32.xlu0 %v6135, 28
        %v6837 = vpop.permute.xlu0 %6836
        %6838 = vrot.lane.b32.xlu0 %v6788, 28
        %v6839 = vpop.permute.xlu0 %6838
        %6840 = vrot.lane.b32.xlu0 %v6149, 28
        %v6841 = vpop.permute.xlu0 %6840
        %6842 = vrot.lane.b32.xlu0 %v6156, 28
        %v6843 = vpop.permute.xlu0 %6842
        %6844 = vrot.lane.b32.xlu0 %v6163, 28
        %v6845 = vpop.permute.xlu0 %6844
        %6846 = vrot.lane.b32.xlu0 %v6170, 28
        %v6847 = vpop.permute.xlu0 %6846
        %6848 = vrot.lane.b32.xlu0 %v6177, 28
        %v6849 = vpop.permute.xlu0 %6848
        %6850 = vrot.lane.b32.xlu0 %v6184, 28
        %v6851 = vpop.permute.xlu0 %6850
        %6852 = vrot.lane.b32.xlu0 %v6191, 28
        %v6853 = vpop.permute.xlu0 %6852
        %6854 = vrot.lane.b32.xlu0 %v6795, 28
        %v6855 = vpop.permute.xlu0 %6854
        %6856 = vrot.lane.b32.xlu0 %v6205, 28
        %v6857 = vpop.permute.xlu0 %6856
        %6858 = vrot.lane.b32.xlu0 %v6212, 28
        %v6859 = vpop.permute.xlu0 %6858
        %6860 = vrot.lane.b32.xlu0 %v6219, 28
        %v6861 = vpop.permute.xlu0 %6860
        %6862 = vrot.lane.b32.xlu0 %v6226, 28
        %v6863 = vpop.permute.xlu0 %6862
        %6864 = vrot.lane.b32.xlu0 %v6233, 28
        %v6865 = vpop.permute.xlu0 %6864
        %6866 = vrot.lane.b32.xlu0 %v6240, 28
        %v6867 = vpop.permute.xlu0 %6866
        %6868 = vrot.lane.b32.xlu0 %v6247, 28
        %v6869 = vpop.permute.xlu0 %6868
        %6870 = vrot.lane.b32.xlu0 %v6802, 28
        %v6871 = vpop.permute.xlu0 %6870
        %6872 = vrot.lane.b32.xlu0 %v6261, 28
        %v6873 = vpop.permute.xlu0 %6872
        %6874 = vrot.lane.b32.xlu0 %v6268, 28
        %v6875 = vpop.permute.xlu0 %6874
        %6876 = vrot.lane.b32.xlu0 %v6275, 28
        %v6877 = vpop.permute.xlu0 %6876
        %6878 = vrot.lane.b32.xlu0 %v6282, 28
        %v6879 = vpop.permute.xlu0 %6878
        %6880 = vrot.lane.b32.xlu0 %v6289, 28
        %v6881 = vpop.permute.xlu0 %6880
        %6882 = vrot.lane.b32.xlu0 %v6296, 28
        %v6883 = vpop.permute.xlu0 %6882
        %6884 = vrot.lane.b32.xlu0 %v6303, 28
        %v6885 = vpop.permute.xlu0 %6884
        %6886 = vrot.lane.b32.xlu0 %v6809, 28
        %v6887 = vpop.permute.xlu0 %6886
        %6888 = vrot.lane.b32.xlu0 %v6317, 28
        %v6889 = vpop.permute.xlu0 %6888
        %6890 = vrot.lane.b32.xlu0 %v6324, 28
        %v6891 = vpop.permute.xlu0 %6890
        %6892 = vrot.lane.b32.xlu0 %v6331, 28
        %v6893 = vpop.permute.xlu0 %6892
        %6894 = vrot.lane.b32.xlu0 %v6338, 28
        %v6895 = vpop.permute.xlu0 %6894
        %6896 = vrot.lane.b32.xlu0 %v6345, 28
        %v6897 = vpop.permute.xlu0 %6896
        %6898 = vrot.lane.b32.xlu0 %v6352, 28
        %v6899 = vpop.permute.xlu0 %6898
        %6900 = vrot.lane.b32.xlu0 %v6359, 28
        %v6901 = vpop.permute.xlu0 %6900
        %6902 = vrot.lane.b32.xlu0 %v6816, 28
        %v6903 = vpop.permute.xlu0 %6902
        %6904 = vrot.lane.b32.xlu0 %v6373, 28
        %v6905 = vpop.permute.xlu0 %6904
        %6906 = vrot.lane.b32.xlu0 %v6380, 28
        %v6907 = vpop.permute.xlu0 %6906
        %6908 = vrot.lane.b32.xlu0 %v6387, 28
        %v6909 = vpop.permute.xlu0 %6908
        %6910 = vrot.lane.b32.xlu0 %v6394, 28
        %v6911 = vpop.permute.xlu0 %6910
        %6912 = vrot.lane.b32.xlu0 %v6401, 28
        %v6913 = vpop.permute.xlu0 %6912
        %6914 = vrot.lane.b32.xlu0 %v6408, 28
        %v6915 = vpop.permute.xlu0 %6914
        %6916 = vrot.lane.b32.xlu0 %v6415, 28
        %v6917 = vpop.permute.xlu0 %6916
        %6918 = vrot.lane.b32.xlu0 %v6823, 28
        %v6919 = vpop.permute.xlu0 %6918
        %v6926 = vunpack.c.l.b16 %v455
        %v6927 = vunpack.c.l.b16 %v475
        %v6928 = vunpack.c.l.b16 %v495
        %v6929 = vunpack.c.l.b16 %v515
        %v6930 = vunpack.c.l.b16 %v535
        %v6931 = vunpack.c.l.b16 %v555
        %v6932 = vpack.c.b16 %v6926, %v6926
        %v6933 = vpack.c.b16 %v6927, %v6927
        %v6934 = vpack.c.b16 %v6928, %v6928
        %v6935 = vpack.c.b16 %v6929, %v6929
        %v6936 = vpack.c.b16 %v6930, %v6930
        %v6937 = vpack.c.b16 %v6931, %v6931
        %v6939 = vshrl.u32 %v6932, 16
        %v6941 = vrot.slane %v6939, 7
        %v6942 = vshll.u32 %v6932, 16
        %v6944 = vor.u32 %v6941, %v6942
        %v6946 = vshrl.u32 %v6933, 16
        %v6948 = vrot.slane %v6946, 7
        %v6949 = vshll.u32 %v6933, 16
        %v6951 = vor.u32 %v6948, %v6949
        %v6953 = vshrl.u32 %v6934, 16
        %v6955 = vrot.slane %v6953, 7
        %v6956 = vshll.u32 %v6934, 16
        %v6958 = vor.u32 %v6955, %v6956
        %v6960 = vshrl.u32 %v6935, 16
        %v6962 = vrot.slane %v6960, 7
        %v6963 = vshll.u32 %v6935, 16
        %v6965 = vor.u32 %v6962, %v6963
        %v6967 = vshrl.u32 %v6936, 16
        %v6969 = vrot.slane %v6967, 7
        %v6970 = vshll.u32 %v6936, 16
        %v6972 = vor.u32 %v6969, %v6970
        %v6974 = vshrl.u32 %v6937, 16
        %v6976 = vrot.slane %v6974, 7
        %v6977 = vshll.u32 %v6937, 16
        %v6979 = vor.u32 %v6976, %v6977
        %6980 = vrot.lane.b32.xlu0 %v5428, 32
        %v6981 = vpop.permute.xlu0 %6980
        %6982 = vrot.lane.b32.xlu0 %v5435, 32
        %v6983 = vpop.permute.xlu0 %6982
        %6984 = vrot.lane.b32.xlu0 %v5442, 32
        %v6985 = vpop.permute.xlu0 %6984
        %6986 = vrot.lane.b32.xlu0 %v5449, 32
        %v6987 = vpop.permute.xlu0 %6986
        %6988 = vrot.lane.b32.xlu0 %v5456, 32
        %v6989 = vpop.permute.xlu0 %6988
        %6990 = vrot.lane.b32.xlu0 %v5463, 32
        %v6991 = vpop.permute.xlu0 %6990
        %6992 = vrot.lane.b32.xlu0 %v6536, 32
        %v6993 = vpop.permute.xlu0 %6992
        %6994 = vrot.lane.b32.xlu0 %v6944, 32
        %v6995 = vpop.permute.xlu0 %6994
        %6996 = vrot.lane.b32.xlu0 %v5484, 32
        %v6997 = vpop.permute.xlu0 %6996
        %6998 = vrot.lane.b32.xlu0 %v5491, 32
        %v6999 = vpop.permute.xlu0 %6998
        %7000 = vrot.lane.b32.xlu0 %v5498, 32
        %v7001 = vpop.permute.xlu0 %7000
        %7002 = vrot.lane.b32.xlu0 %v5505, 32
        %v7003 = vpop.permute.xlu0 %7002
        %7004 = vrot.lane.b32.xlu0 %v5512, 32
        %v7005 = vpop.permute.xlu0 %7004
        %7006 = vrot.lane.b32.xlu0 %v5519, 32
        %v7007 = vpop.permute.xlu0 %7006
        %7008 = vrot.lane.b32.xlu0 %v6543, 32
        %v7009 = vpop.permute.xlu0 %7008
        %7010 = vrot.lane.b32.xlu0 %v6951, 32
        %v7011 = vpop.permute.xlu0 %7010
        %7012 = vrot.lane.b32.xlu0 %v5540, 32
        %v7013 = vpop.permute.xlu0 %7012
        %7014 = vrot.lane.b32.xlu0 %v5547, 32
        %v7015 = vpop.permute.xlu0 %7014
        %7016 = vrot.lane.b32.xlu0 %v5554, 32
        %v7017 = vpop.permute.xlu0 %7016
        %7018 = vrot.lane.b32.xlu0 %v5561, 32
        %v7019 = vpop.permute.xlu0 %7018
        %7020 = vrot.lane.b32.xlu0 %v5568, 32
        %v7021 = vpop.permute.xlu0 %7020
        %7022 = vrot.lane.b32.xlu0 %v5575, 32
        %v7023 = vpop.permute.xlu0 %7022
        %7024 = vrot.lane.b32.xlu0 %v6550, 32
        %v7025 = vpop.permute.xlu0 %7024
        %7026 = vrot.lane.b32.xlu0 %v6958, 32
        %v7027 = vpop.permute.xlu0 %7026
        %7028 = vrot.lane.b32.xlu0 %v5596, 32
        %v7029 = vpop.permute.xlu0 %7028
        %7030 = vrot.lane.b32.xlu0 %v5603, 32
        %v7031 = vpop.permute.xlu0 %7030
        %7032 = vrot.lane.b32.xlu0 %v5610, 32
        %v7033 = vpop.permute.xlu0 %7032
        %7034 = vrot.lane.b32.xlu0 %v5617, 32
        %v7035 = vpop.permute.xlu0 %7034
        %7036 = vrot.lane.b32.xlu0 %v5624, 32
        %v7037 = vpop.permute.xlu0 %7036
        %7038 = vrot.lane.b32.xlu0 %v5631, 32
        %v7039 = vpop.permute.xlu0 %7038
        %7040 = vrot.lane.b32.xlu0 %v6557, 32
        %v7041 = vpop.permute.xlu0 %7040
        %7042 = vrot.lane.b32.xlu0 %v6965, 32
        %v7043 = vpop.permute.xlu0 %7042
        %7044 = vrot.lane.b32.xlu0 %v5652, 32
        %v7045 = vpop.permute.xlu0 %7044
        %7046 = vrot.lane.b32.xlu0 %v5659, 32
        %v7047 = vpop.permute.xlu0 %7046
        %7048 = vrot.lane.b32.xlu0 %v5666, 32
        %v7049 = vpop.permute.xlu0 %7048
        %7050 = vrot.lane.b32.xlu0 %v5673, 32
        %v7051 = vpop.permute.xlu0 %7050
        %7052 = vrot.lane.b32.xlu0 %v5680, 32
        %v7053 = vpop.permute.xlu0 %7052
        %7054 = vrot.lane.b32.xlu0 %v5687, 32
        %v7055 = vpop.permute.xlu0 %7054
        %7056 = vrot.lane.b32.xlu0 %v6564, 32
        %v7057 = vpop.permute.xlu0 %7056
        %7058 = vrot.lane.b32.xlu0 %v6972, 32
        %v7059 = vpop.permute.xlu0 %7058
        %7060 = vrot.lane.b32.xlu0 %v5708, 32
        %v7061 = vpop.permute.xlu0 %7060
        %7062 = vrot.lane.b32.xlu0 %v5715, 32
        %v7063 = vpop.permute.xlu0 %7062
        %7064 = vrot.lane.b32.xlu0 %v5722, 32
        %v7065 = vpop.permute.xlu0 %7064
        %7066 = vrot.lane.b32.xlu0 %v5729, 32
        %v7067 = vpop.permute.xlu0 %7066
        %7068 = vrot.lane.b32.xlu0 %v5736, 32
        %v7069 = vpop.permute.xlu0 %7068
        %7070 = vrot.lane.b32.xlu0 %v5743, 32
        %v7071 = vpop.permute.xlu0 %7070
        %7072 = vrot.lane.b32.xlu0 %v6571, 32
        %v7073 = vpop.permute.xlu0 %7072
        %7074 = vrot.lane.b32.xlu0 %v6979, 32
        %v7075 = vpop.permute.xlu0 %7074
        %v7082 = vunpack.c.l.b16 %v456
        %v7083 = vunpack.c.l.b16 %v476
        %v7084 = vunpack.c.l.b16 %v496
        %v7085 = vunpack.c.l.b16 %v516
        %v7086 = vunpack.c.l.b16 %v536
        %v7087 = vunpack.c.l.b16 %v556
        %v7088 = vpack.c.b16 %v7082, %v6926
        %v7089 = vpack.c.b16 %v7083, %v6927
        %v7090 = vpack.c.b16 %v7084, %v6928
        %v7091 = vpack.c.b16 %v7085, %v6929
        %v7092 = vpack.c.b16 %v7086, %v6930
        %v7093 = vpack.c.b16 %v7087, %v6931
        %7094 = vrot.lane.b32.xlu0 %v5938, 36
        %v7095 = vpop.permute.xlu0 %7094
        %7096 = vrot.lane.b32.xlu0 %v5939, 36
        %v7097 = vpop.permute.xlu0 %7096
        %7098 = vrot.lane.b32.xlu0 %v5940, 36
        %v7099 = vpop.permute.xlu0 %7098
        %7100 = vrot.lane.b32.xlu0 %v5941, 36
        %v7101 = vpop.permute.xlu0 %7100
        %7102 = vrot.lane.b32.xlu0 %v5942, 36
        %v7103 = vpop.permute.xlu0 %7102
        %7104 = vrot.lane.b32.xlu0 %v5943, 36
        %v7105 = vpop.permute.xlu0 %7104
        %7106 = vrot.lane.b32.xlu0 %v6680, 36
        %v7107 = vpop.permute.xlu0 %7106
        %7108 = vrot.lane.b32.xlu0 %v7088, 36
        %v7109 = vpop.permute.xlu0 %7108
        %7110 = vrot.lane.b32.xlu0 %v5946, 36
        %v7111 = vpop.permute.xlu0 %7110
        %7112 = vrot.lane.b32.xlu0 %v5947, 36
        %v7113 = vpop.permute.xlu0 %7112
        %7114 = vrot.lane.b32.xlu0 %v5948, 36
        %v7115 = vpop.permute.xlu0 %7114
        %7116 = vrot.lane.b32.xlu0 %v5949, 36
        %v7117 = vpop.permute.xlu0 %7116
        %7118 = vrot.lane.b32.xlu0 %v5950, 36
        %v7119 = vpop.permute.xlu0 %7118
        %7120 = vrot.lane.b32.xlu0 %v5951, 36
        %v7121 = vpop.permute.xlu0 %7120
        %7122 = vrot.lane.b32.xlu0 %v6681, 36
        %v7123 = vpop.permute.xlu0 %7122
        %7124 = vrot.lane.b32.xlu0 %v7089, 36
        %v7125 = vpop.permute.xlu0 %7124
        %7126 = vrot.lane.b32.xlu0 %v5954, 36
        %v7127 = vpop.permute.xlu0 %7126
        %7128 = vrot.lane.b32.xlu0 %v5955, 36
        %v7129 = vpop.permute.xlu0 %7128
        %7130 = vrot.lane.b32.xlu0 %v5956, 36
        %v7131 = vpop.permute.xlu0 %7130
        %7132 = vrot.lane.b32.xlu0 %v5957, 36
        %v7133 = vpop.permute.xlu0 %7132
        %7134 = vrot.lane.b32.xlu0 %v5958, 36
        %v7135 = vpop.permute.xlu0 %7134
        %7136 = vrot.lane.b32.xlu0 %v5959, 36
        %v7137 = vpop.permute.xlu0 %7136
        %7138 = vrot.lane.b32.xlu0 %v6682, 36
        %v7139 = vpop.permute.xlu0 %7138
        %7140 = vrot.lane.b32.xlu0 %v7090, 36
        %v7141 = vpop.permute.xlu0 %7140
        %7142 = vrot.lane.b32.xlu0 %v5962, 36
        %v7143 = vpop.permute.xlu0 %7142
        %7144 = vrot.lane.b32.xlu0 %v5963, 36
        %v7145 = vpop.permute.xlu0 %7144
        %7146 = vrot.lane.b32.xlu0 %v5964, 36
        %v7147 = vpop.permute.xlu0 %7146
        %7148 = vrot.lane.b32.xlu0 %v5965, 36
        %v7149 = vpop.permute.xlu0 %7148
        %7150 = vrot.lane.b32.xlu0 %v5966, 36
        %v7151 = vpop.permute.xlu0 %7150
        %7152 = vrot.lane.b32.xlu0 %v5967, 36
        %v7153 = vpop.permute.xlu0 %7152
        %7154 = vrot.lane.b32.xlu0 %v6683, 36
        %v7155 = vpop.permute.xlu0 %7154
        %7156 = vrot.lane.b32.xlu0 %v7091, 36
        %v7157 = vpop.permute.xlu0 %7156
        %7158 = vrot.lane.b32.xlu0 %v5970, 36
        %v7159 = vpop.permute.xlu0 %7158
        %7160 = vrot.lane.b32.xlu0 %v5971, 36
        %v7161 = vpop.permute.xlu0 %7160
        %7162 = vrot.lane.b32.xlu0 %v5972, 36
        %v7163 = vpop.permute.xlu0 %7162
        %7164 = vrot.lane.b32.xlu0 %v5973, 36
        %v7165 = vpop.permute.xlu0 %7164
        %7166 = vrot.lane.b32.xlu0 %v5974, 36
        %v7167 = vpop.permute.xlu0 %7166
        %7168 = vrot.lane.b32.xlu0 %v5975, 36
        %v7169 = vpop.permute.xlu0 %7168
        %7170 = vrot.lane.b32.xlu0 %v6684, 36
        %v7171 = vpop.permute.xlu0 %7170
        %7172 = vrot.lane.b32.xlu0 %v7092, 36
        %v7173 = vpop.permute.xlu0 %7172
        %7174 = vrot.lane.b32.xlu0 %v5978, 36
        %v7175 = vpop.permute.xlu0 %7174
        %7176 = vrot.lane.b32.xlu0 %v5979, 36
        %v7177 = vpop.permute.xlu0 %7176
        %7178 = vrot.lane.b32.xlu0 %v5980, 36
        %v7179 = vpop.permute.xlu0 %7178
        %7180 = vrot.lane.b32.xlu0 %v5981, 36
        %v7181 = vpop.permute.xlu0 %7180
        %7182 = vrot.lane.b32.xlu0 %v5982, 36
        %v7183 = vpop.permute.xlu0 %7182
        %7184 = vrot.lane.b32.xlu0 %v5983, 36
        %v7185 = vpop.permute.xlu0 %7184
        %7186 = vrot.lane.b32.xlu0 %v6685, 36
        %v7187 = vpop.permute.xlu0 %7186
        %7188 = vrot.lane.b32.xlu0 %v7093, 36
        %v7189 = vpop.permute.xlu0 %7188
        %v7191 = vshrl.u32 %v7088, 16
        %v7193 = vshll.u32 %v7088, 16
        %v7195 = vrot.slane %v7193, 1
        %v7196 = vor.u32 %v7191, %v7195
        %v7198 = vshrl.u32 %v7089, 16
        %v7200 = vshll.u32 %v7089, 16
        %v7202 = vrot.slane %v7200, 1
        %v7203 = vor.u32 %v7198, %v7202
        %v7205 = vshrl.u32 %v7090, 16
        %v7207 = vshll.u32 %v7090, 16
        %v7209 = vrot.slane %v7207, 1
        %v7210 = vor.u32 %v7205, %v7209
        %v7212 = vshrl.u32 %v7091, 16
        %v7214 = vshll.u32 %v7091, 16
        %v7216 = vrot.slane %v7214, 1
        %v7217 = vor.u32 %v7212, %v7216
        %v7219 = vshrl.u32 %v7092, 16
        %v7221 = vshll.u32 %v7092, 16
        %v7223 = vrot.slane %v7221, 1
        %v7224 = vor.u32 %v7219, %v7223
        %v7226 = vshrl.u32 %v7093, 16
        %v7228 = vshll.u32 %v7093, 16
        %v7230 = vrot.slane %v7228, 1
        %v7231 = vor.u32 %v7226, %v7230
        %7232 = vrot.lane.b32.xlu0 %v6100, 40
        %v7233 = vpop.permute.xlu0 %7232
        %7234 = vrot.lane.b32.xlu0 %v6107, 40
        %v7235 = vpop.permute.xlu0 %7234
        %7236 = vrot.lane.b32.xlu0 %v6114, 40
        %v7237 = vpop.permute.xlu0 %7236
        %7238 = vrot.lane.b32.xlu0 %v6121, 40
        %v7239 = vpop.permute.xlu0 %7238
        %7240 = vrot.lane.b32.xlu0 %v6128, 40
        %v7241 = vpop.permute.xlu0 %7240
        %7242 = vrot.lane.b32.xlu0 %v6135, 40
        %v7243 = vpop.permute.xlu0 %7242
        %7244 = vrot.lane.b32.xlu0 %v6788, 40
        %v7245 = vpop.permute.xlu0 %7244
        %7246 = vrot.lane.b32.xlu0 %v7196, 40
        %v7247 = vpop.permute.xlu0 %7246
        %7248 = vrot.lane.b32.xlu0 %v6156, 40
        %v7249 = vpop.permute.xlu0 %7248
        %7250 = vrot.lane.b32.xlu0 %v6163, 40
        %v7251 = vpop.permute.xlu0 %7250
        %7252 = vrot.lane.b32.xlu0 %v6170, 40
        %v7253 = vpop.permute.xlu0 %7252
        %7254 = vrot.lane.b32.xlu0 %v6177, 40
        %v7255 = vpop.permute.xlu0 %7254
        %7256 = vrot.lane.b32.xlu0 %v6184, 40
        %v7257 = vpop.permute.xlu0 %7256
        %7258 = vrot.lane.b32.xlu0 %v6191, 40
        %v7259 = vpop.permute.xlu0 %7258
        %7260 = vrot.lane.b32.xlu0 %v6795, 40
        %v7261 = vpop.permute.xlu0 %7260
        %7262 = vrot.lane.b32.xlu0 %v7203, 40
        %v7263 = vpop.permute.xlu0 %7262
        %7264 = vrot.lane.b32.xlu0 %v6212, 40
        %v7265 = vpop.permute.xlu0 %7264
        %7266 = vrot.lane.b32.xlu0 %v6219, 40
        %v7267 = vpop.permute.xlu0 %7266
        %7268 = vrot.lane.b32.xlu0 %v6226, 40
        %v7269 = vpop.permute.xlu0 %7268
        %7270 = vrot.lane.b32.xlu0 %v6233, 40
        %v7271 = vpop.permute.xlu0 %7270
        %7272 = vrot.lane.b32.xlu0 %v6240, 40
        %v7273 = vpop.permute.xlu0 %7272
        %7274 = vrot.lane.b32.xlu0 %v6247, 40
        %v7275 = vpop.permute.xlu0 %7274
        %7276 = vrot.lane.b32.xlu0 %v6802, 40
        %v7277 = vpop.permute.xlu0 %7276
        %7278 = vrot.lane.b32.xlu0 %v7210, 40
        %v7279 = vpop.permute.xlu0 %7278
        %7280 = vrot.lane.b32.xlu0 %v6268, 40
        %v7281 = vpop.permute.xlu0 %7280
        %7282 = vrot.lane.b32.xlu0 %v6275, 40
        %v7283 = vpop.permute.xlu0 %7282
        %7284 = vrot.lane.b32.xlu0 %v6282, 40
        %v7285 = vpop.permute.xlu0 %7284
        %7286 = vrot.lane.b32.xlu0 %v6289, 40
        %v7287 = vpop.permute.xlu0 %7286
        %7288 = vrot.lane.b32.xlu0 %v6296, 40
        %v7289 = vpop.permute.xlu0 %7288
        %7290 = vrot.lane.b32.xlu0 %v6303, 40
        %v7291 = vpop.permute.xlu0 %7290
        %7292 = vrot.lane.b32.xlu0 %v6809, 40
        %v7293 = vpop.permute.xlu0 %7292
        %7294 = vrot.lane.b32.xlu0 %v7217, 40
        %v7295 = vpop.permute.xlu0 %7294
        %7296 = vrot.lane.b32.xlu0 %v6324, 40
        %v7297 = vpop.permute.xlu0 %7296
        %7298 = vrot.lane.b32.xlu0 %v6331, 40
        %v7299 = vpop.permute.xlu0 %7298
        %7300 = vrot.lane.b32.xlu0 %v6338, 40
        %v7301 = vpop.permute.xlu0 %7300
        %7302 = vrot.lane.b32.xlu0 %v6345, 40
        %v7303 = vpop.permute.xlu0 %7302
        %7304 = vrot.lane.b32.xlu0 %v6352, 40
        %v7305 = vpop.permute.xlu0 %7304
        %7306 = vrot.lane.b32.xlu0 %v6359, 40
        %v7307 = vpop.permute.xlu0 %7306
        %7308 = vrot.lane.b32.xlu0 %v6816, 40
        %v7309 = vpop.permute.xlu0 %7308
        %7310 = vrot.lane.b32.xlu0 %v7224, 40
        %v7311 = vpop.permute.xlu0 %7310
        %7312 = vrot.lane.b32.xlu0 %v6380, 40
        %v7313 = vpop.permute.xlu0 %7312
        %7314 = vrot.lane.b32.xlu0 %v6387, 40
        %v7315 = vpop.permute.xlu0 %7314
        %7316 = vrot.lane.b32.xlu0 %v6394, 40
        %v7317 = vpop.permute.xlu0 %7316
        %7318 = vrot.lane.b32.xlu0 %v6401, 40
        %v7319 = vpop.permute.xlu0 %7318
        %7320 = vrot.lane.b32.xlu0 %v6408, 40
        %v7321 = vpop.permute.xlu0 %7320
        %7322 = vrot.lane.b32.xlu0 %v6415, 40
        %v7323 = vpop.permute.xlu0 %7322
        %7324 = vrot.lane.b32.xlu0 %v6823, 40
        %v7325 = vpop.permute.xlu0 %7324
        %7326 = vrot.lane.b32.xlu0 %v7231, 40
        %v7327 = vpop.permute.xlu0 %7326
        %v7329 = vsel %vm3605, %v2497, %v5169
        %v7331 = vsel %vm3605, %v2498, %v5171
        %v7333 = vsel %vm3605, %v2499, %v5173
        %v7335 = vsel %vm3605, %v2500, %v5175
        %v7337 = vsel %vm3605, %v2501, %v5177
        %v7339 = vsel %vm3605, %v2502, %v5179
        %v7341 = vsel %vm3605, %v3245, %v5181
        %v7343 = vsel %vm3605, %v5120, %v5183
        %v7345 = vsel %vm3605, %v2505, %v5185
        %v7347 = vsel %vm3605, %v2506, %v5187
        %v7349 = vsel %vm3605, %v2507, %v5189
        %v7351 = vsel %vm3605, %v2508, %v5191
        %v7353 = vsel %vm3605, %v2509, %v5193
        %v7355 = vsel %vm3605, %v2510, %v5195
        %v7357 = vsel %vm3605, %v3246, %v5197
        %v7359 = vsel %vm3605, %v5121, %v5199
        %v7361 = vsel %vm3605, %v2513, %v5201
        %v7363 = vsel %vm3605, %v2514, %v5203
        %v7365 = vsel %vm3605, %v2515, %v5205
        %v7367 = vsel %vm3605, %v2516, %v5207
        %v7369 = vsel %vm3605, %v2517, %v5209
        %v7371 = vsel %vm3605, %v2518, %v5211
        %v7373 = vsel %vm3605, %v3247, %v5213
        %v7375 = vsel %vm3605, %v5122, %v5215
        %v7377 = vsel %vm3605, %v2521, %v5217
        %v7379 = vsel %vm3605, %v2522, %v5219
        %v7381 = vsel %vm3605, %v2523, %v5221
        %v7383 = vsel %vm3605, %v2524, %v5223
        %v7385 = vsel %vm3605, %v2525, %v5225
        %v7387 = vsel %vm3605, %v2526, %v5227
        %v7389 = vsel %vm3605, %v3248, %v5229
        %v7391 = vsel %vm3605, %v5123, %v5231
        %v7393 = vsel %vm3605, %v2529, %v5233
        %v7395 = vsel %vm3605, %v2530, %v5235
        %v7397 = vsel %vm3605, %v2531, %v5237
        %v7399 = vsel %vm3605, %v2532, %v5239
        %v7401 = vsel %vm3605, %v2533, %v5241
        %v7403 = vsel %vm3605, %v2534, %v5243
        %v7405 = vsel %vm3605, %v3249, %v5245
        %v7407 = vsel %vm3605, %v5124, %v5247
        %v7409 = vsel %vm3605, %v2537, %v5249
        %v7411 = vsel %vm3605, %v2538, %v5251
        %v7413 = vsel %vm3605, %v2539, %v5253
        %v7415 = vsel %vm3605, %v2540, %v5255
        %v7417 = vsel %vm3605, %v2541, %v5257
        %v7419 = vsel %vm3605, %v2542, %v5259
        %v7421 = vsel %vm3605, %v3250, %v5261
        %v7423 = vsel %vm3605, %v5125, %v5263
        %v7425 = vsel %vm3750, %v7329, %v5745
        %v7427 = vsel %vm3750, %v7331, %v5747
        %v7429 = vsel %vm3750, %v7333, %v5749
        %v7431 = vsel %vm3750, %v7335, %v5751
        %v7433 = vsel %vm3750, %v7337, %v5753
        %v7435 = vsel %vm3750, %v7339, %v5755
        %v7437 = vsel %vm3750, %v7341, %v5757
        %v7439 = vsel %vm3750, %v7343, %v5759
        %v7441 = vsel %vm3750, %v7345, %v5761
        %v7443 = vsel %vm3750, %v7347, %v5763
        %v7445 = vsel %vm3750, %v7349, %v5765
        %v7447 = vsel %vm3750, %v7351, %v5767
        %v7449 = vsel %vm3750, %v7353, %v5769
        %v7451 = vsel %vm3750, %v7355, %v5771
        %v7453 = vsel %vm3750, %v7357, %v5773
        %v7455 = vsel %vm3750, %v7359, %v5775
        %v7457 = vsel %vm3750, %v7361, %v5777
        %v7459 = vsel %vm3750, %v7363, %v5779
        %v7461 = vsel %vm3750, %v7365, %v5781
        %v7463 = vsel %vm3750, %v7367, %v5783
        %v7465 = vsel %vm3750, %v7369, %v5785
        %v7467 = vsel %vm3750, %v7371, %v5787
        %v7469 = vsel %vm3750, %v7373, %v5789
        %v7471 = vsel %vm3750, %v7375, %v5791
        %v7473 = vsel %vm3750, %v7377, %v5793
        %v7475 = vsel %vm3750, %v7379, %v5795
        %v7477 = vsel %vm3750, %v7381, %v5797
        %v7479 = vsel %vm3750, %v7383, %v5799
        %v7481 = vsel %vm3750, %v7385, %v5801
        %v7483 = vsel %vm3750, %v7387, %v5803
        %v7485 = vsel %vm3750, %v7389, %v5805
        %v7487 = vsel %vm3750, %v7391, %v5807
        %v7489 = vsel %vm3750, %v7393, %v5809
        %v7491 = vsel %vm3750, %v7395, %v5811
        %v7493 = vsel %vm3750, %v7397, %v5813
        %v7495 = vsel %vm3750, %v7399, %v5815
        %v7497 = vsel %vm3750, %v7401, %v5817
        %v7499 = vsel %vm3750, %v7403, %v5819
        %v7501 = vsel %vm3750, %v7405, %v5821
        %v7503 = vsel %vm3750, %v7407, %v5823
        %v7505 = vsel %vm3750, %v7409, %v5825
        %v7507 = vsel %vm3750, %v7411, %v5827
        %v7509 = vsel %vm3750, %v7413, %v5829
        %v7511 = vsel %vm3750, %v7415, %v5831
        %v7513 = vsel %vm3750, %v7417, %v5833
        %v7515 = vsel %vm3750, %v7419, %v5835
        %v7517 = vsel %vm3750, %v7421, %v5837
        %v7519 = vsel %vm3750, %v7423, %v5839
        %v7521 = vsel %vm3847, %v7425, %v5985
        %v7523 = vsel %vm3847, %v7427, %v5987
        %v7525 = vsel %vm3847, %v7429, %v5989
        %v7527 = vsel %vm3847, %v7431, %v5991
        %v7529 = vsel %vm3847, %v7433, %v5993
        %v7531 = vsel %vm3847, %v7435, %v5995
        %v7533 = vsel %vm3847, %v7437, %v5997
        %v7535 = vsel %vm3847, %v7439, %v5999
        %v7537 = vsel %vm3847, %v7441, %v6001
        %v7539 = vsel %vm3847, %v7443, %v6003
        %v7541 = vsel %vm3847, %v7445, %v6005
        %v7543 = vsel %vm3847, %v7447, %v6007
        %v7545 = vsel %vm3847, %v7449, %v6009
        %v7547 = vsel %vm3847, %v7451, %v6011
        %v7549 = vsel %vm3847, %v7453, %v6013
        %v7551 = vsel %vm3847, %v7455, %v6015
        %v7553 = vsel %vm3847, %v7457, %v6017
        %v7555 = vsel %vm3847, %v7459, %v6019
        %v7557 = vsel %vm3847, %v7461, %v6021
        %v7559 = vsel %vm3847, %v7463, %v6023
        %v7561 = vsel %vm3847, %v7465, %v6025
        %v7563 = vsel %vm3847, %v7467, %v6027
        %v7565 = vsel %vm3847, %v7469, %v6029
        %v7567 = vsel %vm3847, %v7471, %v6031
        %v7569 = vsel %vm3847, %v7473, %v6033
        %v7571 = vsel %vm3847, %v7475, %v6035
        %v7573 = vsel %vm3847, %v7477, %v6037
        %v7575 = vsel %vm3847, %v7479, %v6039
        %v7577 = vsel %vm3847, %v7481, %v6041
        %v7579 = vsel %vm3847, %v7483, %v6043
        %v7581 = vsel %vm3847, %v7485, %v6045
        %v7583 = vsel %vm3847, %v7487, %v6047
        %v7585 = vsel %vm3847, %v7489, %v6049
        %v7587 = vsel %vm3847, %v7491, %v6051
        %v7589 = vsel %vm3847, %v7493, %v6053
        %v7591 = vsel %vm3847, %v7495, %v6055
        %v7593 = vsel %vm3847, %v7497, %v6057
        %v7595 = vsel %vm3847, %v7499, %v6059
        %v7597 = vsel %vm3847, %v7501, %v6061
        %v7599 = vsel %vm3847, %v7503, %v6063
        %v7601 = vsel %vm3847, %v7505, %v6065
        %v7603 = vsel %vm3847, %v7507, %v6067
        %v7605 = vsel %vm3847, %v7509, %v6069
        %v7607 = vsel %vm3847, %v7511, %v6071
        %v7609 = vsel %vm3847, %v7513, %v6073
        %v7611 = vsel %vm3847, %v7515, %v6075
        %v7613 = vsel %vm3847, %v7517, %v6077
        %v7615 = vsel %vm3847, %v7519, %v6079
        %v7617 = vsel %vm3944, %v7521, %v6417
        %v7619 = vsel %vm3944, %v7523, %v6419
        %v7621 = vsel %vm3944, %v7525, %v6421
        %v7623 = vsel %vm3944, %v7527, %v6423
        %v7625 = vsel %vm3944, %v7529, %v6425
        %v7627 = vsel %vm3944, %v7531, %v6427
        %v7629 = vsel %vm3944, %v7533, %v6429
        %v7631 = vsel %vm3944, %v7535, %v6431
        %v7633 = vsel %vm3944, %v7537, %v6433
        %v7635 = vsel %vm3944, %v7539, %v6435
        %v7637 = vsel %vm3944, %v7541, %v6437
        %v7639 = vsel %vm3944, %v7543, %v6439
        %v7641 = vsel %vm3944, %v7545, %v6441
        %v7643 = vsel %vm3944, %v7547, %v6443
        %v7645 = vsel %vm3944, %v7549, %v6445
        %v7647 = vsel %vm3944, %v7551, %v6447
        %v7649 = vsel %vm3944, %v7553, %v6449
        %v7651 = vsel %vm3944, %v7555, %v6451
        %v7653 = vsel %vm3944, %v7557, %v6453
        %v7655 = vsel %vm3944, %v7559, %v6455
        %v7657 = vsel %vm3944, %v7561, %v6457
        %v7659 = vsel %vm3944, %v7563, %v6459
        %v7661 = vsel %vm3944, %v7565, %v6461
        %v7663 = vsel %vm3944, %v7567, %v6463
        %v7665 = vsel %vm3944, %v7569, %v6465
        %v7667 = vsel %vm3944, %v7571, %v6467
        %v7669 = vsel %vm3944, %v7573, %v6469
        %v7671 = vsel %vm3944, %v7575, %v6471
        %v7673 = vsel %vm3944, %v7577, %v6473
        %v7675 = vsel %vm3944, %v7579, %v6475
        %v7677 = vsel %vm3944, %v7581, %v6477
        %v7679 = vsel %vm3944, %v7583, %v6479
        %v7681 = vsel %vm3944, %v7585, %v6481
        %v7683 = vsel %vm3944, %v7587, %v6483
        %v7685 = vsel %vm3944, %v7589, %v6485
        %v7687 = vsel %vm3944, %v7591, %v6487
        %v7689 = vsel %vm3944, %v7593, %v6489
        %v7691 = vsel %vm3944, %v7595, %v6491
        %v7693 = vsel %vm3944, %v7597, %v6493
        %v7695 = vsel %vm3944, %v7599, %v6495
        %v7697 = vsel %vm3944, %v7601, %v6497
        %v7699 = vsel %vm3944, %v7603, %v6499
        %v7701 = vsel %vm3944, %v7605, %v6501
        %v7703 = vsel %vm3944, %v7607, %v6503
        %v7705 = vsel %vm3944, %v7609, %v6505
        %v7707 = vsel %vm3944, %v7611, %v6507
        %v7709 = vsel %vm3944, %v7613, %v6509
        %v7711 = vsel %vm3944, %v7615, %v6511
        %v7713 = vsel %vm4041, %v7617, %v6573
        %v7715 = vsel %vm4041, %v7619, %v6575
        %v7717 = vsel %vm4041, %v7621, %v6577
        %v7719 = vsel %vm4041, %v7623, %v6579
        %v7721 = vsel %vm4041, %v7625, %v6581
        %v7723 = vsel %vm4041, %v7627, %v6583
        %v7725 = vsel %vm4041, %v7629, %v6585
        %v7727 = vsel %vm4041, %v7631, %v6587
        %v7729 = vsel %vm4041, %v7633, %v6589
        %v7731 = vsel %vm4041, %v7635, %v6591
        %v7733 = vsel %vm4041, %v7637, %v6593
        %v7735 = vsel %vm4041, %v7639, %v6595
        %v7737 = vsel %vm4041, %v7641, %v6597
        %v7739 = vsel %vm4041, %v7643, %v6599
        %v7741 = vsel %vm4041, %v7645, %v6601
        %v7743 = vsel %vm4041, %v7647, %v6603
        %v7745 = vsel %vm4041, %v7649, %v6605
        %v7747 = vsel %vm4041, %v7651, %v6607
        %v7749 = vsel %vm4041, %v7653, %v6609
        %v7751 = vsel %vm4041, %v7655, %v6611
        %v7753 = vsel %vm4041, %v7657, %v6613
        %v7755 = vsel %vm4041, %v7659, %v6615
        %v7757 = vsel %vm4041, %v7661, %v6617
        %v7759 = vsel %vm4041, %v7663, %v6619
        %v7761 = vsel %vm4041, %v7665, %v6621
        %v7763 = vsel %vm4041, %v7667, %v6623
        %v7765 = vsel %vm4041, %v7669, %v6625
        %v7767 = vsel %vm4041, %v7671, %v6627
        %v7769 = vsel %vm4041, %v7673, %v6629
        %v7771 = vsel %vm4041, %v7675, %v6631
        %v7773 = vsel %vm4041, %v7677, %v6633
        %v7775 = vsel %vm4041, %v7679, %v6635
        %v7777 = vsel %vm4041, %v7681, %v6637
        %v7779 = vsel %vm4041, %v7683, %v6639
        %v7781 = vsel %vm4041, %v7685, %v6641
        %v7783 = vsel %vm4041, %v7687, %v6643
        %v7785 = vsel %vm4041, %v7689, %v6645
        %v7787 = vsel %vm4041, %v7691, %v6647
        %v7789 = vsel %vm4041, %v7693, %v6649
        %v7791 = vsel %vm4041, %v7695, %v6651
        %v7793 = vsel %vm4041, %v7697, %v6653
        %v7795 = vsel %vm4041, %v7699, %v6655
        %v7797 = vsel %vm4041, %v7701, %v6657
        %v7799 = vsel %vm4041, %v7703, %v6659
        %v7801 = vsel %vm4041, %v7705, %v6661
        %v7803 = vsel %vm4041, %v7707, %v6663
        %v7805 = vsel %vm4041, %v7709, %v6665
        %v7807 = vsel %vm4041, %v7711, %v6667
        %v7809 = vsel %vm4138, %v7713, %v6687
        %v7811 = vsel %vm4138, %v7715, %v6689
        %v7813 = vsel %vm4138, %v7717, %v6691
        %v7815 = vsel %vm4138, %v7719, %v6693
        %v7817 = vsel %vm4138, %v7721, %v6695
        %v7819 = vsel %vm4138, %v7723, %v6697
        %v7821 = vsel %vm4138, %v7725, %v6699
        %v7823 = vsel %vm4138, %v7727, %v6701
        %v7825 = vsel %vm4138, %v7729, %v6703
        %v7827 = vsel %vm4138, %v7731, %v6705
        %v7829 = vsel %vm4138, %v7733, %v6707
        %v7831 = vsel %vm4138, %v7735, %v6709
        %v7833 = vsel %vm4138, %v7737, %v6711
        %v7835 = vsel %vm4138, %v7739, %v6713
        %v7837 = vsel %vm4138, %v7741, %v6715
        %v7839 = vsel %vm4138, %v7743, %v6717
        %v7841 = vsel %vm4138, %v7745, %v6719
        %v7843 = vsel %vm4138, %v7747, %v6721
        %v7845 = vsel %vm4138, %v7749, %v6723
        %v7847 = vsel %vm4138, %v7751, %v6725
        %v7849 = vsel %vm4138, %v7753, %v6727
        %v7851 = vsel %vm4138, %v7755, %v6729
        %v7853 = vsel %vm4138, %v7757, %v6731
        %v7855 = vsel %vm4138, %v7759, %v6733
        %v7857 = vsel %vm4138, %v7761, %v6735
        %v7859 = vsel %vm4138, %v7763, %v6737
        %v7861 = vsel %vm4138, %v7765, %v6739
        %v7863 = vsel %vm4138, %v7767, %v6741
        %v7865 = vsel %vm4138, %v7769, %v6743
        %v7867 = vsel %vm4138, %v7771, %v6745
        %v7869 = vsel %vm4138, %v7773, %v6747
        %v7871 = vsel %vm4138, %v7775, %v6749
        %v7873 = vsel %vm4138, %v7777, %v6751
        %v7875 = vsel %vm4138, %v7779, %v6753
        %v7877 = vsel %vm4138, %v7781, %v6755
        %v7879 = vsel %vm4138, %v7783, %v6757
        %v7881 = vsel %vm4138, %v7785, %v6759
        %v7883 = vsel %vm4138, %v7787, %v6761
        %v7885 = vsel %vm4138, %v7789, %v6763
        %v7887 = vsel %vm4138, %v7791, %v6765
        %v7889 = vsel %vm4138, %v7793, %v6767
        %v7891 = vsel %vm4138, %v7795, %v6769
        %v7893 = vsel %vm4138, %v7797, %v6771
        %v7895 = vsel %vm4138, %v7799, %v6773
        %v7897 = vsel %vm4138, %v7801, %v6775
        %v7899 = vsel %vm4138, %v7803, %v6777
        %v7901 = vsel %vm4138, %v7805, %v6779
        %v7903 = vsel %vm4138, %v7807, %v6781
        %v7905 = vsel %vm4235, %v7809, %v6825
        %v7907 = vsel %vm4235, %v7811, %v6827
        %v7909 = vsel %vm4235, %v7813, %v6829
        %v7911 = vsel %vm4235, %v7815, %v6831
        %v7913 = vsel %vm4235, %v7817, %v6833
        %v7915 = vsel %vm4235, %v7819, %v6835
        %v7917 = vsel %vm4235, %v7821, %v6837
        %v7919 = vsel %vm4235, %v7823, %v6839
        %v7921 = vsel %vm4235, %v7825, %v6841
        %v7923 = vsel %vm4235, %v7827, %v6843
        %v7925 = vsel %vm4235, %v7829, %v6845
        %v7927 = vsel %vm4235, %v7831, %v6847
        %v7929 = vsel %vm4235, %v7833, %v6849
        %v7931 = vsel %vm4235, %v7835, %v6851
        %v7933 = vsel %vm4235, %v7837, %v6853
        %v7935 = vsel %vm4235, %v7839, %v6855
        %v7937 = vsel %vm4235, %v7841, %v6857
        %v7939 = vsel %vm4235, %v7843, %v6859
        %v7941 = vsel %vm4235, %v7845, %v6861
        %v7943 = vsel %vm4235, %v7847, %v6863
        %v7945 = vsel %vm4235, %v7849, %v6865
        %v7947 = vsel %vm4235, %v7851, %v6867
        %v7949 = vsel %vm4235, %v7853, %v6869
        %v7951 = vsel %vm4235, %v7855, %v6871
        %v7953 = vsel %vm4235, %v7857, %v6873
        %v7955 = vsel %vm4235, %v7859, %v6875
        %v7957 = vsel %vm4235, %v7861, %v6877
        %v7959 = vsel %vm4235, %v7863, %v6879
        %v7961 = vsel %vm4235, %v7865, %v6881
        %v7963 = vsel %vm4235, %v7867, %v6883
        %v7965 = vsel %vm4235, %v7869, %v6885
        %v7967 = vsel %vm4235, %v7871, %v6887
        %v7969 = vsel %vm4235, %v7873, %v6889
        %v7971 = vsel %vm4235, %v7875, %v6891
        %v7973 = vsel %vm4235, %v7877, %v6893
        %v7975 = vsel %vm4235, %v7879, %v6895
        %v7977 = vsel %vm4235, %v7881, %v6897
        %v7979 = vsel %vm4235, %v7883, %v6899
        %v7981 = vsel %vm4235, %v7885, %v6901
        %v7983 = vsel %vm4235, %v7887, %v6903
        %v7985 = vsel %vm4235, %v7889, %v6905
        %v7987 = vsel %vm4235, %v7891, %v6907
        %v7989 = vsel %vm4235, %v7893, %v6909
        %v7991 = vsel %vm4235, %v7895, %v6911
        %v7993 = vsel %vm4235, %v7897, %v6913
        %v7995 = vsel %vm4235, %v7899, %v6915
        %v7997 = vsel %vm4235, %v7901, %v6917
        %v7999 = vsel %vm4235, %v7903, %v6919
        %v8001 = vsel %vm4332, %v7905, %v6981
        %v8003 = vsel %vm4332, %v7907, %v6983
        %v8005 = vsel %vm4332, %v7909, %v6985
        %v8007 = vsel %vm4332, %v7911, %v6987
        %v8009 = vsel %vm4332, %v7913, %v6989
        %v8011 = vsel %vm4332, %v7915, %v6991
        %v8013 = vsel %vm4332, %v7917, %v6993
        %v8015 = vsel %vm4332, %v7919, %v6995
        %v8017 = vsel %vm4332, %v7921, %v6997
        %v8019 = vsel %vm4332, %v7923, %v6999
        %v8021 = vsel %vm4332, %v7925, %v7001
        %v8023 = vsel %vm4332, %v7927, %v7003
        %v8025 = vsel %vm4332, %v7929, %v7005
        %v8027 = vsel %vm4332, %v7931, %v7007
        %v8029 = vsel %vm4332, %v7933, %v7009
        %v8031 = vsel %vm4332, %v7935, %v7011
        %v8033 = vsel %vm4332, %v7937, %v7013
        %v8035 = vsel %vm4332, %v7939, %v7015
        %v8037 = vsel %vm4332, %v7941, %v7017
        %v8039 = vsel %vm4332, %v7943, %v7019
        %v8041 = vsel %vm4332, %v7945, %v7021
        %v8043 = vsel %vm4332, %v7947, %v7023
        %v8045 = vsel %vm4332, %v7949, %v7025
        %v8047 = vsel %vm4332, %v7951, %v7027
        %v8049 = vsel %vm4332, %v7953, %v7029
        %v8051 = vsel %vm4332, %v7955, %v7031
        %v8053 = vsel %vm4332, %v7957, %v7033
        %v8055 = vsel %vm4332, %v7959, %v7035
        %v8057 = vsel %vm4332, %v7961, %v7037
        %v8059 = vsel %vm4332, %v7963, %v7039
        %v8061 = vsel %vm4332, %v7965, %v7041
        %v8063 = vsel %vm4332, %v7967, %v7043
        %v8065 = vsel %vm4332, %v7969, %v7045
        %v8067 = vsel %vm4332, %v7971, %v7047
        %v8069 = vsel %vm4332, %v7973, %v7049
        %v8071 = vsel %vm4332, %v7975, %v7051
        %v8073 = vsel %vm4332, %v7977, %v7053
        %v8075 = vsel %vm4332, %v7979, %v7055
        %v8077 = vsel %vm4332, %v7981, %v7057
        %v8079 = vsel %vm4332, %v7983, %v7059
        %v8081 = vsel %vm4332, %v7985, %v7061
        %v8083 = vsel %vm4332, %v7987, %v7063
        %v8085 = vsel %vm4332, %v7989, %v7065
        %v8087 = vsel %vm4332, %v7991, %v7067
        %v8089 = vsel %vm4332, %v7993, %v7069
        %v8091 = vsel %vm4332, %v7995, %v7071
        %v8093 = vsel %vm4332, %v7997, %v7073
        %v8095 = vsel %vm4332, %v7999, %v7075
        %v8097 = vsel %vm4429, %v8001, %v7095
        %v8099 = vsel %vm4429, %v8003, %v7097
        %v8101 = vsel %vm4429, %v8005, %v7099
        %v8103 = vsel %vm4429, %v8007, %v7101
        %v8105 = vsel %vm4429, %v8009, %v7103
        %v8107 = vsel %vm4429, %v8011, %v7105
        %v8109 = vsel %vm4429, %v8013, %v7107
        %v8111 = vsel %vm4429, %v8015, %v7109
        %v8113 = vsel %vm4429, %v8017, %v7111
        %v8115 = vsel %vm4429, %v8019, %v7113
        %v8117 = vsel %vm4429, %v8021, %v7115
        %v8119 = vsel %vm4429, %v8023, %v7117
        %v8121 = vsel %vm4429, %v8025, %v7119
        %v8123 = vsel %vm4429, %v8027, %v7121
        %v8125 = vsel %vm4429, %v8029, %v7123
        %v8127 = vsel %vm4429, %v8031, %v7125
        %v8129 = vsel %vm4429, %v8033, %v7127
        %v8131 = vsel %vm4429, %v8035, %v7129
        %v8133 = vsel %vm4429, %v8037, %v7131
        %v8135 = vsel %vm4429, %v8039, %v7133
        %v8137 = vsel %vm4429, %v8041, %v7135
        %v8139 = vsel %vm4429, %v8043, %v7137
        %v8141 = vsel %vm4429, %v8045, %v7139
        %v8143 = vsel %vm4429, %v8047, %v7141
        %v8145 = vsel %vm4429, %v8049, %v7143
        %v8147 = vsel %vm4429, %v8051, %v7145
        %v8149 = vsel %vm4429, %v8053, %v7147
        %v8151 = vsel %vm4429, %v8055, %v7149
        %v8153 = vsel %vm4429, %v8057, %v7151
        %v8155 = vsel %vm4429, %v8059, %v7153
        %v8157 = vsel %vm4429, %v8061, %v7155
        %v8159 = vsel %vm4429, %v8063, %v7157
        %v8161 = vsel %vm4429, %v8065, %v7159
        %v8163 = vsel %vm4429, %v8067, %v7161
        %v8165 = vsel %vm4429, %v8069, %v7163
        %v8167 = vsel %vm4429, %v8071, %v7165
        %v8169 = vsel %vm4429, %v8073, %v7167
        %v8171 = vsel %vm4429, %v8075, %v7169
        %v8173 = vsel %vm4429, %v8077, %v7171
        %v8175 = vsel %vm4429, %v8079, %v7173
        %v8177 = vsel %vm4429, %v8081, %v7175
        %v8179 = vsel %vm4429, %v8083, %v7177
        %v8181 = vsel %vm4429, %v8085, %v7179
        %v8183 = vsel %vm4429, %v8087, %v7181
        %v8185 = vsel %vm4429, %v8089, %v7183
        %v8187 = vsel %vm4429, %v8091, %v7185
        %v8189 = vsel %vm4429, %v8093, %v7187
        %v8191 = vsel %vm4429, %v8095, %v7189
        %v8193 = vsel %vm4526, %v8097, %v7233
        %v8195 = vsel %vm4526, %v8099, %v7235
        %v8197 = vsel %vm4526, %v8101, %v7237
        %v8199 = vsel %vm4526, %v8103, %v7239
        %v8201 = vsel %vm4526, %v8105, %v7241
        %v8203 = vsel %vm4526, %v8107, %v7243
        %v8205 = vsel %vm4526, %v8109, %v7245
        %v8207 = vsel %vm4526, %v8111, %v7247
        %v8209 = vsel %vm4526, %v8113, %v7249
        %v8211 = vsel %vm4526, %v8115, %v7251
        %v8213 = vsel %vm4526, %v8117, %v7253
        %v8215 = vsel %vm4526, %v8119, %v7255
        %v8217 = vsel %vm4526, %v8121, %v7257
        %v8219 = vsel %vm4526, %v8123, %v7259
        %v8221 = vsel %vm4526, %v8125, %v7261
        %v8223 = vsel %vm4526, %v8127, %v7263
        %v8225 = vsel %vm4526, %v8129, %v7265
        %v8227 = vsel %vm4526, %v8131, %v7267
        %v8229 = vsel %vm4526, %v8133, %v7269
        %v8231 = vsel %vm4526, %v8135, %v7271
        %v8233 = vsel %vm4526, %v8137, %v7273
        %v8235 = vsel %vm4526, %v8139, %v7275
        %v8237 = vsel %vm4526, %v8141, %v7277
        %v8239 = vsel %vm4526, %v8143, %v7279
        %v8241 = vsel %vm4526, %v8145, %v7281
        %v8243 = vsel %vm4526, %v8147, %v7283
        %v8245 = vsel %vm4526, %v8149, %v7285
        %v8247 = vsel %vm4526, %v8151, %v7287
        %v8249 = vsel %vm4526, %v8153, %v7289
        %v8251 = vsel %vm4526, %v8155, %v7291
        %v8253 = vsel %vm4526, %v8157, %v7293
        %v8255 = vsel %vm4526, %v8159, %v7295
        %v8257 = vsel %vm4526, %v8161, %v7297
        %v8259 = vsel %vm4526, %v8163, %v7299
        %v8261 = vsel %vm4526, %v8165, %v7301
        %v8263 = vsel %vm4526, %v8167, %v7303
        %v8265 = vsel %vm4526, %v8169, %v7305
        %v8267 = vsel %vm4526, %v8171, %v7307
        %v8269 = vsel %vm4526, %v8173, %v7309
        %v8271 = vsel %vm4526, %v8175, %v7311
        %v8273 = vsel %vm4526, %v8177, %v7313
        %v8275 = vsel %vm4526, %v8179, %v7315
        %v8277 = vsel %vm4526, %v8181, %v7317
        %v8279 = vsel %vm4526, %v8183, %v7319
        %v8281 = vsel %vm4526, %v8185, %v7321
        %v8283 = vsel %vm4526, %v8187, %v7323
        %v8285 = vsel %vm4526, %v8189, %v7325
        %v8287 = vsel %vm4526, %v8191, %v7327
        %v8288 = vshrl.u32 %v8193, 16
        %v8290 = vshll.u32 %v8193, 16
        %v8292 = vrot.slane %v8290, 1
        %v8293 = vor.u32 %v8288, %v8292
        %v8294 = vshrl.u32 %v8195, 16
        %v8296 = vshll.u32 %v8195, 16
        %v8298 = vrot.slane %v8296, 1
        %v8299 = vor.u32 %v8294, %v8298
        %v8300 = vshrl.u32 %v8197, 16
        %v8302 = vshll.u32 %v8197, 16
        %v8304 = vrot.slane %v8302, 1
        %v8305 = vor.u32 %v8300, %v8304
        %v8306 = vshrl.u32 %v8199, 16
        %v8308 = vshll.u32 %v8199, 16
        %v8310 = vrot.slane %v8308, 1
        %v8311 = vor.u32 %v8306, %v8310
        %v8312 = vshrl.u32 %v8201, 16
        %v8314 = vshll.u32 %v8201, 16
        %v8316 = vrot.slane %v8314, 1
        %v8317 = vor.u32 %v8312, %v8316
        %v8318 = vshrl.u32 %v8203, 16
        %v8320 = vshll.u32 %v8203, 16
        %v8322 = vrot.slane %v8320, 1
        %v8323 = vor.u32 %v8318, %v8322
        %v8324 = vshrl.u32 %v8205, 16
        %v8326 = vshll.u32 %v8205, 16
        %v8328 = vrot.slane %v8326, 1
        %v8329 = vor.u32 %v8324, %v8328
        %v8330 = vshrl.u32 %v8207, 16
        %v8332 = vshll.u32 %v8207, 16
        %v8334 = vrot.slane %v8332, 1
        %v8335 = vor.u32 %v8330, %v8334
        %v8336 = vshrl.u32 %v8209, 16
        %v8338 = vshll.u32 %v8209, 16
        %v8340 = vrot.slane %v8338, 1
        %v8341 = vor.u32 %v8336, %v8340
        %v8342 = vshrl.u32 %v8211, 16
        %v8344 = vshll.u32 %v8211, 16
        %v8346 = vrot.slane %v8344, 1
        %v8347 = vor.u32 %v8342, %v8346
        %v8348 = vshrl.u32 %v8213, 16
        %v8350 = vshll.u32 %v8213, 16
        %v8352 = vrot.slane %v8350, 1
        %v8353 = vor.u32 %v8348, %v8352
        %v8354 = vshrl.u32 %v8215, 16
        %v8356 = vshll.u32 %v8215, 16
        %v8358 = vrot.slane %v8356, 1
        %v8359 = vor.u32 %v8354, %v8358
        %v8360 = vshrl.u32 %v8217, 16
        %v8362 = vshll.u32 %v8217, 16
        %v8364 = vrot.slane %v8362, 1
        %v8365 = vor.u32 %v8360, %v8364
        %v8366 = vshrl.u32 %v8219, 16
        %v8368 = vshll.u32 %v8219, 16
        %v8370 = vrot.slane %v8368, 1
        %v8371 = vor.u32 %v8366, %v8370
        %v8372 = vshrl.u32 %v8221, 16
        %v8374 = vshll.u32 %v8221, 16
        %v8376 = vrot.slane %v8374, 1
        %v8377 = vor.u32 %v8372, %v8376
        %v8378 = vshrl.u32 %v8223, 16
        %v8380 = vshll.u32 %v8223, 16
        %v8382 = vrot.slane %v8380, 1
        %v8383 = vor.u32 %v8378, %v8382
        %v8384 = vshrl.u32 %v8225, 16
        %v8386 = vshll.u32 %v8225, 16
        %v8388 = vrot.slane %v8386, 1
        %v8389 = vor.u32 %v8384, %v8388
        %v8390 = vshrl.u32 %v8227, 16
        %v8392 = vshll.u32 %v8227, 16
        %v8394 = vrot.slane %v8392, 1
        %v8395 = vor.u32 %v8390, %v8394
        %v8396 = vshrl.u32 %v8229, 16
        %v8398 = vshll.u32 %v8229, 16
        %v8400 = vrot.slane %v8398, 1
        %v8401 = vor.u32 %v8396, %v8400
        %v8402 = vshrl.u32 %v8231, 16
        %v8404 = vshll.u32 %v8231, 16
        %v8406 = vrot.slane %v8404, 1
        %v8407 = vor.u32 %v8402, %v8406
        %v8408 = vshrl.u32 %v8233, 16
        %v8410 = vshll.u32 %v8233, 16
        %v8412 = vrot.slane %v8410, 1
        %v8413 = vor.u32 %v8408, %v8412
        %v8414 = vshrl.u32 %v8235, 16
        %v8416 = vshll.u32 %v8235, 16
        %v8418 = vrot.slane %v8416, 1
        %v8419 = vor.u32 %v8414, %v8418
        %v8420 = vshrl.u32 %v8237, 16
        %v8422 = vshll.u32 %v8237, 16
        %v8424 = vrot.slane %v8422, 1
        %v8425 = vor.u32 %v8420, %v8424
        %v8426 = vshrl.u32 %v8239, 16
        %v8428 = vshll.u32 %v8239, 16
        %v8430 = vrot.slane %v8428, 1
        %v8431 = vor.u32 %v8426, %v8430
        %v8432 = vshrl.u32 %v8241, 16
        %v8434 = vshll.u32 %v8241, 16
        %v8436 = vrot.slane %v8434, 1
        %v8437 = vor.u32 %v8432, %v8436
        %v8438 = vshrl.u32 %v8243, 16
        %v8440 = vshll.u32 %v8243, 16
        %v8442 = vrot.slane %v8440, 1
        %v8443 = vor.u32 %v8438, %v8442
        %v8444 = vshrl.u32 %v8245, 16
        %v8446 = vshll.u32 %v8245, 16
        %v8448 = vrot.slane %v8446, 1
        %v8449 = vor.u32 %v8444, %v8448
        %v8450 = vshrl.u32 %v8247, 16
        %v8452 = vshll.u32 %v8247, 16
        %v8454 = vrot.slane %v8452, 1
        %v8455 = vor.u32 %v8450, %v8454
        %v8456 = vshrl.u32 %v8249, 16
        %v8458 = vshll.u32 %v8249, 16
        %v8460 = vrot.slane %v8458, 1
        %v8461 = vor.u32 %v8456, %v8460
        %v8462 = vshrl.u32 %v8251, 16
        %v8464 = vshll.u32 %v8251, 16
        %v8466 = vrot.slane %v8464, 1
        %v8467 = vor.u32 %v8462, %v8466
        %v8468 = vshrl.u32 %v8253, 16
        %v8470 = vshll.u32 %v8253, 16
        %v8472 = vrot.slane %v8470, 1
        %v8473 = vor.u32 %v8468, %v8472
        %v8474 = vshrl.u32 %v8255, 16
        %v8476 = vshll.u32 %v8255, 16
        %v8478 = vrot.slane %v8476, 1
        %v8479 = vor.u32 %v8474, %v8478
        %v8480 = vshrl.u32 %v8257, 16
        %v8482 = vshll.u32 %v8257, 16
        %v8484 = vrot.slane %v8482, 1
        %v8485 = vor.u32 %v8480, %v8484
        %v8486 = vshrl.u32 %v8259, 16
        %v8488 = vshll.u32 %v8259, 16
        %v8490 = vrot.slane %v8488, 1
        %v8491 = vor.u32 %v8486, %v8490
        %v8492 = vshrl.u32 %v8261, 16
        %v8494 = vshll.u32 %v8261, 16
        %v8496 = vrot.slane %v8494, 1
        %v8497 = vor.u32 %v8492, %v8496
        %v8498 = vshrl.u32 %v8263, 16
        %v8500 = vshll.u32 %v8263, 16
        %v8502 = vrot.slane %v8500, 1
        %v8503 = vor.u32 %v8498, %v8502
        %v8504 = vshrl.u32 %v8265, 16
        %v8506 = vshll.u32 %v8265, 16
        %v8508 = vrot.slane %v8506, 1
        %v8509 = vor.u32 %v8504, %v8508
        %v8510 = vshrl.u32 %v8267, 16
        %v8512 = vshll.u32 %v8267, 16
        %v8514 = vrot.slane %v8512, 1
        %v8515 = vor.u32 %v8510, %v8514
        %v8516 = vshrl.u32 %v8269, 16
        %v8518 = vshll.u32 %v8269, 16
        %v8520 = vrot.slane %v8518, 1
        %v8521 = vor.u32 %v8516, %v8520
        %v8522 = vshrl.u32 %v8271, 16
        %v8524 = vshll.u32 %v8271, 16
        %v8526 = vrot.slane %v8524, 1
        %v8527 = vor.u32 %v8522, %v8526
        %v8528 = vshrl.u32 %v8273, 16
        %v8530 = vshll.u32 %v8273, 16
        %v8532 = vrot.slane %v8530, 1
        %v8533 = vor.u32 %v8528, %v8532
        %v8534 = vshrl.u32 %v8275, 16
        %v8536 = vshll.u32 %v8275, 16
        %v8538 = vrot.slane %v8536, 1
        %v8539 = vor.u32 %v8534, %v8538
        %v8540 = vshrl.u32 %v8277, 16
        %v8542 = vshll.u32 %v8277, 16
        %v8544 = vrot.slane %v8542, 1
        %v8545 = vor.u32 %v8540, %v8544
        %v8546 = vshrl.u32 %v8279, 16
        %v8548 = vshll.u32 %v8279, 16
        %v8550 = vrot.slane %v8548, 1
        %v8551 = vor.u32 %v8546, %v8550
        %v8552 = vshrl.u32 %v8281, 16
        %v8554 = vshll.u32 %v8281, 16
        %v8556 = vrot.slane %v8554, 1
        %v8557 = vor.u32 %v8552, %v8556
        %v8558 = vshrl.u32 %v8283, 16
        %v8560 = vshll.u32 %v8283, 16
        %v8562 = vrot.slane %v8560, 1
        %v8563 = vor.u32 %v8558, %v8562
        %v8564 = vshrl.u32 %v8285, 16
        %v8566 = vshll.u32 %v8285, 16
        %v8568 = vrot.slane %v8566, 1
        %v8569 = vor.u32 %v8564, %v8568
        %v8570 = vshrl.u32 %v8287, 16
        %v8572 = vshll.u32 %v8287, 16
        %v8574 = vrot.slane %v8572, 1
        %v8575 = vor.u32 %v8570, %v8574
        %8576 = vrot.lane.b32.xlu0 %v8293, 64
        %v8577 = vpop.permute.xlu0 %8576
        %8578 = vrot.lane.b32.xlu0 %v8299, 64
        %v8579 = vpop.permute.xlu0 %8578
        %8580 = vrot.lane.b32.xlu0 %v8305, 64
        %v8581 = vpop.permute.xlu0 %8580
        %8582 = vrot.lane.b32.xlu0 %v8311, 64
        %v8583 = vpop.permute.xlu0 %8582
        %8584 = vrot.lane.b32.xlu0 %v8317, 64
        %v8585 = vpop.permute.xlu0 %8584
        %8586 = vrot.lane.b32.xlu0 %v8323, 64
        %v8587 = vpop.permute.xlu0 %8586
        %8588 = vrot.lane.b32.xlu0 %v8329, 64
        %v8589 = vpop.permute.xlu0 %8588
        %8590 = vrot.lane.b32.xlu0 %v8335, 64
        %v8591 = vpop.permute.xlu0 %8590
        %8592 = vrot.lane.b32.xlu0 %v8341, 64
        %v8593 = vpop.permute.xlu0 %8592
        %8594 = vrot.lane.b32.xlu0 %v8347, 64
        %v8595 = vpop.permute.xlu0 %8594
        %8596 = vrot.lane.b32.xlu0 %v8353, 64
        %v8597 = vpop.permute.xlu0 %8596
        %8598 = vrot.lane.b32.xlu0 %v8359, 64
        %v8599 = vpop.permute.xlu0 %8598
        %8600 = vrot.lane.b32.xlu0 %v8365, 64
        %v8601 = vpop.permute.xlu0 %8600
        %8602 = vrot.lane.b32.xlu0 %v8371, 64
        %v8603 = vpop.permute.xlu0 %8602
        %8604 = vrot.lane.b32.xlu0 %v8377, 64
        %v8605 = vpop.permute.xlu0 %8604
        %8606 = vrot.lane.b32.xlu0 %v8383, 64
        %v8607 = vpop.permute.xlu0 %8606
        %8608 = vrot.lane.b32.xlu0 %v8389, 64
        %v8609 = vpop.permute.xlu0 %8608
        %8610 = vrot.lane.b32.xlu0 %v8395, 64
        %v8611 = vpop.permute.xlu0 %8610
        %8612 = vrot.lane.b32.xlu0 %v8401, 64
        %v8613 = vpop.permute.xlu0 %8612
        %8614 = vrot.lane.b32.xlu0 %v8407, 64
        %v8615 = vpop.permute.xlu0 %8614
        %8616 = vrot.lane.b32.xlu0 %v8413, 64
        %v8617 = vpop.permute.xlu0 %8616
        %8618 = vrot.lane.b32.xlu0 %v8419, 64
        %v8619 = vpop.permute.xlu0 %8618
        %8620 = vrot.lane.b32.xlu0 %v8425, 64
        %v8621 = vpop.permute.xlu0 %8620
        %8622 = vrot.lane.b32.xlu0 %v8431, 64
        %v8623 = vpop.permute.xlu0 %8622
        %8624 = vrot.lane.b32.xlu0 %v8437, 64
        %v8625 = vpop.permute.xlu0 %8624
        %8626 = vrot.lane.b32.xlu0 %v8443, 64
        %v8627 = vpop.permute.xlu0 %8626
        %8628 = vrot.lane.b32.xlu0 %v8449, 64
        %v8629 = vpop.permute.xlu0 %8628
        %8630 = vrot.lane.b32.xlu0 %v8455, 64
        %v8631 = vpop.permute.xlu0 %8630
        %8632 = vrot.lane.b32.xlu0 %v8461, 64
        %v8633 = vpop.permute.xlu0 %8632
        %8634 = vrot.lane.b32.xlu0 %v8467, 64
        %v8635 = vpop.permute.xlu0 %8634
        %8636 = vrot.lane.b32.xlu0 %v8473, 64
        %v8637 = vpop.permute.xlu0 %8636
        %8638 = vrot.lane.b32.xlu0 %v8479, 64
        %v8639 = vpop.permute.xlu0 %8638
        %8640 = vrot.lane.b32.xlu0 %v8485, 64
        %v8641 = vpop.permute.xlu0 %8640
        %8642 = vrot.lane.b32.xlu0 %v8491, 64
        %v8643 = vpop.permute.xlu0 %8642
        %8644 = vrot.lane.b32.xlu0 %v8497, 64
        %v8645 = vpop.permute.xlu0 %8644
        %8646 = vrot.lane.b32.xlu0 %v8503, 64
        %v8647 = vpop.permute.xlu0 %8646
        %8648 = vrot.lane.b32.xlu0 %v8509, 64
        %v8649 = vpop.permute.xlu0 %8648
        %8650 = vrot.lane.b32.xlu0 %v8515, 64
        %v8651 = vpop.permute.xlu0 %8650
        %8652 = vrot.lane.b32.xlu0 %v8521, 64
        %v8653 = vpop.permute.xlu0 %8652
        %8654 = vrot.lane.b32.xlu0 %v8527, 64
        %v8655 = vpop.permute.xlu0 %8654
        %8656 = vrot.lane.b32.xlu0 %v8533, 64
        %v8657 = vpop.permute.xlu0 %8656
        %8658 = vrot.lane.b32.xlu0 %v8539, 64
        %v8659 = vpop.permute.xlu0 %8658
        %8660 = vrot.lane.b32.xlu0 %v8545, 64
        %v8661 = vpop.permute.xlu0 %8660
        %8662 = vrot.lane.b32.xlu0 %v8551, 64
        %v8663 = vpop.permute.xlu0 %8662
        %8664 = vrot.lane.b32.xlu0 %v8557, 64
        %v8665 = vpop.permute.xlu0 %8664
        %8666 = vrot.lane.b32.xlu0 %v8563, 64
        %v8667 = vpop.permute.xlu0 %8666
        %8668 = vrot.lane.b32.xlu0 %v8569, 64
        %v8669 = vpop.permute.xlu0 %8668
        %8670 = vrot.lane.b32.xlu0 %v8575, 64
        %v8671 = vpop.permute.xlu0 %8670
        %vm8672 = vcmask 523264
        %v8674 = vsel %vm8672, %v5013, %v8577
        %v8676 = vsel %vm8672, %v5015, %v8579
        %v8678 = vsel %vm8672, %v5017, %v8581
        %v8680 = vsel %vm8672, %v5019, %v8583
        %v8682 = vsel %vm8672, %v5021, %v8585
        %v8684 = vsel %vm8672, %v5023, %v8587
        %v8686 = vsel %vm8672, %v5025, %v8589
        %v8688 = vsel %vm8672, %v5027, %v8591
        %v8690 = vsel %vm8672, %v5029, %v8593
        %v8692 = vsel %vm8672, %v5031, %v8595
        %v8694 = vsel %vm8672, %v5033, %v8597
        %v8696 = vsel %vm8672, %v5035, %v8599
        %v8698 = vsel %vm8672, %v5037, %v8601
        %v8700 = vsel %vm8672, %v5039, %v8603
        %v8702 = vsel %vm8672, %v5041, %v8605
        %v8704 = vsel %vm8672, %v5043, %v8607
        %v8706 = vsel %vm8672, %v5045, %v8609
        %v8708 = vsel %vm8672, %v5047, %v8611
        %v8710 = vsel %vm8672, %v5049, %v8613
        %v8712 = vsel %vm8672, %v5051, %v8615
        %v8714 = vsel %vm8672, %v5053, %v8617
        %v8716 = vsel %vm8672, %v5055, %v8619
        %v8718 = vsel %vm8672, %v5057, %v8621
        %v8720 = vsel %vm8672, %v5059, %v8623
        %v8722 = vsel %vm8672, %v5061, %v8625
        %v8724 = vsel %vm8672, %v5063, %v8627
        %v8726 = vsel %vm8672, %v5065, %v8629
        %v8728 = vsel %vm8672, %v5067, %v8631
        %v8730 = vsel %vm8672, %v5069, %v8633
        %v8732 = vsel %vm8672, %v5071, %v8635
        %v8734 = vsel %vm8672, %v5073, %v8637
        %v8736 = vsel %vm8672, %v5075, %v8639
        %v8738 = vsel %vm8672, %v5077, %v8641
        %v8740 = vsel %vm8672, %v5079, %v8643
        %v8742 = vsel %vm8672, %v5081, %v8645
        %v8744 = vsel %vm8672, %v5083, %v8647
        %v8746 = vsel %vm8672, %v5085, %v8649
        %v8748 = vsel %vm8672, %v5087, %v8651
        %v8750 = vsel %vm8672, %v5089, %v8653
        %v8752 = vsel %vm8672, %v5091, %v8655
        %v8754 = vsel %vm8672, %v5093, %v8657
        %v8756 = vsel %vm8672, %v5095, %v8659
        %v8758 = vsel %vm8672, %v5097, %v8661
        %v8760 = vsel %vm8672, %v5099, %v8663
        %v8762 = vsel %vm8672, %v5101, %v8665
        %v8764 = vsel %vm8672, %v5103, %v8667
        %v8766 = vsel %vm8672, %v5105, %v8669
        %v8768 = vsel %vm8672, %v5107, %v8671
        %v8769 = vld [vmem:[%s1] sm:$0xf]
        %v8770 = vld [vmem:[%s1 + $0x4] sm:$0xf]
        %v8771 = vld [vmem:[%s1 + $0x8] sm:$0xf]
        %v8772 = vld [vmem:[%s1 + $0xc] sm:$0xf]
        %v8773 = vld [vmem:[%s1 + $0x10] sm:$0xf]
        %v8774 = vld [vmem:[%s1 + $0x14] sm:$0xf]
        %v8775 = vld [vmem:[%s1 + $0x18] sm:$0xf]
        %v8776 = vld [vmem:[%s1 + $0x1c] sm:$0xf]
        %v8777 = vld [vmem:[%s1 + $0x20] sm:$0xf]
        %v8778 = vld [vmem:[%s1 + $0x24] sm:$0xf]
        %v8779 = vld [vmem:[%s1 + $0x28] sm:$0xf]
        %v8780 = vld [vmem:[%s1 + $0x2c] sm:$0xf]
        %v8781 = vld [vmem:[%s1 + $0x30] sm:$0xf]
        %v8782 = vld [vmem:[%s1 + $0x34] sm:$0x3]
        %v8783 = vld [vmem:[%s2] sm:$0x1]
        %v8785 = vperm.slane %v8783, 0
        %v8835 = vunpack.c.l.b16 %v8674
        %v8836 = vunpack.c.l.b16 %v8676
        %v8837 = vunpack.c.l.b16 %v8678
        %v8838 = vunpack.c.l.b16 %v8680
        %v8839 = vunpack.c.l.b16 %v8682
        %v8840 = vunpack.c.l.b16 %v8684
        %v8841 = vunpack.c.l.b16 %v8686
        %v8842 = vunpack.c.l.b16 %v8688
        %v8843 = vunpack.c.l.b16 %v8690
        %v8844 = vunpack.c.l.b16 %v8692
        %v8845 = vunpack.c.l.b16 %v8694
        %v8846 = vunpack.c.l.b16 %v8696
        %v8847 = vunpack.c.l.b16 %v8698
        %v8848 = vunpack.c.l.b16 %v8700
        %v8849 = vunpack.c.l.b16 %v8702
        %v8850 = vunpack.c.l.b16 %v8704
        %v8851 = vunpack.c.l.b16 %v8706
        %v8852 = vunpack.c.l.b16 %v8708
        %v8853 = vunpack.c.l.b16 %v8710
        %v8854 = vunpack.c.l.b16 %v8712
        %v8855 = vunpack.c.l.b16 %v8714
        %v8856 = vunpack.c.l.b16 %v8716
        %v8857 = vunpack.c.l.b16 %v8718
        %v8858 = vunpack.c.l.b16 %v8720
        %v8859 = vunpack.c.l.b16 %v8722
        %v8860 = vunpack.c.l.b16 %v8724
        %v8861 = vunpack.c.l.b16 %v8726
        %v8862 = vunpack.c.l.b16 %v8728
        %v8863 = vunpack.c.l.b16 %v8730
        %v8864 = vunpack.c.l.b16 %v8732
        %v8865 = vunpack.c.l.b16 %v8734
        %v8866 = vunpack.c.l.b16 %v8736
        %v8867 = vunpack.c.l.b16 %v8738
        %v8868 = vunpack.c.l.b16 %v8740
        %v8869 = vunpack.c.l.b16 %v8742
        %v8870 = vunpack.c.l.b16 %v8744
        %v8871 = vunpack.c.l.b16 %v8746
        %v8872 = vunpack.c.l.b16 %v8748
        %v8873 = vunpack.c.l.b16 %v8750
        %v8874 = vunpack.c.l.b16 %v8752
        %v8875 = vunpack.c.l.b16 %v8754
        %v8876 = vunpack.c.l.b16 %v8756
        %v8877 = vunpack.c.l.b16 %v8758
        %v8878 = vunpack.c.l.b16 %v8760
        %v8879 = vunpack.c.l.b16 %v8762
        %v8880 = vunpack.c.l.b16 %v8764
        %v8881 = vunpack.c.l.b16 %v8766
        %v8882 = vunpack.c.l.b16 %v8768
        %v8883 = vpack.c.b16 %v8836, %v8835
        %v8884 = vpack.c.b16 %v8838, %v8837
        %v8885 = vpack.c.b16 %v8840, %v8839
        %v8886 = vpack.c.b16 %v8842, %v8841
        %v8887 = vpack.c.b16 %v8844, %v8843
        %v8888 = vpack.c.b16 %v8846, %v8845
        %v8889 = vpack.c.b16 %v8848, %v8847
        %v8890 = vpack.c.b16 %v8850, %v8849
        %v8891 = vpack.c.b16 %v8852, %v8851
        %v8892 = vpack.c.b16 %v8854, %v8853
        %v8893 = vpack.c.b16 %v8856, %v8855
        %v8894 = vpack.c.b16 %v8858, %v8857
        %v8895 = vpack.c.b16 %v8860, %v8859
        %v8896 = vpack.c.b16 %v8862, %v8861
        %v8897 = vpack.c.b16 %v8864, %v8863
        %v8898 = vpack.c.b16 %v8866, %v8865
        %v8899 = vpack.c.b16 %v8868, %v8867
        %v8900 = vpack.c.b16 %v8870, %v8869
        %v8901 = vpack.c.b16 %v8872, %v8871
        %v8902 = vpack.c.b16 %v8874, %v8873
        %v8903 = vpack.c.b16 %v8876, %v8875
        %v8904 = vpack.c.b16 %v8878, %v8877
        %v8905 = vpack.c.b16 %v8880, %v8879
        %v8906 = vpack.c.b16 %v8882, %v8881
        %v8921 = vunpack.c.l.b16 %v8769
        %v8922 = vunpack.c.l.b16 %v8770
        %v8923 = vunpack.c.l.b16 %v8771
        %v8924 = vunpack.c.l.b16 %v8772
        %v8925 = vunpack.c.l.b16 %v8773
        %v8926 = vunpack.c.l.b16 %v8774
        %v8927 = vunpack.c.l.b16 %v8775
        %v8928 = vunpack.c.l.b16 %v8776
        %v8929 = vunpack.c.l.b16 %v8777
        %v8930 = vunpack.c.l.b16 %v8778
        %v8931 = vunpack.c.l.b16 %v8779
        %v8932 = vunpack.c.l.b16 %v8780
        %v8933 = vunpack.c.l.b16 %v8781
        %v8934 = vunpack.c.l.b16 %v8782
        %v8935 = vpack.c.b16 %v8922, %v8921
        %v8936 = vpack.c.b16 %v8924, %v8923
        %v8937 = vpack.c.b16 %v8926, %v8925
        %v8938 = vpack.c.b16 %v8928, %v8927
        %v8939 = vpack.c.b16 %v8930, %v8929
        %v8940 = vpack.c.b16 %v8932, %v8931
        %v8941 = vpack.c.b16 %v8934, %v8933
        %vm8948 = vcmask 883712
        %v8950 = vsel %vm8948, %v8883, 0
        %v8953 = vsel %vm8948, %v8884, 0
        %v8956 = vsel %vm8948, %v8885, 0
        %v8959 = vsel %vm8948, %v8886, 0
        %v8962 = vsel %vm8948, %v8887, 0
        %v8965 = vsel %vm8948, %v8888, 0
        %v8968 = vsel %vm8948, %v8889, 0
        %v8971 = vsel %vm8948, %v8890, 0
        %v8974 = vsel %vm8948, %v8891, 0
        %v8977 = vsel %vm8948, %v8892, 0
        %v8980 = vsel %vm8948, %v8893, 0
        %v8983 = vsel %vm8948, %v8894, 0
        %v8986 = vsel %vm8948, %v8895, 0
        %v8989 = vsel %vm8948, %v8896, 0
        %v8992 = vsel %vm8948, %v8897, 0
        %v8995 = vsel %vm8948, %v8898, 0
        %v8998 = vsel %vm8948, %v8899, 0
        %v9001 = vsel %vm8948, %v8900, 0
        %v9004 = vsel %vm8948, %v8901, 0
        %v9007 = vsel %vm8948, %v8902, 0
        %v9010 = vsel %vm8948, %v8903, 0
        %v9013 = vsel %vm8948, %v8904, 0
        %v9016 = vsel %vm8948, %v8905, 0
        %v9019 = vsel %vm8948, %v8906, 0
        %vm9021 = vcmask 1045504
        %v9023 = vsel %vm9021, %v8941, 0
        %9025 = vmatpush.bf16.msra.mxu0 0
        %9026 = vmatpush.bf16.msra.mxu0 %v9023
        %9027 = vmatpush.bf16.msra.mxu0 %v8940
        %9028 = vmatpush.bf16.msra.mxu0 %v8939
        %9029 = vmatpush.bf16.msra.mxu0 %v8938
        %9030 = vmatpush.bf16.msra.mxu0 %v8937
        %9031 = vmatpush.bf16.msra.mxu0 %v8936
        %9032 = vmatpush.bf16.msra.mxu0 %v8935
        %9033 = vmatmul.bf16.gmra.mxu0 %v8950
        %v9034 = vpop.f32.mrf.mxu0
        %v9035 = vadd.f32 %v8785, %v9034
        %v9036 = vpop.f32.mrf.mxu0
        %v9037 = vadd.f32 %v8785, %v9036
        %9038 = vmatmul.bf16.gmra.mxu0 %v8953
        %v9039 = vpop.f32.mrf.mxu0
        %v9040 = vadd.f32 %v8785, %v9039
        %v9041 = vpop.f32.mrf.mxu0
        %v9042 = vadd.f32 %v8785, %v9041
        %9043 = vmatmul.bf16.gmra.mxu0 %v8956
        %v9044 = vpop.f32.mrf.mxu0
        %v9045 = vadd.f32 %v8785, %v9044
        %v9046 = vpop.f32.mrf.mxu0
        %v9047 = vadd.f32 %v8785, %v9046
        %9048 = vmatmul.bf16.gmra.mxu0 %v8959
        %v9049 = vpop.f32.mrf.mxu0
        %v9050 = vadd.f32 %v8785, %v9049
        %v9051 = vpop.f32.mrf.mxu0
        %v9052 = vadd.f32 %v8785, %v9051
        %9053 = vmatmul.bf16.gmra.mxu0 %v8962
        %v9054 = vpop.f32.mrf.mxu0
        %v9055 = vadd.f32 %v8785, %v9054
        %v9056 = vpop.f32.mrf.mxu0
        %v9057 = vadd.f32 %v8785, %v9056
        %9058 = vmatmul.bf16.gmra.mxu0 %v8965
        %v9059 = vpop.f32.mrf.mxu0
        %v9060 = vadd.f32 %v8785, %v9059
        %v9061 = vpop.f32.mrf.mxu0
        %v9062 = vadd.f32 %v8785, %v9061
        %9063 = vmatmul.bf16.gmra.mxu0 %v8968
        %v9064 = vpop.f32.mrf.mxu0
        %v9065 = vadd.f32 %v8785, %v9064
        %v9066 = vpop.f32.mrf.mxu0
        %v9067 = vadd.f32 %v8785, %v9066
        %9068 = vmatmul.bf16.gmra.mxu0 %v8971
        %v9069 = vpop.f32.mrf.mxu0
        %v9070 = vadd.f32 %v8785, %v9069
        %v9071 = vpop.f32.mrf.mxu0
        %v9072 = vadd.f32 %v8785, %v9071
        %9073 = vmatmul.bf16.gmra.mxu0 %v8974
        %v9074 = vpop.f32.mrf.mxu0
        %v9075 = vadd.f32 %v8785, %v9074
        %v9076 = vpop.f32.mrf.mxu0
        %v9077 = vadd.f32 %v8785, %v9076
        %9078 = vmatmul.bf16.gmra.mxu0 %v8977
        %v9079 = vpop.f32.mrf.mxu0
        %v9080 = vadd.f32 %v8785, %v9079
        %v9081 = vpop.f32.mrf.mxu0
        %v9082 = vadd.f32 %v8785, %v9081
        %9083 = vmatmul.bf16.gmra.mxu0 %v8980
        %v9084 = vpop.f32.mrf.mxu0
        %v9085 = vadd.f32 %v8785, %v9084
        %v9086 = vpop.f32.mrf.mxu0
        %v9087 = vadd.f32 %v8785, %v9086
        %9088 = vmatmul.bf16.gmra.mxu0 %v8983
        %v9089 = vpop.f32.mrf.mxu0
        %v9090 = vadd.f32 %v8785, %v9089
        %v9091 = vpop.f32.mrf.mxu0
        %v9092 = vadd.f32 %v8785, %v9091
        %9093 = vmatmul.bf16.gmra.mxu0 %v8986
        %v9094 = vpop.f32.mrf.mxu0
        %v9095 = vadd.f32 %v8785, %v9094
        %v9096 = vpop.f32.mrf.mxu0
        %v9097 = vadd.f32 %v8785, %v9096
        %9098 = vmatmul.bf16.gmra.mxu0 %v8989
        %v9099 = vpop.f32.mrf.mxu0
        %v9100 = vadd.f32 %v8785, %v9099
        %v9101 = vpop.f32.mrf.mxu0
        %v9102 = vadd.f32 %v8785, %v9101
        %9103 = vmatmul.bf16.gmra.mxu0 %v8992
        %v9104 = vpop.f32.mrf.mxu0
        %v9105 = vadd.f32 %v8785, %v9104
        %v9106 = vpop.f32.mrf.mxu0
        %v9107 = vadd.f32 %v8785, %v9106
        %9108 = vmatmul.bf16.gmra.mxu0 %v8995
        %v9109 = vpop.f32.mrf.mxu0
        %v9110 = vadd.f32 %v8785, %v9109
        %v9111 = vpop.f32.mrf.mxu0
        %v9112 = vadd.f32 %v8785, %v9111
        %9113 = vmatmul.bf16.gmra.mxu0 %v8998
        %v9114 = vpop.f32.mrf.mxu0
        %v9115 = vadd.f32 %v8785, %v9114
        %v9116 = vpop.f32.mrf.mxu0
        %v9117 = vadd.f32 %v8785, %v9116
        %9118 = vmatmul.bf16.gmra.mxu0 %v9001
        %v9119 = vpop.f32.mrf.mxu0
        %v9120 = vadd.f32 %v8785, %v9119
        %v9121 = vpop.f32.mrf.mxu0
        %v9122 = vadd.f32 %v8785, %v9121
        %9123 = vmatmul.bf16.gmra.mxu0 %v9004
        %v9124 = vpop.f32.mrf.mxu0
        %v9125 = vadd.f32 %v8785, %v9124
        %v9126 = vpop.f32.mrf.mxu0
        %v9127 = vadd.f32 %v8785, %v9126
        %9128 = vmatmul.bf16.gmra.mxu0 %v9007
        %v9129 = vpop.f32.mrf.mxu0
        %v9130 = vadd.f32 %v8785, %v9129
        %v9131 = vpop.f32.mrf.mxu0
        %v9132 = vadd.f32 %v8785, %v9131
        %9133 = vmatmul.bf16.gmra.mxu0 %v9010
        %v9134 = vpop.f32.mrf.mxu0
        %v9135 = vadd.f32 %v8785, %v9134
        %v9136 = vpop.f32.mrf.mxu0
        %v9137 = vadd.f32 %v8785, %v9136
        %9138 = vmatmul.bf16.gmra.mxu0 %v9013
        %v9139 = vpop.f32.mrf.mxu0
        %v9140 = vadd.f32 %v8785, %v9139
        %v9141 = vpop.f32.mrf.mxu0
        %v9142 = vadd.f32 %v8785, %v9141
        %9143 = vmatmul.bf16.gmra.mxu0 %v9016
        %v9144 = vpop.f32.mrf.mxu0
        %v9145 = vadd.f32 %v8785, %v9144
        %v9146 = vpop.f32.mrf.mxu0
        %v9147 = vadd.f32 %v8785, %v9146
        %9148 = vmatmul.bf16.gmra.mxu0 %v9019
        %v9149 = vpop.f32.mrf.mxu0
        %v9150 = vadd.f32 %v8785, %v9149
        %v9151 = vpop.f32.mrf.mxu0
        %v9152 = vadd.f32 %v8785, %v9151
        %9153 = vdwg.mxu0
        %9154 = vst [vmem:[%s177] sm:$0xff] %v9035
        %9155 = vst [vmem:[%s177 + $0x8] sm:$0xff] %v9037
        %9156 = vst [vmem:[%s177 + $0x10] sm:$0xff] %v9040
        %9157 = vst [vmem:[%s177 + $0x18] sm:$0xff] %v9042
        %9158 = vst [vmem:[%s177 + $0x20] sm:$0xff] %v9045
        %9159 = vst [vmem:[%s177 + $0x28] sm:$0xff] %v9047
        %9160 = vst [vmem:[%s177 + $0x30] sm:$0xff] %v9050
        %9161 = vst [vmem:[%s177 + $0x38] sm:$0xff] %v9052
        %9162 = vst [vmem:[%s177 + $0x40] sm:$0xff] %v9055
        %9163 = vst [vmem:[%s177 + $0x48] sm:$0xff] %v9057
        %9164 = vst [vmem:[%s177 + $0x50] sm:$0xff] %v9060
        %9165 = vst [vmem:[%s177 + $0x58] sm:$0xff] %v9062
        %9166 = vst [vmem:[%s177 + $0x60] sm:$0xff] %v9065
        %9167 = vst [vmem:[%s177 + $0x68] sm:$0xff] %v9067
        %9168 = vst [vmem:[%s177 + $0x70] sm:$0xff] %v9070
        %9169 = vst [vmem:[%s177 + $0x78] sm:$0xff] %v9072
        %9170 = vst [vmem:[%s177 + $0x80] sm:$0xff] %v9075
        %9171 = vst [vmem:[%s177 + $0x88] sm:$0xff] %v9077
        %9172 = vst [vmem:[%s177 + $0x90] sm:$0xff] %v9080
        %9173 = vst [vmem:[%s177 + $0x98] sm:$0xff] %v9082
        %9174 = vst [vmem:[%s177 + $0xa0] sm:$0xff] %v9085
        %9175 = vst [vmem:[%s177 + $0xa8] sm:$0xff] %v9087
        %9176 = vst [vmem:[%s177 + $0xb0] sm:$0xff] %v9090
        %9177 = vst [vmem:[%s177 + $0xb8] sm:$0xff] %v9092
        %9178 = vst [vmem:[%s177 + $0xc0] sm:$0xff] %v9095
        %9179 = vst [vmem:[%s177 + $0xc8] sm:$0xff] %v9097
        %9180 = vst [vmem:[%s177 + $0xd0] sm:$0xff] %v9100
        %9181 = vst [vmem:[%s177 + $0xd8] sm:$0xff] %v9102
        %9182 = vst [vmem:[%s177 + $0xe0] sm:$0xff] %v9105
        %9183 = vst [vmem:[%s177 + $0xe8] sm:$0xff] %v9107
        %9184 = vst [vmem:[%s177 + $0xf0] sm:$0xff] %v9110
        %9185 = vst [vmem:[%s177 + $0xf8] sm:$0xff] %v9112
        %9186 = vst [vmem:[%s177 + $0x100] sm:$0xff] %v9115
        %9187 = vst [vmem:[%s177 + $0x108] sm:$0xff] %v9117
        %9188 = vst [vmem:[%s177 + $0x110] sm:$0xff] %v9120
        %9189 = vst [vmem:[%s177 + $0x118] sm:$0xff] %v9122
        %9190 = vst [vmem:[%s177 + $0x120] sm:$0xff] %v9125
        %9191 = vst [vmem:[%s177 + $0x128] sm:$0xff] %v9127
        %9192 = vst [vmem:[%s177 + $0x130] sm:$0xff] %v9130
        %9193 = vst [vmem:[%s177 + $0x138] sm:$0xff] %v9132
        %9194 = vst [vmem:[%s177 + $0x140] sm:$0xff] %v9135
        %9195 = vst [vmem:[%s177 + $0x148] sm:$0xff] %v9137
        %9196 = vst [vmem:[%s177 + $0x150] sm:$0xff] %v9140
        %9197 = vst [vmem:[%s177 + $0x158] sm:$0xff] %v9142
        %9198 = vst [vmem:[%s177 + $0x160] sm:$0xff] %v9145
        %9199 = vst [vmem:[%s177 + $0x168] sm:$0xff] %v9147
        %9200 = vst [vmem:[%s177 + $0x170] sm:$0xff] %v9150
        %9201 = vst [vmem:[%s177 + $0x178] sm:$0xff] %v9152
        %s9202 = sand.u32 %s107, 1
        %s9203 = scalar_lea.sflag [#allocation3], %s9202
        %s9204 = sand.u32 %s107, 1
        %s9205 = smul.addr %s9204, 384
        %s9206 = scalar_lea.vmem [#allocation2], %s9205
        // Predicated region
        $region33: #{tpu_custom_call.1} parent=31 // pred_check
          %p9207 = pneg %p117
        $region34: #{tpu_custom_call.1} parent=31 // pred_check_branch
          %9209 = sbr.rel (%p9207) target = $region36
        $region35: #{tpu_custom_call.1} parent=31 // pred_region
          %s9210 = smul.u32 6, %s22
          %9212 = vsyncadd %s9203, 0
          %s9213 = smul.addr %s9210, 8
          %s9214 = smul.addr %s21, 48
          %s9215 = sadd.s32 %s9213, %s9214
          %s9216 = smul.addr %s9215, 8
          %s9217 = scalar_lea.hbm %s3, %s9216
          %s9218 = sshll.u32 %s9206, 4
          %s9219 = int_to_ptr.vmem [resolvable:$true] %s9218
          %s9220 = sshll.u32 %s9217, 4
          %s9221 = int_to_ptr.hbm [resolvable:$true] %s9220
          %9226 = dma.vmem_to_hbm [thread:$0]  %s9219, 6144, %s9221, %s9203, 128, 128, 8
        $region36: #{tpu_custom_call.1} parent=31 // pred_fallthru
          _
      $region32: #{tpu_custom_call.1} parent=5 // pred_fallthru
        _
      %p9227 = scmp.le.s32.totalorder 2, %s12
      // Predicated region
      $region37: #{tpu_custom_call.1} parent=5 // pred_check
        %p9228 = pneg %p9227
      $region38: #{tpu_custom_call.1} parent=5 // pred_check_branch
        %9230 = sbr.rel (%p9228) target = $region40
      $region39: #{tpu_custom_call.1} parent=5 // pred_region
        %s9231 = ssub.s32 %s12, 2
        // Predicated region
        $region41: #{tpu_custom_call.1} parent=39 // pred_check
          %p9232 = pneg %p123
        $region42: #{tpu_custom_call.1} parent=39 // pred_check_branch
          %9234 = sbr.rel (%p9232) target = $region44
        $region43: #{tpu_custom_call.1} parent=39 // pred_region
          %s9235 = sand.u32 %s108, 1
          %s9236 = scalar_lea.sflag [#allocation3], %s9235
          %s9237 = sand.u32 %s108, 1
          %s9238 = smul.addr %s9237, 384
          %s9239 = scalar_lea.vmem [#allocation2], %s9238
          %9241 = dma.done %s9236, 6144
        $region44: #{tpu_custom_call.1} parent=39 // pred_fallthru
          _
      $region40: #{tpu_custom_call.1} parent=5 // pred_fallthru
        _
    $region6: #{tpu_custom_call.1} parent=1 // loop_footer
      %s16 = sadd.s32 1, %s12
    $region7: #{tpu_custom_call.1} parent=1 // loop_footer_branch
      %11 = sbr.rel target = $region3
    $region8: #{tpu_custom_call.1} parent=1 // loop_exit
      _
    %9242 = vsyncpa [#allocation3], 1
    %s9243 = scalar_lea.sflag [#allocation3], 1
    %9244 = vsyncpa %s9243, 1

</llo_original>
